<compile_context>
chip_gen: v7x
topology: tpu7x:2x2x1
jax: 0.10.0
libtpu: 0.0.40
codegen_flags: <defaults>
</compile_context>

<pallas_src>
import jax
import jax.numpy as jnp
from jax.experimental import pallas as pl
from jax.experimental.pallas import tpu as pltpu

H_DIM = 10                   # hidden_dim of the module
HP = 16                      # hidden padded to a sublane-aligned size
HP2 = 2 * HP                 # 32
HP3 = 3 * HP                 # 48
UPPER_PARTS = [1, 2, 3, 4]
LOWER_PARTS = [5, 6]
CLS_P = 7
NODES = CLS_P - 1            # 6 part nodes
P1U = len(UPPER_PARTS) + 1   # 5
P1L = len(LOWER_PARTS) + 1   # 3

MAX_TILE = 4096              # pixel-tile ceiling (lanes per grid step)
_APPROX_SOFTMAX_RECIP = True  # EUP vrcp (~1e-3 rel err); set False for exact


def _pick_tile(hw):
    """Largest lane-dense pixel tile: the whole row if it fits, otherwise the
    biggest multiple-of-128 divisor <= MAX_TILE.  Single-TC chips (v5e/v6e) are
    no longer forced to grid >= 2."""
    if hw <= MAX_TILE:
        return hw                              # full row is always a legal block
    for t in range(MAX_TILE, 127, -128):
        if hw % t == 0:
            return t
    # TODO(synk): ragged pixel counts need a masked final tile; fall back to a
    # single full-row block per batch element.
    return hw


# ----------------------------------------------------------------------------
# The single fused kernel (one grid step = one (batch, pixel-tile)):
#   activations : xh_u (h,T), xh_l (h,T), xp (6,h,T)      [lane-dense blocks]
#   weights     : packed, BN-scale-folded, 16-row padded slabs
#   outputs     : xp_new (6,h,T), decomp map upper (5,T), lower (3,T)
# ----------------------------------------------------------------------------
def _fused_part_graph_kernel(
        xhu_ref, xhl_ref, xp_ref,
        wau_ref, bau_ref, wal_ref, bal_ref,
        w1a_ref, w1b_ref, b1_ref, w2_ref, b2_ref,
        wgm_ref, wgh_ref, wch_ref, bg_ref,
        out_ref, mapu_ref, mapl_ref):
    h = H_DIM
    f32 = jnp.float32
    xhu = xhu_ref[...]                                  # (h, T) upper-half feature
    xhl = xhl_ref[...]                                  # (h, T) lower-half feature

    def softmax_ch(m):                                  # softmax over channel (sublane) axis
        e = jnp.exp(m - jnp.max(m, axis=0, keepdims=True))
        s = jnp.sum(e, axis=0, keepdims=True)
        if _APPROX_SOFTMAX_RECIP:
            return e * pl.reciprocal(s, approx=True)    # EUP vrcp, free slot
        return e / s

    # Decomp_att for both halves (1x1 conv + bias, raw map out, channel softmax)
    m_u = jnp.dot(wau_ref[...], xhu, preferred_element_type=f32) + bau_ref[...]
    m_l = jnp.dot(wal_ref[...], xhl, preferred_element_type=f32) + bal_ref[...]
    mapu_ref[...] = m_u                                 # lane-dense stores
    mapl_ref[...] = m_l
    att_u = softmax_ch(m_u)                             # (5, T)
    att_l = softmax_ch(m_l)                             # (3, T)

    # Attention is a per-pixel scalar, so W1a @ (xh*a) == (W1a @ xh) * a.
    # Compute the shared per-half product once (not once per node).
    p_u = jnp.dot(w1a_ref[0], xhu, preferred_element_type=f32)   # (32, T)
    p_l = jnp.dot(w1a_ref[1], xhl, preferred_element_type=f32)   # (32, T)

    # TODO(synk): the 6-node loop is statically unrolled; if bundle dumps show
    # vreg spills, move the node axis into the grid (scalar-prefetched half
    # index) or into a fori_loop over a stacked VMEM scratch.
    for i in range(NODES):
        node = i + 1
        if node in UPPER_PARTS:
            half, j = 0, UPPER_PARTS.index(node)
            p_half, att = p_u, att_u
        else:
            half, j = 1, LOWER_PARTS.index(node)
            p_half, att = p_l, att_l
        a = att[j + 1:j + 2, :]                          # (1, T) per-pixel attention
        xp_i = xp_ref[i]                                 # (h, T) current part node

        # Decomposition.conv_fh (BN scale folded into weights, shift kept).
        q_i = jnp.dot(w1b_ref[half], xp_i, preferred_element_type=f32)           # (32, T)
        y1 = jnp.maximum(p_half * a + q_i + b1_ref[half], 0.0)                   # (32, T)
        msg = jnp.maximum(
            jnp.dot(w2_ref[half], y1, preferred_element_type=f32) + b2_ref[half],
            0.0)                                                                  # (16, T); rows h: are 0

        # ConvGRU (1x1). Gate rows are 16-aligned: r=[0:16), z=[16:32), c=[32:48).
        g_m = jnp.dot(wgm_ref[i], msg, preferred_element_type=f32) + bg_ref[i]   # (48, T)
        g_h = jnp.dot(wgh_ref[i], xp_i, preferred_element_type=f32)              # (32, T)
        r = jax.nn.sigmoid(g_m[0:HP, :] + g_h[0:HP, :])                          # (16, T)
        z = jax.nn.sigmoid(g_m[HP:HP2, :] + g_h[HP:HP2, :])                      # (16, T)
        c = jnp.tanh(g_m[HP2:HP3, :]
                     + jnp.dot(wch_ref[i], r[0:h, :] * xp_i,
                               preferred_element_type=f32))                      # (16, T)
        out_ref[i] = (1.0 - z[0:h, :]) * xp_i + z[0:h, :] * c[0:h, :]            # (h, T)


# ----------------------------------------------------------------------------
# Host-side weight packing: channel-major, BN scale folded in, output channels
# zero-padded to 16/32/48 rows so all gate slices are vreg-row aligned.
# ----------------------------------------------------------------------------
def _pack_params(params):
    h = H_DIM
    f32 = jnp.float32

    def pad2(a, rows, cols):
        return jnp.zeros((rows, cols), f32).at[:a.shape[0], :a.shape[1]].set(a)

    def pack_dec(dec):
        w1a, w1b, s1, b1, w2, s2, b2 = dec
        w1a_cm = pad2((w1a * s1).T, HP2, h)        # (32, 10)
        w1b_cm = pad2((w1b * s1).T, HP2, h)        # (32, 10)
        b1_cm = pad2(b1.T, HP2, 1)                 # (32, 1)  (pad rows 0 -> relu keeps them 0)
        w2_cm = pad2((w2 * s2).T, HP, HP2)         # (16, 32)
        b2_cm = pad2(b2.T, HP, 1)                  # (16, 1)
        return w1a_cm, w1b_cm, b1_cm, w2_cm, b2_cm

    w1a_u, w1b_u, b1_u, w2_u, b2_u = pack_dec(params['dec_u'])
    w1a_l, w1b_l, b1_l, w2_l, b2_l = pack_dec(params['dec_l'])

    wgm, wgh, wch, bg = [], [], [], []
    for g in params['gru']:
        wgr_m, wgr_h, bgr, wgz_m, wgz_h, bgz, wc_m, wc_h, bc = g
        m = jnp.zeros((HP3, HP), f32)
        m = m.at[0:h, 0:h].set(wgr_m.T)
        m = m.at[HP:HP + h, 0:h].set(wgz_m.T)
        m = m.at[HP2:HP2 + h, 0:h].set(wc_m.T)
        wgm.append(m)
        hh = jnp.zeros((HP2, h), f32)
        hh = hh.at[0:h, :].set(wgr_h.T)
        hh = hh.at[HP:HP + h, :].set(wgz_h.T)
        wgh.append(hh)
        wch.append(pad2(wc_h.T, HP, h))
        b = jnp.zeros((HP3, 1), f32)
        b = b.at[0:h, :].set(bgr.T)
        b = b.at[HP:HP + h, :].set(bgz.T)
        b = b.at[HP2:HP2 + h, :].set(bc.T)
        bg.append(b)

    return (params['wa_u'].T, params['ba_u'].T,         # (5,10), (5,1)
            params['wa_l'].T, params['ba_l'].T,         # (3,10), (3,1)
            jnp.stack([w1a_u, w1a_l]),                  # (2,32,10)
            jnp.stack([w1b_u, w1b_l]),                  # (2,32,10)
            jnp.stack([b1_u, b1_l]),                    # (2,32,1)
            jnp.stack([w2_u, w2_l]),                    # (2,16,32)
            jnp.stack([b2_u, b2_l]),                    # (2,16,1)
            jnp.stack(wgm), jnp.stack(wgh),             # (6,48,16), (6,32,10)
            jnp.stack(wch), jnp.stack(bg))              # (6,16,10), (6,48,1)


# ----------------------------------------------------------------------------
# Part_Graph forward: one pallas_call, zero host-side layout passes.
# ----------------------------------------------------------------------------
def _part_graph_forward_impl(params, xf, xh_list, xp_nodes, xp):
    """`xp_nodes` is the channel-stacked part features (B, 6*h, H, W), i.e.
    torch.cat(xp_list, dim=1) -- which is exactly `p_conv` in GNN_infer, so no
    extra copy exists upstream.  xf / xp are unused by this graph stage and are
    kept only for interface parity with the PyTorch module."""
    del xf, xp
    xh_u, xh_l = xh_list
    B, h, Hs, Ws = xh_u.shape
    assert h == H_DIM
    HW = Hs * Ws
    tile = _pick_tile(HW)
    grid = (B, HW // tile)

    # Free reshapes only (contiguous dim splits/merges), no transposes.
    xhu3 = xh_u.reshape(B, h, HW)
    xhl3 = xh_l.reshape(B, h, HW)
    xp4 = xp_nodes.reshape(B, NODES, h, HW)

    weights = _pack_params(params)

    def act_spec(c):
        return pl.BlockSpec((None, c, tile), lambda b, t: (b, 0, t))

    def w_spec(a):
        if a.ndim == 2:
            return pl.BlockSpec(a.shape, lambda b, t: (0, 0))
        return pl.BlockSpec(a.shape, lambda b, t: (0, 0, 0))

    xp_spec = pl.BlockSpec((None, NODES, h, tile), lambda b, t: (b, 0, 0, t))

    out_all, map_u, map_l = pl.pallas_call(
        _fused_part_graph_kernel,
        out_shape=(jax.ShapeDtypeStruct((B, NODES, h, HW), jnp.float32),
                   jax.ShapeDtypeStruct((B, P1U, HW), jnp.float32),
                   jax.ShapeDtypeStruct((B, P1L, HW), jnp.float32)),
        grid_spec=pltpu.PrefetchScalarGridSpec(
            num_scalar_prefetch=0,
            grid=grid,
            in_specs=[act_spec(h), act_spec(h), xp_spec]
                     + [w_spec(w) for w in weights],
            out_specs=[xp_spec, act_spec(P1U), act_spec(P1L)],
        ),
        compiler_params=pltpu.CompilerParams(
            dimension_semantics=("parallel", "parallel"),
            vmem_limit_bytes=32 * 1024 * 1024),
    )(xhu3, xhl3, xp4, *weights)

    # Free reshapes back to NCHW (no transposes).
    xp_new = out_all.reshape(B, NODES * h, Hs, Ws)
    return (xp_new,
            map_u.reshape(B, P1U, Hs, Ws),
            map_l.reshape(B, P1L, Hs, Ws))


part_graph_forward = jax.jit(_part_graph_forward_impl)


# ----------------------------------------------------------------------------
# Pure-JAX reference (uses the unpacked, logical parameters)
# ----------------------------------------------------------------------------
def reference_forward(params, xh_list, xp_list):
    B, C, Hs, Ws = xh_list[0].shape
    N = B * Hs * Ws
    to_nc = lambda t: jnp.transpose(t, (0, 2, 3, 1)).reshape(N, t.shape[1])
    to_nchw = lambda t: jnp.transpose(t.reshape(B, Hs, Ws, t.shape[1]), (0, 3, 1, 2))

    xh_u, xh_l = to_nc(xh_list[0]), to_nc(xh_list[1])
    xp_flat = [to_nc(t) for t in xp_list]

    def att(x, wa, ba):
        m = x @ wa + ba
        return m, jax.nn.softmax(m, axis=-1)

    map_u, a_u = att(xh_u, params['wa_u'], params['ba_u'])
    map_l, a_l = att(xh_l, params['wa_l'], params['ba_l'])

    def node(xh_half, a_col, xpi, dec, gru):
        w1a, w1b, s1, b1, w2, s2, b2 = dec
        y1 = jnp.maximum(((xh_half * a_col) @ w1a + xpi @ w1b) * s1 + b1, 0.0)
        msg = jnp.maximum((y1 @ w2) * s2 + b2, 0.0)
        wgr_m, wgr_h, bgr, wgz_m, wgz_h, bgz, wc_m, wc_h, bc = gru
        r = jax.nn.sigmoid(msg @ wgr_m + xpi @ wgr_h + bgr)
        z = jax.nn.sigmoid(msg @ wgz_m + xpi @ wgz_h + bgz)
        c = jnp.tanh(msg @ wc_m + (r * xpi) @ wc_h + bc)
        return (1.0 - z) * xpi + z * c

    outs = []
    for i in range(NODES):
        node_id = i + 1
        if node_id in UPPER_PARTS:
            j = UPPER_PARTS.index(node_id)
            o = node(xh_u, a_u[:, j + 1:j + 2], xp_flat[i],
                     params['dec_u'], params['gru'][i])
        else:
            j = LOWER_PARTS.index(node_id)
            o = node(xh_l, a_l[:, j + 1:j + 2], xp_flat[i],
                     params['dec_l'], params['gru'][i])
        outs.append(to_nchw(o))
    return outs, to_nchw(map_u), to_nchw(map_l)


# ----------------------------------------------------------------------------
# Deterministic synthetic parameters
# ----------------------------------------------------------------------------
def init_params(key, h):
    keys = iter(jax.random.split(key, 128))
    nk = lambda: next(keys)
    w = lambda cin, cout: 0.3 * jax.random.normal(nk(), (cin, cout), jnp.float32)
    b = lambda c: 0.1 * jax.random.normal(nk(), (1, c), jnp.float32)

    def bn(c):  # folded inference-mode BatchNorm (InPlaceABNSync, activation='none')
        gamma = 1.0 + 0.1 * jax.random.normal(nk(), (1, c), jnp.float32)
        beta = 0.1 * jax.random.normal(nk(), (1, c), jnp.float32)
        mean = 0.1 * jax.random.normal(nk(), (1, c), jnp.float32)
        var = 1.0 + 0.1 * jax.random.uniform(nk(), (1, c), jnp.float32)
        scale = gamma * jax.lax.rsqrt(var + 1e-5)
        return scale, beta - mean * scale

    def dec():
        w1a, w1b = w(h, 2 * h), w(h, 2 * h)      # conv(2h->2h) split over the cat halves
        s1, b1 = bn(2 * h)
        w2 = w(2 * h, h)                         # conv(2h->h)
        s2, b2 = bn(h)
        return (w1a, w1b, s1, b1, w2, s2, b2)

    def gru():
        return (w(h, h), w(h, h), b(h),          # reset gate  (msg part, hidden part, bias)
                w(h, h), w(h, h), b(h),          # update gate
                w(h, h), w(h, h), b(h))          # candidate

    return {
        'wa_u': w(h, P1U), 'ba_u': b(P1U),
        'wa_l': w(h, P1L), 'ba_l': b(P1L),
        'dec_u': dec(), 'dec_l': dec(),
        'gru': [gru() for _ in range(NODES)],
    }


if __name__ == "__main__":
    B, Hs, Ws = 2, 16, 16
    h = H_DIM

    key = jax.random.PRNGKey(0)
    k_par, k_xf, k_xh, k_xp, k_xpl = jax.random.split(key, 5)

    params = init_params(k_par, h)

    xf = jax.random.normal(k_xf, (B, h, Hs, Ws), jnp.float32)            # unused by forward
    xh_list = [jax.random.normal(jax.random.fold_in(k_xh, i), (B, h, Hs, Ws), jnp.float32)
               for i in range(2)]                                        # cls_h - 1 = 2 halves
    xp_nodes = jax.random.normal(k_xpl, (B, NODES * h, Hs, Ws), jnp.float32)  # stacked part nodes
    xp = jax.random.normal(k_xp, (B, h, Hs, Ws), jnp.float32)            # unused by forward

    out = part_graph_forward(params, xf, xh_list, xp_nodes, xp)
    out = jax.block_until_ready(out)
    xp_new, map_u, map_l = out

    xp_list = [xp_nodes[:, i * h:(i + 1) * h] for i in range(NODES)]
    ref_list, ref_map_u, ref_map_l = reference_forward(params, xh_list, xp_list)
    ref_xp_new = jnp.concatenate(ref_list, axis=1)

    assert xp_new.shape == (B, NODES * h, Hs, Ws)
    assert map_u.shape == (B, P1U, Hs, Ws)
    assert map_l.shape == (B, P1L, Hs, Ws)

    assert jnp.allclose(xp_new, ref_xp_new, rtol=1e-2, atol=1e-2)
    assert jnp.allclose(map_u, ref_map_u, rtol=1e-2, atol=1e-2)
    assert jnp.allclose(map_l, ref_map_l, rtol=1e-2, atol=1e-2)

    print("KERNEL_OK")
</pallas_src>

<mosaic_0001>
module attributes {stable_mosaic.version = 11 : i64} {
  func.func @_fused_part_graph_kernel(%arg0: i32, %arg1: i32, %arg2: memref<1x10x256xf32, #tpu.memory_space<vmem>>, %arg3: memref<1x10x256xf32, #tpu.memory_space<vmem>>, %arg4: memref<1x6x10x256xf32, #tpu.memory_space<vmem>>, %arg5: memref<5x10xf32, #tpu.memory_space<vmem>>, %arg6: memref<5x1xf32, #tpu.memory_space<vmem>>, %arg7: memref<3x10xf32, #tpu.memory_space<vmem>>, %arg8: memref<3x1xf32, #tpu.memory_space<vmem>>, %arg9: memref<2x32x10xf32, #tpu.memory_space<vmem>>, %arg10: memref<2x32x10xf32, #tpu.memory_space<vmem>>, %arg11: memref<2x32x1xf32, #tpu.memory_space<vmem>>, %arg12: memref<2x16x32xf32, #tpu.memory_space<vmem>>, %arg13: memref<2x16x1xf32, #tpu.memory_space<vmem>>, %arg14: memref<6x48x16xf32, #tpu.memory_space<vmem>>, %arg15: memref<6x32x10xf32, #tpu.memory_space<vmem>>, %arg16: memref<6x16x10xf32, #tpu.memory_space<vmem>>, %arg17: memref<6x48x1xf32, #tpu.memory_space<vmem>>, %arg18: memref<1x6x10x256xf32, #tpu.memory_space<vmem>>, %arg19: memref<1x5x256xf32, #tpu.memory_space<vmem>>, %arg20: memref<1x3x256xf32, #tpu.memory_space<vmem>>) attributes {dimension_semantics = [#tpu.dimension_semantics<parallel>, #tpu.dimension_semantics<parallel>], iteration_bounds = array<i64: 2, 1>, scalar_prefetch = 0 : i64, scratch_operands = 0 : i64, tpu.core_type = #tpu.core_type<tc>, window_params = [{transform_indices = @transform_0, window_bounds = array<i64: 1, 10, 256>}, {transform_indices = @transform_1, window_bounds = array<i64: 1, 10, 256>}, {transform_indices = @transform_2, window_bounds = array<i64: 1, 6, 10, 256>}, {pipeline_mode = #tpu.pipeline_mode<synchronous>, transform_indices = @transform_3, window_bounds = array<i64: 5, 10>}, {pipeline_mode = #tpu.pipeline_mode<synchronous>, transform_indices = @transform_4, window_bounds = array<i64: 5, 1>}, {pipeline_mode = #tpu.pipeline_mode<synchronous>, transform_indices = @transform_5, window_bounds = array<i64: 3, 10>}, {pipeline_mode = #tpu.pipeline_mode<synchronous>, transform_indices = @transform_6, window_bounds = array<i64: 3, 1>}, {pipeline_mode = #tpu.pipeline_mode<synchronous>, transform_indices = @transform_7, window_bounds = array<i64: 2, 32, 10>}, {pipeline_mode = #tpu.pipeline_mode<synchronous>, transform_indices = @transform_8, window_bounds = array<i64: 2, 32, 10>}, {pipeline_mode = #tpu.pipeline_mode<synchronous>, transform_indices = @transform_9, window_bounds = array<i64: 2, 32, 1>}, {pipeline_mode = #tpu.pipeline_mode<synchronous>, transform_indices = @transform_10, window_bounds = array<i64: 2, 16, 32>}, {pipeline_mode = #tpu.pipeline_mode<synchronous>, transform_indices = @transform_11, window_bounds = array<i64: 2, 16, 1>}, {pipeline_mode = #tpu.pipeline_mode<synchronous>, transform_indices = @transform_12, window_bounds = array<i64: 6, 48, 16>}, {pipeline_mode = #tpu.pipeline_mode<synchronous>, transform_indices = @transform_13, window_bounds = array<i64: 6, 32, 10>}, {pipeline_mode = #tpu.pipeline_mode<synchronous>, transform_indices = @transform_14, window_bounds = array<i64: 6, 16, 10>}, {pipeline_mode = #tpu.pipeline_mode<synchronous>, transform_indices = @transform_15, window_bounds = array<i64: 6, 48, 1>}, {transform_indices = @transform_16, window_bounds = array<i64: 1, 6, 10, 256>}, {transform_indices = @transform_17, window_bounds = array<i64: 1, 5, 256>}, {transform_indices = @transform_18, window_bounds = array<i64: 1, 3, 256>}]} {
    %c0 = arith.constant 0 : index
    %c0_0 = arith.constant 0 : index
    %c0_1 = arith.constant 0 : index
    %0 = vector.load %arg2[%c0, %c0_0, %c0_1] : memref<1x10x256xf32, #tpu.memory_space<vmem>>, vector<1x10x256xf32>
    %1 = vector.shape_cast %0 : vector<1x10x256xf32> to vector<10x256xf32>
    %c0_2 = arith.constant 0 : index
    %c0_3 = arith.constant 0 : index
    %c0_4 = arith.constant 0 : index
    %2 = vector.load %arg3[%c0_2, %c0_3, %c0_4] : memref<1x10x256xf32, #tpu.memory_space<vmem>>, vector<1x10x256xf32>
    %3 = vector.shape_cast %2 : vector<1x10x256xf32> to vector<10x256xf32>
    %c0_5 = arith.constant 0 : index
    %c0_6 = arith.constant 0 : index
    %4 = vector.load %arg5[%c0_5, %c0_6] : memref<5x10xf32, #tpu.memory_space<vmem>>, vector<5x10xf32>
    %cst = arith.constant dense<0.000000e+00> : vector<5x256xf32>
    %5 = tpu.matmul %4, %1, %cst {dimension_numbers = #tpu.dot_dimension_numbers<[1], [0], [0], [1], [0, 0, 1, 1], [], []>} : vector<5x10xf32>, vector<10x256xf32>, vector<5x256xf32> -> vector<5x256xf32>
    %c0_7 = arith.constant 0 : index
    %c0_8 = arith.constant 0 : index
    %6 = vector.load %arg6[%c0_7, %c0_8] : memref<5x1xf32, #tpu.memory_space<vmem>>, vector<5x1xf32>
    %7 = vector.broadcast %6 : vector<5x1xf32> to vector<5x256xf32>
    %8 = arith.addf %5, %7 : vector<5x256xf32>
    %c0_9 = arith.constant 0 : index
    %c0_10 = arith.constant 0 : index
    %9 = vector.load %arg7[%c0_9, %c0_10] : memref<3x10xf32, #tpu.memory_space<vmem>>, vector<3x10xf32>
    %cst_11 = arith.constant dense<0.000000e+00> : vector<3x256xf32>
    %10 = tpu.matmul %9, %3, %cst_11 {dimension_numbers = #tpu.dot_dimension_numbers<[1], [0], [0], [1], [0, 0, 1, 1], [], []>} : vector<3x10xf32>, vector<10x256xf32>, vector<3x256xf32> -> vector<3x256xf32>
    %c0_12 = arith.constant 0 : index
    %c0_13 = arith.constant 0 : index
    %11 = vector.load %arg8[%c0_12, %c0_13] : memref<3x1xf32, #tpu.memory_space<vmem>>, vector<3x1xf32>
    %12 = vector.broadcast %11 : vector<3x1xf32> to vector<3x256xf32>
    %13 = arith.addf %10, %12 : vector<3x256xf32>
    %c0_14 = arith.constant 0 : index
    %c0_15 = arith.constant 0 : index
    %c0_16 = arith.constant 0 : index
    %14 = vector.load %arg19[%c0_14, %c0_15, %c0_16] : memref<1x5x256xf32, #tpu.memory_space<vmem>>, vector<1x5x256xf32>
    %15 = vector.shape_cast %14 : vector<1x5x256xf32> to vector<5x256xf32>
    %16 = vector.shape_cast %8 : vector<5x256xf32> to vector<1x5x256xf32>
    tpu.vector_store %arg19[%c0_14, %c0_15, %c0_16], %16 {strides = array<i32>} : memref<1x5x256xf32, #tpu.memory_space<vmem>>, vector<1x5x256xf32>,
    %c0_17 = arith.constant 0 : index
    %c0_18 = arith.constant 0 : index
    %c0_19 = arith.constant 0 : index
    %17 = vector.load %arg20[%c0_17, %c0_18, %c0_19] : memref<1x3x256xf32, #tpu.memory_space<vmem>>, vector<1x3x256xf32>
    %18 = vector.shape_cast %17 : vector<1x3x256xf32> to vector<3x256xf32>
    %19 = vector.shape_cast %13 : vector<3x256xf32> to vector<1x3x256xf32>
    tpu.vector_store %arg20[%c0_17, %c0_18, %c0_19], %19 {strides = array<i32>} : memref<1x3x256xf32, #tpu.memory_space<vmem>>, vector<1x3x256xf32>,
    %cst_20 = arith.constant dense<0xFF800000> : vector<256xf32>
    %20 = vector.multi_reduction <maximumf>, %8, %cst_20 [0] : vector<5x256xf32> to vector<256xf32>
    %21 = vector.shape_cast %20 : vector<256xf32> to vector<1x256xf32>
    %22 = vector.broadcast %21 : vector<1x256xf32> to vector<5x256xf32>
    %23 = arith.subf %8, %22 : vector<5x256xf32>
    %24 = math.exp %23 : vector<5x256xf32>
    %cst_21 = arith.constant dense<0.000000e+00> : vector<256xf32>
    %25 = vector.multi_reduction <add>, %24, %cst_21 [0] : vector<5x256xf32> to vector<256xf32>
    %26 = vector.shape_cast %25 : vector<256xf32> to vector<1x256xf32>
    %27 = tpu.reciprocal %26 {approx = true} : vector<1x256xf32> -> vector<1x256xf32>
    %28 = vector.broadcast %27 : vector<1x256xf32> to vector<5x256xf32>
    %29 = arith.mulf %24, %28 : vector<5x256xf32>
    %cst_22 = arith.constant dense<0xFF800000> : vector<256xf32>
    %30 = vector.multi_reduction <maximumf>, %13, %cst_22 [0] : vector<3x256xf32> to vector<256xf32>
    %31 = vector.shape_cast %30 : vector<256xf32> to vector<1x256xf32>
    %32 = vector.broadcast %31 : vector<1x256xf32> to vector<3x256xf32>
    %33 = arith.subf %13, %32 : vector<3x256xf32>
    %34 = math.exp %33 : vector<3x256xf32>
    %cst_23 = arith.constant dense<0.000000e+00> : vector<256xf32>
    %35 = vector.multi_reduction <add>, %34, %cst_23 [0] : vector<3x256xf32> to vector<256xf32>
    %36 = vector.shape_cast %35 : vector<256xf32> to vector<1x256xf32>
    %37 = tpu.reciprocal %36 {approx = true} : vector<1x256xf32> -> vector<1x256xf32>
    %38 = vector.broadcast %37 : vector<1x256xf32> to vector<3x256xf32>
    %39 = arith.mulf %34, %38 : vector<3x256xf32>
    %c0_24 = arith.constant 0 : index
    %c0_25 = arith.constant 0 : index
    %c0_26 = arith.constant 0 : index
    %40 = vector.load %arg9[%c0_24, %c0_25, %c0_26] : memref<2x32x10xf32, #tpu.memory_space<vmem>>, vector<1x32x10xf32>
    %41 = vector.shape_cast %40 : vector<1x32x10xf32> to vector<32x10xf32>
    %cst_27 = arith.constant dense<0.000000e+00> : vector<32x256xf32>
    %42 = tpu.matmul %41, %1, %cst_27 {dimension_numbers = #tpu.dot_dimension_numbers<[1], [0], [0], [1], [0, 0, 1, 1], [], []>} : vector<32x10xf32>, vector<10x256xf32>, vector<32x256xf32> -> vector<32x256xf32>
    %c1 = arith.constant 1 : index
    %c0_28 = arith.constant 0 : index
    %c0_29 = arith.constant 0 : index
    %43 = vector.load %arg9[%c1, %c0_28, %c0_29] : memref<2x32x10xf32, #tpu.memory_space<vmem>>, vector<1x32x10xf32>
    %44 = vector.shape_cast %43 : vector<1x32x10xf32> to vector<32x10xf32>
    %cst_30 = arith.constant dense<0.000000e+00> : vector<32x256xf32>
    %45 = tpu.matmul %44, %3, %cst_30 {dimension_numbers = #tpu.dot_dimension_numbers<[1], [0], [0], [1], [0, 0, 1, 1], [], []>} : vector<32x10xf32>, vector<10x256xf32>, vector<32x256xf32> -> vector<32x256xf32>
    %46 = vector.extract_strided_slice %29 {offsets = [1, 0], sizes = [1, 256], strides = [1, 1]} : vector<5x256xf32> to vector<1x256xf32>
    %c0_31 = arith.constant 0 : index
    %c0_32 = arith.constant 0 : index
    %c0_33 = arith.constant 0 : index
    %c0_34 = arith.constant 0 : index
    %47 = vector.load %arg4[%c0_31, %c0_32, %c0_33, %c0_34] : memref<1x6x10x256xf32, #tpu.memory_space<vmem>>, vector<1x1x10x256xf32>
    %48 = vector.shape_cast %47 : vector<1x1x10x256xf32> to vector<10x256xf32>
    %c0_35 = arith.constant 0 : index
    %c0_36 = arith.constant 0 : index
    %c0_37 = arith.constant 0 : index
    %49 = vector.load %arg10[%c0_35, %c0_36, %c0_37] : memref<2x32x10xf32, #tpu.memory_space<vmem>>, vector<1x32x10xf32>
    %50 = vector.shape_cast %49 : vector<1x32x10xf32> to vector<32x10xf32>
    %cst_38 = arith.constant dense<0.000000e+00> : vector<32x256xf32>
    %51 = tpu.matmul %50, %48, %cst_38 {dimension_numbers = #tpu.dot_dimension_numbers<[1], [0], [0], [1], [0, 0, 1, 1], [], []>} : vector<32x10xf32>, vector<10x256xf32>, vector<32x256xf32> -> vector<32x256xf32>
    %52 = vector.broadcast %46 : vector<1x256xf32> to vector<32x256xf32>
    %53 = arith.mulf %42, %52 : vector<32x256xf32>
    %54 = arith.addf %53, %51 : vector<32x256xf32>
    %c0_39 = arith.constant 0 : index
    %c0_40 = arith.constant 0 : index
    %c0_41 = arith.constant 0 : index
    %55 = vector.load %arg11[%c0_39, %c0_40, %c0_41] : memref<2x32x1xf32, #tpu.memory_space<vmem>>, vector<1x32x1xf32>
    %56 = vector.shape_cast %55 : vector<1x32x1xf32> to vector<32x1xf32>
    %57 = vector.broadcast %56 : vector<32x1xf32> to vector<32x256xf32>
    %58 = arith.addf %54, %57 : vector<32x256xf32>
    %cst_42 = arith.constant 0.000000e+00 : f32
    %59 = vector.broadcast %cst_42 : f32 to vector<32x256xf32>
    %60 = arith.maximumf %58, %59 : vector<32x256xf32>
    %c0_43 = arith.constant 0 : index
    %c0_44 = arith.constant 0 : index
    %c0_45 = arith.constant 0 : index
    %61 = vector.load %arg12[%c0_43, %c0_44, %c0_45] : memref<2x16x32xf32, #tpu.memory_space<vmem>>, vector<1x16x32xf32>
    %62 = vector.shape_cast %61 : vector<1x16x32xf32> to vector<16x32xf32>
    %cst_46 = arith.constant dense<0.000000e+00> : vector<16x256xf32>
    %63 = tpu.matmul %62, %60, %cst_46 {dimension_numbers = #tpu.dot_dimension_numbers<[1], [0], [0], [1], [0, 0, 1, 1], [], []>} : vector<16x32xf32>, vector<32x256xf32>, vector<16x256xf32> -> vector<16x256xf32>
    %c0_47 = arith.constant 0 : index
    %c0_48 = arith.constant 0 : index
    %c0_49 = arith.constant 0 : index
    %64 = vector.load %arg13[%c0_47, %c0_48, %c0_49] : memref<2x16x1xf32, #tpu.memory_space<vmem>>, vector<1x16x1xf32>
    %65 = vector.shape_cast %64 : vector<1x16x1xf32> to vector<16x1xf32>
    %66 = vector.broadcast %65 : vector<16x1xf32> to vector<16x256xf32>
    %67 = arith.addf %63, %66 : vector<16x256xf32>
    %cst_50 = arith.constant 0.000000e+00 : f32
    %68 = vector.broadcast %cst_50 : f32 to vector<16x256xf32>
    %69 = arith.maximumf %67, %68 : vector<16x256xf32>
    %c0_51 = arith.constant 0 : index
    %c0_52 = arith.constant 0 : index
    %c0_53 = arith.constant 0 : index
    %70 = vector.load %arg14[%c0_51, %c0_52, %c0_53] : memref<6x48x16xf32, #tpu.memory_space<vmem>>, vector<1x48x16xf32>
    %71 = vector.shape_cast %70 : vector<1x48x16xf32> to vector<48x16xf32>
    %cst_54 = arith.constant dense<0.000000e+00> : vector<48x256xf32>
    %72 = tpu.matmul %71, %69, %cst_54 {dimension_numbers = #tpu.dot_dimension_numbers<[1], [0], [0], [1], [0, 0, 1, 1], [], []>} : vector<48x16xf32>, vector<16x256xf32>, vector<48x256xf32> -> vector<48x256xf32>
    %c0_55 = arith.constant 0 : index
    %c0_56 = arith.constant 0 : index
    %c0_57 = arith.constant 0 : index
    %73 = vector.load %arg17[%c0_55, %c0_56, %c0_57] : memref<6x48x1xf32, #tpu.memory_space<vmem>>, vector<1x48x1xf32>
    %74 = vector.shape_cast %73 : vector<1x48x1xf32> to vector<48x1xf32>
    %75 = vector.broadcast %74 : vector<48x1xf32> to vector<48x256xf32>
    %76 = arith.addf %72, %75 : vector<48x256xf32>
    %c0_58 = arith.constant 0 : index
    %c0_59 = arith.constant 0 : index
    %c0_60 = arith.constant 0 : index
    %77 = vector.load %arg15[%c0_58, %c0_59, %c0_60] : memref<6x32x10xf32, #tpu.memory_space<vmem>>, vector<1x32x10xf32>
    %78 = vector.shape_cast %77 : vector<1x32x10xf32> to vector<32x10xf32>
    %cst_61 = arith.constant dense<0.000000e+00> : vector<32x256xf32>
    %79 = tpu.matmul %78, %48, %cst_61 {dimension_numbers = #tpu.dot_dimension_numbers<[1], [0], [0], [1], [0, 0, 1, 1], [], []>} : vector<32x10xf32>, vector<10x256xf32>, vector<32x256xf32> -> vector<32x256xf32>
    %80 = vector.extract_strided_slice %76 {offsets = [0, 0], sizes = [16, 256], strides = [1, 1]} : vector<48x256xf32> to vector<16x256xf32>
    %81 = vector.extract_strided_slice %79 {offsets = [0, 0], sizes = [16, 256], strides = [1, 1]} : vector<32x256xf32> to vector<16x256xf32>
    %82 = arith.addf %80, %81 : vector<16x256xf32>
    %83 = arith.negf %82 : vector<16x256xf32>
    %84 = math.exp %83 : vector<16x256xf32>
    %cst_62 = arith.constant 1.000000e+00 : f32
    %85 = vector.broadcast %cst_62 : f32 to vector<16x256xf32>
    %86 = arith.addf %85, %84 : vector<16x256xf32>
    %87 = arith.divf %85, %86 : vector<16x256xf32>
    %88 = vector.extract_strided_slice %76 {offsets = [16, 0], sizes = [16, 256], strides = [1, 1]} : vector<48x256xf32> to vector<16x256xf32>
    %89 = vector.extract_strided_slice %79 {offsets = [16, 0], sizes = [16, 256], strides = [1, 1]} : vector<32x256xf32> to vector<16x256xf32>
    %90 = arith.addf %88, %89 : vector<16x256xf32>
    %91 = arith.negf %90 : vector<16x256xf32>
    %92 = math.exp %91 : vector<16x256xf32>
    %cst_63 = arith.constant 1.000000e+00 : f32
    %93 = vector.broadcast %cst_63 : f32 to vector<16x256xf32>
    %94 = arith.addf %93, %92 : vector<16x256xf32>
    %95 = arith.divf %93, %94 : vector<16x256xf32>
    %96 = vector.extract_strided_slice %76 {offsets = [32, 0], sizes = [16, 256], strides = [1, 1]} : vector<48x256xf32> to vector<16x256xf32>
    %c0_64 = arith.constant 0 : index
    %c0_65 = arith.constant 0 : index
    %c0_66 = arith.constant 0 : index
    %97 = vector.load %arg16[%c0_64, %c0_65, %c0_66] : memref<6x16x10xf32, #tpu.memory_space<vmem>>, vector<1x16x10xf32>
    %98 = vector.shape_cast %97 : vector<1x16x10xf32> to vector<16x10xf32>
    %99 = vector.extract_strided_slice %87 {offsets = [0, 0], sizes = [10, 256], strides = [1, 1]} : vector<16x256xf32> to vector<10x256xf32>
    %100 = arith.mulf %99, %48 : vector<10x256xf32>
    %cst_67 = arith.constant dense<0.000000e+00> : vector<16x256xf32>
    %101 = tpu.matmul %98, %100, %cst_67 {dimension_numbers = #tpu.dot_dimension_numbers<[1], [0], [0], [1], [0, 0, 1, 1], [], []>} : vector<16x10xf32>, vector<10x256xf32>, vector<16x256xf32> -> vector<16x256xf32>
    %102 = arith.addf %96, %101 : vector<16x256xf32>
    %103 = math.tanh %102 : vector<16x256xf32>
    %104 = vector.extract_strided_slice %95 {offsets = [0, 0], sizes = [10, 256], strides = [1, 1]} : vector<16x256xf32> to vector<10x256xf32>
    %cst_68 = arith.constant 1.000000e+00 : f32
    %105 = vector.broadcast %cst_68 : f32 to vector<10x256xf32>
    %106 = arith.subf %105, %104 : vector<10x256xf32>
    %107 = arith.mulf %106, %48 : vector<10x256xf32>
    %108 = vector.extract_strided_slice %95 {offsets = [0, 0], sizes = [10, 256], strides = [1, 1]} : vector<16x256xf32> to vector<10x256xf32>
    %109 = vector.extract_strided_slice %103 {offsets = [0, 0], sizes = [10, 256], strides = [1, 1]} : vector<16x256xf32> to vector<10x256xf32>
    %110 = arith.mulf %108, %109 : vector<10x256xf32>
    %111 = arith.addf %107, %110 : vector<10x256xf32>
    %c0_69 = arith.constant 0 : index
    %c0_70 = arith.constant 0 : index
    %c0_71 = arith.constant 0 : index
    %c0_72 = arith.constant 0 : index
    %112 = vector.load %arg18[%c0_69, %c0_70, %c0_71, %c0_72] : memref<1x6x10x256xf32, #tpu.memory_space<vmem>>, vector<1x1x10x256xf32>
    %113 = vector.shape_cast %112 : vector<1x1x10x256xf32> to vector<10x256xf32>
    %114 = vector.shape_cast %111 : vector<10x256xf32> to vector<1x1x10x256xf32>
    tpu.vector_store %arg18[%c0_69, %c0_70, %c0_71, %c0_72], %114 {strides = array<i32>} : memref<1x6x10x256xf32, #tpu.memory_space<vmem>>, vector<1x1x10x256xf32>,
    %115 = vector.extract_strided_slice %29 {offsets = [2, 0], sizes = [1, 256], strides = [1, 1]} : vector<5x256xf32> to vector<1x256xf32>
    %c0_73 = arith.constant 0 : index
    %c1_74 = arith.constant 1 : index
    %c0_75 = arith.constant 0 : index
    %c0_76 = arith.constant 0 : index
    %116 = vector.load %arg4[%c0_73, %c1_74, %c0_75, %c0_76] : memref<1x6x10x256xf32, #tpu.memory_space<vmem>>, vector<1x1x10x256xf32>
    %117 = vector.shape_cast %116 : vector<1x1x10x256xf32> to vector<10x256xf32>
    %c0_77 = arith.constant 0 : index
    %c0_78 = arith.constant 0 : index
    %c0_79 = arith.constant 0 : index
    %118 = vector.load %arg10[%c0_77, %c0_78, %c0_79] : memref<2x32x10xf32, #tpu.memory_space<vmem>>, vector<1x32x10xf32>
    %119 = vector.shape_cast %118 : vector<1x32x10xf32> to vector<32x10xf32>
    %cst_80 = arith.constant dense<0.000000e+00> : vector<32x256xf32>
    %120 = tpu.matmul %119, %117, %cst_80 {dimension_numbers = #tpu.dot_dimension_numbers<[1], [0], [0], [1], [0, 0, 1, 1], [], []>} : vector<32x10xf32>, vector<10x256xf32>, vector<32x256xf32> -> vector<32x256xf32>
    %121 = vector.broadcast %115 : vector<1x256xf32> to vector<32x256xf32>
    %122 = arith.mulf %42, %121 : vector<32x256xf32>
    %123 = arith.addf %122, %120 : vector<32x256xf32>
    %c0_81 = arith.constant 0 : index
    %c0_82 = arith.constant 0 : index
    %c0_83 = arith.constant 0 : index
    %124 = vector.load %arg11[%c0_81, %c0_82, %c0_83] : memref<2x32x1xf32, #tpu.memory_space<vmem>>, vector<1x32x1xf32>
    %125 = vector.shape_cast %124 : vector<1x32x1xf32> to vector<32x1xf32>
    %126 = vector.broadcast %125 : vector<32x1xf32> to vector<32x256xf32>
    %127 = arith.addf %123, %126 : vector<32x256xf32>
    %cst_84 = arith.constant 0.000000e+00 : f32
    %128 = vector.broadcast %cst_84 : f32 to vector<32x256xf32>
    %129 = arith.maximumf %127, %128 : vector<32x256xf32>
    %c0_85 = arith.constant 0 : index
    %c0_86 = arith.constant 0 : index
    %c0_87 = arith.constant 0 : index
    %130 = vector.load %arg12[%c0_85, %c0_86, %c0_87] : memref<2x16x32xf32, #tpu.memory_space<vmem>>, vector<1x16x32xf32>
    %131 = vector.shape_cast %130 : vector<1x16x32xf32> to vector<16x32xf32>
    %cst_88 = arith.constant dense<0.000000e+00> : vector<16x256xf32>
    %132 = tpu.matmul %131, %129, %cst_88 {dimension_numbers = #tpu.dot_dimension_numbers<[1], [0], [0], [1], [0, 0, 1, 1], [], []>} : vector<16x32xf32>, vector<32x256xf32>, vector<16x256xf32> -> vector<16x256xf32>
    %c0_89 = arith.constant 0 : index
    %c0_90 = arith.constant 0 : index
    %c0_91 = arith.constant 0 : index
    %133 = vector.load %arg13[%c0_89, %c0_90, %c0_91] : memref<2x16x1xf32, #tpu.memory_space<vmem>>, vector<1x16x1xf32>
    %134 = vector.shape_cast %133 : vector<1x16x1xf32> to vector<16x1xf32>
    %135 = vector.broadcast %134 : vector<16x1xf32> to vector<16x256xf32>
    %136 = arith.addf %132, %135 : vector<16x256xf32>
    %cst_92 = arith.constant 0.000000e+00 : f32
    %137 = vector.broadcast %cst_92 : f32 to vector<16x256xf32>
    %138 = arith.maximumf %136, %137 : vector<16x256xf32>
    %c1_93 = arith.constant 1 : index
    %c0_94 = arith.constant 0 : index
    %c0_95 = arith.constant 0 : index
    %139 = vector.load %arg14[%c1_93, %c0_94, %c0_95] : memref<6x48x16xf32, #tpu.memory_space<vmem>>, vector<1x48x16xf32>
    %140 = vector.shape_cast %139 : vector<1x48x16xf32> to vector<48x16xf32>
    %cst_96 = arith.constant dense<0.000000e+00> : vector<48x256xf32>
    %141 = tpu.matmul %140, %138, %cst_96 {dimension_numbers = #tpu.dot_dimension_numbers<[1], [0], [0], [1], [0, 0, 1, 1], [], []>} : vector<48x16xf32>, vector<16x256xf32>, vector<48x256xf32> -> vector<48x256xf32>
    %c1_97 = arith.constant 1 : index
    %c0_98 = arith.constant 0 : index
    %c0_99 = arith.constant 0 : index
    %142 = vector.load %arg17[%c1_97, %c0_98, %c0_99] : memref<6x48x1xf32, #tpu.memory_space<vmem>>, vector<1x48x1xf32>
    %143 = vector.shape_cast %142 : vector<1x48x1xf32> to vector<48x1xf32>
    %144 = vector.broadcast %143 : vector<48x1xf32> to vector<48x256xf32>
    %145 = arith.addf %141, %144 : vector<48x256xf32>
    %c1_100 = arith.constant 1 : index
    %c0_101 = arith.constant 0 : index
    %c0_102 = arith.constant 0 : index
    %146 = vector.load %arg15[%c1_100, %c0_101, %c0_102] : memref<6x32x10xf32, #tpu.memory_space<vmem>>, vector<1x32x10xf32>
    %147 = vector.shape_cast %146 : vector<1x32x10xf32> to vector<32x10xf32>
    %cst_103 = arith.constant dense<0.000000e+00> : vector<32x256xf32>
    %148 = tpu.matmul %147, %117, %cst_103 {dimension_numbers = #tpu.dot_dimension_numbers<[1], [0], [0], [1], [0, 0, 1, 1], [], []>} : vector<32x10xf32>, vector<10x256xf32>, vector<32x256xf32> -> vector<32x256xf32>
    %149 = vector.extract_strided_slice %145 {offsets = [0, 0], sizes = [16, 256], strides = [1, 1]} : vector<48x256xf32> to vector<16x256xf32>
    %150 = vector.extract_strided_slice %148 {offsets = [0, 0], sizes = [16, 256], strides = [1, 1]} : vector<32x256xf32> to vector<16x256xf32>
    %151 = arith.addf %149, %150 : vector<16x256xf32>
    %152 = arith.negf %151 : vector<16x256xf32>
    %153 = math.exp %152 : vector<16x256xf32>
    %cst_104 = arith.constant 1.000000e+00 : f32
    %154 = vector.broadcast %cst_104 : f32 to vector<16x256xf32>
    %155 = arith.addf %154, %153 : vector<16x256xf32>
    %156 = arith.divf %154, %155 : vector<16x256xf32>
    %157 = vector.extract_strided_slice %145 {offsets = [16, 0], sizes = [16, 256], strides = [1, 1]} : vector<48x256xf32> to vector<16x256xf32>
    %158 = vector.extract_strided_slice %148 {offsets = [16, 0], sizes = [16, 256], strides = [1, 1]} : vector<32x256xf32> to vector<16x256xf32>
    %159 = arith.addf %157, %158 : vector<16x256xf32>
    %160 = arith.negf %159 : vector<16x256xf32>
    %161 = math.exp %160 : vector<16x256xf32>
    %cst_105 = arith.constant 1.000000e+00 : f32
    %162 = vector.broadcast %cst_105 : f32 to vector<16x256xf32>
    %163 = arith.addf %162, %161 : vector<16x256xf32>
    %164 = arith.divf %162, %163 : vector<16x256xf32>
    %165 = vector.extract_strided_slice %145 {offsets = [32, 0], sizes = [16, 256], strides = [1, 1]} : vector<48x256xf32> to vector<16x256xf32>
    %c1_106 = arith.constant 1 : index
    %c0_107 = arith.constant 0 : index
    %c0_108 = arith.constant 0 : index
    %166 = vector.load %arg16[%c1_106, %c0_107, %c0_108] : memref<6x16x10xf32, #tpu.memory_space<vmem>>, vector<1x16x10xf32>
    %167 = vector.shape_cast %166 : vector<1x16x10xf32> to vector<16x10xf32>
    %168 = vector.extract_strided_slice %156 {offsets = [0, 0], sizes = [10, 256], strides = [1, 1]} : vector<16x256xf32> to vector<10x256xf32>
    %169 = arith.mulf %168, %117 : vector<10x256xf32>
    %cst_109 = arith.constant dense<0.000000e+00> : vector<16x256xf32>
    %170 = tpu.matmul %167, %169, %cst_109 {dimension_numbers = #tpu.dot_dimension_numbers<[1], [0], [0], [1], [0, 0, 1, 1], [], []>} : vector<16x10xf32>, vector<10x256xf32>, vector<16x256xf32> -> vector<16x256xf32>
    %171 = arith.addf %165, %170 : vector<16x256xf32>
    %172 = math.tanh %171 : vector<16x256xf32>
    %173 = vector.extract_strided_slice %164 {offsets = [0, 0], sizes = [10, 256], strides = [1, 1]} : vector<16x256xf32> to vector<10x256xf32>
    %cst_110 = arith.constant 1.000000e+00 : f32
    %174 = vector.broadcast %cst_110 : f32 to vector<10x256xf32>
    %175 = arith.subf %174, %173 : vector<10x256xf32>
    %176 = arith.mulf %175, %117 : vector<10x256xf32>
    %177 = vector.extract_strided_slice %164 {offsets = [0, 0], sizes = [10, 256], strides = [1, 1]} : vector<16x256xf32> to vector<10x256xf32>
    %178 = vector.extract_strided_slice %172 {offsets = [0, 0], sizes = [10, 256], strides = [1, 1]} : vector<16x256xf32> to vector<10x256xf32>
    %179 = arith.mulf %177, %178 : vector<10x256xf32>
    %180 = arith.addf %176, %179 : vector<10x256xf32>
    %c0_111 = arith.constant 0 : index
    %c1_112 = arith.constant 1 : index
    %c0_113 = arith.constant 0 : index
    %c0_114 = arith.constant 0 : index
    %181 = vector.load %arg18[%c0_111, %c1_112, %c0_113, %c0_114] : memref<1x6x10x256xf32, #tpu.memory_space<vmem>>, vector<1x1x10x256xf32>
    %182 = vector.shape_cast %181 : vector<1x1x10x256xf32> to vector<10x256xf32>
    %183 = vector.shape_cast %180 : vector<10x256xf32> to vector<1x1x10x256xf32>
    tpu.vector_store %arg18[%c0_111, %c1_112, %c0_113, %c0_114], %183 {strides = array<i32>} : memref<1x6x10x256xf32, #tpu.memory_space<vmem>>, vector<1x1x10x256xf32>,
    %184 = vector.extract_strided_slice %29 {offsets = [3, 0], sizes = [1, 256], strides = [1, 1]} : vector<5x256xf32> to vector<1x256xf32>
    %c0_115 = arith.constant 0 : index
    %c2 = arith.constant 2 : index
    %c0_116 = arith.constant 0 : index
    %c0_117 = arith.constant 0 : index
    %185 = vector.load %arg4[%c0_115, %c2, %c0_116, %c0_117] : memref<1x6x10x256xf32, #tpu.memory_space<vmem>>, vector<1x1x10x256xf32>
    %186 = vector.shape_cast %185 : vector<1x1x10x256xf32> to vector<10x256xf32>
    %c0_118 = arith.constant 0 : index
    %c0_119 = arith.constant 0 : index
    %c0_120 = arith.constant 0 : index
    %187 = vector.load %arg10[%c0_118, %c0_119, %c0_120] : memref<2x32x10xf32, #tpu.memory_space<vmem>>, vector<1x32x10xf32>
    %188 = vector.shape_cast %187 : vector<1x32x10xf32> to vector<32x10xf32>
    %cst_121 = arith.constant dense<0.000000e+00> : vector<32x256xf32>
    %189 = tpu.matmul %188, %186, %cst_121 {dimension_numbers = #tpu.dot_dimension_numbers<[1], [0], [0], [1], [0, 0, 1, 1], [], []>} : vector<32x10xf32>, vector<10x256xf32>, vector<32x256xf32> -> vector<32x256xf32>
    %190 = vector.broadcast %184 : vector<1x256xf32> to vector<32x256xf32>
    %191 = arith.mulf %42, %190 : vector<32x256xf32>
    %192 = arith.addf %191, %189 : vector<32x256xf32>
    %c0_122 = arith.constant 0 : index
    %c0_123 = arith.constant 0 : index
    %c0_124 = arith.constant 0 : index
    %193 = vector.load %arg11[%c0_122, %c0_123, %c0_124] : memref<2x32x1xf32, #tpu.memory_space<vmem>>, vector<1x32x1xf32>
    %194 = vector.shape_cast %193 : vector<1x32x1xf32> to vector<32x1xf32>
    %195 = vector.broadcast %194 : vector<32x1xf32> to vector<32x256xf32>
    %196 = arith.addf %192, %195 : vector<32x256xf32>
    %cst_125 = arith.constant 0.000000e+00 : f32
    %197 = vector.broadcast %cst_125 : f32 to vector<32x256xf32>
    %198 = arith.maximumf %196, %197 : vector<32x256xf32>
    %c0_126 = arith.constant 0 : index
    %c0_127 = arith.constant 0 : index
    %c0_128 = arith.constant 0 : index
    %199 = vector.load %arg12[%c0_126, %c0_127, %c0_128] : memref<2x16x32xf32, #tpu.memory_space<vmem>>, vector<1x16x32xf32>
    %200 = vector.shape_cast %199 : vector<1x16x32xf32> to vector<16x32xf32>
    %cst_129 = arith.constant dense<0.000000e+00> : vector<16x256xf32>
    %201 = tpu.matmul %200, %198, %cst_129 {dimension_numbers = #tpu.dot_dimension_numbers<[1], [0], [0], [1], [0, 0, 1, 1], [], []>} : vector<16x32xf32>, vector<32x256xf32>, vector<16x256xf32> -> vector<16x256xf32>
    %c0_130 = arith.constant 0 : index
    %c0_131 = arith.constant 0 : index
    %c0_132 = arith.constant 0 : index
    %202 = vector.load %arg13[%c0_130, %c0_131, %c0_132] : memref<2x16x1xf32, #tpu.memory_space<vmem>>, vector<1x16x1xf32>
    %203 = vector.shape_cast %202 : vector<1x16x1xf32> to vector<16x1xf32>
    %204 = vector.broadcast %203 : vector<16x1xf32> to vector<16x256xf32>
    %205 = arith.addf %201, %204 : vector<16x256xf32>
    %cst_133 = arith.constant 0.000000e+00 : f32
    %206 = vector.broadcast %cst_133 : f32 to vector<16x256xf32>
    %207 = arith.maximumf %205, %206 : vector<16x256xf32>
    %c2_134 = arith.constant 2 : index
    %c0_135 = arith.constant 0 : index
    %c0_136 = arith.constant 0 : index
    %208 = vector.load %arg14[%c2_134, %c0_135, %c0_136] : memref<6x48x16xf32, #tpu.memory_space<vmem>>, vector<1x48x16xf32>
    %209 = vector.shape_cast %208 : vector<1x48x16xf32> to vector<48x16xf32>
    %cst_137 = arith.constant dense<0.000000e+00> : vector<48x256xf32>
    %210 = tpu.matmul %209, %207, %cst_137 {dimension_numbers = #tpu.dot_dimension_numbers<[1], [0], [0], [1], [0, 0, 1, 1], [], []>} : vector<48x16xf32>, vector<16x256xf32>, vector<48x256xf32> -> vector<48x256xf32>
    %c2_138 = arith.constant 2 : index
    %c0_139 = arith.constant 0 : index
    %c0_140 = arith.constant 0 : index
    %211 = vector.load %arg17[%c2_138, %c0_139, %c0_140] : memref<6x48x1xf32, #tpu.memory_space<vmem>>, vector<1x48x1xf32>
    %212 = vector.shape_cast %211 : vector<1x48x1xf32> to vector<48x1xf32>
    %213 = vector.broadcast %212 : vector<48x1xf32> to vector<48x256xf32>
    %214 = arith.addf %210, %213 : vector<48x256xf32>
    %c2_141 = arith.constant 2 : index
    %c0_142 = arith.constant 0 : index
    %c0_143 = arith.constant 0 : index
    %215 = vector.load %arg15[%c2_141, %c0_142, %c0_143] : memref<6x32x10xf32, #tpu.memory_space<vmem>>, vector<1x32x10xf32>
    %216 = vector.shape_cast %215 : vector<1x32x10xf32> to vector<32x10xf32>
    %cst_144 = arith.constant dense<0.000000e+00> : vector<32x256xf32>
    %217 = tpu.matmul %216, %186, %cst_144 {dimension_numbers = #tpu.dot_dimension_numbers<[1], [0], [0], [1], [0, 0, 1, 1], [], []>} : vector<32x10xf32>, vector<10x256xf32>, vector<32x256xf32> -> vector<32x256xf32>
    %218 = vector.extract_strided_slice %214 {offsets = [0, 0], sizes = [16, 256], strides = [1, 1]} : vector<48x256xf32> to vector<16x256xf32>
    %219 = vector.extract_strided_slice %217 {offsets = [0, 0], sizes = [16, 256], strides = [1, 1]} : vector<32x256xf32> to vector<16x256xf32>
    %220 = arith.addf %218, %219 : vector<16x256xf32>
    %221 = arith.negf %220 : vector<16x256xf32>
    %222 = math.exp %221 : vector<16x256xf32>
    %cst_145 = arith.constant 1.000000e+00 : f32
    %223 = vector.broadcast %cst_145 : f32 to vector<16x256xf32>
    %224 = arith.addf %223, %222 : vector<16x256xf32>
    %225 = arith.divf %223, %224 : vector<16x256xf32>
    %226 = vector.extract_strided_slice %214 {offsets = [16, 0], sizes = [16, 256], strides = [1, 1]} : vector<48x256xf32> to vector<16x256xf32>
    %227 = vector.extract_strided_slice %217 {offsets = [16, 0], sizes = [16, 256], strides = [1, 1]} : vector<32x256xf32> to vector<16x256xf32>
    %228 = arith.addf %226, %227 : vector<16x256xf32>
    %229 = arith.negf %228 : vector<16x256xf32>
    %230 = math.exp %229 : vector<16x256xf32>
    %cst_146 = arith.constant 1.000000e+00 : f32
    %231 = vector.broadcast %cst_146 : f32 to vector<16x256xf32>
    %232 = arith.addf %231, %230 : vector<16x256xf32>
    %233 = arith.divf %231, %232 : vector<16x256xf32>
    %234 = vector.extract_strided_slice %214 {offsets = [32, 0], sizes = [16, 256], strides = [1, 1]} : vector<48x256xf32> to vector<16x256xf32>
    %c2_147 = arith.constant 2 : index
    %c0_148 = arith.constant 0 : index
    %c0_149 = arith.constant 0 : index
    %235 = vector.load %arg16[%c2_147, %c0_148, %c0_149] : memref<6x16x10xf32, #tpu.memory_space<vmem>>, vector<1x16x10xf32>
    %236 = vector.shape_cast %235 : vector<1x16x10xf32> to vector<16x10xf32>
    %237 = vector.extract_strided_slice %225 {offsets = [0, 0], sizes = [10, 256], strides = [1, 1]} : vector<16x256xf32> to vector<10x256xf32>
    %238 = arith.mulf %237, %186 : vector<10x256xf32>
    %cst_150 = arith.constant dense<0.000000e+00> : vector<16x256xf32>
    %239 = tpu.matmul %236, %238, %cst_150 {dimension_numbers = #tpu.dot_dimension_numbers<[1], [0], [0], [1], [0, 0, 1, 1], [], []>} : vector<16x10xf32>, vector<10x256xf32>, vector<16x256xf32> -> vector<16x256xf32>
    %240 = arith.addf %234, %239 : vector<16x256xf32>
    %241 = math.tanh %240 : vector<16x256xf32>
    %242 = vector.extract_strided_slice %233 {offsets = [0, 0], sizes = [10, 256], strides = [1, 1]} : vector<16x256xf32> to vector<10x256xf32>
    %cst_151 = arith.constant 1.000000e+00 : f32
    %243 = vector.broadcast %cst_151 : f32 to vector<10x256xf32>
    %244 = arith.subf %243, %242 : vector<10x256xf32>
    %245 = arith.mulf %244, %186 : vector<10x256xf32>
    %246 = vector.extract_strided_slice %233 {offsets = [0, 0], sizes = [10, 256], strides = [1, 1]} : vector<16x256xf32> to vector<10x256xf32>
    %247 = vector.extract_strided_slice %241 {offsets = [0, 0], sizes = [10, 256], strides = [1, 1]} : vector<16x256xf32> to vector<10x256xf32>
    %248 = arith.mulf %246, %247 : vector<10x256xf32>
    %249 = arith.addf %245, %248 : vector<10x256xf32>
    %c0_152 = arith.constant 0 : index
    %c2_153 = arith.constant 2 : index
    %c0_154 = arith.constant 0 : index
    %c0_155 = arith.constant 0 : index
    %250 = vector.load %arg18[%c0_152, %c2_153, %c0_154, %c0_155] : memref<1x6x10x256xf32, #tpu.memory_space<vmem>>, vector<1x1x10x256xf32>
    %251 = vector.shape_cast %250 : vector<1x1x10x256xf32> to vector<10x256xf32>
    %252 = vector.shape_cast %249 : vector<10x256xf32> to vector<1x1x10x256xf32>
    tpu.vector_store %arg18[%c0_152, %c2_153, %c0_154, %c0_155], %252 {strides = array<i32>} : memref<1x6x10x256xf32, #tpu.memory_space<vmem>>, vector<1x1x10x256xf32>,
    %253 = vector.extract_strided_slice %29 {offsets = [4, 0], sizes = [1, 256], strides = [1, 1]} : vector<5x256xf32> to vector<1x256xf32>
    %c0_156 = arith.constant 0 : index
    %c3 = arith.constant 3 : index
    %c0_157 = arith.constant 0 : index
    %c0_158 = arith.constant 0 : index
    %254 = vector.load %arg4[%c0_156, %c3, %c0_157, %c0_158] : memref<1x6x10x256xf32, #tpu.memory_space<vmem>>, vector<1x1x10x256xf32>
    %255 = vector.shape_cast %254 : vector<1x1x10x256xf32> to vector<10x256xf32>
    %c0_159 = arith.constant 0 : index
    %c0_160 = arith.constant 0 : index
    %c0_161 = arith.constant 0 : index
    %256 = vector.load %arg10[%c0_159, %c0_160, %c0_161] : memref<2x32x10xf32, #tpu.memory_space<vmem>>, vector<1x32x10xf32>
    %257 = vector.shape_cast %256 : vector<1x32x10xf32> to vector<32x10xf32>
    %cst_162 = arith.constant dense<0.000000e+00> : vector<32x256xf32>
    %258 = tpu.matmul %257, %255, %cst_162 {dimension_numbers = #tpu.dot_dimension_numbers<[1], [0], [0], [1], [0, 0, 1, 1], [], []>} : vector<32x10xf32>, vector<10x256xf32>, vector<32x256xf32> -> vector<32x256xf32>
    %259 = vector.broadcast %253 : vector<1x256xf32> to vector<32x256xf32>
    %260 = arith.mulf %42, %259 : vector<32x256xf32>
    %261 = arith.addf %260, %258 : vector<32x256xf32>
    %c0_163 = arith.constant 0 : index
    %c0_164 = arith.constant 0 : index
    %c0_165 = arith.constant 0 : index
    %262 = vector.load %arg11[%c0_163, %c0_164, %c0_165] : memref<2x32x1xf32, #tpu.memory_space<vmem>>, vector<1x32x1xf32>
    %263 = vector.shape_cast %262 : vector<1x32x1xf32> to vector<32x1xf32>
    %264 = vector.broadcast %263 : vector<32x1xf32> to vector<32x256xf32>
    %265 = arith.addf %261, %264 : vector<32x256xf32>
    %cst_166 = arith.constant 0.000000e+00 : f32
    %266 = vector.broadcast %cst_166 : f32 to vector<32x256xf32>
    %267 = arith.maximumf %265, %266 : vector<32x256xf32>
    %c0_167 = arith.constant 0 : index
    %c0_168 = arith.constant 0 : index
    %c0_169 = arith.constant 0 : index
    %268 = vector.load %arg12[%c0_167, %c0_168, %c0_169] : memref<2x16x32xf32, #tpu.memory_space<vmem>>, vector<1x16x32xf32>
    %269 = vector.shape_cast %268 : vector<1x16x32xf32> to vector<16x32xf32>
    %cst_170 = arith.constant dense<0.000000e+00> : vector<16x256xf32>
    %270 = tpu.matmul %269, %267, %cst_170 {dimension_numbers = #tpu.dot_dimension_numbers<[1], [0], [0], [1], [0, 0, 1, 1], [], []>} : vector<16x32xf32>, vector<32x256xf32>, vector<16x256xf32> -> vector<16x256xf32>
    %c0_171 = arith.constant 0 : index
    %c0_172 = arith.constant 0 : index
    %c0_173 = arith.constant 0 : index
    %271 = vector.load %arg13[%c0_171, %c0_172, %c0_173] : memref<2x16x1xf32, #tpu.memory_space<vmem>>, vector<1x16x1xf32>
    %272 = vector.shape_cast %271 : vector<1x16x1xf32> to vector<16x1xf32>
    %273 = vector.broadcast %272 : vector<16x1xf32> to vector<16x256xf32>
    %274 = arith.addf %270, %273 : vector<16x256xf32>
    %cst_174 = arith.constant 0.000000e+00 : f32
    %275 = vector.broadcast %cst_174 : f32 to vector<16x256xf32>
    %276 = arith.maximumf %274, %275 : vector<16x256xf32>
    %c3_175 = arith.constant 3 : index
    %c0_176 = arith.constant 0 : index
    %c0_177 = arith.constant 0 : index
    %277 = vector.load %arg14[%c3_175, %c0_176, %c0_177] : memref<6x48x16xf32, #tpu.memory_space<vmem>>, vector<1x48x16xf32>
    %278 = vector.shape_cast %277 : vector<1x48x16xf32> to vector<48x16xf32>
    %cst_178 = arith.constant dense<0.000000e+00> : vector<48x256xf32>
    %279 = tpu.matmul %278, %276, %cst_178 {dimension_numbers = #tpu.dot_dimension_numbers<[1], [0], [0], [1], [0, 0, 1, 1], [], []>} : vector<48x16xf32>, vector<16x256xf32>, vector<48x256xf32> -> vector<48x256xf32>
    %c3_179 = arith.constant 3 : index
    %c0_180 = arith.constant 0 : index
    %c0_181 = arith.constant 0 : index
    %280 = vector.load %arg17[%c3_179, %c0_180, %c0_181] : memref<6x48x1xf32, #tpu.memory_space<vmem>>, vector<1x48x1xf32>
    %281 = vector.shape_cast %280 : vector<1x48x1xf32> to vector<48x1xf32>
    %282 = vector.broadcast %281 : vector<48x1xf32> to vector<48x256xf32>
    %283 = arith.addf %279, %282 : vector<48x256xf32>
    %c3_182 = arith.constant 3 : index
    %c0_183 = arith.constant 0 : index
    %c0_184 = arith.constant 0 : index
    %284 = vector.load %arg15[%c3_182, %c0_183, %c0_184] : memref<6x32x10xf32, #tpu.memory_space<vmem>>, vector<1x32x10xf32>
    %285 = vector.shape_cast %284 : vector<1x32x10xf32> to vector<32x10xf32>
    %cst_185 = arith.constant dense<0.000000e+00> : vector<32x256xf32>
    %286 = tpu.matmul %285, %255, %cst_185 {dimension_numbers = #tpu.dot_dimension_numbers<[1], [0], [0], [1], [0, 0, 1, 1], [], []>} : vector<32x10xf32>, vector<10x256xf32>, vector<32x256xf32> -> vector<32x256xf32>
    %287 = vector.extract_strided_slice %283 {offsets = [0, 0], sizes = [16, 256], strides = [1, 1]} : vector<48x256xf32> to vector<16x256xf32>
    %288 = vector.extract_strided_slice %286 {offsets = [0, 0], sizes = [16, 256], strides = [1, 1]} : vector<32x256xf32> to vector<16x256xf32>
    %289 = arith.addf %287, %288 : vector<16x256xf32>
    %290 = arith.negf %289 : vector<16x256xf32>
    %291 = math.exp %290 : vector<16x256xf32>
    %cst_186 = arith.constant 1.000000e+00 : f32
    %292 = vector.broadcast %cst_186 : f32 to vector<16x256xf32>
    %293 = arith.addf %292, %291 : vector<16x256xf32>
    %294 = arith.divf %292, %293 : vector<16x256xf32>
    %295 = vector.extract_strided_slice %283 {offsets = [16, 0], sizes = [16, 256], strides = [1, 1]} : vector<48x256xf32> to vector<16x256xf32>
    %296 = vector.extract_strided_slice %286 {offsets = [16, 0], sizes = [16, 256], strides = [1, 1]} : vector<32x256xf32> to vector<16x256xf32>
    %297 = arith.addf %295, %296 : vector<16x256xf32>
    %298 = arith.negf %297 : vector<16x256xf32>
    %299 = math.exp %298 : vector<16x256xf32>
    %cst_187 = arith.constant 1.000000e+00 : f32
    %300 = vector.broadcast %cst_187 : f32 to vector<16x256xf32>
    %301 = arith.addf %300, %299 : vector<16x256xf32>
    %302 = arith.divf %300, %301 : vector<16x256xf32>
    %303 = vector.extract_strided_slice %283 {offsets = [32, 0], sizes = [16, 256], strides = [1, 1]} : vector<48x256xf32> to vector<16x256xf32>
    %c3_188 = arith.constant 3 : index
    %c0_189 = arith.constant 0 : index
    %c0_190 = arith.constant 0 : index
    %304 = vector.load %arg16[%c3_188, %c0_189, %c0_190] : memref<6x16x10xf32, #tpu.memory_space<vmem>>, vector<1x16x10xf32>
    %305 = vector.shape_cast %304 : vector<1x16x10xf32> to vector<16x10xf32>
    %306 = vector.extract_strided_slice %294 {offsets = [0, 0], sizes = [10, 256], strides = [1, 1]} : vector<16x256xf32> to vector<10x256xf32>
    %307 = arith.mulf %306, %255 : vector<10x256xf32>
    %cst_191 = arith.constant dense<0.000000e+00> : vector<16x256xf32>
    %308 = tpu.matmul %305, %307, %cst_191 {dimension_numbers = #tpu.dot_dimension_numbers<[1], [0], [0], [1], [0, 0, 1, 1], [], []>} : vector<16x10xf32>, vector<10x256xf32>, vector<16x256xf32> -> vector<16x256xf32>
    %309 = arith.addf %303, %308 : vector<16x256xf32>
    %310 = math.tanh %309 : vector<16x256xf32>
    %311 = vector.extract_strided_slice %302 {offsets = [0, 0], sizes = [10, 256], strides = [1, 1]} : vector<16x256xf32> to vector<10x256xf32>
    %cst_192 = arith.constant 1.000000e+00 : f32
    %312 = vector.broadcast %cst_192 : f32 to vector<10x256xf32>
    %313 = arith.subf %312, %311 : vector<10x256xf32>
    %314 = arith.mulf %313, %255 : vector<10x256xf32>
    %315 = vector.extract_strided_slice %302 {offsets = [0, 0], sizes = [10, 256], strides = [1, 1]} : vector<16x256xf32> to vector<10x256xf32>
    %316 = vector.extract_strided_slice %310 {offsets = [0, 0], sizes = [10, 256], strides = [1, 1]} : vector<16x256xf32> to vector<10x256xf32>
    %317 = arith.mulf %315, %316 : vector<10x256xf32>
    %318 = arith.addf %314, %317 : vector<10x256xf32>
    %c0_193 = arith.constant 0 : index
    %c3_194 = arith.constant 3 : index
    %c0_195 = arith.constant 0 : index
    %c0_196 = arith.constant 0 : index
    %319 = vector.load %arg18[%c0_193, %c3_194, %c0_195, %c0_196] : memref<1x6x10x256xf32, #tpu.memory_space<vmem>>, vector<1x1x10x256xf32>
    %320 = vector.shape_cast %319 : vector<1x1x10x256xf32> to vector<10x256xf32>
    %321 = vector.shape_cast %318 : vector<10x256xf32> to vector<1x1x10x256xf32>
    tpu.vector_store %arg18[%c0_193, %c3_194, %c0_195, %c0_196], %321 {strides = array<i32>} : memref<1x6x10x256xf32, #tpu.memory_space<vmem>>, vector<1x1x10x256xf32>,
    %322 = vector.extract_strided_slice %39 {offsets = [1, 0], sizes = [1, 256], strides = [1, 1]} : vector<3x256xf32> to vector<1x256xf32>
    %c0_197 = arith.constant 0 : index
    %c4 = arith.constant 4 : index
    %c0_198 = arith.constant 0 : index
    %c0_199 = arith.constant 0 : index
    %323 = vector.load %arg4[%c0_197, %c4, %c0_198, %c0_199] : memref<1x6x10x256xf32, #tpu.memory_space<vmem>>, vector<1x1x10x256xf32>
    %324 = vector.shape_cast %323 : vector<1x1x10x256xf32> to vector<10x256xf32>
    %c1_200 = arith.constant 1 : index
    %c0_201 = arith.constant 0 : index
    %c0_202 = arith.constant 0 : index
    %325 = vector.load %arg10[%c1_200, %c0_201, %c0_202] : memref<2x32x10xf32, #tpu.memory_space<vmem>>, vector<1x32x10xf32>
    %326 = vector.shape_cast %325 : vector<1x32x10xf32> to vector<32x10xf32>
    %cst_203 = arith.constant dense<0.000000e+00> : vector<32x256xf32>
    %327 = tpu.matmul %326, %324, %cst_203 {dimension_numbers = #tpu.dot_dimension_numbers<[1], [0], [0], [1], [0, 0, 1, 1], [], []>} : vector<32x10xf32>, vector<10x256xf32>, vector<32x256xf32> -> vector<32x256xf32>
    %328 = vector.broadcast %322 : vector<1x256xf32> to vector<32x256xf32>
    %329 = arith.mulf %45, %328 : vector<32x256xf32>
    %330 = arith.addf %329, %327 : vector<32x256xf32>
    %c1_204 = arith.constant 1 : index
    %c0_205 = arith.constant 0 : index
    %c0_206 = arith.constant 0 : index
    %331 = vector.load %arg11[%c1_204, %c0_205, %c0_206] : memref<2x32x1xf32, #tpu.memory_space<vmem>>, vector<1x32x1xf32>
    %332 = vector.shape_cast %331 : vector<1x32x1xf32> to vector<32x1xf32>
    %333 = vector.broadcast %332 : vector<32x1xf32> to vector<32x256xf32>
    %334 = arith.addf %330, %333 : vector<32x256xf32>
    %cst_207 = arith.constant 0.000000e+00 : f32
    %335 = vector.broadcast %cst_207 : f32 to vector<32x256xf32>
    %336 = arith.maximumf %334, %335 : vector<32x256xf32>
    %c1_208 = arith.constant 1 : index
    %c0_209 = arith.constant 0 : index
    %c0_210 = arith.constant 0 : index
    %337 = vector.load %arg12[%c1_208, %c0_209, %c0_210] : memref<2x16x32xf32, #tpu.memory_space<vmem>>, vector<1x16x32xf32>
    %338 = vector.shape_cast %337 : vector<1x16x32xf32> to vector<16x32xf32>
    %cst_211 = arith.constant dense<0.000000e+00> : vector<16x256xf32>
    %339 = tpu.matmul %338, %336, %cst_211 {dimension_numbers = #tpu.dot_dimension_numbers<[1], [0], [0], [1], [0, 0, 1, 1], [], []>} : vector<16x32xf32>, vector<32x256xf32>, vector<16x256xf32> -> vector<16x256xf32>
    %c1_212 = arith.constant 1 : index
    %c0_213 = arith.constant 0 : index
    %c0_214 = arith.constant 0 : index
    %340 = vector.load %arg13[%c1_212, %c0_213, %c0_214] : memref<2x16x1xf32, #tpu.memory_space<vmem>>, vector<1x16x1xf32>
    %341 = vector.shape_cast %340 : vector<1x16x1xf32> to vector<16x1xf32>
    %342 = vector.broadcast %341 : vector<16x1xf32> to vector<16x256xf32>
    %343 = arith.addf %339, %342 : vector<16x256xf32>
    %cst_215 = arith.constant 0.000000e+00 : f32
    %344 = vector.broadcast %cst_215 : f32 to vector<16x256xf32>
    %345 = arith.maximumf %343, %344 : vector<16x256xf32>
    %c4_216 = arith.constant 4 : index
    %c0_217 = arith.constant 0 : index
    %c0_218 = arith.constant 0 : index
    %346 = vector.load %arg14[%c4_216, %c0_217, %c0_218] : memref<6x48x16xf32, #tpu.memory_space<vmem>>, vector<1x48x16xf32>
    %347 = vector.shape_cast %346 : vector<1x48x16xf32> to vector<48x16xf32>
    %cst_219 = arith.constant dense<0.000000e+00> : vector<48x256xf32>
    %348 = tpu.matmul %347, %345, %cst_219 {dimension_numbers = #tpu.dot_dimension_numbers<[1], [0], [0], [1], [0, 0, 1, 1], [], []>} : vector<48x16xf32>, vector<16x256xf32>, vector<48x256xf32> -> vector<48x256xf32>
    %c4_220 = arith.constant 4 : index
    %c0_221 = arith.constant 0 : index
    %c0_222 = arith.constant 0 : index
    %349 = vector.load %arg17[%c4_220, %c0_221, %c0_222] : memref<6x48x1xf32, #tpu.memory_space<vmem>>, vector<1x48x1xf32>
    %350 = vector.shape_cast %349 : vector<1x48x1xf32> to vector<48x1xf32>
    %351 = vector.broadcast %350 : vector<48x1xf32> to vector<48x256xf32>
    %352 = arith.addf %348, %351 : vector<48x256xf32>
    %c4_223 = arith.constant 4 : index
    %c0_224 = arith.constant 0 : index
    %c0_225 = arith.constant 0 : index
    %353 = vector.load %arg15[%c4_223, %c0_224, %c0_225] : memref<6x32x10xf32, #tpu.memory_space<vmem>>, vector<1x32x10xf32>
    %354 = vector.shape_cast %353 : vector<1x32x10xf32> to vector<32x10xf32>
    %cst_226 = arith.constant dense<0.000000e+00> : vector<32x256xf32>
    %355 = tpu.matmul %354, %324, %cst_226 {dimension_numbers = #tpu.dot_dimension_numbers<[1], [0], [0], [1], [0, 0, 1, 1], [], []>} : vector<32x10xf32>, vector<10x256xf32>, vector<32x256xf32> -> vector<32x256xf32>
    %356 = vector.extract_strided_slice %352 {offsets = [0, 0], sizes = [16, 256], strides = [1, 1]} : vector<48x256xf32> to vector<16x256xf32>
    %357 = vector.extract_strided_slice %355 {offsets = [0, 0], sizes = [16, 256], strides = [1, 1]} : vector<32x256xf32> to vector<16x256xf32>
    %358 = arith.addf %356, %357 : vector<16x256xf32>
    %359 = arith.negf %358 : vector<16x256xf32>
    %360 = math.exp %359 : vector<16x256xf32>
    %cst_227 = arith.constant 1.000000e+00 : f32
    %361 = vector.broadcast %cst_227 : f32 to vector<16x256xf32>
    %362 = arith.addf %361, %360 : vector<16x256xf32>
    %363 = arith.divf %361, %362 : vector<16x256xf32>
    %364 = vector.extract_strided_slice %352 {offsets = [16, 0], sizes = [16, 256], strides = [1, 1]} : vector<48x256xf32> to vector<16x256xf32>
    %365 = vector.extract_strided_slice %355 {offsets = [16, 0], sizes = [16, 256], strides = [1, 1]} : vector<32x256xf32> to vector<16x256xf32>
    %366 = arith.addf %364, %365 : vector<16x256xf32>
    %367 = arith.negf %366 : vector<16x256xf32>
    %368 = math.exp %367 : vector<16x256xf32>
    %cst_228 = arith.constant 1.000000e+00 : f32
    %369 = vector.broadcast %cst_228 : f32 to vector<16x256xf32>
    %370 = arith.addf %369, %368 : vector<16x256xf32>
    %371 = arith.divf %369, %370 : vector<16x256xf32>
    %372 = vector.extract_strided_slice %352 {offsets = [32, 0], sizes = [16, 256], strides = [1, 1]} : vector<48x256xf32> to vector<16x256xf32>
    %c4_229 = arith.constant 4 : index
    %c0_230 = arith.constant 0 : index
    %c0_231 = arith.constant 0 : index
    %373 = vector.load %arg16[%c4_229, %c0_230, %c0_231] : memref<6x16x10xf32, #tpu.memory_space<vmem>>, vector<1x16x10xf32>
    %374 = vector.shape_cast %373 : vector<1x16x10xf32> to vector<16x10xf32>
    %375 = vector.extract_strided_slice %363 {offsets = [0, 0], sizes = [10, 256], strides = [1, 1]} : vector<16x256xf32> to vector<10x256xf32>
    %376 = arith.mulf %375, %324 : vector<10x256xf32>
    %cst_232 = arith.constant dense<0.000000e+00> : vector<16x256xf32>
    %377 = tpu.matmul %374, %376, %cst_232 {dimension_numbers = #tpu.dot_dimension_numbers<[1], [0], [0], [1], [0, 0, 1, 1], [], []>} : vector<16x10xf32>, vector<10x256xf32>, vector<16x256xf32> -> vector<16x256xf32>
    %378 = arith.addf %372, %377 : vector<16x256xf32>
    %379 = math.tanh %378 : vector<16x256xf32>
    %380 = vector.extract_strided_slice %371 {offsets = [0, 0], sizes = [10, 256], strides = [1, 1]} : vector<16x256xf32> to vector<10x256xf32>
    %cst_233 = arith.constant 1.000000e+00 : f32
    %381 = vector.broadcast %cst_233 : f32 to vector<10x256xf32>
    %382 = arith.subf %381, %380 : vector<10x256xf32>
    %383 = arith.mulf %382, %324 : vector<10x256xf32>
    %384 = vector.extract_strided_slice %371 {offsets = [0, 0], sizes = [10, 256], strides = [1, 1]} : vector<16x256xf32> to vector<10x256xf32>
    %385 = vector.extract_strided_slice %379 {offsets = [0, 0], sizes = [10, 256], strides = [1, 1]} : vector<16x256xf32> to vector<10x256xf32>
    %386 = arith.mulf %384, %385 : vector<10x256xf32>
    %387 = arith.addf %383, %386 : vector<10x256xf32>
    %c0_234 = arith.constant 0 : index
    %c4_235 = arith.constant 4 : index
    %c0_236 = arith.constant 0 : index
    %c0_237 = arith.constant 0 : index
    %388 = vector.load %arg18[%c0_234, %c4_235, %c0_236, %c0_237] : memref<1x6x10x256xf32, #tpu.memory_space<vmem>>, vector<1x1x10x256xf32>
    %389 = vector.shape_cast %388 : vector<1x1x10x256xf32> to vector<10x256xf32>
    %390 = vector.shape_cast %387 : vector<10x256xf32> to vector<1x1x10x256xf32>
    tpu.vector_store %arg18[%c0_234, %c4_235, %c0_236, %c0_237], %390 {strides = array<i32>} : memref<1x6x10x256xf32, #tpu.memory_space<vmem>>, vector<1x1x10x256xf32>,
    %391 = vector.extract_strided_slice %39 {offsets = [2, 0], sizes = [1, 256], strides = [1, 1]} : vector<3x256xf32> to vector<1x256xf32>
    %c0_238 = arith.constant 0 : index
    %c5 = arith.constant 5 : index
    %c0_239 = arith.constant 0 : index
    %c0_240 = arith.constant 0 : index
    %392 = vector.load %arg4[%c0_238, %c5, %c0_239, %c0_240] : memref<1x6x10x256xf32, #tpu.memory_space<vmem>>, vector<1x1x10x256xf32>
    %393 = vector.shape_cast %392 : vector<1x1x10x256xf32> to vector<10x256xf32>
    %c1_241 = arith.constant 1 : index
    %c0_242 = arith.constant 0 : index
    %c0_243 = arith.constant 0 : index
    %394 = vector.load %arg10[%c1_241, %c0_242, %c0_243] : memref<2x32x10xf32, #tpu.memory_space<vmem>>, vector<1x32x10xf32>
    %395 = vector.shape_cast %394 : vector<1x32x10xf32> to vector<32x10xf32>
    %cst_244 = arith.constant dense<0.000000e+00> : vector<32x256xf32>
    %396 = tpu.matmul %395, %393, %cst_244 {dimension_numbers = #tpu.dot_dimension_numbers<[1], [0], [0], [1], [0, 0, 1, 1], [], []>} : vector<32x10xf32>, vector<10x256xf32>, vector<32x256xf32> -> vector<32x256xf32>
    %397 = vector.broadcast %391 : vector<1x256xf32> to vector<32x256xf32>
    %398 = arith.mulf %45, %397 : vector<32x256xf32>
    %399 = arith.addf %398, %396 : vector<32x256xf32>
    %c1_245 = arith.constant 1 : index
    %c0_246 = arith.constant 0 : index
    %c0_247 = arith.constant 0 : index
    %400 = vector.load %arg11[%c1_245, %c0_246, %c0_247] : memref<2x32x1xf32, #tpu.memory_space<vmem>>, vector<1x32x1xf32>
    %401 = vector.shape_cast %400 : vector<1x32x1xf32> to vector<32x1xf32>
    %402 = vector.broadcast %401 : vector<32x1xf32> to vector<32x256xf32>
    %403 = arith.addf %399, %402 : vector<32x256xf32>
    %cst_248 = arith.constant 0.000000e+00 : f32
    %404 = vector.broadcast %cst_248 : f32 to vector<32x256xf32>
    %405 = arith.maximumf %403, %404 : vector<32x256xf32>
    %c1_249 = arith.constant 1 : index
    %c0_250 = arith.constant 0 : index
    %c0_251 = arith.constant 0 : index
    %406 = vector.load %arg12[%c1_249, %c0_250, %c0_251] : memref<2x16x32xf32, #tpu.memory_space<vmem>>, vector<1x16x32xf32>
    %407 = vector.shape_cast %406 : vector<1x16x32xf32> to vector<16x32xf32>
    %cst_252 = arith.constant dense<0.000000e+00> : vector<16x256xf32>
    %408 = tpu.matmul %407, %405, %cst_252 {dimension_numbers = #tpu.dot_dimension_numbers<[1], [0], [0], [1], [0, 0, 1, 1], [], []>} : vector<16x32xf32>, vector<32x256xf32>, vector<16x256xf32> -> vector<16x256xf32>
    %c1_253 = arith.constant 1 : index
    %c0_254 = arith.constant 0 : index
    %c0_255 = arith.constant 0 : index
    %409 = vector.load %arg13[%c1_253, %c0_254, %c0_255] : memref<2x16x1xf32, #tpu.memory_space<vmem>>, vector<1x16x1xf32>
    %410 = vector.shape_cast %409 : vector<1x16x1xf32> to vector<16x1xf32>
    %411 = vector.broadcast %410 : vector<16x1xf32> to vector<16x256xf32>
    %412 = arith.addf %408, %411 : vector<16x256xf32>
    %cst_256 = arith.constant 0.000000e+00 : f32
    %413 = vector.broadcast %cst_256 : f32 to vector<16x256xf32>
    %414 = arith.maximumf %412, %413 : vector<16x256xf32>
    %c5_257 = arith.constant 5 : index
    %c0_258 = arith.constant 0 : index
    %c0_259 = arith.constant 0 : index
    %415 = vector.load %arg14[%c5_257, %c0_258, %c0_259] : memref<6x48x16xf32, #tpu.memory_space<vmem>>, vector<1x48x16xf32>
    %416 = vector.shape_cast %415 : vector<1x48x16xf32> to vector<48x16xf32>
    %cst_260 = arith.constant dense<0.000000e+00> : vector<48x256xf32>
    %417 = tpu.matmul %416, %414, %cst_260 {dimension_numbers = #tpu.dot_dimension_numbers<[1], [0], [0], [1], [0, 0, 1, 1], [], []>} : vector<48x16xf32>, vector<16x256xf32>, vector<48x256xf32> -> vector<48x256xf32>
    %c5_261 = arith.constant 5 : index
    %c0_262 = arith.constant 0 : index
    %c0_263 = arith.constant 0 : index
    %418 = vector.load %arg17[%c5_261, %c0_262, %c0_263] : memref<6x48x1xf32, #tpu.memory_space<vmem>>, vector<1x48x1xf32>
    %419 = vector.shape_cast %418 : vector<1x48x1xf32> to vector<48x1xf32>
    %420 = vector.broadcast %419 : vector<48x1xf32> to vector<48x256xf32>
    %421 = arith.addf %417, %420 : vector<48x256xf32>
    %c5_264 = arith.constant 5 : index
    %c0_265 = arith.constant 0 : index
    %c0_266 = arith.constant 0 : index
    %422 = vector.load %arg15[%c5_264, %c0_265, %c0_266] : memref<6x32x10xf32, #tpu.memory_space<vmem>>, vector<1x32x10xf32>
    %423 = vector.shape_cast %422 : vector<1x32x10xf32> to vector<32x10xf32>
    %cst_267 = arith.constant dense<0.000000e+00> : vector<32x256xf32>
    %424 = tpu.matmul %423, %393, %cst_267 {dimension_numbers = #tpu.dot_dimension_numbers<[1], [0], [0], [1], [0, 0, 1, 1], [], []>} : vector<32x10xf32>, vector<10x256xf32>, vector<32x256xf32> -> vector<32x256xf32>
    %425 = vector.extract_strided_slice %421 {offsets = [0, 0], sizes = [16, 256], strides = [1, 1]} : vector<48x256xf32> to vector<16x256xf32>
    %426 = vector.extract_strided_slice %424 {offsets = [0, 0], sizes = [16, 256], strides = [1, 1]} : vector<32x256xf32> to vector<16x256xf32>
    %427 = arith.addf %425, %426 : vector<16x256xf32>
    %428 = arith.negf %427 : vector<16x256xf32>
    %429 = math.exp %428 : vector<16x256xf32>
    %cst_268 = arith.constant 1.000000e+00 : f32
    %430 = vector.broadcast %cst_268 : f32 to vector<16x256xf32>
    %431 = arith.addf %430, %429 : vector<16x256xf32>
    %432 = arith.divf %430, %431 : vector<16x256xf32>
    %433 = vector.extract_strided_slice %421 {offsets = [16, 0], sizes = [16, 256], strides = [1, 1]} : vector<48x256xf32> to vector<16x256xf32>
    %434 = vector.extract_strided_slice %424 {offsets = [16, 0], sizes = [16, 256], strides = [1, 1]} : vector<32x256xf32> to vector<16x256xf32>
    %435 = arith.addf %433, %434 : vector<16x256xf32>
    %436 = arith.negf %435 : vector<16x256xf32>
    %437 = math.exp %436 : vector<16x256xf32>
    %cst_269 = arith.constant 1.000000e+00 : f32
    %438 = vector.broadcast %cst_269 : f32 to vector<16x256xf32>
    %439 = arith.addf %438, %437 : vector<16x256xf32>
    %440 = arith.divf %438, %439 : vector<16x256xf32>
    %441 = vector.extract_strided_slice %421 {offsets = [32, 0], sizes = [16, 256], strides = [1, 1]} : vector<48x256xf32> to vector<16x256xf32>
    %c5_270 = arith.constant 5 : index
    %c0_271 = arith.constant 0 : index
    %c0_272 = arith.constant 0 : index
    %442 = vector.load %arg16[%c5_270, %c0_271, %c0_272] : memref<6x16x10xf32, #tpu.memory_space<vmem>>, vector<1x16x10xf32>
    %443 = vector.shape_cast %442 : vector<1x16x10xf32> to vector<16x10xf32>
    %444 = vector.extract_strided_slice %432 {offsets = [0, 0], sizes = [10, 256], strides = [1, 1]} : vector<16x256xf32> to vector<10x256xf32>
    %445 = arith.mulf %444, %393 : vector<10x256xf32>
    %cst_273 = arith.constant dense<0.000000e+00> : vector<16x256xf32>
    %446 = tpu.matmul %443, %445, %cst_273 {dimension_numbers = #tpu.dot_dimension_numbers<[1], [0], [0], [1], [0, 0, 1, 1], [], []>} : vector<16x10xf32>, vector<10x256xf32>, vector<16x256xf32> -> vector<16x256xf32>
    %447 = arith.addf %441, %446 : vector<16x256xf32>
    %448 = math.tanh %447 : vector<16x256xf32>
    %449 = vector.extract_strided_slice %440 {offsets = [0, 0], sizes = [10, 256], strides = [1, 1]} : vector<16x256xf32> to vector<10x256xf32>
    %cst_274 = arith.constant 1.000000e+00 : f32
    %450 = vector.broadcast %cst_274 : f32 to vector<10x256xf32>
    %451 = arith.subf %450, %449 : vector<10x256xf32>
    %452 = arith.mulf %451, %393 : vector<10x256xf32>
    %453 = vector.extract_strided_slice %440 {offsets = [0, 0], sizes = [10, 256], strides = [1, 1]} : vector<16x256xf32> to vector<10x256xf32>
    %454 = vector.extract_strided_slice %448 {offsets = [0, 0], sizes = [10, 256], strides = [1, 1]} : vector<16x256xf32> to vector<10x256xf32>
    %455 = arith.mulf %453, %454 : vector<10x256xf32>
    %456 = arith.addf %452, %455 : vector<10x256xf32>
    %c0_275 = arith.constant 0 : index
    %c5_276 = arith.constant 5 : index
    %c0_277 = arith.constant 0 : index
    %c0_278 = arith.constant 0 : index
    %457 = vector.load %arg18[%c0_275, %c5_276, %c0_277, %c0_278] : memref<1x6x10x256xf32, #tpu.memory_space<vmem>>, vector<1x1x10x256xf32>
    %458 = vector.shape_cast %457 : vector<1x1x10x256xf32> to vector<10x256xf32>
    %459 = vector.shape_cast %456 : vector<10x256xf32> to vector<1x1x10x256xf32>
    tpu.vector_store %arg18[%c0_275, %c5_276, %c0_277, %c0_278], %459 {strides = array<i32>} : memref<1x6x10x256xf32, #tpu.memory_space<vmem>>, vector<1x1x10x256xf32>,
    return
  }
  func.func @transform_0(%arg0: i32, %arg1: i32) -> (i32, i32, i32) {
    %c0_i32 = arith.constant 0 : i32
    %c0_i32_0 = arith.constant 0 : i32
    return %arg0, %c0_i32, %arg1 : i32, i32, i32
  }
  func.func @transform_1(%arg0: i32, %arg1: i32) -> (i32, i32, i32) {
    %c0_i32 = arith.constant 0 : i32
    %c0_i32_0 = arith.constant 0 : i32
    return %arg0, %c0_i32, %arg1 : i32, i32, i32
  }
  func.func @transform_2(%arg0: i32, %arg1: i32) -> (i32, i32, i32, i32) {
    %c0_i32 = arith.constant 0 : i32
    %c0_i32_0 = arith.constant 0 : i32
    %c0_i32_1 = arith.constant 0 : i32
    return %arg0, %c0_i32, %c0_i32_0, %arg1 : i32, i32, i32, i32
  }
  func.func @transform_3(%arg0: i32, %arg1: i32) -> (i32, i32) {
    %c0_i32 = arith.constant 0 : i32
    %c0_i32_0 = arith.constant 0 : i32
    %c0_i32_1 = arith.constant 0 : i32
    return %c0_i32, %c0_i32_0 : i32, i32
  }
  func.func @transform_4(%arg0: i32, %arg1: i32) -> (i32, i32) {
    %c0_i32 = arith.constant 0 : i32
    %c0_i32_0 = arith.constant 0 : i32
    %c0_i32_1 = arith.constant 0 : i32
    return %c0_i32, %c0_i32_0 : i32, i32
  }
  func.func @transform_5(%arg0: i32, %arg1: i32) -> (i32, i32) {
    %c0_i32 = arith.constant 0 : i32
    %c0_i32_0 = arith.constant 0 : i32
    %c0_i32_1 = arith.constant 0 : i32
    return %c0_i32, %c0_i32_0 : i32, i32
  }
  func.func @transform_6(%arg0: i32, %arg1: i32) -> (i32, i32) {
    %c0_i32 = arith.constant 0 : i32
    %c0_i32_0 = arith.constant 0 : i32
    %c0_i32_1 = arith.constant 0 : i32
    return %c0_i32, %c0_i32_0 : i32, i32
  }
  func.func @transform_7(%arg0: i32, %arg1: i32) -> (i32, i32, i32) {
    %c0_i32 = arith.constant 0 : i32
    %c0_i32_0 = arith.constant 0 : i32
    %c0_i32_1 = arith.constant 0 : i32
    %c0_i32_2 = arith.constant 0 : i32
    return %c0_i32, %c0_i32_0, %c0_i32_1 : i32, i32, i32
  }
  func.func @transform_8(%arg0: i32, %arg1: i32) -> (i32, i32, i32) {
    %c0_i32 = arith.constant 0 : i32
    %c0_i32_0 = arith.constant 0 : i32
    %c0_i32_1 = arith.constant 0 : i32
    %c0_i32_2 = arith.constant 0 : i32
    return %c0_i32, %c0_i32_0, %c0_i32_1 : i32, i32, i32
  }
  func.func @transform_9(%arg0: i32, %arg1: i32) -> (i32, i32, i32) {
    %c0_i32 = arith.constant 0 : i32
    %c0_i32_0 = arith.constant 0 : i32
    %c0_i32_1 = arith.constant 0 : i32
    %c0_i32_2 = arith.constant 0 : i32
    return %c0_i32, %c0_i32_0, %c0_i32_1 : i32, i32, i32
  }
  func.func @transform_10(%arg0: i32, %arg1: i32) -> (i32, i32, i32) {
    %c0_i32 = arith.constant 0 : i32
    %c0_i32_0 = arith.constant 0 : i32
    %c0_i32_1 = arith.constant 0 : i32
    %c0_i32_2 = arith.constant 0 : i32
    return %c0_i32, %c0_i32_0, %c0_i32_1 : i32, i32, i32
  }
  func.func @transform_11(%arg0: i32, %arg1: i32) -> (i32, i32, i32) {
    %c0_i32 = arith.constant 0 : i32
    %c0_i32_0 = arith.constant 0 : i32
    %c0_i32_1 = arith.constant 0 : i32
    %c0_i32_2 = arith.constant 0 : i32
    return %c0_i32, %c0_i32_0, %c0_i32_1 : i32, i32, i32
  }
  func.func @transform_12(%arg0: i32, %arg1: i32) -> (i32, i32, i32) {
    %c0_i32 = arith.constant 0 : i32
    %c0_i32_0 = arith.constant 0 : i32
    %c0_i32_1 = arith.constant 0 : i32
    %c0_i32_2 = arith.constant 0 : i32
    return %c0_i32, %c0_i32_0, %c0_i32_1 : i32, i32, i32
  }
  func.func @transform_13(%arg0: i32, %arg1: i32) -> (i32, i32, i32) {
    %c0_i32 = arith.constant 0 : i32
    %c0_i32_0 = arith.constant 0 : i32
    %c0_i32_1 = arith.constant 0 : i32
    %c0_i32_2 = arith.constant 0 : i32
    return %c0_i32, %c0_i32_0, %c0_i32_1 : i32, i32, i32
  }
  func.func @transform_14(%arg0: i32, %arg1: i32) -> (i32, i32, i32) {
    %c0_i32 = arith.constant 0 : i32
    %c0_i32_0 = arith.constant 0 : i32
    %c0_i32_1 = arith.constant 0 : i32
    %c0_i32_2 = arith.constant 0 : i32
    return %c0_i32, %c0_i32_0, %c0_i32_1 : i32, i32, i32
  }
  func.func @transform_15(%arg0: i32, %arg1: i32) -> (i32, i32, i32) {
    %c0_i32 = arith.constant 0 : i32
    %c0_i32_0 = arith.constant 0 : i32
    %c0_i32_1 = arith.constant 0 : i32
    %c0_i32_2 = arith.constant 0 : i32
    return %c0_i32, %c0_i32_0, %c0_i32_1 : i32, i32, i32
  }
  func.func @transform_16(%arg0: i32, %arg1: i32) -> (i32, i32, i32, i32) {
    %c0_i32 = arith.constant 0 : i32
    %c0_i32_0 = arith.constant 0 : i32
    %c0_i32_1 = arith.constant 0 : i32
    return %arg0, %c0_i32, %c0_i32_0, %arg1 : i32, i32, i32, i32
  }
  func.func @transform_17(%arg0: i32, %arg1: i32) -> (i32, i32, i32) {
    %c0_i32 = arith.constant 0 : i32
    %c0_i32_0 = arith.constant 0 : i32
    return %arg0, %c0_i32, %arg1 : i32, i32, i32
  }
  func.func @transform_18(%arg0: i32, %arg1: i32) -> (i32, i32, i32) {
    %c0_i32 = arith.constant 0 : i32
    %c0_i32_0 = arith.constant 0 : i32
    return %arg0, %c0_i32, %arg1 : i32, i32, i32
  }
}

</mosaic_0001>

<llo_original>
// kernel: _part_graph_forward_impl.1
$region0: #{_part_graph_forward_impl.1}
  #allocation0 [shape = 'u32[]', space=smem, size = 0x4, offset = 0x4, fixed_abs, tag = 'smem constant byte address 0x4 - core index']
  #allocation1 [shape = 'u32[144,128]{1,0:T(1,128)}', space=vmem, size = 0x12000, scoped, tag = 'internal scratch']
  %s0 = inlined_call_operand.vmem [shape: f32[2,10,256], index: 0, kind: input, shape index: {}]
  %s1 = inlined_call_operand.vmem [shape: f32[2,10,256], index: 1, kind: input, shape index: {}]
  %s2 = inlined_call_operand.vmem [shape: f32[2,6,10,256], index: 2, kind: input, shape index: {}]
  %s3 = inlined_call_operand.vmem [shape: f32[5,10], index: 3, kind: input, shape index: {}]
  %s4 = inlined_call_operand.vmem [shape: f32[5,1], index: 4, kind: input, shape index: {}]
  %s5 = inlined_call_operand.vmem [shape: f32[3,10], index: 5, kind: input, shape index: {}]
  %s6 = inlined_call_operand.vmem [shape: f32[3,1], index: 6, kind: input, shape index: {}]
  %s7 = inlined_call_operand.vmem [shape: f32[2,32,10], index: 7, kind: input, shape index: {}]
  %s8 = inlined_call_operand.vmem [shape: f32[2,32,10], index: 8, kind: input, shape index: {}]
  %s9 = inlined_call_operand.vmem [shape: f32[2,32,1], index: 9, kind: input, shape index: {}]
  %s10 = inlined_call_operand.vmem [shape: f32[2,16,32], index: 10, kind: input, shape index: {}]
  %s11 = inlined_call_operand.vmem [shape: f32[2,16,1], index: 11, kind: input, shape index: {}]
  %s12 = inlined_call_operand.vmem [shape: f32[6,48,16], index: 12, kind: input, shape index: {}]
  %s13 = inlined_call_operand.vmem [shape: f32[6,32,10], index: 13, kind: input, shape index: {}]
  %s14 = inlined_call_operand.vmem [shape: f32[6,16,10], index: 14, kind: input, shape index: {}]
  %s15 = inlined_call_operand.vmem [shape: f32[6,48,1], index: 15, kind: input, shape index: {}]
  %s16 = inlined_call_operand.vmem [shape: f32[2,6,10,256], index: 16, kind: output, shape index: {0}]
  %s17 = inlined_call_operand.vmem [shape: f32[2,5,256], index: 17, kind: output, shape index: {1}]
  %s18 = inlined_call_operand.vmem [shape: f32[2,3,256], index: 18, kind: output, shape index: {2}]
  %19 = xla_tuple %s16, %s17, %s18
  %s20 = sld [smem:[#allocation0]]
  $region113: #{_part_graph_forward_impl.1} parent=0
    _
  %s22 = ssub.s32 1, %s20
  %s23 = scalar_select 0, %s22, %s20
  loop: start=0, step=1, limit=4
  $region2: #{_part_graph_forward_impl.1} parent=0 // loop_pre_header
    _
  $region3: #{_part_graph_forward_impl.1} parent=0 // loop_header
    %s25 = sphi 0, %s29
    %p26 = scmp.ge.s32.totalorder %s25, 4
    %s32 = sphi 0, %s44
    %s33 = sphi 0, %s40
    %s34 = sphi 0, %s32
    %s35 = sphi 0, %s33
    %s36 = sphi 0, %s34
    %s37 = sphi 0, %s35
    %s49 = sphi 0, %s51
    %s52 = sphi 0, %s49
    %s53 = sphi 0, %s52
    %s69 = sphi 0, %s53
    %s77 = sphi 0, %s79
    %s80 = sphi 0, %s77
    %s81 = sphi 0, %s80
    %s97 = sphi 0, %s81
    %s105 = sphi 0, %s107
    %s108 = sphi 0, %s105
    %s109 = sphi 0, %s108
    %s125 = sphi 0, %s109
    %s129 = sphi 0, %s129
    %s131 = sphi 0, %s129
    %s132 = sphi 0, %s131
    %s146 = sphi 0, %s132
    %s150 = sphi 0, %s150
    %s152 = sphi 0, %s150
    %s153 = sphi 0, %s152
    %s167 = sphi 0, %s153
    %s171 = sphi 0, %s171
    %s173 = sphi 0, %s171
    %s174 = sphi 0, %s173
    %s188 = sphi 0, %s174
    %s192 = sphi 0, %s192
    %s194 = sphi 0, %s192
    %s195 = sphi 0, %s194
    %s209 = sphi 0, %s195
    %s213 = sphi 0, %s213
    %s215 = sphi 0, %s213
    %s216 = sphi 0, %s215
    %s230 = sphi 0, %s216
    %s234 = sphi 0, %s234
    %s236 = sphi 0, %s234
    %s237 = sphi 0, %s236
    %s251 = sphi 0, %s237
    %s255 = sphi 0, %s255
    %s257 = sphi 0, %s255
    %s258 = sphi 0, %s257
    %s272 = sphi 0, %s258
    %s276 = sphi 0, %s276
    %s278 = sphi 0, %s276
    %s279 = sphi 0, %s278
    %s293 = sphi 0, %s279
    %s297 = sphi 0, %s297
    %s299 = sphi 0, %s297
    %s300 = sphi 0, %s299
    %s314 = sphi 0, %s300
    %s318 = sphi 0, %s318
    %s320 = sphi 0, %s318
    %s321 = sphi 0, %s320
    %s335 = sphi 0, %s321
    %s339 = sphi 0, %s339
    %s341 = sphi 0, %s339
    %s342 = sphi 0, %s341
    %s356 = sphi 0, %s342
    %s360 = sphi 0, %s360
    %s362 = sphi 0, %s360
    %s363 = sphi 0, %s362
    %s377 = sphi 0, %s363
    %s381 = sphi 0, %s381
    %s383 = sphi 0, %s381
    %s384 = sphi 0, %s383
    %s398 = sphi 0, %s384
    %s406 = sphi 0, %s408
    %s409 = sphi 0, %s406
    %s410 = sphi 0, %s409
    %s426 = sphi 0, %s410
    %s434 = sphi 0, %s436
    %s437 = sphi 0, %s434
    %s438 = sphi 0, %s437
    %s454 = sphi 0, %s438
    %s462 = sphi 0, %s464
    %s465 = sphi 0, %s462
    %s466 = sphi 0, %s465
    %s482 = sphi 0, %s466
  $region4: #{_part_graph_forward_impl.1} parent=0 // loop_header_branch
    %28 = sbr.rel (%p26) target = $region8
  $region5: #{_part_graph_forward_impl.1} parent=0 // loop_body
    %s30 = ssub.s32 %s25, 1
    %s31 = ssub.s32 %s25, 2
    %s38 = sadd.s32 1, %s33
    %p39 = scmp.ge.s32.totalorder %s38, 1
    %s40 = scalar_select %p39, 0, %s38
    %s41 = sadd.s32 1, %s32
    %s42 = scalar_select %p39, %s41, %s32
    %p43 = scmp.ge.s32.totalorder %s42, 2
    %s44 = scalar_select %p43, 0, %s42
    %s45 = ssub.s32 %s32, %s44
    %s46 = ssub.s32 %s33, %s40
    %s47 = sor.u32 %s45, %s46
    %p48 = scmp.eq.s32.totalorder %s47, 0
    %s50 = sadd.s32 %s49, 1
    %s51 = scalar_select %p48, %s49, %s50
    %p54 = pneg %p48
    %p55 = scmp.eq.s32.totalorder %s25, 1
    %p56 = por %p54, %p55
    %p57 = scmp.ne.s32.totalorder %s49, %s52
    %p58 = scmp.eq.s32.totalorder %s25, 0
    %p59 = por %p57, %p58
    %p60 = scmp.ne.s32.totalorder %s49, %s52
    %p61 = scmp.eq.s32.totalorder %s30, 1
    %p62 = por %p60, %p61
    %p63 = scmp.ne.s32.totalorder %s52, %s53
    %p64 = scmp.eq.s32.totalorder %s30, 0
    %p65 = por %p63, %p64
    %p66 = scmp.ne.s32.totalorder %s52, %s53
    %p67 = scmp.eq.s32.totalorder %s31, 1
    %p68 = por %p66, %p67
    %p70 = scmp.ne.s32.totalorder %s53, %s69
    %p71 = scmp.eq.s32.totalorder %s31, 0
    %p72 = por %p70, %p71
    %s73 = ssub.s32 %s32, %s44
    %s74 = ssub.s32 %s33, %s40
    %s75 = sor.u32 %s73, %s74
    %p76 = scmp.eq.s32.totalorder %s75, 0
    %s78 = sadd.s32 %s77, 1
    %s79 = scalar_select %p76, %s77, %s78
    %p82 = pneg %p76
    %p83 = scmp.eq.s32.totalorder %s25, 1
    %p84 = por %p82, %p83
    %p85 = scmp.ne.s32.totalorder %s77, %s80
    %p86 = scmp.eq.s32.totalorder %s25, 0
    %p87 = por %p85, %p86
    %p88 = scmp.ne.s32.totalorder %s77, %s80
    %p89 = scmp.eq.s32.totalorder %s30, 1
    %p90 = por %p88, %p89
    %p91 = scmp.ne.s32.totalorder %s80, %s81
    %p92 = scmp.eq.s32.totalorder %s30, 0
    %p93 = por %p91, %p92
    %p94 = scmp.ne.s32.totalorder %s80, %s81
    %p95 = scmp.eq.s32.totalorder %s31, 1
    %p96 = por %p94, %p95
    %p98 = scmp.ne.s32.totalorder %s81, %s97
    %p99 = scmp.eq.s32.totalorder %s31, 0
    %p100 = por %p98, %p99
    %s101 = ssub.s32 %s32, %s44
    %s102 = ssub.s32 %s33, %s40
    %s103 = sor.u32 %s101, %s102
    %p104 = scmp.eq.s32.totalorder %s103, 0
    %s106 = sadd.s32 %s105, 1
    %s107 = scalar_select %p104, %s105, %s106
    %p110 = pneg %p104
    %p111 = scmp.eq.s32.totalorder %s25, 1
    %p112 = por %p110, %p111
    %p113 = scmp.ne.s32.totalorder %s105, %s108
    %p114 = scmp.eq.s32.totalorder %s25, 0
    %p115 = por %p113, %p114
    %p116 = scmp.ne.s32.totalorder %s105, %s108
    %p117 = scmp.eq.s32.totalorder %s30, 1
    %p118 = por %p116, %p117
    %p119 = scmp.ne.s32.totalorder %s108, %s109
    %p120 = scmp.eq.s32.totalorder %s30, 0
    %p121 = por %p119, %p120
    %p122 = scmp.ne.s32.totalorder %s108, %s109
    %p123 = scmp.eq.s32.totalorder %s31, 1
    %p124 = por %p122, %p123
    %p126 = scmp.ne.s32.totalorder %s109, %s125
    %p127 = scmp.eq.s32.totalorder %s31, 0
    %p128 = por %p126, %p127
    %s130 = sadd.s32 %s129, 1
    %p133 = scmp.eq.s32.totalorder %s25, 1
    %p134 = scmp.ne.s32.totalorder %s129, %s131
    %p135 = scmp.eq.s32.totalorder %s25, 0
    %p136 = por %p134, %p135
    %p137 = scmp.ne.s32.totalorder %s129, %s131
    %p138 = scmp.eq.s32.totalorder %s30, 1
    %p139 = por %p137, %p138
    %p140 = scmp.ne.s32.totalorder %s131, %s132
    %p141 = scmp.eq.s32.totalorder %s30, 0
    %p142 = por %p140, %p141
    %p143 = scmp.ne.s32.totalorder %s131, %s132
    %p144 = scmp.eq.s32.totalorder %s31, 1
    %p145 = por %p143, %p144
    %p147 = scmp.ne.s32.totalorder %s132, %s146
    %p148 = scmp.eq.s32.totalorder %s31, 0
    %p149 = por %p147, %p148
    %s151 = sadd.s32 %s150, 1
    %p154 = scmp.eq.s32.totalorder %s25, 1
    %p155 = scmp.ne.s32.totalorder %s150, %s152
    %p156 = scmp.eq.s32.totalorder %s25, 0
    %p157 = por %p155, %p156
    %p158 = scmp.ne.s32.totalorder %s150, %s152
    %p159 = scmp.eq.s32.totalorder %s30, 1
    %p160 = por %p158, %p159
    %p161 = scmp.ne.s32.totalorder %s152, %s153
    %p162 = scmp.eq.s32.totalorder %s30, 0
    %p163 = por %p161, %p162
    %p164 = scmp.ne.s32.totalorder %s152, %s153
    %p165 = scmp.eq.s32.totalorder %s31, 1
    %p166 = por %p164, %p165
    %p168 = scmp.ne.s32.totalorder %s153, %s167
    %p169 = scmp.eq.s32.totalorder %s31, 0
    %p170 = por %p168, %p169
    %s172 = sadd.s32 %s171, 1
    %p175 = scmp.eq.s32.totalorder %s25, 1
    %p176 = scmp.ne.s32.totalorder %s171, %s173
    %p177 = scmp.eq.s32.totalorder %s25, 0
    %p178 = por %p176, %p177
    %p179 = scmp.ne.s32.totalorder %s171, %s173
    %p180 = scmp.eq.s32.totalorder %s30, 1
    %p181 = por %p179, %p180
    %p182 = scmp.ne.s32.totalorder %s173, %s174
    %p183 = scmp.eq.s32.totalorder %s30, 0
    %p184 = por %p182, %p183
    %p185 = scmp.ne.s32.totalorder %s173, %s174
    %p186 = scmp.eq.s32.totalorder %s31, 1
    %p187 = por %p185, %p186
    %p189 = scmp.ne.s32.totalorder %s174, %s188
    %p190 = scmp.eq.s32.totalorder %s31, 0
    %p191 = por %p189, %p190
    %s193 = sadd.s32 %s192, 1
    %p196 = scmp.eq.s32.totalorder %s25, 1
    %p197 = scmp.ne.s32.totalorder %s192, %s194
    %p198 = scmp.eq.s32.totalorder %s25, 0
    %p199 = por %p197, %p198
    %p200 = scmp.ne.s32.totalorder %s192, %s194
    %p201 = scmp.eq.s32.totalorder %s30, 1
    %p202 = por %p200, %p201
    %p203 = scmp.ne.s32.totalorder %s194, %s195
    %p204 = scmp.eq.s32.totalorder %s30, 0
    %p205 = por %p203, %p204
    %p206 = scmp.ne.s32.totalorder %s194, %s195
    %p207 = scmp.eq.s32.totalorder %s31, 1
    %p208 = por %p206, %p207
    %p210 = scmp.ne.s32.totalorder %s195, %s209
    %p211 = scmp.eq.s32.totalorder %s31, 0
    %p212 = por %p210, %p211
    %s214 = sadd.s32 %s213, 1
    %p217 = scmp.eq.s32.totalorder %s25, 1
    %p218 = scmp.ne.s32.totalorder %s213, %s215
    %p219 = scmp.eq.s32.totalorder %s25, 0
    %p220 = por %p218, %p219
    %p221 = scmp.ne.s32.totalorder %s213, %s215
    %p222 = scmp.eq.s32.totalorder %s30, 1
    %p223 = por %p221, %p222
    %p224 = scmp.ne.s32.totalorder %s215, %s216
    %p225 = scmp.eq.s32.totalorder %s30, 0
    %p226 = por %p224, %p225
    %p227 = scmp.ne.s32.totalorder %s215, %s216
    %p228 = scmp.eq.s32.totalorder %s31, 1
    %p229 = por %p227, %p228
    %p231 = scmp.ne.s32.totalorder %s216, %s230
    %p232 = scmp.eq.s32.totalorder %s31, 0
    %p233 = por %p231, %p232
    %s235 = sadd.s32 %s234, 1
    %p238 = scmp.eq.s32.totalorder %s25, 1
    %p239 = scmp.ne.s32.totalorder %s234, %s236
    %p240 = scmp.eq.s32.totalorder %s25, 0
    %p241 = por %p239, %p240
    %p242 = scmp.ne.s32.totalorder %s234, %s236
    %p243 = scmp.eq.s32.totalorder %s30, 1
    %p244 = por %p242, %p243
    %p245 = scmp.ne.s32.totalorder %s236, %s237
    %p246 = scmp.eq.s32.totalorder %s30, 0
    %p247 = por %p245, %p246
    %p248 = scmp.ne.s32.totalorder %s236, %s237
    %p249 = scmp.eq.s32.totalorder %s31, 1
    %p250 = por %p248, %p249
    %p252 = scmp.ne.s32.totalorder %s237, %s251
    %p253 = scmp.eq.s32.totalorder %s31, 0
    %p254 = por %p252, %p253
    %s256 = sadd.s32 %s255, 1
    %p259 = scmp.eq.s32.totalorder %s25, 1
    %p260 = scmp.ne.s32.totalorder %s255, %s257
    %p261 = scmp.eq.s32.totalorder %s25, 0
    %p262 = por %p260, %p261
    %p263 = scmp.ne.s32.totalorder %s255, %s257
    %p264 = scmp.eq.s32.totalorder %s30, 1
    %p265 = por %p263, %p264
    %p266 = scmp.ne.s32.totalorder %s257, %s258
    %p267 = scmp.eq.s32.totalorder %s30, 0
    %p268 = por %p266, %p267
    %p269 = scmp.ne.s32.totalorder %s257, %s258
    %p270 = scmp.eq.s32.totalorder %s31, 1
    %p271 = por %p269, %p270
    %p273 = scmp.ne.s32.totalorder %s258, %s272
    %p274 = scmp.eq.s32.totalorder %s31, 0
    %p275 = por %p273, %p274
    %s277 = sadd.s32 %s276, 1
    %p280 = scmp.eq.s32.totalorder %s25, 1
    %p281 = scmp.ne.s32.totalorder %s276, %s278
    %p282 = scmp.eq.s32.totalorder %s25, 0
    %p283 = por %p281, %p282
    %p284 = scmp.ne.s32.totalorder %s276, %s278
    %p285 = scmp.eq.s32.totalorder %s30, 1
    %p286 = por %p284, %p285
    %p287 = scmp.ne.s32.totalorder %s278, %s279
    %p288 = scmp.eq.s32.totalorder %s30, 0
    %p289 = por %p287, %p288
    %p290 = scmp.ne.s32.totalorder %s278, %s279
    %p291 = scmp.eq.s32.totalorder %s31, 1
    %p292 = por %p290, %p291
    %p294 = scmp.ne.s32.totalorder %s279, %s293
    %p295 = scmp.eq.s32.totalorder %s31, 0
    %p296 = por %p294, %p295
    %s298 = sadd.s32 %s297, 1
    %p301 = scmp.eq.s32.totalorder %s25, 1
    %p302 = scmp.ne.s32.totalorder %s297, %s299
    %p303 = scmp.eq.s32.totalorder %s25, 0
    %p304 = por %p302, %p303
    %p305 = scmp.ne.s32.totalorder %s297, %s299
    %p306 = scmp.eq.s32.totalorder %s30, 1
    %p307 = por %p305, %p306
    %p308 = scmp.ne.s32.totalorder %s299, %s300
    %p309 = scmp.eq.s32.totalorder %s30, 0
    %p310 = por %p308, %p309
    %p311 = scmp.ne.s32.totalorder %s299, %s300
    %p312 = scmp.eq.s32.totalorder %s31, 1
    %p313 = por %p311, %p312
    %p315 = scmp.ne.s32.totalorder %s300, %s314
    %p316 = scmp.eq.s32.totalorder %s31, 0
    %p317 = por %p315, %p316
    %s319 = sadd.s32 %s318, 1
    %p322 = scmp.eq.s32.totalorder %s25, 1
    %p323 = scmp.ne.s32.totalorder %s318, %s320
    %p324 = scmp.eq.s32.totalorder %s25, 0
    %p325 = por %p323, %p324
    %p326 = scmp.ne.s32.totalorder %s318, %s320
    %p327 = scmp.eq.s32.totalorder %s30, 1
    %p328 = por %p326, %p327
    %p329 = scmp.ne.s32.totalorder %s320, %s321
    %p330 = scmp.eq.s32.totalorder %s30, 0
    %p331 = por %p329, %p330
    %p332 = scmp.ne.s32.totalorder %s320, %s321
    %p333 = scmp.eq.s32.totalorder %s31, 1
    %p334 = por %p332, %p333
    %p336 = scmp.ne.s32.totalorder %s321, %s335
    %p337 = scmp.eq.s32.totalorder %s31, 0
    %p338 = por %p336, %p337
    %s340 = sadd.s32 %s339, 1
    %p343 = scmp.eq.s32.totalorder %s25, 1
    %p344 = scmp.ne.s32.totalorder %s339, %s341
    %p345 = scmp.eq.s32.totalorder %s25, 0
    %p346 = por %p344, %p345
    %p347 = scmp.ne.s32.totalorder %s339, %s341
    %p348 = scmp.eq.s32.totalorder %s30, 1
    %p349 = por %p347, %p348
    %p350 = scmp.ne.s32.totalorder %s341, %s342
    %p351 = scmp.eq.s32.totalorder %s30, 0
    %p352 = por %p350, %p351
    %p353 = scmp.ne.s32.totalorder %s341, %s342
    %p354 = scmp.eq.s32.totalorder %s31, 1
    %p355 = por %p353, %p354
    %p357 = scmp.ne.s32.totalorder %s342, %s356
    %p358 = scmp.eq.s32.totalorder %s31, 0
    %p359 = por %p357, %p358
    %s361 = sadd.s32 %s360, 1
    %p364 = scmp.eq.s32.totalorder %s25, 1
    %p365 = scmp.ne.s32.totalorder %s360, %s362
    %p366 = scmp.eq.s32.totalorder %s25, 0
    %p367 = por %p365, %p366
    %p368 = scmp.ne.s32.totalorder %s360, %s362
    %p369 = scmp.eq.s32.totalorder %s30, 1
    %p370 = por %p368, %p369
    %p371 = scmp.ne.s32.totalorder %s362, %s363
    %p372 = scmp.eq.s32.totalorder %s30, 0
    %p373 = por %p371, %p372
    %p374 = scmp.ne.s32.totalorder %s362, %s363
    %p375 = scmp.eq.s32.totalorder %s31, 1
    %p376 = por %p374, %p375
    %p378 = scmp.ne.s32.totalorder %s363, %s377
    %p379 = scmp.eq.s32.totalorder %s31, 0
    %p380 = por %p378, %p379
    %s382 = sadd.s32 %s381, 1
    %p385 = scmp.eq.s32.totalorder %s25, 1
    %p386 = scmp.ne.s32.totalorder %s381, %s383
    %p387 = scmp.eq.s32.totalorder %s25, 0
    %p388 = por %p386, %p387
    %p389 = scmp.ne.s32.totalorder %s381, %s383
    %p390 = scmp.eq.s32.totalorder %s30, 1
    %p391 = por %p389, %p390
    %p392 = scmp.ne.s32.totalorder %s383, %s384
    %p393 = scmp.eq.s32.totalorder %s30, 0
    %p394 = por %p392, %p393
    %p395 = scmp.ne.s32.totalorder %s383, %s384
    %p396 = scmp.eq.s32.totalorder %s31, 1
    %p397 = por %p395, %p396
    %p399 = scmp.ne.s32.totalorder %s384, %s398
    %p400 = scmp.eq.s32.totalorder %s31, 0
    %p401 = por %p399, %p400
    %s402 = ssub.s32 %s32, %s44
    %s403 = ssub.s32 %s33, %s40
    %s404 = sor.u32 %s402, %s403
    %p405 = scmp.eq.s32.totalorder %s404, 0
    %s407 = sadd.s32 %s406, 1
    %s408 = scalar_select %p405, %s406, %s407
    %p411 = pneg %p405
    %p412 = scmp.eq.s32.totalorder %s25, 1
    %p413 = por %p411, %p412
    %p414 = scmp.ne.s32.totalorder %s406, %s409
    %p415 = scmp.eq.s32.totalorder %s25, 0
    %p416 = por %p414, %p415
    %p417 = scmp.ne.s32.totalorder %s406, %s409
    %p418 = scmp.eq.s32.totalorder %s30, 1
    %p419 = por %p417, %p418
    %p420 = scmp.ne.s32.totalorder %s409, %s410
    %p421 = scmp.eq.s32.totalorder %s30, 0
    %p422 = por %p420, %p421
    %p423 = scmp.ne.s32.totalorder %s409, %s410
    %p424 = scmp.eq.s32.totalorder %s31, 1
    %p425 = por %p423, %p424
    %p427 = scmp.ne.s32.totalorder %s410, %s426
    %p428 = scmp.eq.s32.totalorder %s31, 0
    %p429 = por %p427, %p428
    %s430 = ssub.s32 %s32, %s44
    %s431 = ssub.s32 %s33, %s40
    %s432 = sor.u32 %s430, %s431
    %p433 = scmp.eq.s32.totalorder %s432, 0
    %s435 = sadd.s32 %s434, 1
    %s436 = scalar_select %p433, %s434, %s435
    %p439 = pneg %p433
    %p440 = scmp.eq.s32.totalorder %s25, 1
    %p441 = por %p439, %p440
    %p442 = scmp.ne.s32.totalorder %s434, %s437
    %p443 = scmp.eq.s32.totalorder %s25, 0
    %p444 = por %p442, %p443
    %p445 = scmp.ne.s32.totalorder %s434, %s437
    %p446 = scmp.eq.s32.totalorder %s30, 1
    %p447 = por %p445, %p446
    %p448 = scmp.ne.s32.totalorder %s437, %s438
    %p449 = scmp.eq.s32.totalorder %s30, 0
    %p450 = por %p448, %p449
    %p451 = scmp.ne.s32.totalorder %s437, %s438
    %p452 = scmp.eq.s32.totalorder %s31, 1
    %p453 = por %p451, %p452
    %p455 = scmp.ne.s32.totalorder %s438, %s454
    %p456 = scmp.eq.s32.totalorder %s31, 0
    %p457 = por %p455, %p456
    %s458 = ssub.s32 %s32, %s44
    %s459 = ssub.s32 %s33, %s40
    %s460 = sor.u32 %s458, %s459
    %p461 = scmp.eq.s32.totalorder %s460, 0
    %s463 = sadd.s32 %s462, 1
    %s464 = scalar_select %p461, %s462, %s463
    %p467 = pneg %p461
    %p468 = scmp.eq.s32.totalorder %s25, 1
    %p469 = por %p467, %p468
    %p470 = scmp.ne.s32.totalorder %s462, %s465
    %p471 = scmp.eq.s32.totalorder %s25, 0
    %p472 = por %p470, %p471
    %p473 = scmp.ne.s32.totalorder %s462, %s465
    %p474 = scmp.eq.s32.totalorder %s30, 1
    %p475 = por %p473, %p474
    %p476 = scmp.ne.s32.totalorder %s465, %s466
    %p477 = scmp.eq.s32.totalorder %s30, 0
    %p478 = por %p476, %p477
    %p479 = scmp.ne.s32.totalorder %s465, %s466
    %p480 = scmp.eq.s32.totalorder %s31, 1
    %p481 = por %p479, %p480
    %p483 = scmp.ne.s32.totalorder %s466, %s482
    %p484 = scmp.eq.s32.totalorder %s31, 0
    %p485 = por %p483, %p484
    %p486 = scmp.le.s32.totalorder 1, %s25
    %p487 = scmp.lt.s32.totalorder %s25, 3
    %p488 = pnand %p486, %p487
    %p489 = pneg %p488
    // Predicated region
    $region9: #{_part_graph_forward_impl.1} parent=5 // pred_check
      _
    $region10: #{_part_graph_forward_impl.1} parent=5 // pred_check_branch
      %491 = sbr.rel (%p488) target = $region12
    $region11: #{_part_graph_forward_impl.1} parent=5 // pred_region
      %s492 = ssub.s32 %s25, 1
      // Predicated region
      $region13: #{_part_graph_forward_impl.1} parent=11 // pred_check
        %p493 = pneg %p142
      $region14: #{_part_graph_forward_impl.1} parent=11 // pred_check_branch
        %495 = sbr.rel (%p493) target = $region16
      $region15: #{_part_graph_forward_impl.1} parent=11 // pred_region
        _
      $region16: #{_part_graph_forward_impl.1} parent=11 // pred_fallthru
        _
      // Predicated region
      $region17: #{_part_graph_forward_impl.1} parent=11 // pred_check
        %p496 = pneg %p163
      $region18: #{_part_graph_forward_impl.1} parent=11 // pred_check_branch
        %498 = sbr.rel (%p496) target = $region20
      $region19: #{_part_graph_forward_impl.1} parent=11 // pred_region
        _
      $region20: #{_part_graph_forward_impl.1} parent=11 // pred_fallthru
        _
      // Predicated region
      $region21: #{_part_graph_forward_impl.1} parent=11 // pred_check
        %p499 = pneg %p184
      $region22: #{_part_graph_forward_impl.1} parent=11 // pred_check_branch
        %501 = sbr.rel (%p499) target = $region24
      $region23: #{_part_graph_forward_impl.1} parent=11 // pred_region
        _
      $region24: #{_part_graph_forward_impl.1} parent=11 // pred_fallthru
        _
      // Predicated region
      $region25: #{_part_graph_forward_impl.1} parent=11 // pred_check
        %p502 = pneg %p205
      $region26: #{_part_graph_forward_impl.1} parent=11 // pred_check_branch
        %504 = sbr.rel (%p502) target = $region28
      $region27: #{_part_graph_forward_impl.1} parent=11 // pred_region
        _
      $region28: #{_part_graph_forward_impl.1} parent=11 // pred_fallthru
        _
      // Predicated region
      $region29: #{_part_graph_forward_impl.1} parent=11 // pred_check
        %p505 = pneg %p226
      $region30: #{_part_graph_forward_impl.1} parent=11 // pred_check_branch
        %507 = sbr.rel (%p505) target = $region32
      $region31: #{_part_graph_forward_impl.1} parent=11 // pred_region
        _
      $region32: #{_part_graph_forward_impl.1} parent=11 // pred_fallthru
        _
      // Predicated region
      $region33: #{_part_graph_forward_impl.1} parent=11 // pred_check
        %p508 = pneg %p247
      $region34: #{_part_graph_forward_impl.1} parent=11 // pred_check_branch
        %510 = sbr.rel (%p508) target = $region36
      $region35: #{_part_graph_forward_impl.1} parent=11 // pred_region
        _
      $region36: #{_part_graph_forward_impl.1} parent=11 // pred_fallthru
        _
      // Predicated region
      $region37: #{_part_graph_forward_impl.1} parent=11 // pred_check
        %p511 = pneg %p268
      $region38: #{_part_graph_forward_impl.1} parent=11 // pred_check_branch
        %513 = sbr.rel (%p511) target = $region40
      $region39: #{_part_graph_forward_impl.1} parent=11 // pred_region
        _
      $region40: #{_part_graph_forward_impl.1} parent=11 // pred_fallthru
        _
      // Predicated region
      $region41: #{_part_graph_forward_impl.1} parent=11 // pred_check
        %p514 = pneg %p289
      $region42: #{_part_graph_forward_impl.1} parent=11 // pred_check_branch
        %516 = sbr.rel (%p514) target = $region44
      $region43: #{_part_graph_forward_impl.1} parent=11 // pred_region
        _
      $region44: #{_part_graph_forward_impl.1} parent=11 // pred_fallthru
        _
      // Predicated region
      $region45: #{_part_graph_forward_impl.1} parent=11 // pred_check
        %p517 = pneg %p310
      $region46: #{_part_graph_forward_impl.1} parent=11 // pred_check_branch
        %519 = sbr.rel (%p517) target = $region48
      $region47: #{_part_graph_forward_impl.1} parent=11 // pred_region
        _
      $region48: #{_part_graph_forward_impl.1} parent=11 // pred_fallthru
        _
      // Predicated region
      $region49: #{_part_graph_forward_impl.1} parent=11 // pred_check
        %p520 = pneg %p331
      $region50: #{_part_graph_forward_impl.1} parent=11 // pred_check_branch
        %522 = sbr.rel (%p520) target = $region52
      $region51: #{_part_graph_forward_impl.1} parent=11 // pred_region
        _
      $region52: #{_part_graph_forward_impl.1} parent=11 // pred_fallthru
        _
      // Predicated region
      $region53: #{_part_graph_forward_impl.1} parent=11 // pred_check
        %p523 = pneg %p352
      $region54: #{_part_graph_forward_impl.1} parent=11 // pred_check_branch
        %525 = sbr.rel (%p523) target = $region56
      $region55: #{_part_graph_forward_impl.1} parent=11 // pred_region
        _
      $region56: #{_part_graph_forward_impl.1} parent=11 // pred_fallthru
        _
      // Predicated region
      $region57: #{_part_graph_forward_impl.1} parent=11 // pred_check
        %p526 = pneg %p373
      $region58: #{_part_graph_forward_impl.1} parent=11 // pred_check_branch
        %528 = sbr.rel (%p526) target = $region60
      $region59: #{_part_graph_forward_impl.1} parent=11 // pred_region
        _
      $region60: #{_part_graph_forward_impl.1} parent=11 // pred_fallthru
        _
      // Predicated region
      $region61: #{_part_graph_forward_impl.1} parent=11 // pred_check
        %p529 = pneg %p394
      $region62: #{_part_graph_forward_impl.1} parent=11 // pred_check_branch
        %531 = sbr.rel (%p529) target = $region64
      $region63: #{_part_graph_forward_impl.1} parent=11 // pred_region
        _
      $region64: #{_part_graph_forward_impl.1} parent=11 // pred_fallthru
        _
    $region12: #{_part_graph_forward_impl.1} parent=5 // pred_fallthru
      _
    %p532 = scmp.lt.s32.totalorder %s25, 2
    // Predicated region
    $region65: #{_part_graph_forward_impl.1} parent=5 // pred_check
      %p533 = pneg %p532
    $region66: #{_part_graph_forward_impl.1} parent=5 // pred_check_branch
      %535 = sbr.rel (%p533) target = $region68
    $region67: #{_part_graph_forward_impl.1} parent=5 // pred_region
      // Predicated region
      $region69: #{_part_graph_forward_impl.1} parent=67 // pred_check
        %p536 = pneg %p59
      $region70: #{_part_graph_forward_impl.1} parent=67 // pred_check_branch
        %538 = sbr.rel (%p536) target = $region72
      $region71: #{_part_graph_forward_impl.1} parent=67 // pred_region
        %s539 = smul.u32 2, %s33
        %p540 = scmp.lt.s32.totalorder %s32, 1
        %s541 = scalar_select %p540, %s32, 1
        %p542 = scmp.lt.s32.totalorder %s539, 1
        %s543 = scalar_select %p542, %s539, 1
        %s544 = smul.addr %s541, 4
        %s545 = sadd.s32 %s543, %s544
        %s546 = smul.addr %s545, 8
        %s547 = scalar_lea.vmem %s0, %s546
        %s548 = smul.u32 2, %s33
      $region72: #{_part_graph_forward_impl.1} parent=67 // pred_fallthru
        _
      // Predicated region
      $region73: #{_part_graph_forward_impl.1} parent=67 // pred_check
        %p549 = pneg %p87
      $region74: #{_part_graph_forward_impl.1} parent=67 // pred_check_branch
        %551 = sbr.rel (%p549) target = $region76
      $region75: #{_part_graph_forward_impl.1} parent=67 // pred_region
        %s552 = smul.u32 2, %s33
        %p553 = scmp.lt.s32.totalorder %s32, 1
        %s554 = scalar_select %p553, %s32, 1
        %p555 = scmp.lt.s32.totalorder %s552, 1
        %s556 = scalar_select %p555, %s552, 1
        %s557 = smul.addr %s554, 4
        %s558 = sadd.s32 %s556, %s557
        %s559 = smul.addr %s558, 8
        %s560 = scalar_lea.vmem %s1, %s559
        %s561 = smul.u32 2, %s33
      $region76: #{_part_graph_forward_impl.1} parent=67 // pred_fallthru
        _
      // Predicated region
      $region77: #{_part_graph_forward_impl.1} parent=67 // pred_check
        %p562 = pneg %p115
      $region78: #{_part_graph_forward_impl.1} parent=67 // pred_check_branch
        %564 = sbr.rel (%p562) target = $region80
      $region79: #{_part_graph_forward_impl.1} parent=67 // pred_region
        %s565 = smul.u32 2, %s33
        %p566 = scmp.lt.s32.totalorder %s32, 1
        %s567 = scalar_select %p566, %s32, 1
        %p568 = scmp.lt.s32.totalorder %s565, 1
        %s569 = scalar_select %p568, %s565, 1
        %s570 = smul.addr %s567, 24
        %s571 = sadd.s32 %s569, %s570
        %s572 = smul.addr %s571, 8
        %s573 = scalar_lea.vmem %s2, %s572
        %s574 = smul.u32 2, %s33
      $region80: #{_part_graph_forward_impl.1} parent=67 // pred_fallthru
        _
    $region68: #{_part_graph_forward_impl.1} parent=5 // pred_fallthru
      _
    %p575 = scmp.le.s32.totalorder 1, %s25
    %p576 = scmp.lt.s32.totalorder %s25, 3
    %p577 = pnand %p575, %p576
    %p578 = pneg %p577
    // Predicated region
    $region81: #{_part_graph_forward_impl.1} parent=5 // pred_check
      _
    $region82: #{_part_graph_forward_impl.1} parent=5 // pred_check_branch
      %580 = sbr.rel (%p577) target = $region84
    $region83: #{_part_graph_forward_impl.1} parent=5 // pred_region
      %s581 = ssub.s32 %s25, 1
      %s582 = smul.u32 2, %s35
      %p583 = scmp.lt.s32.totalorder %s34, 1
      %s584 = scalar_select %p583, %s34, 1
      %p585 = scmp.lt.s32.totalorder %s582, 1
      %s586 = scalar_select %p585, %s582, 1
      %s587 = smul.addr %s584, 4
      %s588 = sadd.s32 %s586, %s587
      %s589 = smul.addr %s588, 8
      %s590 = scalar_lea.vmem %s0, %s589
      %p591 = pneg %p65
      %p592 = pneg %p62
      %s593 = smul.u32 2, %s35
      %p594 = scmp.lt.s32.totalorder %s34, 1
      %s595 = scalar_select %p594, %s34, 1
      %p596 = scmp.lt.s32.totalorder %s593, 1
      %s597 = scalar_select %p596, %s593, 1
      %s598 = smul.addr %s595, 4
      %s599 = sadd.s32 %s597, %s598
      %s600 = smul.addr %s599, 8
      %s601 = scalar_lea.vmem %s1, %s600
      %p602 = pneg %p93
      %p603 = pneg %p90
      %s604 = smul.u32 2, %s35
      %p605 = scmp.lt.s32.totalorder %s34, 1
      %s606 = scalar_select %p605, %s34, 1
      %p607 = scmp.lt.s32.totalorder %s604, 1
      %s608 = scalar_select %p607, %s604, 1
      %s609 = smul.addr %s606, 24
      %s610 = sadd.s32 %s608, %s609
      %s611 = smul.addr %s610, 8
      %s612 = scalar_lea.vmem %s2, %s611
      %p613 = pneg %p121
      %p614 = pneg %p118
      %p615 = pneg %p142
      %p616 = pneg %p139
      %p617 = pneg %p163
      %p618 = pneg %p160
      %p619 = pneg %p184
      %p620 = pneg %p181
      %p621 = pneg %p205
      %p622 = pneg %p202
      %p623 = pneg %p226
      %p624 = pneg %p223
      %p625 = pneg %p247
      %p626 = pneg %p244
      %p627 = pneg %p268
      %p628 = pneg %p265
      %p629 = pneg %p289
      %p630 = pneg %p286
      %p631 = pneg %p310
      %p632 = pneg %p307
      %p633 = pneg %p331
      %p634 = pneg %p328
      %p635 = pneg %p352
      %p636 = pneg %p349
      %p637 = pneg %p373
      %p638 = pneg %p370
      %p639 = pneg %p394
      %p640 = pneg %p391
      %p641 = pneg %p422
      %p642 = pneg %p419
      %s643 = smul.u32 2, %s35
      %p644 = scmp.lt.s32.totalorder %s34, 1
      %s645 = scalar_select %p644, %s34, 1
      %p646 = scmp.lt.s32.totalorder %s643, 1
      %s647 = scalar_select %p646, %s643, 1
      %s648 = smul.addr %s645, 24
      %s649 = sadd.s32 %s647, %s648
      %s650 = smul.addr %s649, 8
      %s651 = scalar_lea.vmem %s16, %s650
      %p652 = pneg %p450
      %p653 = pneg %p447
      %s654 = smul.u32 2, %s35
      %p655 = scmp.lt.s32.totalorder %s34, 1
      %s656 = scalar_select %p655, %s34, 1
      %p657 = scmp.lt.s32.totalorder %s654, 1
      %s658 = scalar_select %p657, %s654, 1
      %s659 = smul.addr %s656, 2
      %s660 = sadd.s32 %s658, %s659
      %s661 = smul.addr %s660, 8
      %s662 = scalar_lea.vmem %s17, %s661
      %p663 = pneg %p478
      %p664 = pneg %p475
      %s665 = smul.u32 2, %s35
      %p666 = scmp.lt.s32.totalorder %s34, 1
      %s667 = scalar_select %p666, %s34, 1
      %p668 = scmp.lt.s32.totalorder %s665, 1
      %s669 = scalar_select %p668, %s665, 1
      %s670 = smul.addr %s667, 2
      %s671 = sadd.s32 %s669, %s670
      %s672 = smul.addr %s671, 4
      %s673 = scalar_lea.vmem %s18, %s672
      %s674 = smul.u32 2, %s35
      %p675 = scmp.lt.s32.totalorder %s34, 1
      %s676 = scalar_select %p675, %s34, 1
      %p677 = scmp.lt.s32.totalorder %s674, 1
      %s678 = scalar_select %p677, %s674, 1
      %s679 = smul.addr %s676, 4
      %s680 = sadd.s32 %s678, %s679
      %s681 = smul.addr %s680, 8
      %s682 = scalar_lea.vmem %s0, %s681
      %s683 = smul.u32 2, %s35
      %s684 = smul.u32 2, %s35
      %p685 = scmp.lt.s32.totalorder %s34, 1
      %s686 = scalar_select %p685, %s34, 1
      %p687 = scmp.lt.s32.totalorder %s684, 1
      %s688 = scalar_select %p687, %s684, 1
      %s689 = smul.addr %s686, 4
      %s690 = sadd.s32 %s688, %s689
      %s691 = smul.addr %s690, 8
      %s692 = scalar_lea.vmem %s1, %s691
      %s693 = smul.u32 2, %s35
      %s694 = smul.u32 2, %s35
      %p695 = scmp.lt.s32.totalorder %s34, 1
      %s696 = scalar_select %p695, %s34, 1
      %p697 = scmp.lt.s32.totalorder %s694, 1
      %s698 = scalar_select %p697, %s694, 1
      %s699 = smul.addr %s696, 24
      %s700 = sadd.s32 %s698, %s699
      %s701 = smul.addr %s700, 8
      %s702 = scalar_lea.vmem %s2, %s701
      %s703 = smul.u32 2, %s35
      %s704 = smul.u32 2, %s35
      %p705 = scmp.lt.s32.totalorder %s34, 1
      %s706 = scalar_select %p705, %s34, 1
      %p707 = scmp.lt.s32.totalorder %s704, 1
      %s708 = scalar_select %p707, %s704, 1
      %s709 = smul.addr %s706, 24
      %s710 = sadd.s32 %s708, %s709
      %s711 = smul.addr %s710, 8
      %s712 = scalar_lea.vmem %s16, %s711
      %s713 = smul.u32 2, %s35
      %s714 = smul.u32 2, %s35
      %p715 = scmp.lt.s32.totalorder %s34, 1
      %s716 = scalar_select %p715, %s34, 1
      %p717 = scmp.lt.s32.totalorder %s714, 1
      %s718 = scalar_select %p717, %s714, 1
      %s719 = smul.addr %s716, 2
      %s720 = sadd.s32 %s718, %s719
      %s721 = smul.addr %s720, 8
      %s722 = scalar_lea.vmem %s17, %s721
      %s723 = smul.u32 2, %s35
      %s724 = smul.u32 2, %s35
      %p725 = scmp.lt.s32.totalorder %s34, 1
      %s726 = scalar_select %p725, %s34, 1
      %p727 = scmp.lt.s32.totalorder %s724, 1
      %s728 = scalar_select %p727, %s724, 1
      %s729 = smul.addr %s726, 2
      %s730 = sadd.s32 %s728, %s729
      %s731 = smul.addr %s730, 4
      %s732 = scalar_lea.vmem %s18, %s731
      %s733 = smul.u32 2, %s35
      %v734 = vld [vmem:[%s682] sm:$0xff]
      %v735 = vld [vmem:[%s682 + $0x8] sm:$0xff]
      %v736 = vld [vmem:[%s682 + $0x10] sm:$0x3]
      %v737 = vld [vmem:[%s682 + $0x18] sm:$0x3]
      %v738 = vld [vmem:[%s692] sm:$0xff]
      %v739 = vld [vmem:[%s692 + $0x8] sm:$0xff]
      %v740 = vld [vmem:[%s692 + $0x10] sm:$0x3]
      %v741 = vld [vmem:[%s692 + $0x18] sm:$0x3]
      %v742 = vld [vmem:[%s3] sm:$0x1f]
      %v743 = vld [vmem:[%s4] sm:$0x1f]
      %745 = vset.pattern.permute.xlu0 0
      %746 = vperm.xlu0 %745, %v743
      %v747 = vpop.permute.xlu0 %746
      %vm749 = vcmask 80896
      %v751 = vsel %vm749, %v742, 0
      %vm753 = vcmask 1041408
      %v755 = vsel %vm753, %v736, 0
      %v758 = vsel %vm753, %v737, 0
      %760 = vmatprep.subr.mxu0 %v735
      %761 = vmatpush1.msra.mxu0 %v734
      %762 = vmatprep.subr.mxu0 %v758
      %763 = vmatpush1.msra.mxu0 %v755
      %764 = vmatprep.subr.mxu0 0.0
      %765 = vmatpush1.msra.mxu0 0.0
      %766 = vmatprep.subr.mxu0 0.0
      %767 = vmatpush1.msra.mxu0 0.0
      %768 = vmatprep.subr.mxu0 0.0
      %769 = vmatpush1.msra.mxu0 0.0
      %770 = vmatprep.subr.mxu0 0.0
      %771 = vmatpush1.msra.mxu0 0.0
      %772 = vmatprep.subr.mxu0 0.0
      %773 = vmatpush1.msra.mxu0 0.0
      %774 = vmatprep.subr.mxu0 0.0
      %775 = vmatpush1.msra.mxu0 0.0
      %776 = vmatprep.subr.mxu0 0.0
      %777 = vmatpush1.msra.mxu0 0.0
      %778 = vmatprep.subr.mxu0 0.0
      %779 = vmatpush1.msra.mxu0 0.0
      %780 = vmatprep.subr.mxu0 0.0
      %781 = vmatpush1.msra.mxu0 0.0
      %782 = vmatprep.subr.mxu0 0.0
      %783 = vmatpush1.msra.mxu0 0.0
      %784 = vmatprep.subr.mxu0 0.0
      %785 = vmatpush1.msra.mxu0 0.0
      %786 = vmatprep.subr.mxu0 0.0
      %787 = vmatpush1.msra.mxu0 0.0
      %788 = vmatprep.subr.mxu0 0.0
      %789 = vmatpush1.msra.mxu0 0.0
      %790 = vmatprep.subr.mxu0 0.0
      %791 = vmatpush1.msra.mxu0 0.0
      %792 = vmatprep.subr.mxu0 0.0
      %793 = vmatpush1.msra.mxu0 0.0
      %794 = vmatprep.subr.mxu0 0.0
      %795 = vmatpush1.msra.mxu0 0.0
      %796 = vmatprep.subr.mxu0 0.0
      %797 = vmatpush1.msra.mxu0 0.0
      %798 = vmatprep.subr.mxu0 0.0
      %799 = vmatpush1.msra.mxu0 0.0
      %800 = vmatprep.subr.mxu0 0.0
      %801 = vmatpush1.msra.mxu0 0.0
      %802 = vmatprep.subr.mxu0 0.0
      %803 = vmatpush1.msra.mxu0 0.0
      %804 = vmatprep.subr.mxu0 0.0
      %805 = vmatpush1.msra.mxu0 0.0
      %806 = vmatprep.subr.mxu0 0.0
      %807 = vmatpush1.msra.mxu0 0.0
      %808 = vmatprep.subr.mxu0 0.0
      %809 = vmatpush1.msra.mxu0 0.0
      %810 = vmatprep.subr.mxu0 0.0
      %811 = vmatpush1.msra.mxu0 0.0
      %812 = vmatprep.subr.mxu0 0.0
      %813 = vmatpush1.msra.mxu0 0.0
      %814 = vmatprep.subr.mxu0 0.0
      %815 = vmatpush1.msra.mxu0 0.0
      %816 = vmatprep.subr.mxu0 0.0
      %817 = vmatpush1.msra.mxu0 0.0
      %818 = vmatprep.subr.mxu0 0.0
      %819 = vmatpush1.msra.mxu0 0.0
      %820 = vmatprep.subr.mxu0 0.0
      %821 = vmatpush1.msra.mxu0 0.0
      %822 = vmatprep.subr.mxu0 0.0
      %823 = vmatpush1.msra.mxu0 0.0
      %824 = vmatprep.mubr.f32.mxu0 0.0
      %825 = vmatmul.mubr.f32.gmra.mrb[0].mxu0 %v751
      %v826 = vpop.f32.mrb[0].mxu0
      %v827 = vadd.f32 %v747, %v826
      %v828 = vpop.f32.mrb[0].mxu0
      %v829 = vadd.f32 %v747, %v828
      %830 = vdwg.mxu0
      %v831 = vld [vmem:[%s5] sm:$0x7]
      %v832 = vld [vmem:[%s6] sm:$0x7]
      %834 = vset.pattern.permute.xlu0 0
      %835 = vperm.xlu0 %834, %v832
      %v836 = vpop.permute.xlu0 %835
      %v839 = vsel %vm749, %v831, 0
      %v842 = vsel %vm753, %v740, 0
      %v845 = vsel %vm753, %v741, 0
      %847 = vmatprep.subr.mxu0 %v739
      %848 = vmatpush1.msra.mxu0 %v738
      %849 = vmatprep.subr.mxu0 %v845
      %850 = vmatpush1.msra.mxu0 %v842
      %851 = vmatprep.subr.mxu0 0.0
      %852 = vmatpush1.msra.mxu0 0.0
      %853 = vmatprep.subr.mxu0 0.0
      %854 = vmatpush1.msra.mxu0 0.0
      %855 = vmatprep.subr.mxu0 0.0
      %856 = vmatpush1.msra.mxu0 0.0
      %857 = vmatprep.subr.mxu0 0.0
      %858 = vmatpush1.msra.mxu0 0.0
      %859 = vmatprep.subr.mxu0 0.0
      %860 = vmatpush1.msra.mxu0 0.0
      %861 = vmatprep.subr.mxu0 0.0
      %862 = vmatpush1.msra.mxu0 0.0
      %863 = vmatprep.subr.mxu0 0.0
      %864 = vmatpush1.msra.mxu0 0.0
      %865 = vmatprep.subr.mxu0 0.0
      %866 = vmatpush1.msra.mxu0 0.0
      %867 = vmatprep.subr.mxu0 0.0
      %868 = vmatpush1.msra.mxu0 0.0
      %869 = vmatprep.subr.mxu0 0.0
      %870 = vmatpush1.msra.mxu0 0.0
      %871 = vmatprep.subr.mxu0 0.0
      %872 = vmatpush1.msra.mxu0 0.0
      %873 = vmatprep.subr.mxu0 0.0
      %874 = vmatpush1.msra.mxu0 0.0
      %875 = vmatprep.subr.mxu0 0.0
      %876 = vmatpush1.msra.mxu0 0.0
      %877 = vmatprep.subr.mxu0 0.0
      %878 = vmatpush1.msra.mxu0 0.0
      %879 = vmatprep.subr.mxu0 0.0
      %880 = vmatpush1.msra.mxu0 0.0
      %881 = vmatprep.subr.mxu0 0.0
      %882 = vmatpush1.msra.mxu0 0.0
      %883 = vmatprep.subr.mxu0 0.0
      %884 = vmatpush1.msra.mxu0 0.0
      %885 = vmatprep.subr.mxu0 0.0
      %886 = vmatpush1.msra.mxu0 0.0
      %887 = vmatprep.subr.mxu0 0.0
      %888 = vmatpush1.msra.mxu0 0.0
      %889 = vmatprep.subr.mxu0 0.0
      %890 = vmatpush1.msra.mxu0 0.0
      %891 = vmatprep.subr.mxu0 0.0
      %892 = vmatpush1.msra.mxu0 0.0
      %893 = vmatprep.subr.mxu0 0.0
      %894 = vmatpush1.msra.mxu0 0.0
      %895 = vmatprep.subr.mxu0 0.0
      %896 = vmatpush1.msra.mxu0 0.0
      %897 = vmatprep.subr.mxu0 0.0
      %898 = vmatpush1.msra.mxu0 0.0
      %899 = vmatprep.subr.mxu0 0.0
      %900 = vmatpush1.msra.mxu0 0.0
      %901 = vmatprep.subr.mxu0 0.0
      %902 = vmatpush1.msra.mxu0 0.0
      %903 = vmatprep.subr.mxu0 0.0
      %904 = vmatpush1.msra.mxu0 0.0
      %905 = vmatprep.subr.mxu0 0.0
      %906 = vmatpush1.msra.mxu0 0.0
      %907 = vmatprep.subr.mxu0 0.0
      %908 = vmatpush1.msra.mxu0 0.0
      %909 = vmatprep.subr.mxu0 0.0
      %910 = vmatpush1.msra.mxu0 0.0
      %911 = vmatprep.mubr.f32.mxu0 0.0
      %912 = vmatmul.mubr.f32.gmra.mrb[0].mxu0 %v839
      %v913 = vpop.f32.mrb[0].mxu0
      %v914 = vadd.f32 %v836, %v913
      %v915 = vpop.f32.mrb[0].mxu0
      %v916 = vadd.f32 %v836, %v915
      %917 = vdwg.mxu0
      %918 = vst [vmem:[%s722] sm:$0x1f] %v827
      %919 = vst [vmem:[%s722 + $0x8] sm:$0x1f] %v829
      %v922 = vcombine.low %v914, %v916
      %924 = vst [vmem:[%s732] sm:$0x77] %v922
      %vm925 = vcmask 1044480
      %v926 = vsel %vm925, %v827, -inf
      %v927 = vrot.slane %v926, 4
      %v928 = vmax.f32 %v926, %v927
      %v929 = vrot.slane %v928, 2
      %v930 = vmax.f32 %v928, %v929
      %v931 = vrot.slane %v930, 1
      %v932 = vmax.f32 %v930, %v931
      %v933 = vsel %vm925, %v829, -inf
      %v934 = vrot.slane %v933, 4
      %v935 = vmax.f32 %v933, %v934
      %v936 = vrot.slane %v935, 2
      %v937 = vmax.f32 %v935, %v936
      %v938 = vrot.slane %v937, 1
      %v939 = vmax.f32 %v937, %v938
      %v940 = vsub.f32 %v827, %v932
      %v941 = vsub.f32 %v829, %v939
      %v942 = vmul.f32 %v940, 1.442695
      %v943 = vpow.pop %v942
      %v944 = vmul.f32 %v941, 1.442695
      %v945 = vpow.pop %v944
      %v946 = vsel %vm925, %v943, 0.0
      %v947 = vrot.slane %v946, 4
      %v948 = vadd.f32 %v946, %v947
      %v949 = vrot.slane %v948, 2
      %v950 = vadd.f32 %v948, %v949
      %v951 = vrot.slane %v950, 1
      %v952 = vadd.f32 %v950, %v951
      %v953 = vsel %vm925, %v945, 0.0
      %v954 = vrot.slane %v953, 4
      %v955 = vadd.f32 %v953, %v954
      %v956 = vrot.slane %v955, 2
      %v957 = vadd.f32 %v955, %v956
      %v958 = vrot.slane %v957, 1
      %v959 = vadd.f32 %v957, %v958
      %v960 = vrcp.pop %v952
      %v961 = vrcp.pop %v959
      %v962 = vmul.f32 %v943, %v960
      %v963 = vmul.f32 %v945, %v961
      %vm964 = vcmask 1042432
      %v965 = vsel %vm964, %v914, -inf
      %v966 = vrot.slane %v965, 4
      %v967 = vmax.f32 %v965, %v966
      %v968 = vrot.slane %v967, 2
      %v969 = vmax.f32 %v967, %v968
      %v970 = vrot.slane %v969, 1
      %v971 = vmax.f32 %v969, %v970
      %v972 = vsel %vm964, %v916, -inf
      %v973 = vrot.slane %v972, 4
      %v974 = vmax.f32 %v972, %v973
      %v975 = vrot.slane %v974, 2
      %v976 = vmax.f32 %v974, %v975
      %v977 = vrot.slane %v976, 1
      %v978 = vmax.f32 %v976, %v977
      %v979 = vsub.f32 %v914, %v971
      %v980 = vsub.f32 %v916, %v978
      %v981 = vmul.f32 %v979, 1.442695
      %v982 = vpow.pop %v981
      %v983 = vmul.f32 %v980, 1.442695
      %v984 = vpow.pop %v983
      %v985 = vsel %vm964, %v982, 0.0
      %v986 = vrot.slane %v985, 4
      %v987 = vadd.f32 %v985, %v986
      %v988 = vrot.slane %v987, 2
      %v989 = vadd.f32 %v987, %v988
      %v990 = vrot.slane %v989, 1
      %v991 = vadd.f32 %v989, %v990
      %v992 = vsel %vm964, %v984, 0.0
      %v993 = vrot.slane %v992, 4
      %v994 = vadd.f32 %v992, %v993
      %v995 = vrot.slane %v994, 2
      %v996 = vadd.f32 %v994, %v995
      %v997 = vrot.slane %v996, 1
      %v998 = vadd.f32 %v996, %v997
      %v999 = vrcp.pop %v991
      %v1000 = vrcp.pop %v998
      %v1001 = vmul.f32 %v982, %v999
      %v1002 = vmul.f32 %v984, %v1000
      %v1003 = vld [vmem:[%s7] sm:$0xff]
      %v1004 = vld [vmem:[%s7 + $0x8] sm:$0xff]
      %v1005 = vld [vmem:[%s7 + $0x10] sm:$0xff]
      %v1006 = vld [vmem:[%s7 + $0x18] sm:$0xff]
      %v1008 = vsel %vm749, %v1003, 0
      %v1011 = vsel %vm749, %v1004, 0
      %v1014 = vsel %vm749, %v1005, 0
      %v1017 = vsel %vm749, %v1006, 0
      %1019 = vmatprep.subr.mxu0 %v735
      %1020 = vmatpush1.msra.mxu0 %v734
      %1021 = vmatprep.subr.mxu0 %v758
      %1022 = vmatpush1.msra.mxu0 %v755
      %1023 = vmatprep.subr.mxu0 0.0
      %1024 = vmatpush1.msra.mxu0 0.0
      %1025 = vmatprep.subr.mxu0 0.0
      %1026 = vmatpush1.msra.mxu0 0.0
      %1027 = vmatprep.subr.mxu0 0.0
      %1028 = vmatpush1.msra.mxu0 0.0
      %1029 = vmatprep.subr.mxu0 0.0
      %1030 = vmatpush1.msra.mxu0 0.0
      %1031 = vmatprep.subr.mxu0 0.0
      %1032 = vmatpush1.msra.mxu0 0.0
      %1033 = vmatprep.subr.mxu0 0.0
      %1034 = vmatpush1.msra.mxu0 0.0
      %1035 = vmatprep.subr.mxu0 0.0
      %1036 = vmatpush1.msra.mxu0 0.0
      %1037 = vmatprep.subr.mxu0 0.0
      %1038 = vmatpush1.msra.mxu0 0.0
      %1039 = vmatprep.subr.mxu0 0.0
      %1040 = vmatpush1.msra.mxu0 0.0
      %1041 = vmatprep.subr.mxu0 0.0
      %1042 = vmatpush1.msra.mxu0 0.0
      %1043 = vmatprep.subr.mxu0 0.0
      %1044 = vmatpush1.msra.mxu0 0.0
      %1045 = vmatprep.subr.mxu0 0.0
      %1046 = vmatpush1.msra.mxu0 0.0
      %1047 = vmatprep.subr.mxu0 0.0
      %1048 = vmatpush1.msra.mxu0 0.0
      %1049 = vmatprep.subr.mxu0 0.0
      %1050 = vmatpush1.msra.mxu0 0.0
      %1051 = vmatprep.subr.mxu0 0.0
      %1052 = vmatpush1.msra.mxu0 0.0
      %1053 = vmatprep.subr.mxu0 0.0
      %1054 = vmatpush1.msra.mxu0 0.0
      %1055 = vmatprep.subr.mxu0 0.0
      %1056 = vmatpush1.msra.mxu0 0.0
      %1057 = vmatprep.subr.mxu0 0.0
      %1058 = vmatpush1.msra.mxu0 0.0
      %1059 = vmatprep.subr.mxu0 0.0
      %1060 = vmatpush1.msra.mxu0 0.0
      %1061 = vmatprep.subr.mxu0 0.0
      %1062 = vmatpush1.msra.mxu0 0.0
      %1063 = vmatprep.subr.mxu0 0.0
      %1064 = vmatpush1.msra.mxu0 0.0
      %1065 = vmatprep.subr.mxu0 0.0
      %1066 = vmatpush1.msra.mxu0 0.0
      %1067 = vmatprep.subr.mxu0 0.0
      %1068 = vmatpush1.msra.mxu0 0.0
      %1069 = vmatprep.subr.mxu0 0.0
      %1070 = vmatpush1.msra.mxu0 0.0
      %1071 = vmatprep.subr.mxu0 0.0
      %1072 = vmatpush1.msra.mxu0 0.0
      %1073 = vmatprep.subr.mxu0 0.0
      %1074 = vmatpush1.msra.mxu0 0.0
      %1075 = vmatprep.subr.mxu0 0.0
      %1076 = vmatpush1.msra.mxu0 0.0
      %1077 = vmatprep.subr.mxu0 0.0
      %1078 = vmatpush1.msra.mxu0 0.0
      %1079 = vmatprep.subr.mxu0 0.0
      %1080 = vmatpush1.msra.mxu0 0.0
      %1081 = vmatprep.subr.mxu0 0.0
      %1082 = vmatpush1.msra.mxu0 0.0
      %1083 = vmatprep.mubr.f32.mxu0 0.0
      %1084 = vmatmul.mubr.f32.gmra.mrb[0].mxu0 %v1008
      %v1085 = vpop.f32.mrb[0].mxu0
      %v1086 = vadd.f32 0.0, %v1085
      %v1087 = vpop.f32.mrb[0].mxu0
      %v1088 = vadd.f32 0.0, %v1087
      %1089 = vmatprep.mubr.f32.mxu0 0.0
      %1090 = vmatmul.mubr.f32.gmra.mrb[0].mxu0 %v1011
      %v1091 = vpop.f32.mrb[0].mxu0
      %v1092 = vadd.f32 0.0, %v1091
      %v1093 = vpop.f32.mrb[0].mxu0
      %v1094 = vadd.f32 0.0, %v1093
      %1095 = vmatprep.mubr.f32.mxu0 0.0
      %1096 = vmatmul.mubr.f32.gmra.mrb[0].mxu0 %v1014
      %v1097 = vpop.f32.mrb[0].mxu0
      %v1098 = vadd.f32 0.0, %v1097
      %v1099 = vpop.f32.mrb[0].mxu0
      %v1100 = vadd.f32 0.0, %v1099
      %1101 = vmatprep.mubr.f32.mxu0 0.0
      %1102 = vmatmul.mubr.f32.gmra.mrb[0].mxu0 %v1017
      %v1103 = vpop.f32.mrb[0].mxu0
      %v1104 = vadd.f32 0.0, %v1103
      %v1105 = vpop.f32.mrb[0].mxu0
      %v1106 = vadd.f32 0.0, %v1105
      %1107 = vdwg.mxu0
      %s1108 = scalar_lea.vmem %s7, 32
      %v1109 = vld [vmem:[%s1108] sm:$0xff]
      %v1110 = vld [vmem:[%s1108 + $0x8] sm:$0xff]
      %v1111 = vld [vmem:[%s1108 + $0x10] sm:$0xff]
      %v1112 = vld [vmem:[%s1108 + $0x18] sm:$0xff]
      %v1114 = vsel %vm749, %v1109, 0
      %v1117 = vsel %vm749, %v1110, 0
      %v1120 = vsel %vm749, %v1111, 0
      %v1123 = vsel %vm749, %v1112, 0
      %1125 = vmatprep.subr.mxu0 %v739
      %1126 = vmatpush1.msra.mxu0 %v738
      %1127 = vmatprep.subr.mxu0 %v845
      %1128 = vmatpush1.msra.mxu0 %v842
      %1129 = vmatprep.subr.mxu0 0.0
      %1130 = vmatpush1.msra.mxu0 0.0
      %1131 = vmatprep.subr.mxu0 0.0
      %1132 = vmatpush1.msra.mxu0 0.0
      %1133 = vmatprep.subr.mxu0 0.0
      %1134 = vmatpush1.msra.mxu0 0.0
      %1135 = vmatprep.subr.mxu0 0.0
      %1136 = vmatpush1.msra.mxu0 0.0
      %1137 = vmatprep.subr.mxu0 0.0
      %1138 = vmatpush1.msra.mxu0 0.0
      %1139 = vmatprep.subr.mxu0 0.0
      %1140 = vmatpush1.msra.mxu0 0.0
      %1141 = vmatprep.subr.mxu0 0.0
      %1142 = vmatpush1.msra.mxu0 0.0
      %1143 = vmatprep.subr.mxu0 0.0
      %1144 = vmatpush1.msra.mxu0 0.0
      %1145 = vmatprep.subr.mxu0 0.0
      %1146 = vmatpush1.msra.mxu0 0.0
      %1147 = vmatprep.subr.mxu0 0.0
      %1148 = vmatpush1.msra.mxu0 0.0
      %1149 = vmatprep.subr.mxu0 0.0
      %1150 = vmatpush1.msra.mxu0 0.0
      %1151 = vmatprep.subr.mxu0 0.0
      %1152 = vmatpush1.msra.mxu0 0.0
      %1153 = vmatprep.subr.mxu0 0.0
      %1154 = vmatpush1.msra.mxu0 0.0
      %1155 = vmatprep.subr.mxu0 0.0
      %1156 = vmatpush1.msra.mxu0 0.0
      %1157 = vmatprep.subr.mxu0 0.0
      %1158 = vmatpush1.msra.mxu0 0.0
      %1159 = vmatprep.subr.mxu0 0.0
      %1160 = vmatpush1.msra.mxu0 0.0
      %1161 = vmatprep.subr.mxu0 0.0
      %1162 = vmatpush1.msra.mxu0 0.0
      %1163 = vmatprep.subr.mxu0 0.0
      %1164 = vmatpush1.msra.mxu0 0.0
      %1165 = vmatprep.subr.mxu0 0.0
      %1166 = vmatpush1.msra.mxu0 0.0
      %1167 = vmatprep.subr.mxu0 0.0
      %1168 = vmatpush1.msra.mxu0 0.0
      %1169 = vmatprep.subr.mxu0 0.0
      %1170 = vmatpush1.msra.mxu0 0.0
      %1171 = vmatprep.subr.mxu0 0.0
      %1172 = vmatpush1.msra.mxu0 0.0
      %1173 = vmatprep.subr.mxu0 0.0
      %1174 = vmatpush1.msra.mxu0 0.0
      %1175 = vmatprep.subr.mxu0 0.0
      %1176 = vmatpush1.msra.mxu0 0.0
      %1177 = vmatprep.subr.mxu0 0.0
      %1178 = vmatpush1.msra.mxu0 0.0
      %1179 = vmatprep.subr.mxu0 0.0
      %1180 = vmatpush1.msra.mxu0 0.0
      %1181 = vmatprep.subr.mxu0 0.0
      %1182 = vmatpush1.msra.mxu0 0.0
      %1183 = vmatprep.subr.mxu0 0.0
      %1184 = vmatpush1.msra.mxu0 0.0
      %1185 = vmatprep.subr.mxu0 0.0
      %1186 = vmatpush1.msra.mxu0 0.0
      %1187 = vmatprep.subr.mxu0 0.0
      %1188 = vmatpush1.msra.mxu0 0.0
      %1189 = vmatprep.mubr.f32.mxu0 0.0
      %1190 = vmatmul.mubr.f32.gmra.mrb[0].mxu0 %v1114
      %v1191 = vpop.f32.mrb[0].mxu0
      %v1192 = vadd.f32 0.0, %v1191
      %v1193 = vpop.f32.mrb[0].mxu0
      %v1194 = vadd.f32 0.0, %v1193
      %1195 = vmatprep.mubr.f32.mxu0 0.0
      %1196 = vmatmul.mubr.f32.gmra.mrb[0].mxu0 %v1117
      %v1197 = vpop.f32.mrb[0].mxu0
      %v1198 = vadd.f32 0.0, %v1197
      %v1199 = vpop.f32.mrb[0].mxu0
      %v1200 = vadd.f32 0.0, %v1199
      %1201 = vmatprep.mubr.f32.mxu0 0.0
      %1202 = vmatmul.mubr.f32.gmra.mrb[0].mxu0 %v1120
      %v1203 = vpop.f32.mrb[0].mxu0
      %v1204 = vadd.f32 0.0, %v1203
      %v1205 = vpop.f32.mrb[0].mxu0
      %v1206 = vadd.f32 0.0, %v1205
      %1207 = vmatprep.mubr.f32.mxu0 0.0
      %1208 = vmatmul.mubr.f32.gmra.mrb[0].mxu0 %v1123
      %v1209 = vpop.f32.mrb[0].mxu0
      %v1210 = vadd.f32 0.0, %v1209
      %v1211 = vpop.f32.mrb[0].mxu0
      %v1212 = vadd.f32 0.0, %v1211
      %1213 = vdwg.mxu0
      %v1214 = vld [vmem:[%s702] sm:$0xff]
      %v1215 = vld [vmem:[%s702 + $0x8] sm:$0xff]
      %v1216 = vld [vmem:[%s702 + $0x10] sm:$0x3]
      %v1217 = vld [vmem:[%s702 + $0x18] sm:$0x3]
      %v1218 = vld [vmem:[%s8] sm:$0xff]
      %v1219 = vld [vmem:[%s8 + $0x8] sm:$0xff]
      %v1220 = vld [vmem:[%s8 + $0x10] sm:$0xff]
      %v1221 = vld [vmem:[%s8 + $0x18] sm:$0xff]
      %v1223 = vsel %vm749, %v1218, 0
      %v1226 = vsel %vm749, %v1219, 0
      %v1229 = vsel %vm749, %v1220, 0
      %v1232 = vsel %vm749, %v1221, 0
      %v1235 = vsel %vm753, %v1216, 0
      %v1238 = vsel %vm753, %v1217, 0
      %1240 = vmatprep.subr.mxu0 %v1215
      %1241 = vmatpush1.msra.mxu0 %v1214
      %1242 = vmatprep.subr.mxu0 %v1238
      %1243 = vmatpush1.msra.mxu0 %v1235
      %1244 = vmatprep.subr.mxu0 0.0
      %1245 = vmatpush1.msra.mxu0 0.0
      %1246 = vmatprep.subr.mxu0 0.0
      %1247 = vmatpush1.msra.mxu0 0.0
      %1248 = vmatprep.subr.mxu0 0.0
      %1249 = vmatpush1.msra.mxu0 0.0
      %1250 = vmatprep.subr.mxu0 0.0
      %1251 = vmatpush1.msra.mxu0 0.0
      %1252 = vmatprep.subr.mxu0 0.0
      %1253 = vmatpush1.msra.mxu0 0.0
      %1254 = vmatprep.subr.mxu0 0.0
      %1255 = vmatpush1.msra.mxu0 0.0
      %1256 = vmatprep.subr.mxu0 0.0
      %1257 = vmatpush1.msra.mxu0 0.0
      %1258 = vmatprep.subr.mxu0 0.0
      %1259 = vmatpush1.msra.mxu0 0.0
      %1260 = vmatprep.subr.mxu0 0.0
      %1261 = vmatpush1.msra.mxu0 0.0
      %1262 = vmatprep.subr.mxu0 0.0
      %1263 = vmatpush1.msra.mxu0 0.0
      %1264 = vmatprep.subr.mxu0 0.0
      %1265 = vmatpush1.msra.mxu0 0.0
      %1266 = vmatprep.subr.mxu0 0.0
      %1267 = vmatpush1.msra.mxu0 0.0
      %1268 = vmatprep.subr.mxu0 0.0
      %1269 = vmatpush1.msra.mxu0 0.0
      %1270 = vmatprep.subr.mxu0 0.0
      %1271 = vmatpush1.msra.mxu0 0.0
      %1272 = vmatprep.subr.mxu0 0.0
      %1273 = vmatpush1.msra.mxu0 0.0
      %1274 = vmatprep.subr.mxu0 0.0
      %1275 = vmatpush1.msra.mxu0 0.0
      %1276 = vmatprep.subr.mxu0 0.0
      %1277 = vmatpush1.msra.mxu0 0.0
      %1278 = vmatprep.subr.mxu0 0.0
      %1279 = vmatpush1.msra.mxu0 0.0
      %1280 = vmatprep.subr.mxu0 0.0
      %1281 = vmatpush1.msra.mxu0 0.0
      %1282 = vmatprep.subr.mxu0 0.0
      %1283 = vmatpush1.msra.mxu0 0.0
      %1284 = vmatprep.subr.mxu0 0.0
      %1285 = vmatpush1.msra.mxu0 0.0
      %1286 = vmatprep.subr.mxu0 0.0
      %1287 = vmatpush1.msra.mxu0 0.0
      %1288 = vmatprep.subr.mxu0 0.0
      %1289 = vmatpush1.msra.mxu0 0.0
      %1290 = vmatprep.subr.mxu0 0.0
      %1291 = vmatpush1.msra.mxu0 0.0
      %1292 = vmatprep.subr.mxu0 0.0
      %1293 = vmatpush1.msra.mxu0 0.0
      %1294 = vmatprep.subr.mxu0 0.0
      %1295 = vmatpush1.msra.mxu0 0.0
      %1296 = vmatprep.subr.mxu0 0.0
      %1297 = vmatpush1.msra.mxu0 0.0
      %1298 = vmatprep.subr.mxu0 0.0
      %1299 = vmatpush1.msra.mxu0 0.0
      %1300 = vmatprep.subr.mxu0 0.0
      %1301 = vmatpush1.msra.mxu0 0.0
      %1302 = vmatprep.subr.mxu0 0.0
      %1303 = vmatpush1.msra.mxu0 0.0
      %1304 = vmatprep.mubr.f32.mxu0 0.0
      %1305 = vmatmul.mubr.f32.gmra.mrb[0].mxu0 %v1223
      %v1306 = vpop.f32.mrb[0].mxu0
      %v1307 = vadd.f32 0.0, %v1306
      %v1308 = vpop.f32.mrb[0].mxu0
      %v1309 = vadd.f32 0.0, %v1308
      %1310 = vmatprep.mubr.f32.mxu0 0.0
      %1311 = vmatmul.mubr.f32.gmra.mrb[0].mxu0 %v1226
      %v1312 = vpop.f32.mrb[0].mxu0
      %v1313 = vadd.f32 0.0, %v1312
      %v1314 = vpop.f32.mrb[0].mxu0
      %v1315 = vadd.f32 0.0, %v1314
      %1316 = vmatprep.mubr.f32.mxu0 0.0
      %1317 = vmatmul.mubr.f32.gmra.mrb[0].mxu0 %v1229
      %v1318 = vpop.f32.mrb[0].mxu0
      %v1319 = vadd.f32 0.0, %v1318
      %v1320 = vpop.f32.mrb[0].mxu0
      %v1321 = vadd.f32 0.0, %v1320
      %1322 = vmatprep.mubr.f32.mxu0 0.0
      %1323 = vmatmul.mubr.f32.gmra.mrb[0].mxu0 %v1232
      %v1324 = vpop.f32.mrb[0].mxu0
      %v1325 = vadd.f32 0.0, %v1324
      %v1326 = vpop.f32.mrb[0].mxu0
      %v1327 = vadd.f32 0.0, %v1326
      %1328 = vdwg.mxu0
      %v1329 = vlaneseq
      %v1330 = vshrl.u32 %v1329, 7
      %v1331 = vsub.s32 1, %v1330
      %v1332 = vrot.slane %v962, %v1331
      %v1333 = vlaneseq
      %v1334 = vshrl.u32 %v1333, 7
      %v1335 = vsub.s32 1, %v1334
      %v1336 = vrot.slane %v963, %v1335
      %v1337 = vmul.f32 %v1086, %v1332
      %v1338 = vmul.f32 %v1088, %v1336
      %v1339 = vmul.f32 %v1092, %v1332
      %v1340 = vmul.f32 %v1094, %v1336
      %v1341 = vmul.f32 %v1098, %v1332
      %v1342 = vmul.f32 %v1100, %v1336
      %v1343 = vmul.f32 %v1104, %v1332
      %v1344 = vmul.f32 %v1106, %v1336
      %v1345 = vadd.f32 %v1337, %v1307
      %v1346 = vadd.f32 %v1338, %v1309
      %v1347 = vadd.f32 %v1339, %v1313
      %v1348 = vadd.f32 %v1340, %v1315
      %v1349 = vadd.f32 %v1341, %v1319
      %v1350 = vadd.f32 %v1342, %v1321
      %v1351 = vadd.f32 %v1343, %v1325
      %v1352 = vadd.f32 %v1344, %v1327
      %v1353 = vld [vmem:[%s9] sm:$0xff]
      %v1354 = vld [vmem:[%s9 + $0x8] sm:$0xff]
      %v1355 = vld [vmem:[%s9 + $0x10] sm:$0xff]
      %v1356 = vld [vmem:[%s9 + $0x18] sm:$0xff]
      %1358 = vset.pattern.permute.xlu0 0
      %1359 = vperm.xlu0 %1358, %v1353
      %v1360 = vpop.permute.xlu0 %1359
      %1363 = vset.pattern.permute.xlu0 0
      %1364 = vperm.xlu0 %1363, %v1354
      %v1365 = vpop.permute.xlu0 %1364
      %1368 = vset.pattern.permute.xlu0 0
      %1369 = vperm.xlu0 %1368, %v1355
      %v1370 = vpop.permute.xlu0 %1369
      %1373 = vset.pattern.permute.xlu0 0
      %1374 = vperm.xlu0 %1373, %v1356
      %v1375 = vpop.permute.xlu0 %1374
      %v1377 = vadd.f32 %v1345, %v1360
      %v1378 = vadd.f32 %v1346, %v1360
      %v1379 = vadd.f32 %v1347, %v1365
      %v1380 = vadd.f32 %v1348, %v1365
      %v1381 = vadd.f32 %v1349, %v1370
      %v1382 = vadd.f32 %v1350, %v1370
      %v1383 = vadd.f32 %v1351, %v1375
      %v1384 = vadd.f32 %v1352, %v1375
      %v1385 = vmax.f32 %v1377, 0.0
      %v1386 = vmax.f32 %v1378, 0.0
      %v1387 = vmax.f32 %v1379, 0.0
      %v1388 = vmax.f32 %v1380, 0.0
      %v1389 = vmax.f32 %v1381, 0.0
      %v1390 = vmax.f32 %v1382, 0.0
      %v1391 = vmax.f32 %v1383, 0.0
      %v1392 = vmax.f32 %v1384, 0.0
      %v1393 = vld [vmem:[%s10] sm:$0xff]
      %v1394 = vld [vmem:[%s10 + $0x8] sm:$0xff]
      %v1395 = vld [vmem:[%s11] sm:$0xff]
      %v1396 = vld [vmem:[%s11 + $0x8] sm:$0xff]
      %1398 = vset.pattern.permute.xlu0 0
      %1399 = vperm.xlu0 %1398, %v1395
      %v1400 = vpop.permute.xlu0 %1399
      %1403 = vset.pattern.permute.xlu0 0
      %1404 = vperm.xlu0 %1403, %v1396
      %v1405 = vpop.permute.xlu0 %1404
      %vm1407 = vcmask 261120
      %v1409 = vsel %vm1407, %v1393, 0
      %v1412 = vsel %vm1407, %v1394, 0
      %1414 = vmatprep.subr.mxu0 %v1386
      %1415 = vmatpush1.msra.mxu0 %v1385
      %1416 = vmatprep.subr.mxu0 %v1388
      %1417 = vmatpush1.msra.mxu0 %v1387
      %1418 = vmatprep.subr.mxu0 %v1390
      %1419 = vmatpush1.msra.mxu0 %v1389
      %1420 = vmatprep.subr.mxu0 %v1392
      %1421 = vmatpush1.msra.mxu0 %v1391
      %1422 = vmatprep.subr.mxu0 0.0
      %1423 = vmatpush1.msra.mxu0 0.0
      %1424 = vmatprep.subr.mxu0 0.0
      %1425 = vmatpush1.msra.mxu0 0.0
      %1426 = vmatprep.subr.mxu0 0.0
      %1427 = vmatpush1.msra.mxu0 0.0
      %1428 = vmatprep.subr.mxu0 0.0
      %1429 = vmatpush1.msra.mxu0 0.0
      %1430 = vmatprep.subr.mxu0 0.0
      %1431 = vmatpush1.msra.mxu0 0.0
      %1432 = vmatprep.subr.mxu0 0.0
      %1433 = vmatpush1.msra.mxu0 0.0
      %1434 = vmatprep.subr.mxu0 0.0
      %1435 = vmatpush1.msra.mxu0 0.0
      %1436 = vmatprep.subr.mxu0 0.0
      %1437 = vmatpush1.msra.mxu0 0.0
      %1438 = vmatprep.subr.mxu0 0.0
      %1439 = vmatpush1.msra.mxu0 0.0
      %1440 = vmatprep.subr.mxu0 0.0
      %1441 = vmatpush1.msra.mxu0 0.0
      %1442 = vmatprep.subr.mxu0 0.0
      %1443 = vmatpush1.msra.mxu0 0.0
      %1444 = vmatprep.subr.mxu0 0.0
      %1445 = vmatpush1.msra.mxu0 0.0
      %1446 = vmatprep.subr.mxu0 0.0
      %1447 = vmatpush1.msra.mxu0 0.0
      %1448 = vmatprep.subr.mxu0 0.0
      %1449 = vmatpush1.msra.mxu0 0.0
      %1450 = vmatprep.subr.mxu0 0.0
      %1451 = vmatpush1.msra.mxu0 0.0
      %1452 = vmatprep.subr.mxu0 0.0
      %1453 = vmatpush1.msra.mxu0 0.0
      %1454 = vmatprep.subr.mxu0 0.0
      %1455 = vmatpush1.msra.mxu0 0.0
      %1456 = vmatprep.subr.mxu0 0.0
      %1457 = vmatpush1.msra.mxu0 0.0
      %1458 = vmatprep.subr.mxu0 0.0
      %1459 = vmatpush1.msra.mxu0 0.0
      %1460 = vmatprep.subr.mxu0 0.0
      %1461 = vmatpush1.msra.mxu0 0.0
      %1462 = vmatprep.subr.mxu0 0.0
      %1463 = vmatpush1.msra.mxu0 0.0
      %1464 = vmatprep.subr.mxu0 0.0
      %1465 = vmatpush1.msra.mxu0 0.0
      %1466 = vmatprep.subr.mxu0 0.0
      %1467 = vmatpush1.msra.mxu0 0.0
      %1468 = vmatprep.subr.mxu0 0.0
      %1469 = vmatpush1.msra.mxu0 0.0
      %1470 = vmatprep.subr.mxu0 0.0
      %1471 = vmatpush1.msra.mxu0 0.0
      %1472 = vmatprep.subr.mxu0 0.0
      %1473 = vmatpush1.msra.mxu0 0.0
      %1474 = vmatprep.subr.mxu0 0.0
      %1475 = vmatpush1.msra.mxu0 0.0
      %1476 = vmatprep.subr.mxu0 0.0
      %1477 = vmatpush1.msra.mxu0 0.0
      %1478 = vmatprep.mubr.f32.mxu0 0.0
      %1479 = vmatmul.mubr.f32.gmra.mrb[0].mxu0 %v1409
      %v1480 = vpop.f32.mrb[0].mxu0
      %v1481 = vadd.f32 %v1400, %v1480
      %v1482 = vpop.f32.mrb[0].mxu0
      %v1483 = vadd.f32 %v1400, %v1482
      %1484 = vmatprep.mubr.f32.mxu0 0.0
      %1485 = vmatmul.mubr.f32.gmra.mrb[0].mxu0 %v1412
      %v1486 = vpop.f32.mrb[0].mxu0
      %v1487 = vadd.f32 %v1405, %v1486
      %v1488 = vpop.f32.mrb[0].mxu0
      %v1489 = vadd.f32 %v1405, %v1488
      %1490 = vdwg.mxu0
      %v1491 = vmax.f32 %v1481, 0.0
      %v1492 = vmax.f32 %v1483, 0.0
      %v1493 = vmax.f32 %v1487, 0.0
      %v1494 = vmax.f32 %v1489, 0.0
      %v1495 = vld [vmem:[%s12] sm:$0xff]
      %v1496 = vld [vmem:[%s12 + $0x8] sm:$0xff]
      %v1497 = vld [vmem:[%s12 + $0x10] sm:$0xff]
      %v1498 = vld [vmem:[%s12 + $0x18] sm:$0xff]
      %v1499 = vld [vmem:[%s12 + $0x20] sm:$0xff]
      %v1500 = vld [vmem:[%s12 + $0x28] sm:$0xff]
      %v1501 = vld [vmem:[%s15] sm:$0xff]
      %v1502 = vld [vmem:[%s15 + $0x8] sm:$0xff]
      %v1503 = vld [vmem:[%s15 + $0x10] sm:$0xff]
      %v1504 = vld [vmem:[%s15 + $0x18] sm:$0xff]
      %v1505 = vld [vmem:[%s15 + $0x20] sm:$0xff]
      %v1506 = vld [vmem:[%s15 + $0x28] sm:$0xff]
      %1508 = vset.pattern.permute.xlu0 0
      %1509 = vperm.xlu0 %1508, %v1501
      %v1510 = vpop.permute.xlu0 %1509
      %1513 = vset.pattern.permute.xlu0 0
      %1514 = vperm.xlu0 %1513, %v1502
      %v1515 = vpop.permute.xlu0 %1514
      %1518 = vset.pattern.permute.xlu0 0
      %1519 = vperm.xlu0 %1518, %v1503
      %v1520 = vpop.permute.xlu0 %1519
      %1523 = vset.pattern.permute.xlu0 0
      %1524 = vperm.xlu0 %1523, %v1504
      %v1525 = vpop.permute.xlu0 %1524
      %1528 = vset.pattern.permute.xlu0 0
      %1529 = vperm.xlu0 %1528, %v1505
      %v1530 = vpop.permute.xlu0 %1529
      %1533 = vset.pattern.permute.xlu0 0
      %1534 = vperm.xlu0 %1533, %v1506
      %v1535 = vpop.permute.xlu0 %1534
      %vm1537 = vcmask 130048
      %v1539 = vsel %vm1537, %v1495, 0
      %v1542 = vsel %vm1537, %v1496, 0
      %v1545 = vsel %vm1537, %v1497, 0
      %v1548 = vsel %vm1537, %v1498, 0
      %v1551 = vsel %vm1537, %v1499, 0
      %v1554 = vsel %vm1537, %v1500, 0
      %1556 = vmatprep.subr.mxu0 %v1492
      %1557 = vmatpush1.msra.mxu0 %v1491
      %1558 = vmatprep.subr.mxu0 %v1494
      %1559 = vmatpush1.msra.mxu0 %v1493
      %1560 = vmatprep.subr.mxu0 0.0
      %1561 = vmatpush1.msra.mxu0 0.0
      %1562 = vmatprep.subr.mxu0 0.0
      %1563 = vmatpush1.msra.mxu0 0.0
      %1564 = vmatprep.subr.mxu0 0.0
      %1565 = vmatpush1.msra.mxu0 0.0
      %1566 = vmatprep.subr.mxu0 0.0
      %1567 = vmatpush1.msra.mxu0 0.0
      %1568 = vmatprep.subr.mxu0 0.0
      %1569 = vmatpush1.msra.mxu0 0.0
      %1570 = vmatprep.subr.mxu0 0.0
      %1571 = vmatpush1.msra.mxu0 0.0
      %1572 = vmatprep.subr.mxu0 0.0
      %1573 = vmatpush1.msra.mxu0 0.0
      %1574 = vmatprep.subr.mxu0 0.0
      %1575 = vmatpush1.msra.mxu0 0.0
      %1576 = vmatprep.subr.mxu0 0.0
      %1577 = vmatpush1.msra.mxu0 0.0
      %1578 = vmatprep.subr.mxu0 0.0
      %1579 = vmatpush1.msra.mxu0 0.0
      %1580 = vmatprep.subr.mxu0 0.0
      %1581 = vmatpush1.msra.mxu0 0.0
      %1582 = vmatprep.subr.mxu0 0.0
      %1583 = vmatpush1.msra.mxu0 0.0
      %1584 = vmatprep.subr.mxu0 0.0
      %1585 = vmatpush1.msra.mxu0 0.0
      %1586 = vmatprep.subr.mxu0 0.0
      %1587 = vmatpush1.msra.mxu0 0.0
      %1588 = vmatprep.subr.mxu0 0.0
      %1589 = vmatpush1.msra.mxu0 0.0
      %1590 = vmatprep.subr.mxu0 0.0
      %1591 = vmatpush1.msra.mxu0 0.0
      %1592 = vmatprep.subr.mxu0 0.0
      %1593 = vmatpush1.msra.mxu0 0.0
      %1594 = vmatprep.subr.mxu0 0.0
      %1595 = vmatpush1.msra.mxu0 0.0
      %1596 = vmatprep.subr.mxu0 0.0
      %1597 = vmatpush1.msra.mxu0 0.0
      %1598 = vmatprep.subr.mxu0 0.0
      %1599 = vmatpush1.msra.mxu0 0.0
      %1600 = vmatprep.subr.mxu0 0.0
      %1601 = vmatpush1.msra.mxu0 0.0
      %1602 = vmatprep.subr.mxu0 0.0
      %1603 = vmatpush1.msra.mxu0 0.0
      %1604 = vmatprep.subr.mxu0 0.0
      %1605 = vmatpush1.msra.mxu0 0.0
      %1606 = vmatprep.subr.mxu0 0.0
      %1607 = vmatpush1.msra.mxu0 0.0
      %1608 = vmatprep.subr.mxu0 0.0
      %1609 = vmatpush1.msra.mxu0 0.0
      %1610 = vmatprep.subr.mxu0 0.0
      %1611 = vmatpush1.msra.mxu0 0.0
      %1612 = vmatprep.subr.mxu0 0.0
      %1613 = vmatpush1.msra.mxu0 0.0
      %1614 = vmatprep.subr.mxu0 0.0
      %1615 = vmatpush1.msra.mxu0 0.0
      %1616 = vmatprep.subr.mxu0 0.0
      %1617 = vmatpush1.msra.mxu0 0.0
      %1618 = vmatprep.subr.mxu0 0.0
      %1619 = vmatpush1.msra.mxu0 0.0
      %1620 = vmatprep.mubr.f32.mxu0 0.0
      %1621 = vmatmul.mubr.f32.gmra.mrb[0].mxu0 %v1539
      %v1622 = vpop.f32.mrb[0].mxu0
      %v1623 = vadd.f32 %v1510, %v1622
      %v1624 = vpop.f32.mrb[0].mxu0
      %v1625 = vadd.f32 %v1510, %v1624
      %1626 = vmatprep.mubr.f32.mxu0 0.0
      %1627 = vmatmul.mubr.f32.gmra.mrb[0].mxu0 %v1542
      %v1628 = vpop.f32.mrb[0].mxu0
      %v1629 = vadd.f32 %v1515, %v1628
      %v1630 = vpop.f32.mrb[0].mxu0
      %v1631 = vadd.f32 %v1515, %v1630
      %1632 = vmatprep.mubr.f32.mxu0 0.0
      %1633 = vmatmul.mubr.f32.gmra.mrb[0].mxu0 %v1545
      %v1634 = vpop.f32.mrb[0].mxu0
      %v1635 = vadd.f32 %v1520, %v1634
      %v1636 = vpop.f32.mrb[0].mxu0
      %v1637 = vadd.f32 %v1520, %v1636
      %1638 = vmatprep.mubr.f32.mxu0 0.0
      %1639 = vmatmul.mubr.f32.gmra.mrb[0].mxu0 %v1548
      %v1640 = vpop.f32.mrb[0].mxu0
      %v1641 = vadd.f32 %v1525, %v1640
      %v1642 = vpop.f32.mrb[0].mxu0
      %v1643 = vadd.f32 %v1525, %v1642
      %1644 = vmatprep.mubr.f32.mxu0 0.0
      %1645 = vmatmul.mubr.f32.gmra.mrb[0].mxu0 %v1551
      %v1646 = vpop.f32.mrb[0].mxu0
      %v1647 = vadd.f32 %v1530, %v1646
      %v1648 = vpop.f32.mrb[0].mxu0
      %v1649 = vadd.f32 %v1530, %v1648
      %1650 = vmatprep.mubr.f32.mxu0 0.0
      %1651 = vmatmul.mubr.f32.gmra.mrb[0].mxu0 %v1554
      %v1652 = vpop.f32.mrb[0].mxu0
      %v1653 = vadd.f32 %v1535, %v1652
      %v1654 = vpop.f32.mrb[0].mxu0
      %v1655 = vadd.f32 %v1535, %v1654
      %1656 = vdwg.mxu0
      %v1657 = vld [vmem:[%s13] sm:$0xff]
      %v1658 = vld [vmem:[%s13 + $0x8] sm:$0xff]
      %v1659 = vld [vmem:[%s13 + $0x10] sm:$0xff]
      %v1660 = vld [vmem:[%s13 + $0x18] sm:$0xff]
      %v1662 = vsel %vm749, %v1657, 0
      %v1665 = vsel %vm749, %v1658, 0
      %v1668 = vsel %vm749, %v1659, 0
      %v1671 = vsel %vm749, %v1660, 0
      %1673 = vmatprep.subr.mxu0 %v1215
      %1674 = vmatpush1.msra.mxu0 %v1214
      %1675 = vmatprep.subr.mxu0 %v1238
      %1676 = vmatpush1.msra.mxu0 %v1235
      %1677 = vmatprep.subr.mxu0 0.0
      %1678 = vmatpush1.msra.mxu0 0.0
      %1679 = vmatprep.subr.mxu0 0.0
      %1680 = vmatpush1.msra.mxu0 0.0
      %1681 = vmatprep.subr.mxu0 0.0
      %1682 = vmatpush1.msra.mxu0 0.0
      %1683 = vmatprep.subr.mxu0 0.0
      %1684 = vmatpush1.msra.mxu0 0.0
      %1685 = vmatprep.subr.mxu0 0.0
      %1686 = vmatpush1.msra.mxu0 0.0
      %1687 = vmatprep.subr.mxu0 0.0
      %1688 = vmatpush1.msra.mxu0 0.0
      %1689 = vmatprep.subr.mxu0 0.0
      %1690 = vmatpush1.msra.mxu0 0.0
      %1691 = vmatprep.subr.mxu0 0.0
      %1692 = vmatpush1.msra.mxu0 0.0
      %1693 = vmatprep.subr.mxu0 0.0
      %1694 = vmatpush1.msra.mxu0 0.0
      %1695 = vmatprep.subr.mxu0 0.0
      %1696 = vmatpush1.msra.mxu0 0.0
      %1697 = vmatprep.subr.mxu0 0.0
      %1698 = vmatpush1.msra.mxu0 0.0
      %1699 = vmatprep.subr.mxu0 0.0
      %1700 = vmatpush1.msra.mxu0 0.0
      %1701 = vmatprep.subr.mxu0 0.0
      %1702 = vmatpush1.msra.mxu0 0.0
      %1703 = vmatprep.subr.mxu0 0.0
      %1704 = vmatpush1.msra.mxu0 0.0
      %1705 = vmatprep.subr.mxu0 0.0
      %1706 = vmatpush1.msra.mxu0 0.0
      %1707 = vmatprep.subr.mxu0 0.0
      %1708 = vmatpush1.msra.mxu0 0.0
      %1709 = vmatprep.subr.mxu0 0.0
      %1710 = vmatpush1.msra.mxu0 0.0
      %1711 = vmatprep.subr.mxu0 0.0
      %1712 = vmatpush1.msra.mxu0 0.0
      %1713 = vmatprep.subr.mxu0 0.0
      %1714 = vmatpush1.msra.mxu0 0.0
      %1715 = vmatprep.subr.mxu0 0.0
      %1716 = vmatpush1.msra.mxu0 0.0
      %1717 = vmatprep.subr.mxu0 0.0
      %1718 = vmatpush1.msra.mxu0 0.0
      %1719 = vmatprep.subr.mxu0 0.0
      %1720 = vmatpush1.msra.mxu0 0.0
      %1721 = vmatprep.subr.mxu0 0.0
      %1722 = vmatpush1.msra.mxu0 0.0
      %1723 = vmatprep.subr.mxu0 0.0
      %1724 = vmatpush1.msra.mxu0 0.0
      %1725 = vmatprep.subr.mxu0 0.0
      %1726 = vmatpush1.msra.mxu0 0.0
      %1727 = vmatprep.subr.mxu0 0.0
      %1728 = vmatpush1.msra.mxu0 0.0
      %1729 = vmatprep.subr.mxu0 0.0
      %1730 = vmatpush1.msra.mxu0 0.0
      %1731 = vmatprep.subr.mxu0 0.0
      %1732 = vmatpush1.msra.mxu0 0.0
      %1733 = vmatprep.subr.mxu0 0.0
      %1734 = vmatpush1.msra.mxu0 0.0
      %1735 = vmatprep.subr.mxu0 0.0
      %1736 = vmatpush1.msra.mxu0 0.0
      %1737 = vmatprep.mubr.f32.mxu0 0.0
      %1738 = vmatmul.mubr.f32.gmra.mrb[0].mxu0 %v1662
      %v1739 = vpop.f32.mrb[0].mxu0
      %v1740 = vadd.f32 0.0, %v1739
      %v1741 = vpop.f32.mrb[0].mxu0
      %v1742 = vadd.f32 0.0, %v1741
      %1743 = vmatprep.mubr.f32.mxu0 0.0
      %1744 = vmatmul.mubr.f32.gmra.mrb[0].mxu0 %v1665
      %v1745 = vpop.f32.mrb[0].mxu0
      %v1746 = vadd.f32 0.0, %v1745
      %v1747 = vpop.f32.mrb[0].mxu0
      %v1748 = vadd.f32 0.0, %v1747
      %1749 = vmatprep.mubr.f32.mxu0 0.0
      %1750 = vmatmul.mubr.f32.gmra.mrb[0].mxu0 %v1668
      %v1751 = vpop.f32.mrb[0].mxu0
      %v1752 = vadd.f32 0.0, %v1751
      %v1753 = vpop.f32.mrb[0].mxu0
      %v1754 = vadd.f32 0.0, %v1753
      %1755 = vmatprep.mubr.f32.mxu0 0.0
      %1756 = vmatmul.mubr.f32.gmra.mrb[0].mxu0 %v1671
      %v1757 = vpop.f32.mrb[0].mxu0
      %v1758 = vadd.f32 0.0, %v1757
      %v1759 = vpop.f32.mrb[0].mxu0
      %v1760 = vadd.f32 0.0, %v1759
      %1761 = vdwg.mxu0
      %v1762 = vadd.f32 %v1623, %v1740
      %v1763 = vadd.f32 %v1625, %v1742
      %v1764 = vadd.f32 %v1629, %v1746
      %v1765 = vadd.f32 %v1631, %v1748
      %v1766 = vxor.u32 %v1762, 2147483648
      %v1767 = vxor.u32 %v1763, 2147483648
      %v1768 = vxor.u32 %v1764, 2147483648
      %v1769 = vxor.u32 %v1765, 2147483648
      %v1770 = vmul.f32 %v1766, 1.442695
      %v1771 = vpow.pop %v1770
      %v1772 = vmul.f32 %v1767, 1.442695
      %v1773 = vpow.pop %v1772
      %v1774 = vmul.f32 %v1768, 1.442695
      %v1775 = vpow.pop %v1774
      %v1776 = vmul.f32 %v1769, 1.442695
      %v1777 = vpow.pop %v1776
      %v1778 = vadd.f32 %v1771, 1.0
      %v1779 = vadd.f32 %v1773, 1.0
      %v1780 = vadd.f32 %v1775, 1.0
      %v1781 = vadd.f32 %v1777, 1.0
      %v1782 = vrcp.pop %v1778
      %v1783 = vmul.f32 1.0, %v1782
      %v1784 = vrcp.pop %v1779
      %v1785 = vmul.f32 1.0, %v1784
      %v1786 = vrcp.pop %v1780
      %v1787 = vmul.f32 1.0, %v1786
      %v1788 = vrcp.pop %v1781
      %v1789 = vmul.f32 1.0, %v1788
      %v1790 = vadd.f32 %v1635, %v1752
      %v1791 = vadd.f32 %v1637, %v1754
      %v1792 = vadd.f32 %v1641, %v1758
      %v1793 = vadd.f32 %v1643, %v1760
      %v1794 = vxor.u32 %v1790, 2147483648
      %v1795 = vxor.u32 %v1791, 2147483648
      %v1796 = vxor.u32 %v1792, 2147483648
      %v1797 = vxor.u32 %v1793, 2147483648
      %v1798 = vmul.f32 %v1794, 1.442695
      %v1799 = vpow.pop %v1798
      %v1800 = vmul.f32 %v1795, 1.442695
      %v1801 = vpow.pop %v1800
      %v1802 = vmul.f32 %v1796, 1.442695
      %v1803 = vpow.pop %v1802
      %v1804 = vmul.f32 %v1797, 1.442695
      %v1805 = vpow.pop %v1804
      %v1806 = vadd.f32 %v1799, 1.0
      %v1807 = vadd.f32 %v1801, 1.0
      %v1808 = vadd.f32 %v1803, 1.0
      %v1809 = vadd.f32 %v1805, 1.0
      %v1810 = vrcp.pop %v1806
      %v1811 = vmul.f32 1.0, %v1810
      %v1812 = vrcp.pop %v1807
      %v1813 = vmul.f32 1.0, %v1812
      %v1814 = vrcp.pop %v1808
      %v1815 = vmul.f32 1.0, %v1814
      %v1816 = vrcp.pop %v1809
      %v1817 = vmul.f32 1.0, %v1816
      %v1818 = vld [vmem:[%s14] sm:$0xff]
      %v1819 = vld [vmem:[%s14 + $0x8] sm:$0xff]
      %v1820 = vmul.f32 %v1783, %v1214
      %v1821 = vmul.f32 %v1785, %v1215
      %v1822 = vmul.f32 %v1787, %v1216
      %v1823 = vmul.f32 %v1789, %v1217
      %v1825 = vsel %vm749, %v1818, 0
      %v1828 = vsel %vm749, %v1819, 0
      %v1831 = vsel %vm753, %v1822, 0
      %v1834 = vsel %vm753, %v1823, 0
      %1836 = vmatprep.subr.mxu0 %v1821
      %1837 = vmatpush1.msra.mxu0 %v1820
      %1838 = vmatprep.subr.mxu0 %v1834
      %1839 = vmatpush1.msra.mxu0 %v1831
      %1840 = vmatprep.subr.mxu0 0.0
      %1841 = vmatpush1.msra.mxu0 0.0
      %1842 = vmatprep.subr.mxu0 0.0
      %1843 = vmatpush1.msra.mxu0 0.0
      %1844 = vmatprep.subr.mxu0 0.0
      %1845 = vmatpush1.msra.mxu0 0.0
      %1846 = vmatprep.subr.mxu0 0.0
      %1847 = vmatpush1.msra.mxu0 0.0
      %1848 = vmatprep.subr.mxu0 0.0
      %1849 = vmatpush1.msra.mxu0 0.0
      %1850 = vmatprep.subr.mxu0 0.0
      %1851 = vmatpush1.msra.mxu0 0.0
      %1852 = vmatprep.subr.mxu0 0.0
      %1853 = vmatpush1.msra.mxu0 0.0
      %1854 = vmatprep.subr.mxu0 0.0
      %1855 = vmatpush1.msra.mxu0 0.0
      %1856 = vmatprep.subr.mxu0 0.0
      %1857 = vmatpush1.msra.mxu0 0.0
      %1858 = vmatprep.subr.mxu0 0.0
      %1859 = vmatpush1.msra.mxu0 0.0
      %1860 = vmatprep.subr.mxu0 0.0
      %1861 = vmatpush1.msra.mxu0 0.0
      %1862 = vmatprep.subr.mxu0 0.0
      %1863 = vmatpush1.msra.mxu0 0.0
      %1864 = vmatprep.subr.mxu0 0.0
      %1865 = vmatpush1.msra.mxu0 0.0
      %1866 = vmatprep.subr.mxu0 0.0
      %1867 = vmatpush1.msra.mxu0 0.0
      %1868 = vmatprep.subr.mxu0 0.0
      %1869 = vmatpush1.msra.mxu0 0.0
      %1870 = vmatprep.subr.mxu0 0.0
      %1871 = vmatpush1.msra.mxu0 0.0
      %1872 = vmatprep.subr.mxu0 0.0
      %1873 = vmatpush1.msra.mxu0 0.0
      %1874 = vmatprep.subr.mxu0 0.0
      %1875 = vmatpush1.msra.mxu0 0.0
      %1876 = vmatprep.subr.mxu0 0.0
      %1877 = vmatpush1.msra.mxu0 0.0
      %1878 = vmatprep.subr.mxu0 0.0
      %1879 = vmatpush1.msra.mxu0 0.0
      %1880 = vmatprep.subr.mxu0 0.0
      %1881 = vmatpush1.msra.mxu0 0.0
      %1882 = vmatprep.subr.mxu0 0.0
      %1883 = vmatpush1.msra.mxu0 0.0
      %1884 = vmatprep.subr.mxu0 0.0
      %1885 = vmatpush1.msra.mxu0 0.0
      %1886 = vmatprep.subr.mxu0 0.0
      %1887 = vmatpush1.msra.mxu0 0.0
      %1888 = vmatprep.subr.mxu0 0.0
      %1889 = vmatpush1.msra.mxu0 0.0
      %1890 = vmatprep.subr.mxu0 0.0
      %1891 = vmatpush1.msra.mxu0 0.0
      %1892 = vmatprep.subr.mxu0 0.0
      %1893 = vmatpush1.msra.mxu0 0.0
      %1894 = vmatprep.subr.mxu0 0.0
      %1895 = vmatpush1.msra.mxu0 0.0
      %1896 = vmatprep.subr.mxu0 0.0
      %1897 = vmatpush1.msra.mxu0 0.0
      %1898 = vmatprep.subr.mxu0 0.0
      %1899 = vmatpush1.msra.mxu0 0.0
      %1900 = vmatprep.mubr.f32.mxu0 0.0
      %1901 = vmatmul.mubr.f32.gmra.mrb[0].mxu0 %v1825
      %v1902 = vpop.f32.mrb[0].mxu0
      %v1903 = vadd.f32 0.0, %v1902
      %v1904 = vpop.f32.mrb[0].mxu0
      %v1905 = vadd.f32 0.0, %v1904
      %1906 = vmatprep.mubr.f32.mxu0 0.0
      %1907 = vmatmul.mubr.f32.gmra.mrb[0].mxu0 %v1828
      %v1908 = vpop.f32.mrb[0].mxu0
      %v1909 = vadd.f32 0.0, %v1908
      %v1910 = vpop.f32.mrb[0].mxu0
      %v1911 = vadd.f32 0.0, %v1910
      %1912 = vdwg.mxu0
      %v1913 = vadd.f32 %v1647, %v1903
      %v1914 = vadd.f32 %v1649, %v1905
      %v1915 = vadd.f32 %v1653, %v1909
      %v1916 = vadd.f32 %v1655, %v1911
      %v1917 = vtanh.pop %v1913
      %v1918 = vtanh.pop %v1914
      %v1919 = vtanh.pop %v1915
      %v1920 = vtanh.pop %v1916
      %v1921 = vsub.f32 1.0, %v1811
      %v1922 = vsub.f32 1.0, %v1813
      %v1923 = vsub.f32 1.0, %v1815
      %v1924 = vsub.f32 1.0, %v1817
      %v1925 = vmul.f32 %v1921, %v1214
      %v1926 = vmul.f32 %v1922, %v1215
      %v1927 = vmul.f32 %v1923, %v1216
      %v1928 = vmul.f32 %v1924, %v1217
      %v1929 = vmul.f32 %v1811, %v1917
      %v1930 = vmul.f32 %v1813, %v1918
      %v1931 = vmul.f32 %v1815, %v1919
      %v1932 = vmul.f32 %v1817, %v1920
      %v1933 = vadd.f32 %v1925, %v1929
      %v1934 = vadd.f32 %v1926, %v1930
      %v1935 = vadd.f32 %v1927, %v1931
      %v1936 = vadd.f32 %v1928, %v1932
      %1937 = vst [vmem:[%s712] sm:$0xff] %v1933
      %1938 = vst [vmem:[%s712 + $0x8] sm:$0xff] %v1934
      %1939 = vst [vmem:[%s712 + $0x10] sm:$0x3] %v1935
      %1940 = vst [vmem:[%s712 + $0x18] sm:$0x3] %v1936
      %s1941 = scalar_lea.vmem %s702, 32
      %v1942 = vld [vmem:[%s1941] sm:$0xff]
      %v1943 = vld [vmem:[%s1941 + $0x8] sm:$0xff]
      %v1944 = vld [vmem:[%s1941 + $0x10] sm:$0x3]
      %v1945 = vld [vmem:[%s1941 + $0x18] sm:$0x3]
      %v1946 = vld [vmem:[%s8] sm:$0xff]
      %v1947 = vld [vmem:[%s8 + $0x8] sm:$0xff]
      %v1948 = vld [vmem:[%s8 + $0x10] sm:$0xff]
      %v1949 = vld [vmem:[%s8 + $0x18] sm:$0xff]
      %v1951 = vsel %vm749, %v1946, 0
      %v1954 = vsel %vm749, %v1947, 0
      %v1957 = vsel %vm749, %v1948, 0
      %v1960 = vsel %vm749, %v1949, 0
      %v1963 = vsel %vm753, %v1944, 0
      %v1966 = vsel %vm753, %v1945, 0
      %1968 = vmatprep.subr.mxu0 %v1943
      %1969 = vmatpush1.msra.mxu0 %v1942
      %1970 = vmatprep.subr.mxu0 %v1966
      %1971 = vmatpush1.msra.mxu0 %v1963
      %1972 = vmatprep.subr.mxu0 0.0
      %1973 = vmatpush1.msra.mxu0 0.0
      %1974 = vmatprep.subr.mxu0 0.0
      %1975 = vmatpush1.msra.mxu0 0.0
      %1976 = vmatprep.subr.mxu0 0.0
      %1977 = vmatpush1.msra.mxu0 0.0
      %1978 = vmatprep.subr.mxu0 0.0
      %1979 = vmatpush1.msra.mxu0 0.0
      %1980 = vmatprep.subr.mxu0 0.0
      %1981 = vmatpush1.msra.mxu0 0.0
      %1982 = vmatprep.subr.mxu0 0.0
      %1983 = vmatpush1.msra.mxu0 0.0
      %1984 = vmatprep.subr.mxu0 0.0
      %1985 = vmatpush1.msra.mxu0 0.0
      %1986 = vmatprep.subr.mxu0 0.0
      %1987 = vmatpush1.msra.mxu0 0.0
      %1988 = vmatprep.subr.mxu0 0.0
      %1989 = vmatpush1.msra.mxu0 0.0
      %1990 = vmatprep.subr.mxu0 0.0
      %1991 = vmatpush1.msra.mxu0 0.0
      %1992 = vmatprep.subr.mxu0 0.0
      %1993 = vmatpush1.msra.mxu0 0.0
      %1994 = vmatprep.subr.mxu0 0.0
      %1995 = vmatpush1.msra.mxu0 0.0
      %1996 = vmatprep.subr.mxu0 0.0
      %1997 = vmatpush1.msra.mxu0 0.0
      %1998 = vmatprep.subr.mxu0 0.0
      %1999 = vmatpush1.msra.mxu0 0.0
      %2000 = vmatprep.subr.mxu0 0.0
      %2001 = vmatpush1.msra.mxu0 0.0
      %2002 = vmatprep.subr.mxu0 0.0
      %2003 = vmatpush1.msra.mxu0 0.0
      %2004 = vmatprep.subr.mxu0 0.0
      %2005 = vmatpush1.msra.mxu0 0.0
      %2006 = vmatprep.subr.mxu0 0.0
      %2007 = vmatpush1.msra.mxu0 0.0
      %2008 = vmatprep.subr.mxu0 0.0
      %2009 = vmatpush1.msra.mxu0 0.0
      %2010 = vmatprep.subr.mxu0 0.0
      %2011 = vmatpush1.msra.mxu0 0.0
      %2012 = vmatprep.subr.mxu0 0.0
      %2013 = vmatpush1.msra.mxu0 0.0
      %2014 = vmatprep.subr.mxu0 0.0
      %2015 = vmatpush1.msra.mxu0 0.0
      %2016 = vmatprep.subr.mxu0 0.0
      %2017 = vmatpush1.msra.mxu0 0.0
      %2018 = vmatprep.subr.mxu0 0.0
      %2019 = vmatpush1.msra.mxu0 0.0
      %2020 = vmatprep.subr.mxu0 0.0
      %2021 = vmatpush1.msra.mxu0 0.0
      %2022 = vmatprep.subr.mxu0 0.0
      %2023 = vmatpush1.msra.mxu0 0.0
      %2024 = vmatprep.subr.mxu0 0.0
      %2025 = vmatpush1.msra.mxu0 0.0
      %2026 = vmatprep.subr.mxu0 0.0
      %2027 = vmatpush1.msra.mxu0 0.0
      %2028 = vmatprep.subr.mxu0 0.0
      %2029 = vmatpush1.msra.mxu0 0.0
      %2030 = vmatprep.subr.mxu0 0.0
      %2031 = vmatpush1.msra.mxu0 0.0
      %2032 = vmatprep.mubr.f32.mxu0 0.0
      %2033 = vmatmul.mubr.f32.gmra.mrb[0].mxu0 %v1951
      %v2034 = vpop.f32.mrb[0].mxu0
      %v2035 = vadd.f32 0.0, %v2034
      %v2036 = vpop.f32.mrb[0].mxu0
      %v2037 = vadd.f32 0.0, %v2036
      %2038 = vmatprep.mubr.f32.mxu0 0.0
      %2039 = vmatmul.mubr.f32.gmra.mrb[0].mxu0 %v1954
      %v2040 = vpop.f32.mrb[0].mxu0
      %v2041 = vadd.f32 0.0, %v2040
      %v2042 = vpop.f32.mrb[0].mxu0
      %v2043 = vadd.f32 0.0, %v2042
      %2044 = vmatprep.mubr.f32.mxu0 0.0
      %2045 = vmatmul.mubr.f32.gmra.mrb[0].mxu0 %v1957
      %v2046 = vpop.f32.mrb[0].mxu0
      %v2047 = vadd.f32 0.0, %v2046
      %v2048 = vpop.f32.mrb[0].mxu0
      %v2049 = vadd.f32 0.0, %v2048
      %2050 = vmatprep.mubr.f32.mxu0 0.0
      %2051 = vmatmul.mubr.f32.gmra.mrb[0].mxu0 %v1960
      %v2052 = vpop.f32.mrb[0].mxu0
      %v2053 = vadd.f32 0.0, %v2052
      %v2054 = vpop.f32.mrb[0].mxu0
      %v2055 = vadd.f32 0.0, %v2054
      %2056 = vdwg.mxu0
      %v2057 = vlaneseq
      %v2058 = vshrl.u32 %v2057, 7
      %v2059 = vsub.s32 2, %v2058
      %v2060 = vrot.slane %v962, %v2059
      %v2061 = vlaneseq
      %v2062 = vshrl.u32 %v2061, 7
      %v2063 = vsub.s32 2, %v2062
      %v2064 = vrot.slane %v963, %v2063
      %v2065 = vmul.f32 %v1086, %v2060
      %v2066 = vmul.f32 %v1088, %v2064
      %v2067 = vmul.f32 %v1092, %v2060
      %v2068 = vmul.f32 %v1094, %v2064
      %v2069 = vmul.f32 %v1098, %v2060
      %v2070 = vmul.f32 %v1100, %v2064
      %v2071 = vmul.f32 %v1104, %v2060
      %v2072 = vmul.f32 %v1106, %v2064
      %v2073 = vadd.f32 %v2065, %v2035
      %v2074 = vadd.f32 %v2066, %v2037
      %v2075 = vadd.f32 %v2067, %v2041
      %v2076 = vadd.f32 %v2068, %v2043
      %v2077 = vadd.f32 %v2069, %v2047
      %v2078 = vadd.f32 %v2070, %v2049
      %v2079 = vadd.f32 %v2071, %v2053
      %v2080 = vadd.f32 %v2072, %v2055
      %v2081 = vld [vmem:[%s9] sm:$0xff]
      %v2082 = vld [vmem:[%s9 + $0x8] sm:$0xff]
      %v2083 = vld [vmem:[%s9 + $0x10] sm:$0xff]
      %v2084 = vld [vmem:[%s9 + $0x18] sm:$0xff]
      %2086 = vset.pattern.permute.xlu0 0
      %2087 = vperm.xlu0 %2086, %v2081
      %v2088 = vpop.permute.xlu0 %2087
      %2091 = vset.pattern.permute.xlu0 0
      %2092 = vperm.xlu0 %2091, %v2082
      %v2093 = vpop.permute.xlu0 %2092
      %2096 = vset.pattern.permute.xlu0 0
      %2097 = vperm.xlu0 %2096, %v2083
      %v2098 = vpop.permute.xlu0 %2097
      %2101 = vset.pattern.permute.xlu0 0
      %2102 = vperm.xlu0 %2101, %v2084
      %v2103 = vpop.permute.xlu0 %2102
      %v2105 = vadd.f32 %v2073, %v2088
      %v2106 = vadd.f32 %v2074, %v2088
      %v2107 = vadd.f32 %v2075, %v2093
      %v2108 = vadd.f32 %v2076, %v2093
      %v2109 = vadd.f32 %v2077, %v2098
      %v2110 = vadd.f32 %v2078, %v2098
      %v2111 = vadd.f32 %v2079, %v2103
      %v2112 = vadd.f32 %v2080, %v2103
      %v2113 = vmax.f32 %v2105, 0.0
      %v2114 = vmax.f32 %v2106, 0.0
      %v2115 = vmax.f32 %v2107, 0.0
      %v2116 = vmax.f32 %v2108, 0.0
      %v2117 = vmax.f32 %v2109, 0.0
      %v2118 = vmax.f32 %v2110, 0.0
      %v2119 = vmax.f32 %v2111, 0.0
      %v2120 = vmax.f32 %v2112, 0.0
      %v2121 = vld [vmem:[%s10] sm:$0xff]
      %v2122 = vld [vmem:[%s10 + $0x8] sm:$0xff]
      %v2123 = vld [vmem:[%s11] sm:$0xff]
      %v2124 = vld [vmem:[%s11 + $0x8] sm:$0xff]
      %2126 = vset.pattern.permute.xlu0 0
      %2127 = vperm.xlu0 %2126, %v2123
      %v2128 = vpop.permute.xlu0 %2127
      %2131 = vset.pattern.permute.xlu0 0
      %2132 = vperm.xlu0 %2131, %v2124
      %v2133 = vpop.permute.xlu0 %2132
      %v2136 = vsel %vm1407, %v2121, 0
      %v2139 = vsel %vm1407, %v2122, 0
      %2141 = vmatprep.subr.mxu0 %v2114
      %2142 = vmatpush1.msra.mxu0 %v2113
      %2143 = vmatprep.subr.mxu0 %v2116
      %2144 = vmatpush1.msra.mxu0 %v2115
      %2145 = vmatprep.subr.mxu0 %v2118
      %2146 = vmatpush1.msra.mxu0 %v2117
      %2147 = vmatprep.subr.mxu0 %v2120
      %2148 = vmatpush1.msra.mxu0 %v2119
      %2149 = vmatprep.subr.mxu0 0.0
      %2150 = vmatpush1.msra.mxu0 0.0
      %2151 = vmatprep.subr.mxu0 0.0
      %2152 = vmatpush1.msra.mxu0 0.0
      %2153 = vmatprep.subr.mxu0 0.0
      %2154 = vmatpush1.msra.mxu0 0.0
      %2155 = vmatprep.subr.mxu0 0.0
      %2156 = vmatpush1.msra.mxu0 0.0
      %2157 = vmatprep.subr.mxu0 0.0
      %2158 = vmatpush1.msra.mxu0 0.0
      %2159 = vmatprep.subr.mxu0 0.0
      %2160 = vmatpush1.msra.mxu0 0.0
      %2161 = vmatprep.subr.mxu0 0.0
      %2162 = vmatpush1.msra.mxu0 0.0
      %2163 = vmatprep.subr.mxu0 0.0
      %2164 = vmatpush1.msra.mxu0 0.0
      %2165 = vmatprep.subr.mxu0 0.0
      %2166 = vmatpush1.msra.mxu0 0.0
      %2167 = vmatprep.subr.mxu0 0.0
      %2168 = vmatpush1.msra.mxu0 0.0
      %2169 = vmatprep.subr.mxu0 0.0
      %2170 = vmatpush1.msra.mxu0 0.0
      %2171 = vmatprep.subr.mxu0 0.0
      %2172 = vmatpush1.msra.mxu0 0.0
      %2173 = vmatprep.subr.mxu0 0.0
      %2174 = vmatpush1.msra.mxu0 0.0
      %2175 = vmatprep.subr.mxu0 0.0
      %2176 = vmatpush1.msra.mxu0 0.0
      %2177 = vmatprep.subr.mxu0 0.0
      %2178 = vmatpush1.msra.mxu0 0.0
      %2179 = vmatprep.subr.mxu0 0.0
      %2180 = vmatpush1.msra.mxu0 0.0
      %2181 = vmatprep.subr.mxu0 0.0
      %2182 = vmatpush1.msra.mxu0 0.0
      %2183 = vmatprep.subr.mxu0 0.0
      %2184 = vmatpush1.msra.mxu0 0.0
      %2185 = vmatprep.subr.mxu0 0.0
      %2186 = vmatpush1.msra.mxu0 0.0
      %2187 = vmatprep.subr.mxu0 0.0
      %2188 = vmatpush1.msra.mxu0 0.0
      %2189 = vmatprep.subr.mxu0 0.0
      %2190 = vmatpush1.msra.mxu0 0.0
      %2191 = vmatprep.subr.mxu0 0.0
      %2192 = vmatpush1.msra.mxu0 0.0
      %2193 = vmatprep.subr.mxu0 0.0
      %2194 = vmatpush1.msra.mxu0 0.0
      %2195 = vmatprep.subr.mxu0 0.0
      %2196 = vmatpush1.msra.mxu0 0.0
      %2197 = vmatprep.subr.mxu0 0.0
      %2198 = vmatpush1.msra.mxu0 0.0
      %2199 = vmatprep.subr.mxu0 0.0
      %2200 = vmatpush1.msra.mxu0 0.0
      %2201 = vmatprep.subr.mxu0 0.0
      %2202 = vmatpush1.msra.mxu0 0.0
      %2203 = vmatprep.subr.mxu0 0.0
      %2204 = vmatpush1.msra.mxu0 0.0
      %2205 = vmatprep.mubr.f32.mxu0 0.0
      %2206 = vmatmul.mubr.f32.gmra.mrb[0].mxu0 %v2136
      %v2207 = vpop.f32.mrb[0].mxu0
      %v2208 = vadd.f32 %v2128, %v2207
      %v2209 = vpop.f32.mrb[0].mxu0
      %v2210 = vadd.f32 %v2128, %v2209
      %2211 = vmatprep.mubr.f32.mxu0 0.0
      %2212 = vmatmul.mubr.f32.gmra.mrb[0].mxu0 %v2139
      %v2213 = vpop.f32.mrb[0].mxu0
      %v2214 = vadd.f32 %v2133, %v2213
      %v2215 = vpop.f32.mrb[0].mxu0
      %v2216 = vadd.f32 %v2133, %v2215
      %2217 = vdwg.mxu0
      %v2218 = vmax.f32 %v2208, 0.0
      %v2219 = vmax.f32 %v2210, 0.0
      %v2220 = vmax.f32 %v2214, 0.0
      %v2221 = vmax.f32 %v2216, 0.0
      %s2222 = scalar_lea.vmem %s12, 48
      %v2223 = vld [vmem:[%s2222] sm:$0xff]
      %v2224 = vld [vmem:[%s2222 + $0x8] sm:$0xff]
      %v2225 = vld [vmem:[%s2222 + $0x10] sm:$0xff]
      %v2226 = vld [vmem:[%s2222 + $0x18] sm:$0xff]
      %v2227 = vld [vmem:[%s2222 + $0x20] sm:$0xff]
      %v2228 = vld [vmem:[%s2222 + $0x28] sm:$0xff]
      %s2229 = scalar_lea.vmem %s15, 48
      %v2230 = vld [vmem:[%s2229] sm:$0xff]
      %v2231 = vld [vmem:[%s2229 + $0x8] sm:$0xff]
      %v2232 = vld [vmem:[%s2229 + $0x10] sm:$0xff]
      %v2233 = vld [vmem:[%s2229 + $0x18] sm:$0xff]
      %v2234 = vld [vmem:[%s2229 + $0x20] sm:$0xff]
      %v2235 = vld [vmem:[%s2229 + $0x28] sm:$0xff]
      %2237 = vset.pattern.permute.xlu0 0
      %2238 = vperm.xlu0 %2237, %v2230
      %v2239 = vpop.permute.xlu0 %2238
      %2242 = vset.pattern.permute.xlu0 0
      %2243 = vperm.xlu0 %2242, %v2231
      %v2244 = vpop.permute.xlu0 %2243
      %2247 = vset.pattern.permute.xlu0 0
      %2248 = vperm.xlu0 %2247, %v2232
      %v2249 = vpop.permute.xlu0 %2248
      %2252 = vset.pattern.permute.xlu0 0
      %2253 = vperm.xlu0 %2252, %v2233
      %v2254 = vpop.permute.xlu0 %2253
      %2257 = vset.pattern.permute.xlu0 0
      %2258 = vperm.xlu0 %2257, %v2234
      %v2259 = vpop.permute.xlu0 %2258
      %2262 = vset.pattern.permute.xlu0 0
      %2263 = vperm.xlu0 %2262, %v2235
      %v2264 = vpop.permute.xlu0 %2263
      %v2267 = vsel %vm1537, %v2223, 0
      %v2270 = vsel %vm1537, %v2224, 0
      %v2273 = vsel %vm1537, %v2225, 0
      %v2276 = vsel %vm1537, %v2226, 0
      %v2279 = vsel %vm1537, %v2227, 0
      %v2282 = vsel %vm1537, %v2228, 0
      %2284 = vmatprep.subr.mxu0 %v2219
      %2285 = vmatpush1.msra.mxu0 %v2218
      %2286 = vmatprep.subr.mxu0 %v2221
      %2287 = vmatpush1.msra.mxu0 %v2220
      %2288 = vmatprep.subr.mxu0 0.0
      %2289 = vmatpush1.msra.mxu0 0.0
      %2290 = vmatprep.subr.mxu0 0.0
      %2291 = vmatpush1.msra.mxu0 0.0
      %2292 = vmatprep.subr.mxu0 0.0
      %2293 = vmatpush1.msra.mxu0 0.0
      %2294 = vmatprep.subr.mxu0 0.0
      %2295 = vmatpush1.msra.mxu0 0.0
      %2296 = vmatprep.subr.mxu0 0.0
      %2297 = vmatpush1.msra.mxu0 0.0
      %2298 = vmatprep.subr.mxu0 0.0
      %2299 = vmatpush1.msra.mxu0 0.0
      %2300 = vmatprep.subr.mxu0 0.0
      %2301 = vmatpush1.msra.mxu0 0.0
      %2302 = vmatprep.subr.mxu0 0.0
      %2303 = vmatpush1.msra.mxu0 0.0
      %2304 = vmatprep.subr.mxu0 0.0
      %2305 = vmatpush1.msra.mxu0 0.0
      %2306 = vmatprep.subr.mxu0 0.0
      %2307 = vmatpush1.msra.mxu0 0.0
      %2308 = vmatprep.subr.mxu0 0.0
      %2309 = vmatpush1.msra.mxu0 0.0
      %2310 = vmatprep.subr.mxu0 0.0
      %2311 = vmatpush1.msra.mxu0 0.0
      %2312 = vmatprep.subr.mxu0 0.0
      %2313 = vmatpush1.msra.mxu0 0.0
      %2314 = vmatprep.subr.mxu0 0.0
      %2315 = vmatpush1.msra.mxu0 0.0
      %2316 = vmatprep.subr.mxu0 0.0
      %2317 = vmatpush1.msra.mxu0 0.0
      %2318 = vmatprep.subr.mxu0 0.0
      %2319 = vmatpush1.msra.mxu0 0.0
      %2320 = vmatprep.subr.mxu0 0.0
      %2321 = vmatpush1.msra.mxu0 0.0
      %2322 = vmatprep.subr.mxu0 0.0
      %2323 = vmatpush1.msra.mxu0 0.0
      %2324 = vmatprep.subr.mxu0 0.0
      %2325 = vmatpush1.msra.mxu0 0.0
      %2326 = vmatprep.subr.mxu0 0.0
      %2327 = vmatpush1.msra.mxu0 0.0
      %2328 = vmatprep.subr.mxu0 0.0
      %2329 = vmatpush1.msra.mxu0 0.0
      %2330 = vmatprep.subr.mxu0 0.0
      %2331 = vmatpush1.msra.mxu0 0.0
      %2332 = vmatprep.subr.mxu0 0.0
      %2333 = vmatpush1.msra.mxu0 0.0
      %2334 = vmatprep.subr.mxu0 0.0
      %2335 = vmatpush1.msra.mxu0 0.0
      %2336 = vmatprep.subr.mxu0 0.0
      %2337 = vmatpush1.msra.mxu0 0.0
      %2338 = vmatprep.subr.mxu0 0.0
      %2339 = vmatpush1.msra.mxu0 0.0
      %2340 = vmatprep.subr.mxu0 0.0
      %2341 = vmatpush1.msra.mxu0 0.0
      %2342 = vmatprep.subr.mxu0 0.0
      %2343 = vmatpush1.msra.mxu0 0.0
      %2344 = vmatprep.subr.mxu0 0.0
      %2345 = vmatpush1.msra.mxu0 0.0
      %2346 = vmatprep.subr.mxu0 0.0
      %2347 = vmatpush1.msra.mxu0 0.0
      %2348 = vmatprep.mubr.f32.mxu0 0.0
      %2349 = vmatmul.mubr.f32.gmra.mrb[0].mxu0 %v2267
      %v2350 = vpop.f32.mrb[0].mxu0
      %v2351 = vadd.f32 %v2239, %v2350
      %v2352 = vpop.f32.mrb[0].mxu0
      %v2353 = vadd.f32 %v2239, %v2352
      %2354 = vmatprep.mubr.f32.mxu0 0.0
      %2355 = vmatmul.mubr.f32.gmra.mrb[0].mxu0 %v2270
      %v2356 = vpop.f32.mrb[0].mxu0
      %v2357 = vadd.f32 %v2244, %v2356
      %v2358 = vpop.f32.mrb[0].mxu0
      %v2359 = vadd.f32 %v2244, %v2358
      %2360 = vmatprep.mubr.f32.mxu0 0.0
      %2361 = vmatmul.mubr.f32.gmra.mrb[0].mxu0 %v2273
      %v2362 = vpop.f32.mrb[0].mxu0
      %v2363 = vadd.f32 %v2249, %v2362
      %v2364 = vpop.f32.mrb[0].mxu0
      %v2365 = vadd.f32 %v2249, %v2364
      %2366 = vmatprep.mubr.f32.mxu0 0.0
      %2367 = vmatmul.mubr.f32.gmra.mrb[0].mxu0 %v2276
      %v2368 = vpop.f32.mrb[0].mxu0
      %v2369 = vadd.f32 %v2254, %v2368
      %v2370 = vpop.f32.mrb[0].mxu0
      %v2371 = vadd.f32 %v2254, %v2370
      %2372 = vmatprep.mubr.f32.mxu0 0.0
      %2373 = vmatmul.mubr.f32.gmra.mrb[0].mxu0 %v2279
      %v2374 = vpop.f32.mrb[0].mxu0
      %v2375 = vadd.f32 %v2259, %v2374
      %v2376 = vpop.f32.mrb[0].mxu0
      %v2377 = vadd.f32 %v2259, %v2376
      %2378 = vmatprep.mubr.f32.mxu0 0.0
      %2379 = vmatmul.mubr.f32.gmra.mrb[0].mxu0 %v2282
      %v2380 = vpop.f32.mrb[0].mxu0
      %v2381 = vadd.f32 %v2264, %v2380
      %v2382 = vpop.f32.mrb[0].mxu0
      %v2383 = vadd.f32 %v2264, %v2382
      %2384 = vdwg.mxu0
      %s2385 = scalar_lea.vmem %s13, 32
      %v2386 = vld [vmem:[%s2385] sm:$0xff]
      %v2387 = vld [vmem:[%s2385 + $0x8] sm:$0xff]
      %v2388 = vld [vmem:[%s2385 + $0x10] sm:$0xff]
      %v2389 = vld [vmem:[%s2385 + $0x18] sm:$0xff]
      %v2391 = vsel %vm749, %v2386, 0
      %v2394 = vsel %vm749, %v2387, 0
      %v2397 = vsel %vm749, %v2388, 0
      %v2400 = vsel %vm749, %v2389, 0
      %2402 = vmatprep.subr.mxu0 %v1943
      %2403 = vmatpush1.msra.mxu0 %v1942
      %2404 = vmatprep.subr.mxu0 %v1966
      %2405 = vmatpush1.msra.mxu0 %v1963
      %2406 = vmatprep.subr.mxu0 0.0
      %2407 = vmatpush1.msra.mxu0 0.0
      %2408 = vmatprep.subr.mxu0 0.0
      %2409 = vmatpush1.msra.mxu0 0.0
      %2410 = vmatprep.subr.mxu0 0.0
      %2411 = vmatpush1.msra.mxu0 0.0
      %2412 = vmatprep.subr.mxu0 0.0
      %2413 = vmatpush1.msra.mxu0 0.0
      %2414 = vmatprep.subr.mxu0 0.0
      %2415 = vmatpush1.msra.mxu0 0.0
      %2416 = vmatprep.subr.mxu0 0.0
      %2417 = vmatpush1.msra.mxu0 0.0
      %2418 = vmatprep.subr.mxu0 0.0
      %2419 = vmatpush1.msra.mxu0 0.0
      %2420 = vmatprep.subr.mxu0 0.0
      %2421 = vmatpush1.msra.mxu0 0.0
      %2422 = vmatprep.subr.mxu0 0.0
      %2423 = vmatpush1.msra.mxu0 0.0
      %2424 = vmatprep.subr.mxu0 0.0
      %2425 = vmatpush1.msra.mxu0 0.0
      %2426 = vmatprep.subr.mxu0 0.0
      %2427 = vmatpush1.msra.mxu0 0.0
      %2428 = vmatprep.subr.mxu0 0.0
      %2429 = vmatpush1.msra.mxu0 0.0
      %2430 = vmatprep.subr.mxu0 0.0
      %2431 = vmatpush1.msra.mxu0 0.0
      %2432 = vmatprep.subr.mxu0 0.0
      %2433 = vmatpush1.msra.mxu0 0.0
      %2434 = vmatprep.subr.mxu0 0.0
      %2435 = vmatpush1.msra.mxu0 0.0
      %2436 = vmatprep.subr.mxu0 0.0
      %2437 = vmatpush1.msra.mxu0 0.0
      %2438 = vmatprep.subr.mxu0 0.0
      %2439 = vmatpush1.msra.mxu0 0.0
      %2440 = vmatprep.subr.mxu0 0.0
      %2441 = vmatpush1.msra.mxu0 0.0
      %2442 = vmatprep.subr.mxu0 0.0
      %2443 = vmatpush1.msra.mxu0 0.0
      %2444 = vmatprep.subr.mxu0 0.0
      %2445 = vmatpush1.msra.mxu0 0.0
      %2446 = vmatprep.subr.mxu0 0.0
      %2447 = vmatpush1.msra.mxu0 0.0
      %2448 = vmatprep.subr.mxu0 0.0
      %2449 = vmatpush1.msra.mxu0 0.0
      %2450 = vmatprep.subr.mxu0 0.0
      %2451 = vmatpush1.msra.mxu0 0.0
      %2452 = vmatprep.subr.mxu0 0.0
      %2453 = vmatpush1.msra.mxu0 0.0
      %2454 = vmatprep.subr.mxu0 0.0
      %2455 = vmatpush1.msra.mxu0 0.0
      %2456 = vmatprep.subr.mxu0 0.0
      %2457 = vmatpush1.msra.mxu0 0.0
      %2458 = vmatprep.subr.mxu0 0.0
      %2459 = vmatpush1.msra.mxu0 0.0
      %2460 = vmatprep.subr.mxu0 0.0
      %2461 = vmatpush1.msra.mxu0 0.0
      %2462 = vmatprep.subr.mxu0 0.0
      %2463 = vmatpush1.msra.mxu0 0.0
      %2464 = vmatprep.subr.mxu0 0.0
      %2465 = vmatpush1.msra.mxu0 0.0
      %2466 = vmatprep.mubr.f32.mxu0 0.0
      %2467 = vmatmul.mubr.f32.gmra.mrb[0].mxu0 %v2391
      %v2468 = vpop.f32.mrb[0].mxu0
      %v2469 = vadd.f32 0.0, %v2468
      %v2470 = vpop.f32.mrb[0].mxu0
      %v2471 = vadd.f32 0.0, %v2470
      %2472 = vmatprep.mubr.f32.mxu0 0.0
      %2473 = vmatmul.mubr.f32.gmra.mrb[0].mxu0 %v2394
      %v2474 = vpop.f32.mrb[0].mxu0
      %v2475 = vadd.f32 0.0, %v2474
      %v2476 = vpop.f32.mrb[0].mxu0
      %v2477 = vadd.f32 0.0, %v2476
      %2478 = vmatprep.mubr.f32.mxu0 0.0
      %2479 = vmatmul.mubr.f32.gmra.mrb[0].mxu0 %v2397
      %v2480 = vpop.f32.mrb[0].mxu0
      %v2481 = vadd.f32 0.0, %v2480
      %v2482 = vpop.f32.mrb[0].mxu0
      %v2483 = vadd.f32 0.0, %v2482
      %2484 = vmatprep.mubr.f32.mxu0 0.0
      %2485 = vmatmul.mubr.f32.gmra.mrb[0].mxu0 %v2400
      %v2486 = vpop.f32.mrb[0].mxu0
      %v2487 = vadd.f32 0.0, %v2486
      %v2488 = vpop.f32.mrb[0].mxu0
      %v2489 = vadd.f32 0.0, %v2488
      %2490 = vdwg.mxu0
      %v2491 = vadd.f32 %v2351, %v2469
      %v2492 = vadd.f32 %v2353, %v2471
      %v2493 = vadd.f32 %v2357, %v2475
      %v2494 = vadd.f32 %v2359, %v2477
      %v2495 = vxor.u32 %v2491, 2147483648
      %v2496 = vxor.u32 %v2492, 2147483648
      %v2497 = vxor.u32 %v2493, 2147483648
      %v2498 = vxor.u32 %v2494, 2147483648
      %v2499 = vmul.f32 %v2495, 1.442695
      %v2500 = vpow.pop %v2499
      %v2501 = vmul.f32 %v2496, 1.442695
      %v2502 = vpow.pop %v2501
      %v2503 = vmul.f32 %v2497, 1.442695
      %v2504 = vpow.pop %v2503
      %v2505 = vmul.f32 %v2498, 1.442695
      %v2506 = vpow.pop %v2505
      %v2507 = vadd.f32 %v2500, 1.0
      %v2508 = vadd.f32 %v2502, 1.0
      %v2509 = vadd.f32 %v2504, 1.0
      %v2510 = vadd.f32 %v2506, 1.0
      %v2511 = vrcp.pop %v2507
      %v2512 = vmul.f32 1.0, %v2511
      %v2513 = vrcp.pop %v2508
      %v2514 = vmul.f32 1.0, %v2513
      %v2515 = vrcp.pop %v2509
      %v2516 = vmul.f32 1.0, %v2515
      %v2517 = vrcp.pop %v2510
      %v2518 = vmul.f32 1.0, %v2517
      %v2519 = vadd.f32 %v2363, %v2481
      %v2520 = vadd.f32 %v2365, %v2483
      %v2521 = vadd.f32 %v2369, %v2487
      %v2522 = vadd.f32 %v2371, %v2489
      %v2523 = vxor.u32 %v2519, 2147483648
      %v2524 = vxor.u32 %v2520, 2147483648
      %v2525 = vxor.u32 %v2521, 2147483648
      %v2526 = vxor.u32 %v2522, 2147483648
      %v2527 = vmul.f32 %v2523, 1.442695
      %v2528 = vpow.pop %v2527
      %v2529 = vmul.f32 %v2524, 1.442695
      %v2530 = vpow.pop %v2529
      %v2531 = vmul.f32 %v2525, 1.442695
      %v2532 = vpow.pop %v2531
      %v2533 = vmul.f32 %v2526, 1.442695
      %v2534 = vpow.pop %v2533
      %v2535 = vadd.f32 %v2528, 1.0
      %v2536 = vadd.f32 %v2530, 1.0
      %v2537 = vadd.f32 %v2532, 1.0
      %v2538 = vadd.f32 %v2534, 1.0
      %v2539 = vrcp.pop %v2535
      %v2540 = vmul.f32 1.0, %v2539
      %v2541 = vrcp.pop %v2536
      %v2542 = vmul.f32 1.0, %v2541
      %v2543 = vrcp.pop %v2537
      %v2544 = vmul.f32 1.0, %v2543
      %v2545 = vrcp.pop %v2538
      %v2546 = vmul.f32 1.0, %v2545
      %s2547 = scalar_lea.vmem %s14, 16
      %v2548 = vld [vmem:[%s2547] sm:$0xff]
      %v2549 = vld [vmem:[%s2547 + $0x8] sm:$0xff]
      %v2550 = vmul.f32 %v2512, %v1942
      %v2551 = vmul.f32 %v2514, %v1943
      %v2552 = vmul.f32 %v2516, %v1944
      %v2553 = vmul.f32 %v2518, %v1945
      %v2555 = vsel %vm749, %v2548, 0
      %v2558 = vsel %vm749, %v2549, 0
      %v2561 = vsel %vm753, %v2552, 0
      %v2564 = vsel %vm753, %v2553, 0
      %2566 = vmatprep.subr.mxu0 %v2551
      %2567 = vmatpush1.msra.mxu0 %v2550
      %2568 = vmatprep.subr.mxu0 %v2564
      %2569 = vmatpush1.msra.mxu0 %v2561
      %2570 = vmatprep.subr.mxu0 0.0
      %2571 = vmatpush1.msra.mxu0 0.0
      %2572 = vmatprep.subr.mxu0 0.0
      %2573 = vmatpush1.msra.mxu0 0.0
      %2574 = vmatprep.subr.mxu0 0.0
      %2575 = vmatpush1.msra.mxu0 0.0
      %2576 = vmatprep.subr.mxu0 0.0
      %2577 = vmatpush1.msra.mxu0 0.0
      %2578 = vmatprep.subr.mxu0 0.0
      %2579 = vmatpush1.msra.mxu0 0.0
      %2580 = vmatprep.subr.mxu0 0.0
      %2581 = vmatpush1.msra.mxu0 0.0
      %2582 = vmatprep.subr.mxu0 0.0
      %2583 = vmatpush1.msra.mxu0 0.0
      %2584 = vmatprep.subr.mxu0 0.0
      %2585 = vmatpush1.msra.mxu0 0.0
      %2586 = vmatprep.subr.mxu0 0.0
      %2587 = vmatpush1.msra.mxu0 0.0
      %2588 = vmatprep.subr.mxu0 0.0
      %2589 = vmatpush1.msra.mxu0 0.0
      %2590 = vmatprep.subr.mxu0 0.0
      %2591 = vmatpush1.msra.mxu0 0.0
      %2592 = vmatprep.subr.mxu0 0.0
      %2593 = vmatpush1.msra.mxu0 0.0
      %2594 = vmatprep.subr.mxu0 0.0
      %2595 = vmatpush1.msra.mxu0 0.0
      %2596 = vmatprep.subr.mxu0 0.0
      %2597 = vmatpush1.msra.mxu0 0.0
      %2598 = vmatprep.subr.mxu0 0.0
      %2599 = vmatpush1.msra.mxu0 0.0
      %2600 = vmatprep.subr.mxu0 0.0
      %2601 = vmatpush1.msra.mxu0 0.0
      %2602 = vmatprep.subr.mxu0 0.0
      %2603 = vmatpush1.msra.mxu0 0.0
      %2604 = vmatprep.subr.mxu0 0.0
      %2605 = vmatpush1.msra.mxu0 0.0
      %2606 = vmatprep.subr.mxu0 0.0
      %2607 = vmatpush1.msra.mxu0 0.0
      %2608 = vmatprep.subr.mxu0 0.0
      %2609 = vmatpush1.msra.mxu0 0.0
      %2610 = vmatprep.subr.mxu0 0.0
      %2611 = vmatpush1.msra.mxu0 0.0
      %2612 = vmatprep.subr.mxu0 0.0
      %2613 = vmatpush1.msra.mxu0 0.0
      %2614 = vmatprep.subr.mxu0 0.0
      %2615 = vmatpush1.msra.mxu0 0.0
      %2616 = vmatprep.subr.mxu0 0.0
      %2617 = vmatpush1.msra.mxu0 0.0
      %2618 = vmatprep.subr.mxu0 0.0
      %2619 = vmatpush1.msra.mxu0 0.0
      %2620 = vmatprep.subr.mxu0 0.0
      %2621 = vmatpush1.msra.mxu0 0.0
      %2622 = vmatprep.subr.mxu0 0.0
      %2623 = vmatpush1.msra.mxu0 0.0
      %2624 = vmatprep.subr.mxu0 0.0
      %2625 = vmatpush1.msra.mxu0 0.0
      %2626 = vmatprep.subr.mxu0 0.0
      %2627 = vmatpush1.msra.mxu0 0.0
      %2628 = vmatprep.subr.mxu0 0.0
      %2629 = vmatpush1.msra.mxu0 0.0
      %2630 = vmatprep.mubr.f32.mxu0 0.0
      %2631 = vmatmul.mubr.f32.gmra.mrb[0].mxu0 %v2555
      %v2632 = vpop.f32.mrb[0].mxu0
      %v2633 = vadd.f32 0.0, %v2632
      %v2634 = vpop.f32.mrb[0].mxu0
      %v2635 = vadd.f32 0.0, %v2634
      %2636 = vmatprep.mubr.f32.mxu0 0.0
      %2637 = vmatmul.mubr.f32.gmra.mrb[0].mxu0 %v2558
      %v2638 = vpop.f32.mrb[0].mxu0
      %v2639 = vadd.f32 0.0, %v2638
      %v2640 = vpop.f32.mrb[0].mxu0
      %v2641 = vadd.f32 0.0, %v2640
      %2642 = vdwg.mxu0
      %v2643 = vadd.f32 %v2375, %v2633
      %v2644 = vadd.f32 %v2377, %v2635
      %v2645 = vadd.f32 %v2381, %v2639
      %v2646 = vadd.f32 %v2383, %v2641
      %v2647 = vtanh.pop %v2643
      %v2648 = vtanh.pop %v2644
      %v2649 = vtanh.pop %v2645
      %v2650 = vtanh.pop %v2646
      %v2651 = vsub.f32 1.0, %v2540
      %v2652 = vsub.f32 1.0, %v2542
      %v2653 = vsub.f32 1.0, %v2544
      %v2654 = vsub.f32 1.0, %v2546
      %v2655 = vmul.f32 %v2651, %v1942
      %v2656 = vmul.f32 %v2652, %v1943
      %v2657 = vmul.f32 %v2653, %v1944
      %v2658 = vmul.f32 %v2654, %v1945
      %v2659 = vmul.f32 %v2540, %v2647
      %v2660 = vmul.f32 %v2542, %v2648
      %v2661 = vmul.f32 %v2544, %v2649
      %v2662 = vmul.f32 %v2546, %v2650
      %v2663 = vadd.f32 %v2655, %v2659
      %v2664 = vadd.f32 %v2656, %v2660
      %v2665 = vadd.f32 %v2657, %v2661
      %v2666 = vadd.f32 %v2658, %v2662
      %s2667 = scalar_lea.vmem %s712, 32
      %2668 = vst [vmem:[%s2667] sm:$0xff] %v2663
      %2669 = vst [vmem:[%s2667 + $0x8] sm:$0xff] %v2664
      %2670 = vst [vmem:[%s2667 + $0x10] sm:$0x3] %v2665
      %2671 = vst [vmem:[%s2667 + $0x18] sm:$0x3] %v2666
      %s2672 = scalar_lea.vmem %s702, 64
      %v2673 = vld [vmem:[%s2672] sm:$0xff]
      %v2674 = vld [vmem:[%s2672 + $0x8] sm:$0xff]
      %v2675 = vld [vmem:[%s2672 + $0x10] sm:$0x3]
      %v2676 = vld [vmem:[%s2672 + $0x18] sm:$0x3]
      %v2677 = vld [vmem:[%s8] sm:$0xff]
      %v2678 = vld [vmem:[%s8 + $0x8] sm:$0xff]
      %v2679 = vld [vmem:[%s8 + $0x10] sm:$0xff]
      %v2680 = vld [vmem:[%s8 + $0x18] sm:$0xff]
      %v2682 = vsel %vm749, %v2677, 0
      %v2685 = vsel %vm749, %v2678, 0
      %v2688 = vsel %vm749, %v2679, 0
      %v2691 = vsel %vm749, %v2680, 0
      %v2694 = vsel %vm753, %v2675, 0
      %v2697 = vsel %vm753, %v2676, 0
      %2699 = vmatprep.subr.mxu0 %v2674
      %2700 = vmatpush1.msra.mxu0 %v2673
      %2701 = vmatprep.subr.mxu0 %v2697
      %2702 = vmatpush1.msra.mxu0 %v2694
      %2703 = vmatprep.subr.mxu0 0.0
      %2704 = vmatpush1.msra.mxu0 0.0
      %2705 = vmatprep.subr.mxu0 0.0
      %2706 = vmatpush1.msra.mxu0 0.0
      %2707 = vmatprep.subr.mxu0 0.0
      %2708 = vmatpush1.msra.mxu0 0.0
      %2709 = vmatprep.subr.mxu0 0.0
      %2710 = vmatpush1.msra.mxu0 0.0
      %2711 = vmatprep.subr.mxu0 0.0
      %2712 = vmatpush1.msra.mxu0 0.0
      %2713 = vmatprep.subr.mxu0 0.0
      %2714 = vmatpush1.msra.mxu0 0.0
      %2715 = vmatprep.subr.mxu0 0.0
      %2716 = vmatpush1.msra.mxu0 0.0
      %2717 = vmatprep.subr.mxu0 0.0
      %2718 = vmatpush1.msra.mxu0 0.0
      %2719 = vmatprep.subr.mxu0 0.0
      %2720 = vmatpush1.msra.mxu0 0.0
      %2721 = vmatprep.subr.mxu0 0.0
      %2722 = vmatpush1.msra.mxu0 0.0
      %2723 = vmatprep.subr.mxu0 0.0
      %2724 = vmatpush1.msra.mxu0 0.0
      %2725 = vmatprep.subr.mxu0 0.0
      %2726 = vmatpush1.msra.mxu0 0.0
      %2727 = vmatprep.subr.mxu0 0.0
      %2728 = vmatpush1.msra.mxu0 0.0
      %2729 = vmatprep.subr.mxu0 0.0
      %2730 = vmatpush1.msra.mxu0 0.0
      %2731 = vmatprep.subr.mxu0 0.0
      %2732 = vmatpush1.msra.mxu0 0.0
      %2733 = vmatprep.subr.mxu0 0.0
      %2734 = vmatpush1.msra.mxu0 0.0
      %2735 = vmatprep.subr.mxu0 0.0
      %2736 = vmatpush1.msra.mxu0 0.0
      %2737 = vmatprep.subr.mxu0 0.0
      %2738 = vmatpush1.msra.mxu0 0.0
      %2739 = vmatprep.subr.mxu0 0.0
      %2740 = vmatpush1.msra.mxu0 0.0
      %2741 = vmatprep.subr.mxu0 0.0
      %2742 = vmatpush1.msra.mxu0 0.0
      %2743 = vmatprep.subr.mxu0 0.0
      %2744 = vmatpush1.msra.mxu0 0.0
      %2745 = vmatprep.subr.mxu0 0.0
      %2746 = vmatpush1.msra.mxu0 0.0
      %2747 = vmatprep.subr.mxu0 0.0
      %2748 = vmatpush1.msra.mxu0 0.0
      %2749 = vmatprep.subr.mxu0 0.0
      %2750 = vmatpush1.msra.mxu0 0.0
      %2751 = vmatprep.subr.mxu0 0.0
      %2752 = vmatpush1.msra.mxu0 0.0
      %2753 = vmatprep.subr.mxu0 0.0
      %2754 = vmatpush1.msra.mxu0 0.0
      %2755 = vmatprep.subr.mxu0 0.0
      %2756 = vmatpush1.msra.mxu0 0.0
      %2757 = vmatprep.subr.mxu0 0.0
      %2758 = vmatpush1.msra.mxu0 0.0
      %2759 = vmatprep.subr.mxu0 0.0
      %2760 = vmatpush1.msra.mxu0 0.0
      %2761 = vmatprep.subr.mxu0 0.0
      %2762 = vmatpush1.msra.mxu0 0.0
      %2763 = vmatprep.mubr.f32.mxu0 0.0
      %2764 = vmatmul.mubr.f32.gmra.mrb[0].mxu0 %v2682
      %v2765 = vpop.f32.mrb[0].mxu0
      %v2766 = vadd.f32 0.0, %v2765
      %v2767 = vpop.f32.mrb[0].mxu0
      %v2768 = vadd.f32 0.0, %v2767
      %2769 = vmatprep.mubr.f32.mxu0 0.0
      %2770 = vmatmul.mubr.f32.gmra.mrb[0].mxu0 %v2685
      %v2771 = vpop.f32.mrb[0].mxu0
      %v2772 = vadd.f32 0.0, %v2771
      %v2773 = vpop.f32.mrb[0].mxu0
      %v2774 = vadd.f32 0.0, %v2773
      %2775 = vmatprep.mubr.f32.mxu0 0.0
      %2776 = vmatmul.mubr.f32.gmra.mrb[0].mxu0 %v2688
      %v2777 = vpop.f32.mrb[0].mxu0
      %v2778 = vadd.f32 0.0, %v2777
      %v2779 = vpop.f32.mrb[0].mxu0
      %v2780 = vadd.f32 0.0, %v2779
      %2781 = vmatprep.mubr.f32.mxu0 0.0
      %2782 = vmatmul.mubr.f32.gmra.mrb[0].mxu0 %v2691
      %v2783 = vpop.f32.mrb[0].mxu0
      %v2784 = vadd.f32 0.0, %v2783
      %v2785 = vpop.f32.mrb[0].mxu0
      %v2786 = vadd.f32 0.0, %v2785
      %2787 = vdwg.mxu0
      %v2788 = vlaneseq
      %v2789 = vshrl.u32 %v2788, 7
      %v2790 = vsub.s32 3, %v2789
      %v2791 = vrot.slane %v962, %v2790
      %v2792 = vlaneseq
      %v2793 = vshrl.u32 %v2792, 7
      %v2794 = vsub.s32 3, %v2793
      %v2795 = vrot.slane %v963, %v2794
      %v2796 = vmul.f32 %v1086, %v2791
      %v2797 = vmul.f32 %v1088, %v2795
      %v2798 = vmul.f32 %v1092, %v2791
      %v2799 = vmul.f32 %v1094, %v2795
      %v2800 = vmul.f32 %v1098, %v2791
      %v2801 = vmul.f32 %v1100, %v2795
      %v2802 = vmul.f32 %v1104, %v2791
      %v2803 = vmul.f32 %v1106, %v2795
      %v2804 = vadd.f32 %v2796, %v2766
      %v2805 = vadd.f32 %v2797, %v2768
      %v2806 = vadd.f32 %v2798, %v2772
      %v2807 = vadd.f32 %v2799, %v2774
      %v2808 = vadd.f32 %v2800, %v2778
      %v2809 = vadd.f32 %v2801, %v2780
      %v2810 = vadd.f32 %v2802, %v2784
      %v2811 = vadd.f32 %v2803, %v2786
      %v2812 = vld [vmem:[%s9] sm:$0xff]
      %v2813 = vld [vmem:[%s9 + $0x8] sm:$0xff]
      %v2814 = vld [vmem:[%s9 + $0x10] sm:$0xff]
      %v2815 = vld [vmem:[%s9 + $0x18] sm:$0xff]
      %2817 = vset.pattern.permute.xlu0 0
      %2818 = vperm.xlu0 %2817, %v2812
      %v2819 = vpop.permute.xlu0 %2818
      %2822 = vset.pattern.permute.xlu0 0
      %2823 = vperm.xlu0 %2822, %v2813
      %v2824 = vpop.permute.xlu0 %2823
      %2827 = vset.pattern.permute.xlu0 0
      %2828 = vperm.xlu0 %2827, %v2814
      %v2829 = vpop.permute.xlu0 %2828
      %2832 = vset.pattern.permute.xlu0 0
      %2833 = vperm.xlu0 %2832, %v2815
      %v2834 = vpop.permute.xlu0 %2833
      %v2836 = vadd.f32 %v2804, %v2819
      %v2837 = vadd.f32 %v2805, %v2819
      %v2838 = vadd.f32 %v2806, %v2824
      %v2839 = vadd.f32 %v2807, %v2824
      %v2840 = vadd.f32 %v2808, %v2829
      %v2841 = vadd.f32 %v2809, %v2829
      %v2842 = vadd.f32 %v2810, %v2834
      %v2843 = vadd.f32 %v2811, %v2834
      %v2844 = vmax.f32 %v2836, 0.0
      %v2845 = vmax.f32 %v2837, 0.0
      %v2846 = vmax.f32 %v2838, 0.0
      %v2847 = vmax.f32 %v2839, 0.0
      %v2848 = vmax.f32 %v2840, 0.0
      %v2849 = vmax.f32 %v2841, 0.0
      %v2850 = vmax.f32 %v2842, 0.0
      %v2851 = vmax.f32 %v2843, 0.0
      %v2852 = vld [vmem:[%s10] sm:$0xff]
      %v2853 = vld [vmem:[%s10 + $0x8] sm:$0xff]
      %v2854 = vld [vmem:[%s11] sm:$0xff]
      %v2855 = vld [vmem:[%s11 + $0x8] sm:$0xff]
      %2857 = vset.pattern.permute.xlu0 0
      %2858 = vperm.xlu0 %2857, %v2854
      %v2859 = vpop.permute.xlu0 %2858
      %2862 = vset.pattern.permute.xlu0 0
      %2863 = vperm.xlu0 %2862, %v2855
      %v2864 = vpop.permute.xlu0 %2863
      %v2867 = vsel %vm1407, %v2852, 0
      %v2870 = vsel %vm1407, %v2853, 0
      %2872 = vmatprep.subr.mxu0 %v2845
      %2873 = vmatpush1.msra.mxu0 %v2844
      %2874 = vmatprep.subr.mxu0 %v2847
      %2875 = vmatpush1.msra.mxu0 %v2846
      %2876 = vmatprep.subr.mxu0 %v2849
      %2877 = vmatpush1.msra.mxu0 %v2848
      %2878 = vmatprep.subr.mxu0 %v2851
      %2879 = vmatpush1.msra.mxu0 %v2850
      %2880 = vmatprep.subr.mxu0 0.0
      %2881 = vmatpush1.msra.mxu0 0.0
      %2882 = vmatprep.subr.mxu0 0.0
      %2883 = vmatpush1.msra.mxu0 0.0
      %2884 = vmatprep.subr.mxu0 0.0
      %2885 = vmatpush1.msra.mxu0 0.0
      %2886 = vmatprep.subr.mxu0 0.0
      %2887 = vmatpush1.msra.mxu0 0.0
      %2888 = vmatprep.subr.mxu0 0.0
      %2889 = vmatpush1.msra.mxu0 0.0
      %2890 = vmatprep.subr.mxu0 0.0
      %2891 = vmatpush1.msra.mxu0 0.0
      %2892 = vmatprep.subr.mxu0 0.0
      %2893 = vmatpush1.msra.mxu0 0.0
      %2894 = vmatprep.subr.mxu0 0.0
      %2895 = vmatpush1.msra.mxu0 0.0
      %2896 = vmatprep.subr.mxu0 0.0
      %2897 = vmatpush1.msra.mxu0 0.0
      %2898 = vmatprep.subr.mxu0 0.0
      %2899 = vmatpush1.msra.mxu0 0.0
      %2900 = vmatprep.subr.mxu0 0.0
      %2901 = vmatpush1.msra.mxu0 0.0
      %2902 = vmatprep.subr.mxu0 0.0
      %2903 = vmatpush1.msra.mxu0 0.0
      %2904 = vmatprep.subr.mxu0 0.0
      %2905 = vmatpush1.msra.mxu0 0.0
      %2906 = vmatprep.subr.mxu0 0.0
      %2907 = vmatpush1.msra.mxu0 0.0
      %2908 = vmatprep.subr.mxu0 0.0
      %2909 = vmatpush1.msra.mxu0 0.0
      %2910 = vmatprep.subr.mxu0 0.0
      %2911 = vmatpush1.msra.mxu0 0.0
      %2912 = vmatprep.subr.mxu0 0.0
      %2913 = vmatpush1.msra.mxu0 0.0
      %2914 = vmatprep.subr.mxu0 0.0
      %2915 = vmatpush1.msra.mxu0 0.0
      %2916 = vmatprep.subr.mxu0 0.0
      %2917 = vmatpush1.msra.mxu0 0.0
      %2918 = vmatprep.subr.mxu0 0.0
      %2919 = vmatpush1.msra.mxu0 0.0
      %2920 = vmatprep.subr.mxu0 0.0
      %2921 = vmatpush1.msra.mxu0 0.0
      %2922 = vmatprep.subr.mxu0 0.0
      %2923 = vmatpush1.msra.mxu0 0.0
      %2924 = vmatprep.subr.mxu0 0.0
      %2925 = vmatpush1.msra.mxu0 0.0
      %2926 = vmatprep.subr.mxu0 0.0
      %2927 = vmatpush1.msra.mxu0 0.0
      %2928 = vmatprep.subr.mxu0 0.0
      %2929 = vmatpush1.msra.mxu0 0.0
      %2930 = vmatprep.subr.mxu0 0.0
      %2931 = vmatpush1.msra.mxu0 0.0
      %2932 = vmatprep.subr.mxu0 0.0
      %2933 = vmatpush1.msra.mxu0 0.0
      %2934 = vmatprep.subr.mxu0 0.0
      %2935 = vmatpush1.msra.mxu0 0.0
      %2936 = vmatprep.mubr.f32.mxu0 0.0
      %2937 = vmatmul.mubr.f32.gmra.mrb[0].mxu0 %v2867
      %v2938 = vpop.f32.mrb[0].mxu0
      %v2939 = vadd.f32 %v2859, %v2938
      %v2940 = vpop.f32.mrb[0].mxu0
      %v2941 = vadd.f32 %v2859, %v2940
      %2942 = vmatprep.mubr.f32.mxu0 0.0
      %2943 = vmatmul.mubr.f32.gmra.mrb[0].mxu0 %v2870
      %v2944 = vpop.f32.mrb[0].mxu0
      %v2945 = vadd.f32 %v2864, %v2944
      %v2946 = vpop.f32.mrb[0].mxu0
      %v2947 = vadd.f32 %v2864, %v2946
      %2948 = vdwg.mxu0
      %v2949 = vmax.f32 %v2939, 0.0
      %v2950 = vmax.f32 %v2941, 0.0
      %v2951 = vmax.f32 %v2945, 0.0
      %v2952 = vmax.f32 %v2947, 0.0
      %s2953 = scalar_lea.vmem %s12, 96
      %v2954 = vld [vmem:[%s2953] sm:$0xff]
      %v2955 = vld [vmem:[%s2953 + $0x8] sm:$0xff]
      %v2956 = vld [vmem:[%s2953 + $0x10] sm:$0xff]
      %v2957 = vld [vmem:[%s2953 + $0x18] sm:$0xff]
      %v2958 = vld [vmem:[%s2953 + $0x20] sm:$0xff]
      %v2959 = vld [vmem:[%s2953 + $0x28] sm:$0xff]
      %s2960 = scalar_lea.vmem %s15, 96
      %v2961 = vld [vmem:[%s2960] sm:$0xff]
      %v2962 = vld [vmem:[%s2960 + $0x8] sm:$0xff]
      %v2963 = vld [vmem:[%s2960 + $0x10] sm:$0xff]
      %v2964 = vld [vmem:[%s2960 + $0x18] sm:$0xff]
      %v2965 = vld [vmem:[%s2960 + $0x20] sm:$0xff]
      %v2966 = vld [vmem:[%s2960 + $0x28] sm:$0xff]
      %2968 = vset.pattern.permute.xlu0 0
      %2969 = vperm.xlu0 %2968, %v2961
      %v2970 = vpop.permute.xlu0 %2969
      %2973 = vset.pattern.permute.xlu0 0
      %2974 = vperm.xlu0 %2973, %v2962
      %v2975 = vpop.permute.xlu0 %2974
      %2978 = vset.pattern.permute.xlu0 0
      %2979 = vperm.xlu0 %2978, %v2963
      %v2980 = vpop.permute.xlu0 %2979
      %2983 = vset.pattern.permute.xlu0 0
      %2984 = vperm.xlu0 %2983, %v2964
      %v2985 = vpop.permute.xlu0 %2984
      %2988 = vset.pattern.permute.xlu0 0
      %2989 = vperm.xlu0 %2988, %v2965
      %v2990 = vpop.permute.xlu0 %2989
      %2993 = vset.pattern.permute.xlu0 0
      %2994 = vperm.xlu0 %2993, %v2966
      %v2995 = vpop.permute.xlu0 %2994
      %v2998 = vsel %vm1537, %v2954, 0
      %v3001 = vsel %vm1537, %v2955, 0
      %v3004 = vsel %vm1537, %v2956, 0
      %v3007 = vsel %vm1537, %v2957, 0
      %v3010 = vsel %vm1537, %v2958, 0
      %v3013 = vsel %vm1537, %v2959, 0
      %3015 = vmatprep.subr.mxu0 %v2950
      %3016 = vmatpush1.msra.mxu0 %v2949
      %3017 = vmatprep.subr.mxu0 %v2952
      %3018 = vmatpush1.msra.mxu0 %v2951
      %3019 = vmatprep.subr.mxu0 0.0
      %3020 = vmatpush1.msra.mxu0 0.0
      %3021 = vmatprep.subr.mxu0 0.0
      %3022 = vmatpush1.msra.mxu0 0.0
      %3023 = vmatprep.subr.mxu0 0.0
      %3024 = vmatpush1.msra.mxu0 0.0
      %3025 = vmatprep.subr.mxu0 0.0
      %3026 = vmatpush1.msra.mxu0 0.0
      %3027 = vmatprep.subr.mxu0 0.0
      %3028 = vmatpush1.msra.mxu0 0.0
      %3029 = vmatprep.subr.mxu0 0.0
      %3030 = vmatpush1.msra.mxu0 0.0
      %3031 = vmatprep.subr.mxu0 0.0
      %3032 = vmatpush1.msra.mxu0 0.0
      %3033 = vmatprep.subr.mxu0 0.0
      %3034 = vmatpush1.msra.mxu0 0.0
      %3035 = vmatprep.subr.mxu0 0.0
      %3036 = vmatpush1.msra.mxu0 0.0
      %3037 = vmatprep.subr.mxu0 0.0
      %3038 = vmatpush1.msra.mxu0 0.0
      %3039 = vmatprep.subr.mxu0 0.0
      %3040 = vmatpush1.msra.mxu0 0.0
      %3041 = vmatprep.subr.mxu0 0.0
      %3042 = vmatpush1.msra.mxu0 0.0
      %3043 = vmatprep.subr.mxu0 0.0
      %3044 = vmatpush1.msra.mxu0 0.0
      %3045 = vmatprep.subr.mxu0 0.0
      %3046 = vmatpush1.msra.mxu0 0.0
      %3047 = vmatprep.subr.mxu0 0.0
      %3048 = vmatpush1.msra.mxu0 0.0
      %3049 = vmatprep.subr.mxu0 0.0
      %3050 = vmatpush1.msra.mxu0 0.0
      %3051 = vmatprep.subr.mxu0 0.0
      %3052 = vmatpush1.msra.mxu0 0.0
      %3053 = vmatprep.subr.mxu0 0.0
      %3054 = vmatpush1.msra.mxu0 0.0
      %3055 = vmatprep.subr.mxu0 0.0
      %3056 = vmatpush1.msra.mxu0 0.0
      %3057 = vmatprep.subr.mxu0 0.0
      %3058 = vmatpush1.msra.mxu0 0.0
      %3059 = vmatprep.subr.mxu0 0.0
      %3060 = vmatpush1.msra.mxu0 0.0
      %3061 = vmatprep.subr.mxu0 0.0
      %3062 = vmatpush1.msra.mxu0 0.0
      %3063 = vmatprep.subr.mxu0 0.0
      %3064 = vmatpush1.msra.mxu0 0.0
      %3065 = vmatprep.subr.mxu0 0.0
      %3066 = vmatpush1.msra.mxu0 0.0
      %3067 = vmatprep.subr.mxu0 0.0
      %3068 = vmatpush1.msra.mxu0 0.0
      %3069 = vmatprep.subr.mxu0 0.0
      %3070 = vmatpush1.msra.mxu0 0.0
      %3071 = vmatprep.subr.mxu0 0.0
      %3072 = vmatpush1.msra.mxu0 0.0
      %3073 = vmatprep.subr.mxu0 0.0
      %3074 = vmatpush1.msra.mxu0 0.0
      %3075 = vmatprep.subr.mxu0 0.0
      %3076 = vmatpush1.msra.mxu0 0.0
      %3077 = vmatprep.subr.mxu0 0.0
      %3078 = vmatpush1.msra.mxu0 0.0
      %3079 = vmatprep.mubr.f32.mxu0 0.0
      %3080 = vmatmul.mubr.f32.gmra.mrb[0].mxu0 %v2998
      %v3081 = vpop.f32.mrb[0].mxu0
      %v3082 = vadd.f32 %v2970, %v3081
      %v3083 = vpop.f32.mrb[0].mxu0
      %v3084 = vadd.f32 %v2970, %v3083
      %3085 = vmatprep.mubr.f32.mxu0 0.0
      %3086 = vmatmul.mubr.f32.gmra.mrb[0].mxu0 %v3001
      %v3087 = vpop.f32.mrb[0].mxu0
      %v3088 = vadd.f32 %v2975, %v3087
      %v3089 = vpop.f32.mrb[0].mxu0
      %v3090 = vadd.f32 %v2975, %v3089
      %3091 = vmatprep.mubr.f32.mxu0 0.0
      %3092 = vmatmul.mubr.f32.gmra.mrb[0].mxu0 %v3004
      %v3093 = vpop.f32.mrb[0].mxu0
      %v3094 = vadd.f32 %v2980, %v3093
      %v3095 = vpop.f32.mrb[0].mxu0
      %v3096 = vadd.f32 %v2980, %v3095
      %3097 = vmatprep.mubr.f32.mxu0 0.0
      %3098 = vmatmul.mubr.f32.gmra.mrb[0].mxu0 %v3007
      %v3099 = vpop.f32.mrb[0].mxu0
      %v3100 = vadd.f32 %v2985, %v3099
      %v3101 = vpop.f32.mrb[0].mxu0
      %v3102 = vadd.f32 %v2985, %v3101
      %3103 = vmatprep.mubr.f32.mxu0 0.0
      %3104 = vmatmul.mubr.f32.gmra.mrb[0].mxu0 %v3010
      %v3105 = vpop.f32.mrb[0].mxu0
      %v3106 = vadd.f32 %v2990, %v3105
      %v3107 = vpop.f32.mrb[0].mxu0
      %v3108 = vadd.f32 %v2990, %v3107
      %3109 = vmatprep.mubr.f32.mxu0 0.0
      %3110 = vmatmul.mubr.f32.gmra.mrb[0].mxu0 %v3013
      %v3111 = vpop.f32.mrb[0].mxu0
      %v3112 = vadd.f32 %v2995, %v3111
      %v3113 = vpop.f32.mrb[0].mxu0
      %v3114 = vadd.f32 %v2995, %v3113
      %3115 = vdwg.mxu0
      %s3116 = scalar_lea.vmem %s13, 64
      %v3117 = vld [vmem:[%s3116] sm:$0xff]
      %v3118 = vld [vmem:[%s3116 + $0x8] sm:$0xff]
      %v3119 = vld [vmem:[%s3116 + $0x10] sm:$0xff]
      %v3120 = vld [vmem:[%s3116 + $0x18] sm:$0xff]
      %v3122 = vsel %vm749, %v3117, 0
      %v3125 = vsel %vm749, %v3118, 0
      %v3128 = vsel %vm749, %v3119, 0
      %v3131 = vsel %vm749, %v3120, 0
      %3133 = vmatprep.subr.mxu0 %v2674
      %3134 = vmatpush1.msra.mxu0 %v2673
      %3135 = vmatprep.subr.mxu0 %v2697
      %3136 = vmatpush1.msra.mxu0 %v2694
      %3137 = vmatprep.subr.mxu0 0.0
      %3138 = vmatpush1.msra.mxu0 0.0
      %3139 = vmatprep.subr.mxu0 0.0
      %3140 = vmatpush1.msra.mxu0 0.0
      %3141 = vmatprep.subr.mxu0 0.0
      %3142 = vmatpush1.msra.mxu0 0.0
      %3143 = vmatprep.subr.mxu0 0.0
      %3144 = vmatpush1.msra.mxu0 0.0
      %3145 = vmatprep.subr.mxu0 0.0
      %3146 = vmatpush1.msra.mxu0 0.0
      %3147 = vmatprep.subr.mxu0 0.0
      %3148 = vmatpush1.msra.mxu0 0.0
      %3149 = vmatprep.subr.mxu0 0.0
      %3150 = vmatpush1.msra.mxu0 0.0
      %3151 = vmatprep.subr.mxu0 0.0
      %3152 = vmatpush1.msra.mxu0 0.0
      %3153 = vmatprep.subr.mxu0 0.0
      %3154 = vmatpush1.msra.mxu0 0.0
      %3155 = vmatprep.subr.mxu0 0.0
      %3156 = vmatpush1.msra.mxu0 0.0
      %3157 = vmatprep.subr.mxu0 0.0
      %3158 = vmatpush1.msra.mxu0 0.0
      %3159 = vmatprep.subr.mxu0 0.0
      %3160 = vmatpush1.msra.mxu0 0.0
      %3161 = vmatprep.subr.mxu0 0.0
      %3162 = vmatpush1.msra.mxu0 0.0
      %3163 = vmatprep.subr.mxu0 0.0
      %3164 = vmatpush1.msra.mxu0 0.0
      %3165 = vmatprep.subr.mxu0 0.0
      %3166 = vmatpush1.msra.mxu0 0.0
      %3167 = vmatprep.subr.mxu0 0.0
      %3168 = vmatpush1.msra.mxu0 0.0
      %3169 = vmatprep.subr.mxu0 0.0
      %3170 = vmatpush1.msra.mxu0 0.0
      %3171 = vmatprep.subr.mxu0 0.0
      %3172 = vmatpush1.msra.mxu0 0.0
      %3173 = vmatprep.subr.mxu0 0.0
      %3174 = vmatpush1.msra.mxu0 0.0
      %3175 = vmatprep.subr.mxu0 0.0
      %3176 = vmatpush1.msra.mxu0 0.0
      %3177 = vmatprep.subr.mxu0 0.0
      %3178 = vmatpush1.msra.mxu0 0.0
      %3179 = vmatprep.subr.mxu0 0.0
      %3180 = vmatpush1.msra.mxu0 0.0
      %3181 = vmatprep.subr.mxu0 0.0
      %3182 = vmatpush1.msra.mxu0 0.0
      %3183 = vmatprep.subr.mxu0 0.0
      %3184 = vmatpush1.msra.mxu0 0.0
      %3185 = vmatprep.subr.mxu0 0.0
      %3186 = vmatpush1.msra.mxu0 0.0
      %3187 = vmatprep.subr.mxu0 0.0
      %3188 = vmatpush1.msra.mxu0 0.0
      %3189 = vmatprep.subr.mxu0 0.0
      %3190 = vmatpush1.msra.mxu0 0.0
      %3191 = vmatprep.subr.mxu0 0.0
      %3192 = vmatpush1.msra.mxu0 0.0
      %3193 = vmatprep.subr.mxu0 0.0
      %3194 = vmatpush1.msra.mxu0 0.0
      %3195 = vmatprep.subr.mxu0 0.0
      %3196 = vmatpush1.msra.mxu0 0.0
      %3197 = vmatprep.mubr.f32.mxu0 0.0
      %3198 = vmatmul.mubr.f32.gmra.mrb[0].mxu0 %v3122
      %v3199 = vpop.f32.mrb[0].mxu0
      %v3200 = vadd.f32 0.0, %v3199
      %v3201 = vpop.f32.mrb[0].mxu0
      %v3202 = vadd.f32 0.0, %v3201
      %3203 = vmatprep.mubr.f32.mxu0 0.0
      %3204 = vmatmul.mubr.f32.gmra.mrb[0].mxu0 %v3125
      %v3205 = vpop.f32.mrb[0].mxu0
      %v3206 = vadd.f32 0.0, %v3205
      %v3207 = vpop.f32.mrb[0].mxu0
      %v3208 = vadd.f32 0.0, %v3207
      %3209 = vmatprep.mubr.f32.mxu0 0.0
      %3210 = vmatmul.mubr.f32.gmra.mrb[0].mxu0 %v3128
      %v3211 = vpop.f32.mrb[0].mxu0
      %v3212 = vadd.f32 0.0, %v3211
      %v3213 = vpop.f32.mrb[0].mxu0
      %v3214 = vadd.f32 0.0, %v3213
      %3215 = vmatprep.mubr.f32.mxu0 0.0
      %3216 = vmatmul.mubr.f32.gmra.mrb[0].mxu0 %v3131
      %v3217 = vpop.f32.mrb[0].mxu0
      %v3218 = vadd.f32 0.0, %v3217
      %v3219 = vpop.f32.mrb[0].mxu0
      %v3220 = vadd.f32 0.0, %v3219
      %3221 = vdwg.mxu0
      %v3222 = vadd.f32 %v3082, %v3200
      %v3223 = vadd.f32 %v3084, %v3202
      %v3224 = vadd.f32 %v3088, %v3206
      %v3225 = vadd.f32 %v3090, %v3208
      %v3226 = vxor.u32 %v3222, 2147483648
      %v3227 = vxor.u32 %v3223, 2147483648
      %v3228 = vxor.u32 %v3224, 2147483648
      %v3229 = vxor.u32 %v3225, 2147483648
      %v3230 = vmul.f32 %v3226, 1.442695
      %v3231 = vpow.pop %v3230
      %v3232 = vmul.f32 %v3227, 1.442695
      %v3233 = vpow.pop %v3232
      %v3234 = vmul.f32 %v3228, 1.442695
      %v3235 = vpow.pop %v3234
      %v3236 = vmul.f32 %v3229, 1.442695
      %v3237 = vpow.pop %v3236
      %v3238 = vadd.f32 %v3231, 1.0
      %v3239 = vadd.f32 %v3233, 1.0
      %v3240 = vadd.f32 %v3235, 1.0
      %v3241 = vadd.f32 %v3237, 1.0
      %v3242 = vrcp.pop %v3238
      %v3243 = vmul.f32 1.0, %v3242
      %v3244 = vrcp.pop %v3239
      %v3245 = vmul.f32 1.0, %v3244
      %v3246 = vrcp.pop %v3240
      %v3247 = vmul.f32 1.0, %v3246
      %v3248 = vrcp.pop %v3241
      %v3249 = vmul.f32 1.0, %v3248
      %v3250 = vadd.f32 %v3094, %v3212
      %v3251 = vadd.f32 %v3096, %v3214
      %v3252 = vadd.f32 %v3100, %v3218
      %v3253 = vadd.f32 %v3102, %v3220
      %v3254 = vxor.u32 %v3250, 2147483648
      %v3255 = vxor.u32 %v3251, 2147483648
      %v3256 = vxor.u32 %v3252, 2147483648
      %v3257 = vxor.u32 %v3253, 2147483648
      %v3258 = vmul.f32 %v3254, 1.442695
      %v3259 = vpow.pop %v3258
      %v3260 = vmul.f32 %v3255, 1.442695
      %v3261 = vpow.pop %v3260
      %v3262 = vmul.f32 %v3256, 1.442695
      %v3263 = vpow.pop %v3262
      %v3264 = vmul.f32 %v3257, 1.442695
      %v3265 = vpow.pop %v3264
      %v3266 = vadd.f32 %v3259, 1.0
      %v3267 = vadd.f32 %v3261, 1.0
      %v3268 = vadd.f32 %v3263, 1.0
      %v3269 = vadd.f32 %v3265, 1.0
      %v3270 = vrcp.pop %v3266
      %v3271 = vmul.f32 1.0, %v3270
      %v3272 = vrcp.pop %v3267
      %v3273 = vmul.f32 1.0, %v3272
      %v3274 = vrcp.pop %v3268
      %v3275 = vmul.f32 1.0, %v3274
      %v3276 = vrcp.pop %v3269
      %v3277 = vmul.f32 1.0, %v3276
      %s3278 = scalar_lea.vmem %s14, 32
      %v3279 = vld [vmem:[%s3278] sm:$0xff]
      %v3280 = vld [vmem:[%s3278 + $0x8] sm:$0xff]
      %v3281 = vmul.f32 %v3243, %v2673
      %v3282 = vmul.f32 %v3245, %v2674
      %v3283 = vmul.f32 %v3247, %v2675
      %v3284 = vmul.f32 %v3249, %v2676
      %v3286 = vsel %vm749, %v3279, 0
      %v3289 = vsel %vm749, %v3280, 0
      %v3292 = vsel %vm753, %v3283, 0
      %v3295 = vsel %vm753, %v3284, 0
      %3297 = vmatprep.subr.mxu0 %v3282
      %3298 = vmatpush1.msra.mxu0 %v3281
      %3299 = vmatprep.subr.mxu0 %v3295
      %3300 = vmatpush1.msra.mxu0 %v3292
      %3301 = vmatprep.subr.mxu0 0.0
      %3302 = vmatpush1.msra.mxu0 0.0
      %3303 = vmatprep.subr.mxu0 0.0
      %3304 = vmatpush1.msra.mxu0 0.0
      %3305 = vmatprep.subr.mxu0 0.0
      %3306 = vmatpush1.msra.mxu0 0.0
      %3307 = vmatprep.subr.mxu0 0.0
      %3308 = vmatpush1.msra.mxu0 0.0
      %3309 = vmatprep.subr.mxu0 0.0
      %3310 = vmatpush1.msra.mxu0 0.0
      %3311 = vmatprep.subr.mxu0 0.0
      %3312 = vmatpush1.msra.mxu0 0.0
      %3313 = vmatprep.subr.mxu0 0.0
      %3314 = vmatpush1.msra.mxu0 0.0
      %3315 = vmatprep.subr.mxu0 0.0
      %3316 = vmatpush1.msra.mxu0 0.0
      %3317 = vmatprep.subr.mxu0 0.0
      %3318 = vmatpush1.msra.mxu0 0.0
      %3319 = vmatprep.subr.mxu0 0.0
      %3320 = vmatpush1.msra.mxu0 0.0
      %3321 = vmatprep.subr.mxu0 0.0
      %3322 = vmatpush1.msra.mxu0 0.0
      %3323 = vmatprep.subr.mxu0 0.0
      %3324 = vmatpush1.msra.mxu0 0.0
      %3325 = vmatprep.subr.mxu0 0.0
      %3326 = vmatpush1.msra.mxu0 0.0
      %3327 = vmatprep.subr.mxu0 0.0
      %3328 = vmatpush1.msra.mxu0 0.0
      %3329 = vmatprep.subr.mxu0 0.0
      %3330 = vmatpush1.msra.mxu0 0.0
      %3331 = vmatprep.subr.mxu0 0.0
      %3332 = vmatpush1.msra.mxu0 0.0
      %3333 = vmatprep.subr.mxu0 0.0
      %3334 = vmatpush1.msra.mxu0 0.0
      %3335 = vmatprep.subr.mxu0 0.0
      %3336 = vmatpush1.msra.mxu0 0.0
      %3337 = vmatprep.subr.mxu0 0.0
      %3338 = vmatpush1.msra.mxu0 0.0
      %3339 = vmatprep.subr.mxu0 0.0
      %3340 = vmatpush1.msra.mxu0 0.0
      %3341 = vmatprep.subr.mxu0 0.0
      %3342 = vmatpush1.msra.mxu0 0.0
      %3343 = vmatprep.subr.mxu0 0.0
      %3344 = vmatpush1.msra.mxu0 0.0
      %3345 = vmatprep.subr.mxu0 0.0
      %3346 = vmatpush1.msra.mxu0 0.0
      %3347 = vmatprep.subr.mxu0 0.0
      %3348 = vmatpush1.msra.mxu0 0.0
      %3349 = vmatprep.subr.mxu0 0.0
      %3350 = vmatpush1.msra.mxu0 0.0
      %3351 = vmatprep.subr.mxu0 0.0
      %3352 = vmatpush1.msra.mxu0 0.0
      %3353 = vmatprep.subr.mxu0 0.0
      %3354 = vmatpush1.msra.mxu0 0.0
      %3355 = vmatprep.subr.mxu0 0.0
      %3356 = vmatpush1.msra.mxu0 0.0
      %3357 = vmatprep.subr.mxu0 0.0
      %3358 = vmatpush1.msra.mxu0 0.0
      %3359 = vmatprep.subr.mxu0 0.0
      %3360 = vmatpush1.msra.mxu0 0.0
      %3361 = vmatprep.mubr.f32.mxu0 0.0
      %3362 = vmatmul.mubr.f32.gmra.mrb[0].mxu0 %v3286
      %v3363 = vpop.f32.mrb[0].mxu0
      %v3364 = vadd.f32 0.0, %v3363
      %v3365 = vpop.f32.mrb[0].mxu0
      %v3366 = vadd.f32 0.0, %v3365
      %3367 = vmatprep.mubr.f32.mxu0 0.0
      %3368 = vmatmul.mubr.f32.gmra.mrb[0].mxu0 %v3289
      %v3369 = vpop.f32.mrb[0].mxu0
      %v3370 = vadd.f32 0.0, %v3369
      %v3371 = vpop.f32.mrb[0].mxu0
      %v3372 = vadd.f32 0.0, %v3371
      %3373 = vdwg.mxu0
      %v3374 = vadd.f32 %v3106, %v3364
      %v3375 = vadd.f32 %v3108, %v3366
      %v3376 = vadd.f32 %v3112, %v3370
      %v3377 = vadd.f32 %v3114, %v3372
      %v3378 = vtanh.pop %v3374
      %v3379 = vtanh.pop %v3375
      %v3380 = vtanh.pop %v3376
      %v3381 = vtanh.pop %v3377
      %v3382 = vsub.f32 1.0, %v3271
      %v3383 = vsub.f32 1.0, %v3273
      %v3384 = vsub.f32 1.0, %v3275
      %v3385 = vsub.f32 1.0, %v3277
      %v3386 = vmul.f32 %v3382, %v2673
      %v3387 = vmul.f32 %v3383, %v2674
      %v3388 = vmul.f32 %v3384, %v2675
      %v3389 = vmul.f32 %v3385, %v2676
      %v3390 = vmul.f32 %v3271, %v3378
      %v3391 = vmul.f32 %v3273, %v3379
      %v3392 = vmul.f32 %v3275, %v3380
      %v3393 = vmul.f32 %v3277, %v3381
      %v3394 = vadd.f32 %v3386, %v3390
      %v3395 = vadd.f32 %v3387, %v3391
      %v3396 = vadd.f32 %v3388, %v3392
      %v3397 = vadd.f32 %v3389, %v3393
      %s3398 = scalar_lea.vmem %s712, 64
      %3399 = vst [vmem:[%s3398] sm:$0xff] %v3394
      %3400 = vst [vmem:[%s3398 + $0x8] sm:$0xff] %v3395
      %3401 = vst [vmem:[%s3398 + $0x10] sm:$0x3] %v3396
      %3402 = vst [vmem:[%s3398 + $0x18] sm:$0x3] %v3397
      %s3403 = scalar_lea.vmem %s702, 96
      %v3404 = vld [vmem:[%s3403] sm:$0xff]
      %v3405 = vld [vmem:[%s3403 + $0x8] sm:$0xff]
      %v3406 = vld [vmem:[%s3403 + $0x10] sm:$0x3]
      %v3407 = vld [vmem:[%s3403 + $0x18] sm:$0x3]
      %v3408 = vld [vmem:[%s8] sm:$0xff]
      %v3409 = vld [vmem:[%s8 + $0x8] sm:$0xff]
      %v3410 = vld [vmem:[%s8 + $0x10] sm:$0xff]
      %v3411 = vld [vmem:[%s8 + $0x18] sm:$0xff]
      %v3413 = vsel %vm749, %v3408, 0
      %v3416 = vsel %vm749, %v3409, 0
      %v3419 = vsel %vm749, %v3410, 0
      %v3422 = vsel %vm749, %v3411, 0
      %v3425 = vsel %vm753, %v3406, 0
      %v3428 = vsel %vm753, %v3407, 0
      %3430 = vmatprep.subr.mxu0 %v3405
      %3431 = vmatpush1.msra.mxu0 %v3404
      %3432 = vmatprep.subr.mxu0 %v3428
      %3433 = vmatpush1.msra.mxu0 %v3425
      %3434 = vmatprep.subr.mxu0 0.0
      %3435 = vmatpush1.msra.mxu0 0.0
      %3436 = vmatprep.subr.mxu0 0.0
      %3437 = vmatpush1.msra.mxu0 0.0
      %3438 = vmatprep.subr.mxu0 0.0
      %3439 = vmatpush1.msra.mxu0 0.0
      %3440 = vmatprep.subr.mxu0 0.0
      %3441 = vmatpush1.msra.mxu0 0.0
      %3442 = vmatprep.subr.mxu0 0.0
      %3443 = vmatpush1.msra.mxu0 0.0
      %3444 = vmatprep.subr.mxu0 0.0
      %3445 = vmatpush1.msra.mxu0 0.0
      %3446 = vmatprep.subr.mxu0 0.0
      %3447 = vmatpush1.msra.mxu0 0.0
      %3448 = vmatprep.subr.mxu0 0.0
      %3449 = vmatpush1.msra.mxu0 0.0
      %3450 = vmatprep.subr.mxu0 0.0
      %3451 = vmatpush1.msra.mxu0 0.0
      %3452 = vmatprep.subr.mxu0 0.0
      %3453 = vmatpush1.msra.mxu0 0.0
      %3454 = vmatprep.subr.mxu0 0.0
      %3455 = vmatpush1.msra.mxu0 0.0
      %3456 = vmatprep.subr.mxu0 0.0
      %3457 = vmatpush1.msra.mxu0 0.0
      %3458 = vmatprep.subr.mxu0 0.0
      %3459 = vmatpush1.msra.mxu0 0.0
      %3460 = vmatprep.subr.mxu0 0.0
      %3461 = vmatpush1.msra.mxu0 0.0
      %3462 = vmatprep.subr.mxu0 0.0
      %3463 = vmatpush1.msra.mxu0 0.0
      %3464 = vmatprep.subr.mxu0 0.0
      %3465 = vmatpush1.msra.mxu0 0.0
      %3466 = vmatprep.subr.mxu0 0.0
      %3467 = vmatpush1.msra.mxu0 0.0
      %3468 = vmatprep.subr.mxu0 0.0
      %3469 = vmatpush1.msra.mxu0 0.0
      %3470 = vmatprep.subr.mxu0 0.0
      %3471 = vmatpush1.msra.mxu0 0.0
      %3472 = vmatprep.subr.mxu0 0.0
      %3473 = vmatpush1.msra.mxu0 0.0
      %3474 = vmatprep.subr.mxu0 0.0
      %3475 = vmatpush1.msra.mxu0 0.0
      %3476 = vmatprep.subr.mxu0 0.0
      %3477 = vmatpush1.msra.mxu0 0.0
      %3478 = vmatprep.subr.mxu0 0.0
      %3479 = vmatpush1.msra.mxu0 0.0
      %3480 = vmatprep.subr.mxu0 0.0
      %3481 = vmatpush1.msra.mxu0 0.0
      %3482 = vmatprep.subr.mxu0 0.0
      %3483 = vmatpush1.msra.mxu0 0.0
      %3484 = vmatprep.subr.mxu0 0.0
      %3485 = vmatpush1.msra.mxu0 0.0
      %3486 = vmatprep.subr.mxu0 0.0
      %3487 = vmatpush1.msra.mxu0 0.0
      %3488 = vmatprep.subr.mxu0 0.0
      %3489 = vmatpush1.msra.mxu0 0.0
      %3490 = vmatprep.subr.mxu0 0.0
      %3491 = vmatpush1.msra.mxu0 0.0
      %3492 = vmatprep.subr.mxu0 0.0
      %3493 = vmatpush1.msra.mxu0 0.0
      %3494 = vmatprep.mubr.f32.mxu0 0.0
      %3495 = vmatmul.mubr.f32.gmra.mrb[0].mxu0 %v3413
      %v3496 = vpop.f32.mrb[0].mxu0
      %v3497 = vadd.f32 0.0, %v3496
      %v3498 = vpop.f32.mrb[0].mxu0
      %v3499 = vadd.f32 0.0, %v3498
      %3500 = vmatprep.mubr.f32.mxu0 0.0
      %3501 = vmatmul.mubr.f32.gmra.mrb[0].mxu0 %v3416
      %v3502 = vpop.f32.mrb[0].mxu0
      %v3503 = vadd.f32 0.0, %v3502
      %v3504 = vpop.f32.mrb[0].mxu0
      %v3505 = vadd.f32 0.0, %v3504
      %3506 = vmatprep.mubr.f32.mxu0 0.0
      %3507 = vmatmul.mubr.f32.gmra.mrb[0].mxu0 %v3419
      %v3508 = vpop.f32.mrb[0].mxu0
      %v3509 = vadd.f32 0.0, %v3508
      %v3510 = vpop.f32.mrb[0].mxu0
      %v3511 = vadd.f32 0.0, %v3510
      %3512 = vmatprep.mubr.f32.mxu0 0.0
      %3513 = vmatmul.mubr.f32.gmra.mrb[0].mxu0 %v3422
      %v3514 = vpop.f32.mrb[0].mxu0
      %v3515 = vadd.f32 0.0, %v3514
      %v3516 = vpop.f32.mrb[0].mxu0
      %v3517 = vadd.f32 0.0, %v3516
      %3518 = vdwg.mxu0
      %v3519 = vlaneseq
      %v3520 = vshrl.u32 %v3519, 7
      %v3521 = vsub.s32 4, %v3520
      %v3522 = vrot.slane %v962, %v3521
      %v3523 = vlaneseq
      %v3524 = vshrl.u32 %v3523, 7
      %v3525 = vsub.s32 4, %v3524
      %v3526 = vrot.slane %v963, %v3525
      %v3527 = vmul.f32 %v1086, %v3522
      %v3528 = vmul.f32 %v1088, %v3526
      %v3529 = vmul.f32 %v1092, %v3522
      %v3530 = vmul.f32 %v1094, %v3526
      %v3531 = vmul.f32 %v1098, %v3522
      %v3532 = vmul.f32 %v1100, %v3526
      %v3533 = vmul.f32 %v1104, %v3522
      %v3534 = vmul.f32 %v1106, %v3526
      %v3535 = vadd.f32 %v3527, %v3497
      %v3536 = vadd.f32 %v3528, %v3499
      %v3537 = vadd.f32 %v3529, %v3503
      %v3538 = vadd.f32 %v3530, %v3505
      %v3539 = vadd.f32 %v3531, %v3509
      %v3540 = vadd.f32 %v3532, %v3511
      %v3541 = vadd.f32 %v3533, %v3515
      %v3542 = vadd.f32 %v3534, %v3517
      %v3543 = vld [vmem:[%s9] sm:$0xff]
      %v3544 = vld [vmem:[%s9 + $0x8] sm:$0xff]
      %v3545 = vld [vmem:[%s9 + $0x10] sm:$0xff]
      %v3546 = vld [vmem:[%s9 + $0x18] sm:$0xff]
      %3548 = vset.pattern.permute.xlu0 0
      %3549 = vperm.xlu0 %3548, %v3543
      %v3550 = vpop.permute.xlu0 %3549
      %3553 = vset.pattern.permute.xlu0 0
      %3554 = vperm.xlu0 %3553, %v3544
      %v3555 = vpop.permute.xlu0 %3554
      %3558 = vset.pattern.permute.xlu0 0
      %3559 = vperm.xlu0 %3558, %v3545
      %v3560 = vpop.permute.xlu0 %3559
      %3563 = vset.pattern.permute.xlu0 0
      %3564 = vperm.xlu0 %3563, %v3546
      %v3565 = vpop.permute.xlu0 %3564
      %v3567 = vadd.f32 %v3535, %v3550
      %v3568 = vadd.f32 %v3536, %v3550
      %v3569 = vadd.f32 %v3537, %v3555
      %v3570 = vadd.f32 %v3538, %v3555
      %v3571 = vadd.f32 %v3539, %v3560
      %v3572 = vadd.f32 %v3540, %v3560
      %v3573 = vadd.f32 %v3541, %v3565
      %v3574 = vadd.f32 %v3542, %v3565
      %v3575 = vmax.f32 %v3567, 0.0
      %v3576 = vmax.f32 %v3568, 0.0
      %v3577 = vmax.f32 %v3569, 0.0
      %v3578 = vmax.f32 %v3570, 0.0
      %v3579 = vmax.f32 %v3571, 0.0
      %v3580 = vmax.f32 %v3572, 0.0
      %v3581 = vmax.f32 %v3573, 0.0
      %v3582 = vmax.f32 %v3574, 0.0
      %v3583 = vld [vmem:[%s10] sm:$0xff]
      %v3584 = vld [vmem:[%s10 + $0x8] sm:$0xff]
      %v3585 = vld [vmem:[%s11] sm:$0xff]
      %v3586 = vld [vmem:[%s11 + $0x8] sm:$0xff]
      %3588 = vset.pattern.permute.xlu0 0
      %3589 = vperm.xlu0 %3588, %v3585
      %v3590 = vpop.permute.xlu0 %3589
      %3593 = vset.pattern.permute.xlu0 0
      %3594 = vperm.xlu0 %3593, %v3586
      %v3595 = vpop.permute.xlu0 %3594
      %v3598 = vsel %vm1407, %v3583, 0
      %v3601 = vsel %vm1407, %v3584, 0
      %3603 = vmatprep.subr.mxu0 %v3576
      %3604 = vmatpush1.msra.mxu0 %v3575
      %3605 = vmatprep.subr.mxu0 %v3578
      %3606 = vmatpush1.msra.mxu0 %v3577
      %3607 = vmatprep.subr.mxu0 %v3580
      %3608 = vmatpush1.msra.mxu0 %v3579
      %3609 = vmatprep.subr.mxu0 %v3582
      %3610 = vmatpush1.msra.mxu0 %v3581
      %3611 = vmatprep.subr.mxu0 0.0
      %3612 = vmatpush1.msra.mxu0 0.0
      %3613 = vmatprep.subr.mxu0 0.0
      %3614 = vmatpush1.msra.mxu0 0.0
      %3615 = vmatprep.subr.mxu0 0.0
      %3616 = vmatpush1.msra.mxu0 0.0
      %3617 = vmatprep.subr.mxu0 0.0
      %3618 = vmatpush1.msra.mxu0 0.0
      %3619 = vmatprep.subr.mxu0 0.0
      %3620 = vmatpush1.msra.mxu0 0.0
      %3621 = vmatprep.subr.mxu0 0.0
      %3622 = vmatpush1.msra.mxu0 0.0
      %3623 = vmatprep.subr.mxu0 0.0
      %3624 = vmatpush1.msra.mxu0 0.0
      %3625 = vmatprep.subr.mxu0 0.0
      %3626 = vmatpush1.msra.mxu0 0.0
      %3627 = vmatprep.subr.mxu0 0.0
      %3628 = vmatpush1.msra.mxu0 0.0
      %3629 = vmatprep.subr.mxu0 0.0
      %3630 = vmatpush1.msra.mxu0 0.0
      %3631 = vmatprep.subr.mxu0 0.0
      %3632 = vmatpush1.msra.mxu0 0.0
      %3633 = vmatprep.subr.mxu0 0.0
      %3634 = vmatpush1.msra.mxu0 0.0
      %3635 = vmatprep.subr.mxu0 0.0
      %3636 = vmatpush1.msra.mxu0 0.0
      %3637 = vmatprep.subr.mxu0 0.0
      %3638 = vmatpush1.msra.mxu0 0.0
      %3639 = vmatprep.subr.mxu0 0.0
      %3640 = vmatpush1.msra.mxu0 0.0
      %3641 = vmatprep.subr.mxu0 0.0
      %3642 = vmatpush1.msra.mxu0 0.0
      %3643 = vmatprep.subr.mxu0 0.0
      %3644 = vmatpush1.msra.mxu0 0.0
      %3645 = vmatprep.subr.mxu0 0.0
      %3646 = vmatpush1.msra.mxu0 0.0
      %3647 = vmatprep.subr.mxu0 0.0
      %3648 = vmatpush1.msra.mxu0 0.0
      %3649 = vmatprep.subr.mxu0 0.0
      %3650 = vmatpush1.msra.mxu0 0.0
      %3651 = vmatprep.subr.mxu0 0.0
      %3652 = vmatpush1.msra.mxu0 0.0
      %3653 = vmatprep.subr.mxu0 0.0
      %3654 = vmatpush1.msra.mxu0 0.0
      %3655 = vmatprep.subr.mxu0 0.0
      %3656 = vmatpush1.msra.mxu0 0.0
      %3657 = vmatprep.subr.mxu0 0.0
      %3658 = vmatpush1.msra.mxu0 0.0
      %3659 = vmatprep.subr.mxu0 0.0
      %3660 = vmatpush1.msra.mxu0 0.0
      %3661 = vmatprep.subr.mxu0 0.0
      %3662 = vmatpush1.msra.mxu0 0.0
      %3663 = vmatprep.subr.mxu0 0.0
      %3664 = vmatpush1.msra.mxu0 0.0
      %3665 = vmatprep.subr.mxu0 0.0
      %3666 = vmatpush1.msra.mxu0 0.0
      %3667 = vmatprep.mubr.f32.mxu0 0.0
      %3668 = vmatmul.mubr.f32.gmra.mrb[0].mxu0 %v3598
      %v3669 = vpop.f32.mrb[0].mxu0
      %v3670 = vadd.f32 %v3590, %v3669
      %v3671 = vpop.f32.mrb[0].mxu0
      %v3672 = vadd.f32 %v3590, %v3671
      %3673 = vmatprep.mubr.f32.mxu0 0.0
      %3674 = vmatmul.mubr.f32.gmra.mrb[0].mxu0 %v3601
      %v3675 = vpop.f32.mrb[0].mxu0
      %v3676 = vadd.f32 %v3595, %v3675
      %v3677 = vpop.f32.mrb[0].mxu0
      %v3678 = vadd.f32 %v3595, %v3677
      %3679 = vdwg.mxu0
      %v3680 = vmax.f32 %v3670, 0.0
      %v3681 = vmax.f32 %v3672, 0.0
      %v3682 = vmax.f32 %v3676, 0.0
      %v3683 = vmax.f32 %v3678, 0.0
      %s3684 = scalar_lea.vmem %s12, 144
      %v3685 = vld [vmem:[%s3684] sm:$0xff]
      %v3686 = vld [vmem:[%s3684 + $0x8] sm:$0xff]
      %v3687 = vld [vmem:[%s3684 + $0x10] sm:$0xff]
      %v3688 = vld [vmem:[%s3684 + $0x18] sm:$0xff]
      %v3689 = vld [vmem:[%s3684 + $0x20] sm:$0xff]
      %v3690 = vld [vmem:[%s3684 + $0x28] sm:$0xff]
      %s3691 = scalar_lea.vmem %s15, 144
      %v3692 = vld [vmem:[%s3691] sm:$0xff]
      %v3693 = vld [vmem:[%s3691 + $0x8] sm:$0xff]
      %v3694 = vld [vmem:[%s3691 + $0x10] sm:$0xff]
      %v3695 = vld [vmem:[%s3691 + $0x18] sm:$0xff]
      %v3696 = vld [vmem:[%s3691 + $0x20] sm:$0xff]
      %v3697 = vld [vmem:[%s3691 + $0x28] sm:$0xff]
      %3699 = vset.pattern.permute.xlu0 0
      %3700 = vperm.xlu0 %3699, %v3692
      %v3701 = vpop.permute.xlu0 %3700
      %3704 = vset.pattern.permute.xlu0 0
      %3705 = vperm.xlu0 %3704, %v3693
      %v3706 = vpop.permute.xlu0 %3705
      %3709 = vset.pattern.permute.xlu0 0
      %3710 = vperm.xlu0 %3709, %v3694
      %v3711 = vpop.permute.xlu0 %3710
      %3714 = vset.pattern.permute.xlu0 0
      %3715 = vperm.xlu0 %3714, %v3695
      %v3716 = vpop.permute.xlu0 %3715
      %3719 = vset.pattern.permute.xlu0 0
      %3720 = vperm.xlu0 %3719, %v3696
      %v3721 = vpop.permute.xlu0 %3720
      %3724 = vset.pattern.permute.xlu0 0
      %3725 = vperm.xlu0 %3724, %v3697
      %v3726 = vpop.permute.xlu0 %3725
      %v3729 = vsel %vm1537, %v3685, 0
      %v3732 = vsel %vm1537, %v3686, 0
      %v3735 = vsel %vm1537, %v3687, 0
      %v3738 = vsel %vm1537, %v3688, 0
      %v3741 = vsel %vm1537, %v3689, 0
      %v3744 = vsel %vm1537, %v3690, 0
      %3746 = vmatprep.subr.mxu0 %v3681
      %3747 = vmatpush1.msra.mxu0 %v3680
      %3748 = vmatprep.subr.mxu0 %v3683
      %3749 = vmatpush1.msra.mxu0 %v3682
      %3750 = vmatprep.subr.mxu0 0.0
      %3751 = vmatpush1.msra.mxu0 0.0
      %3752 = vmatprep.subr.mxu0 0.0
      %3753 = vmatpush1.msra.mxu0 0.0
      %3754 = vmatprep.subr.mxu0 0.0
      %3755 = vmatpush1.msra.mxu0 0.0
      %3756 = vmatprep.subr.mxu0 0.0
      %3757 = vmatpush1.msra.mxu0 0.0
      %3758 = vmatprep.subr.mxu0 0.0
      %3759 = vmatpush1.msra.mxu0 0.0
      %3760 = vmatprep.subr.mxu0 0.0
      %3761 = vmatpush1.msra.mxu0 0.0
      %3762 = vmatprep.subr.mxu0 0.0
      %3763 = vmatpush1.msra.mxu0 0.0
      %3764 = vmatprep.subr.mxu0 0.0
      %3765 = vmatpush1.msra.mxu0 0.0
      %3766 = vmatprep.subr.mxu0 0.0
      %3767 = vmatpush1.msra.mxu0 0.0
      %3768 = vmatprep.subr.mxu0 0.0
      %3769 = vmatpush1.msra.mxu0 0.0
      %3770 = vmatprep.subr.mxu0 0.0
      %3771 = vmatpush1.msra.mxu0 0.0
      %3772 = vmatprep.subr.mxu0 0.0
      %3773 = vmatpush1.msra.mxu0 0.0
      %3774 = vmatprep.subr.mxu0 0.0
      %3775 = vmatpush1.msra.mxu0 0.0
      %3776 = vmatprep.subr.mxu0 0.0
      %3777 = vmatpush1.msra.mxu0 0.0
      %3778 = vmatprep.subr.mxu0 0.0
      %3779 = vmatpush1.msra.mxu0 0.0
      %3780 = vmatprep.subr.mxu0 0.0
      %3781 = vmatpush1.msra.mxu0 0.0
      %3782 = vmatprep.subr.mxu0 0.0
      %3783 = vmatpush1.msra.mxu0 0.0
      %3784 = vmatprep.subr.mxu0 0.0
      %3785 = vmatpush1.msra.mxu0 0.0
      %3786 = vmatprep.subr.mxu0 0.0
      %3787 = vmatpush1.msra.mxu0 0.0
      %3788 = vmatprep.subr.mxu0 0.0
      %3789 = vmatpush1.msra.mxu0 0.0
      %3790 = vmatprep.subr.mxu0 0.0
      %3791 = vmatpush1.msra.mxu0 0.0
      %3792 = vmatprep.subr.mxu0 0.0
      %3793 = vmatpush1.msra.mxu0 0.0
      %3794 = vmatprep.subr.mxu0 0.0
      %3795 = vmatpush1.msra.mxu0 0.0
      %3796 = vmatprep.subr.mxu0 0.0
      %3797 = vmatpush1.msra.mxu0 0.0
      %3798 = vmatprep.subr.mxu0 0.0
      %3799 = vmatpush1.msra.mxu0 0.0
      %3800 = vmatprep.subr.mxu0 0.0
      %3801 = vmatpush1.msra.mxu0 0.0
      %3802 = vmatprep.subr.mxu0 0.0
      %3803 = vmatpush1.msra.mxu0 0.0
      %3804 = vmatprep.subr.mxu0 0.0
      %3805 = vmatpush1.msra.mxu0 0.0
      %3806 = vmatprep.subr.mxu0 0.0
      %3807 = vmatpush1.msra.mxu0 0.0
      %3808 = vmatprep.subr.mxu0 0.0
      %3809 = vmatpush1.msra.mxu0 0.0
      %3810 = vmatprep.mubr.f32.mxu0 0.0
      %3811 = vmatmul.mubr.f32.gmra.mrb[0].mxu0 %v3729
      %v3812 = vpop.f32.mrb[0].mxu0
      %v3813 = vadd.f32 %v3701, %v3812
      %v3814 = vpop.f32.mrb[0].mxu0
      %v3815 = vadd.f32 %v3701, %v3814
      %3816 = vmatprep.mubr.f32.mxu0 0.0
      %3817 = vmatmul.mubr.f32.gmra.mrb[0].mxu0 %v3732
      %v3818 = vpop.f32.mrb[0].mxu0
      %v3819 = vadd.f32 %v3706, %v3818
      %v3820 = vpop.f32.mrb[0].mxu0
      %v3821 = vadd.f32 %v3706, %v3820
      %3822 = vmatprep.mubr.f32.mxu0 0.0
      %3823 = vmatmul.mubr.f32.gmra.mrb[0].mxu0 %v3735
      %v3824 = vpop.f32.mrb[0].mxu0
      %v3825 = vadd.f32 %v3711, %v3824
      %v3826 = vpop.f32.mrb[0].mxu0
      %v3827 = vadd.f32 %v3711, %v3826
      %3828 = vmatprep.mubr.f32.mxu0 0.0
      %3829 = vmatmul.mubr.f32.gmra.mrb[0].mxu0 %v3738
      %v3830 = vpop.f32.mrb[0].mxu0
      %v3831 = vadd.f32 %v3716, %v3830
      %v3832 = vpop.f32.mrb[0].mxu0
      %v3833 = vadd.f32 %v3716, %v3832
      %3834 = vmatprep.mubr.f32.mxu0 0.0
      %3835 = vmatmul.mubr.f32.gmra.mrb[0].mxu0 %v3741
      %v3836 = vpop.f32.mrb[0].mxu0
      %v3837 = vadd.f32 %v3721, %v3836
      %v3838 = vpop.f32.mrb[0].mxu0
      %v3839 = vadd.f32 %v3721, %v3838
      %3840 = vmatprep.mubr.f32.mxu0 0.0
      %3841 = vmatmul.mubr.f32.gmra.mrb[0].mxu0 %v3744
      %v3842 = vpop.f32.mrb[0].mxu0
      %v3843 = vadd.f32 %v3726, %v3842
      %v3844 = vpop.f32.mrb[0].mxu0
      %v3845 = vadd.f32 %v3726, %v3844
      %3846 = vdwg.mxu0
      %s3847 = scalar_lea.vmem %s13, 96
      %v3848 = vld [vmem:[%s3847] sm:$0xff]
      %v3849 = vld [vmem:[%s3847 + $0x8] sm:$0xff]
      %v3850 = vld [vmem:[%s3847 + $0x10] sm:$0xff]
      %v3851 = vld [vmem:[%s3847 + $0x18] sm:$0xff]
      %v3853 = vsel %vm749, %v3848, 0
      %v3856 = vsel %vm749, %v3849, 0
      %v3859 = vsel %vm749, %v3850, 0
      %v3862 = vsel %vm749, %v3851, 0
      %3864 = vmatprep.subr.mxu0 %v3405
      %3865 = vmatpush1.msra.mxu0 %v3404
      %3866 = vmatprep.subr.mxu0 %v3428
      %3867 = vmatpush1.msra.mxu0 %v3425
      %3868 = vmatprep.subr.mxu0 0.0
      %3869 = vmatpush1.msra.mxu0 0.0
      %3870 = vmatprep.subr.mxu0 0.0
      %3871 = vmatpush1.msra.mxu0 0.0
      %3872 = vmatprep.subr.mxu0 0.0
      %3873 = vmatpush1.msra.mxu0 0.0
      %3874 = vmatprep.subr.mxu0 0.0
      %3875 = vmatpush1.msra.mxu0 0.0
      %3876 = vmatprep.subr.mxu0 0.0
      %3877 = vmatpush1.msra.mxu0 0.0
      %3878 = vmatprep.subr.mxu0 0.0
      %3879 = vmatpush1.msra.mxu0 0.0
      %3880 = vmatprep.subr.mxu0 0.0
      %3881 = vmatpush1.msra.mxu0 0.0
      %3882 = vmatprep.subr.mxu0 0.0
      %3883 = vmatpush1.msra.mxu0 0.0
      %3884 = vmatprep.subr.mxu0 0.0
      %3885 = vmatpush1.msra.mxu0 0.0
      %3886 = vmatprep.subr.mxu0 0.0
      %3887 = vmatpush1.msra.mxu0 0.0
      %3888 = vmatprep.subr.mxu0 0.0
      %3889 = vmatpush1.msra.mxu0 0.0
      %3890 = vmatprep.subr.mxu0 0.0
      %3891 = vmatpush1.msra.mxu0 0.0
      %3892 = vmatprep.subr.mxu0 0.0
      %3893 = vmatpush1.msra.mxu0 0.0
      %3894 = vmatprep.subr.mxu0 0.0
      %3895 = vmatpush1.msra.mxu0 0.0
      %3896 = vmatprep.subr.mxu0 0.0
      %3897 = vmatpush1.msra.mxu0 0.0
      %3898 = vmatprep.subr.mxu0 0.0
      %3899 = vmatpush1.msra.mxu0 0.0
      %3900 = vmatprep.subr.mxu0 0.0
      %3901 = vmatpush1.msra.mxu0 0.0
      %3902 = vmatprep.subr.mxu0 0.0
      %3903 = vmatpush1.msra.mxu0 0.0
      %3904 = vmatprep.subr.mxu0 0.0
      %3905 = vmatpush1.msra.mxu0 0.0
      %3906 = vmatprep.subr.mxu0 0.0
      %3907 = vmatpush1.msra.mxu0 0.0
      %3908 = vmatprep.subr.mxu0 0.0
      %3909 = vmatpush1.msra.mxu0 0.0
      %3910 = vmatprep.subr.mxu0 0.0
      %3911 = vmatpush1.msra.mxu0 0.0
      %3912 = vmatprep.subr.mxu0 0.0
      %3913 = vmatpush1.msra.mxu0 0.0
      %3914 = vmatprep.subr.mxu0 0.0
      %3915 = vmatpush1.msra.mxu0 0.0
      %3916 = vmatprep.subr.mxu0 0.0
      %3917 = vmatpush1.msra.mxu0 0.0
      %3918 = vmatprep.subr.mxu0 0.0
      %3919 = vmatpush1.msra.mxu0 0.0
      %3920 = vmatprep.subr.mxu0 0.0
      %3921 = vmatpush1.msra.mxu0 0.0
      %3922 = vmatprep.subr.mxu0 0.0
      %3923 = vmatpush1.msra.mxu0 0.0
      %3924 = vmatprep.subr.mxu0 0.0
      %3925 = vmatpush1.msra.mxu0 0.0
      %3926 = vmatprep.subr.mxu0 0.0
      %3927 = vmatpush1.msra.mxu0 0.0
      %3928 = vmatprep.mubr.f32.mxu0 0.0
      %3929 = vmatmul.mubr.f32.gmra.mrb[0].mxu0 %v3853
      %v3930 = vpop.f32.mrb[0].mxu0
      %v3931 = vadd.f32 0.0, %v3930
      %v3932 = vpop.f32.mrb[0].mxu0
      %v3933 = vadd.f32 0.0, %v3932
      %3934 = vmatprep.mubr.f32.mxu0 0.0
      %3935 = vmatmul.mubr.f32.gmra.mrb[0].mxu0 %v3856
      %v3936 = vpop.f32.mrb[0].mxu0
      %v3937 = vadd.f32 0.0, %v3936
      %v3938 = vpop.f32.mrb[0].mxu0
      %v3939 = vadd.f32 0.0, %v3938
      %3940 = vmatprep.mubr.f32.mxu0 0.0
      %3941 = vmatmul.mubr.f32.gmra.mrb[0].mxu0 %v3859
      %v3942 = vpop.f32.mrb[0].mxu0
      %v3943 = vadd.f32 0.0, %v3942
      %v3944 = vpop.f32.mrb[0].mxu0
      %v3945 = vadd.f32 0.0, %v3944
      %3946 = vmatprep.mubr.f32.mxu0 0.0
      %3947 = vmatmul.mubr.f32.gmra.mrb[0].mxu0 %v3862
      %v3948 = vpop.f32.mrb[0].mxu0
      %v3949 = vadd.f32 0.0, %v3948
      %v3950 = vpop.f32.mrb[0].mxu0
      %v3951 = vadd.f32 0.0, %v3950
      %3952 = vdwg.mxu0
      %v3953 = vadd.f32 %v3813, %v3931
      %v3954 = vadd.f32 %v3815, %v3933
      %v3955 = vadd.f32 %v3819, %v3937
      %v3956 = vadd.f32 %v3821, %v3939
      %v3957 = vxor.u32 %v3953, 2147483648
      %v3958 = vxor.u32 %v3954, 2147483648
      %v3959 = vxor.u32 %v3955, 2147483648
      %v3960 = vxor.u32 %v3956, 2147483648
      %v3961 = vmul.f32 %v3957, 1.442695
      %v3962 = vpow.pop %v3961
      %v3963 = vmul.f32 %v3958, 1.442695
      %v3964 = vpow.pop %v3963
      %v3965 = vmul.f32 %v3959, 1.442695
      %v3966 = vpow.pop %v3965
      %v3967 = vmul.f32 %v3960, 1.442695
      %v3968 = vpow.pop %v3967
      %v3969 = vadd.f32 %v3962, 1.0
      %v3970 = vadd.f32 %v3964, 1.0
      %v3971 = vadd.f32 %v3966, 1.0
      %v3972 = vadd.f32 %v3968, 1.0
      %v3973 = vrcp.pop %v3969
      %v3974 = vmul.f32 1.0, %v3973
      %v3975 = vrcp.pop %v3970
      %v3976 = vmul.f32 1.0, %v3975
      %v3977 = vrcp.pop %v3971
      %v3978 = vmul.f32 1.0, %v3977
      %v3979 = vrcp.pop %v3972
      %v3980 = vmul.f32 1.0, %v3979
      %v3981 = vadd.f32 %v3825, %v3943
      %v3982 = vadd.f32 %v3827, %v3945
      %v3983 = vadd.f32 %v3831, %v3949
      %v3984 = vadd.f32 %v3833, %v3951
      %v3985 = vxor.u32 %v3981, 2147483648
      %v3986 = vxor.u32 %v3982, 2147483648
      %v3987 = vxor.u32 %v3983, 2147483648
      %v3988 = vxor.u32 %v3984, 2147483648
      %v3989 = vmul.f32 %v3985, 1.442695
      %v3990 = vpow.pop %v3989
      %v3991 = vmul.f32 %v3986, 1.442695
      %v3992 = vpow.pop %v3991
      %v3993 = vmul.f32 %v3987, 1.442695
      %v3994 = vpow.pop %v3993
      %v3995 = vmul.f32 %v3988, 1.442695
      %v3996 = vpow.pop %v3995
      %v3997 = vadd.f32 %v3990, 1.0
      %v3998 = vadd.f32 %v3992, 1.0
      %v3999 = vadd.f32 %v3994, 1.0
      %v4000 = vadd.f32 %v3996, 1.0
      %v4001 = vrcp.pop %v3997
      %v4002 = vmul.f32 1.0, %v4001
      %v4003 = vrcp.pop %v3998
      %v4004 = vmul.f32 1.0, %v4003
      %v4005 = vrcp.pop %v3999
      %v4006 = vmul.f32 1.0, %v4005
      %v4007 = vrcp.pop %v4000
      %v4008 = vmul.f32 1.0, %v4007
      %s4009 = scalar_lea.vmem %s14, 48
      %v4010 = vld [vmem:[%s4009] sm:$0xff]
      %v4011 = vld [vmem:[%s4009 + $0x8] sm:$0xff]
      %v4012 = vmul.f32 %v3974, %v3404
      %v4013 = vmul.f32 %v3976, %v3405
      %v4014 = vmul.f32 %v3978, %v3406
      %v4015 = vmul.f32 %v3980, %v3407
      %v4017 = vsel %vm749, %v4010, 0
      %v4020 = vsel %vm749, %v4011, 0
      %v4023 = vsel %vm753, %v4014, 0
      %v4026 = vsel %vm753, %v4015, 0
      %4028 = vmatprep.subr.mxu0 %v4013
      %4029 = vmatpush1.msra.mxu0 %v4012
      %4030 = vmatprep.subr.mxu0 %v4026
      %4031 = vmatpush1.msra.mxu0 %v4023
      %4032 = vmatprep.subr.mxu0 0.0
      %4033 = vmatpush1.msra.mxu0 0.0
      %4034 = vmatprep.subr.mxu0 0.0
      %4035 = vmatpush1.msra.mxu0 0.0
      %4036 = vmatprep.subr.mxu0 0.0
      %4037 = vmatpush1.msra.mxu0 0.0
      %4038 = vmatprep.subr.mxu0 0.0
      %4039 = vmatpush1.msra.mxu0 0.0
      %4040 = vmatprep.subr.mxu0 0.0
      %4041 = vmatpush1.msra.mxu0 0.0
      %4042 = vmatprep.subr.mxu0 0.0
      %4043 = vmatpush1.msra.mxu0 0.0
      %4044 = vmatprep.subr.mxu0 0.0
      %4045 = vmatpush1.msra.mxu0 0.0
      %4046 = vmatprep.subr.mxu0 0.0
      %4047 = vmatpush1.msra.mxu0 0.0
      %4048 = vmatprep.subr.mxu0 0.0
      %4049 = vmatpush1.msra.mxu0 0.0
      %4050 = vmatprep.subr.mxu0 0.0
      %4051 = vmatpush1.msra.mxu0 0.0
      %4052 = vmatprep.subr.mxu0 0.0
      %4053 = vmatpush1.msra.mxu0 0.0
      %4054 = vmatprep.subr.mxu0 0.0
      %4055 = vmatpush1.msra.mxu0 0.0
      %4056 = vmatprep.subr.mxu0 0.0
      %4057 = vmatpush1.msra.mxu0 0.0
      %4058 = vmatprep.subr.mxu0 0.0
      %4059 = vmatpush1.msra.mxu0 0.0
      %4060 = vmatprep.subr.mxu0 0.0
      %4061 = vmatpush1.msra.mxu0 0.0
      %4062 = vmatprep.subr.mxu0 0.0
      %4063 = vmatpush1.msra.mxu0 0.0
      %4064 = vmatprep.subr.mxu0 0.0
      %4065 = vmatpush1.msra.mxu0 0.0
      %4066 = vmatprep.subr.mxu0 0.0
      %4067 = vmatpush1.msra.mxu0 0.0
      %4068 = vmatprep.subr.mxu0 0.0
      %4069 = vmatpush1.msra.mxu0 0.0
      %4070 = vmatprep.subr.mxu0 0.0
      %4071 = vmatpush1.msra.mxu0 0.0
      %4072 = vmatprep.subr.mxu0 0.0
      %4073 = vmatpush1.msra.mxu0 0.0
      %4074 = vmatprep.subr.mxu0 0.0
      %4075 = vmatpush1.msra.mxu0 0.0
      %4076 = vmatprep.subr.mxu0 0.0
      %4077 = vmatpush1.msra.mxu0 0.0
      %4078 = vmatprep.subr.mxu0 0.0
      %4079 = vmatpush1.msra.mxu0 0.0
      %4080 = vmatprep.subr.mxu0 0.0
      %4081 = vmatpush1.msra.mxu0 0.0
      %4082 = vmatprep.subr.mxu0 0.0
      %4083 = vmatpush1.msra.mxu0 0.0
      %4084 = vmatprep.subr.mxu0 0.0
      %4085 = vmatpush1.msra.mxu0 0.0
      %4086 = vmatprep.subr.mxu0 0.0
      %4087 = vmatpush1.msra.mxu0 0.0
      %4088 = vmatprep.subr.mxu0 0.0
      %4089 = vmatpush1.msra.mxu0 0.0
      %4090 = vmatprep.subr.mxu0 0.0
      %4091 = vmatpush1.msra.mxu0 0.0
      %4092 = vmatprep.mubr.f32.mxu0 0.0
      %4093 = vmatmul.mubr.f32.gmra.mrb[0].mxu0 %v4017
      %v4094 = vpop.f32.mrb[0].mxu0
      %v4095 = vadd.f32 0.0, %v4094
      %v4096 = vpop.f32.mrb[0].mxu0
      %v4097 = vadd.f32 0.0, %v4096
      %4098 = vmatprep.mubr.f32.mxu0 0.0
      %4099 = vmatmul.mubr.f32.gmra.mrb[0].mxu0 %v4020
      %v4100 = vpop.f32.mrb[0].mxu0
      %v4101 = vadd.f32 0.0, %v4100
      %v4102 = vpop.f32.mrb[0].mxu0
      %v4103 = vadd.f32 0.0, %v4102
      %4104 = vdwg.mxu0
      %v4105 = vadd.f32 %v3837, %v4095
      %v4106 = vadd.f32 %v3839, %v4097
      %v4107 = vadd.f32 %v3843, %v4101
      %v4108 = vadd.f32 %v3845, %v4103
      %v4109 = vtanh.pop %v4105
      %v4110 = vtanh.pop %v4106
      %v4111 = vtanh.pop %v4107
      %v4112 = vtanh.pop %v4108
      %v4113 = vsub.f32 1.0, %v4002
      %v4114 = vsub.f32 1.0, %v4004
      %v4115 = vsub.f32 1.0, %v4006
      %v4116 = vsub.f32 1.0, %v4008
      %v4117 = vmul.f32 %v4113, %v3404
      %v4118 = vmul.f32 %v4114, %v3405
      %v4119 = vmul.f32 %v4115, %v3406
      %v4120 = vmul.f32 %v4116, %v3407
      %v4121 = vmul.f32 %v4002, %v4109
      %v4122 = vmul.f32 %v4004, %v4110
      %v4123 = vmul.f32 %v4006, %v4111
      %v4124 = vmul.f32 %v4008, %v4112
      %v4125 = vadd.f32 %v4117, %v4121
      %v4126 = vadd.f32 %v4118, %v4122
      %v4127 = vadd.f32 %v4119, %v4123
      %v4128 = vadd.f32 %v4120, %v4124
      %s4129 = scalar_lea.vmem %s712, 96
      %4130 = vst [vmem:[%s4129] sm:$0xff] %v4125
      %4131 = vst [vmem:[%s4129 + $0x8] sm:$0xff] %v4126
      %4132 = vst [vmem:[%s4129 + $0x10] sm:$0x3] %v4127
      %4133 = vst [vmem:[%s4129 + $0x18] sm:$0x3] %v4128
      %s4134 = scalar_lea.vmem %s702, 128
      %v4135 = vld [vmem:[%s4134] sm:$0xff]
      %v4136 = vld [vmem:[%s4134 + $0x8] sm:$0xff]
      %v4137 = vld [vmem:[%s4134 + $0x10] sm:$0x3]
      %v4138 = vld [vmem:[%s4134 + $0x18] sm:$0x3]
      %s4139 = scalar_lea.vmem %s8, 32
      %v4140 = vld [vmem:[%s4139] sm:$0xff]
      %v4141 = vld [vmem:[%s4139 + $0x8] sm:$0xff]
      %v4142 = vld [vmem:[%s4139 + $0x10] sm:$0xff]
      %v4143 = vld [vmem:[%s4139 + $0x18] sm:$0xff]
      %v4145 = vsel %vm749, %v4140, 0
      %v4148 = vsel %vm749, %v4141, 0
      %v4151 = vsel %vm749, %v4142, 0
      %v4154 = vsel %vm749, %v4143, 0
      %v4157 = vsel %vm753, %v4137, 0
      %v4160 = vsel %vm753, %v4138, 0
      %4162 = vmatprep.subr.mxu0 %v4136
      %4163 = vmatpush1.msra.mxu0 %v4135
      %4164 = vmatprep.subr.mxu0 %v4160
      %4165 = vmatpush1.msra.mxu0 %v4157
      %4166 = vmatprep.subr.mxu0 0.0
      %4167 = vmatpush1.msra.mxu0 0.0
      %4168 = vmatprep.subr.mxu0 0.0
      %4169 = vmatpush1.msra.mxu0 0.0
      %4170 = vmatprep.subr.mxu0 0.0
      %4171 = vmatpush1.msra.mxu0 0.0
      %4172 = vmatprep.subr.mxu0 0.0
      %4173 = vmatpush1.msra.mxu0 0.0
      %4174 = vmatprep.subr.mxu0 0.0
      %4175 = vmatpush1.msra.mxu0 0.0
      %4176 = vmatprep.subr.mxu0 0.0
      %4177 = vmatpush1.msra.mxu0 0.0
      %4178 = vmatprep.subr.mxu0 0.0
      %4179 = vmatpush1.msra.mxu0 0.0
      %4180 = vmatprep.subr.mxu0 0.0
      %4181 = vmatpush1.msra.mxu0 0.0
      %4182 = vmatprep.subr.mxu0 0.0
      %4183 = vmatpush1.msra.mxu0 0.0
      %4184 = vmatprep.subr.mxu0 0.0
      %4185 = vmatpush1.msra.mxu0 0.0
      %4186 = vmatprep.subr.mxu0 0.0
      %4187 = vmatpush1.msra.mxu0 0.0
      %4188 = vmatprep.subr.mxu0 0.0
      %4189 = vmatpush1.msra.mxu0 0.0
      %4190 = vmatprep.subr.mxu0 0.0
      %4191 = vmatpush1.msra.mxu0 0.0
      %4192 = vmatprep.subr.mxu0 0.0
      %4193 = vmatpush1.msra.mxu0 0.0
      %4194 = vmatprep.subr.mxu0 0.0
      %4195 = vmatpush1.msra.mxu0 0.0
      %4196 = vmatprep.subr.mxu0 0.0
      %4197 = vmatpush1.msra.mxu0 0.0
      %4198 = vmatprep.subr.mxu0 0.0
      %4199 = vmatpush1.msra.mxu0 0.0
      %4200 = vmatprep.subr.mxu0 0.0
      %4201 = vmatpush1.msra.mxu0 0.0
      %4202 = vmatprep.subr.mxu0 0.0
      %4203 = vmatpush1.msra.mxu0 0.0
      %4204 = vmatprep.subr.mxu0 0.0
      %4205 = vmatpush1.msra.mxu0 0.0
      %4206 = vmatprep.subr.mxu0 0.0
      %4207 = vmatpush1.msra.mxu0 0.0
      %4208 = vmatprep.subr.mxu0 0.0
      %4209 = vmatpush1.msra.mxu0 0.0
      %4210 = vmatprep.subr.mxu0 0.0
      %4211 = vmatpush1.msra.mxu0 0.0
      %4212 = vmatprep.subr.mxu0 0.0
      %4213 = vmatpush1.msra.mxu0 0.0
      %4214 = vmatprep.subr.mxu0 0.0
      %4215 = vmatpush1.msra.mxu0 0.0
      %4216 = vmatprep.subr.mxu0 0.0
      %4217 = vmatpush1.msra.mxu0 0.0
      %4218 = vmatprep.subr.mxu0 0.0
      %4219 = vmatpush1.msra.mxu0 0.0
      %4220 = vmatprep.subr.mxu0 0.0
      %4221 = vmatpush1.msra.mxu0 0.0
      %4222 = vmatprep.subr.mxu0 0.0
      %4223 = vmatpush1.msra.mxu0 0.0
      %4224 = vmatprep.subr.mxu0 0.0
      %4225 = vmatpush1.msra.mxu0 0.0
      %4226 = vmatprep.mubr.f32.mxu0 0.0
      %4227 = vmatmul.mubr.f32.gmra.mrb[0].mxu0 %v4145
      %v4228 = vpop.f32.mrb[0].mxu0
      %v4229 = vadd.f32 0.0, %v4228
      %v4230 = vpop.f32.mrb[0].mxu0
      %v4231 = vadd.f32 0.0, %v4230
      %4232 = vmatprep.mubr.f32.mxu0 0.0
      %4233 = vmatmul.mubr.f32.gmra.mrb[0].mxu0 %v4148
      %v4234 = vpop.f32.mrb[0].mxu0
      %v4235 = vadd.f32 0.0, %v4234
      %v4236 = vpop.f32.mrb[0].mxu0
      %v4237 = vadd.f32 0.0, %v4236
      %4238 = vmatprep.mubr.f32.mxu0 0.0
      %4239 = vmatmul.mubr.f32.gmra.mrb[0].mxu0 %v4151
      %v4240 = vpop.f32.mrb[0].mxu0
      %v4241 = vadd.f32 0.0, %v4240
      %v4242 = vpop.f32.mrb[0].mxu0
      %v4243 = vadd.f32 0.0, %v4242
      %4244 = vmatprep.mubr.f32.mxu0 0.0
      %4245 = vmatmul.mubr.f32.gmra.mrb[0].mxu0 %v4154
      %v4246 = vpop.f32.mrb[0].mxu0
      %v4247 = vadd.f32 0.0, %v4246
      %v4248 = vpop.f32.mrb[0].mxu0
      %v4249 = vadd.f32 0.0, %v4248
      %4250 = vdwg.mxu0
      %v4251 = vlaneseq
      %v4252 = vshrl.u32 %v4251, 7
      %v4253 = vsub.s32 1, %v4252
      %v4254 = vrot.slane %v1001, %v4253
      %v4255 = vlaneseq
      %v4256 = vshrl.u32 %v4255, 7
      %v4257 = vsub.s32 1, %v4256
      %v4258 = vrot.slane %v1002, %v4257
      %v4259 = vmul.f32 %v1192, %v4254
      %v4260 = vmul.f32 %v1194, %v4258
      %v4261 = vmul.f32 %v1198, %v4254
      %v4262 = vmul.f32 %v1200, %v4258
      %v4263 = vmul.f32 %v1204, %v4254
      %v4264 = vmul.f32 %v1206, %v4258
      %v4265 = vmul.f32 %v1210, %v4254
      %v4266 = vmul.f32 %v1212, %v4258
      %v4267 = vadd.f32 %v4259, %v4229
      %v4268 = vadd.f32 %v4260, %v4231
      %v4269 = vadd.f32 %v4261, %v4235
      %v4270 = vadd.f32 %v4262, %v4237
      %v4271 = vadd.f32 %v4263, %v4241
      %v4272 = vadd.f32 %v4264, %v4243
      %v4273 = vadd.f32 %v4265, %v4247
      %v4274 = vadd.f32 %v4266, %v4249
      %s4275 = scalar_lea.vmem %s9, 32
      %v4276 = vld [vmem:[%s4275] sm:$0xff]
      %v4277 = vld [vmem:[%s4275 + $0x8] sm:$0xff]
      %v4278 = vld [vmem:[%s4275 + $0x10] sm:$0xff]
      %v4279 = vld [vmem:[%s4275 + $0x18] sm:$0xff]
      %4281 = vset.pattern.permute.xlu0 0
      %4282 = vperm.xlu0 %4281, %v4276
      %v4283 = vpop.permute.xlu0 %4282
      %4286 = vset.pattern.permute.xlu0 0
      %4287 = vperm.xlu0 %4286, %v4277
      %v4288 = vpop.permute.xlu0 %4287
      %4291 = vset.pattern.permute.xlu0 0
      %4292 = vperm.xlu0 %4291, %v4278
      %v4293 = vpop.permute.xlu0 %4292
      %4296 = vset.pattern.permute.xlu0 0
      %4297 = vperm.xlu0 %4296, %v4279
      %v4298 = vpop.permute.xlu0 %4297
      %v4300 = vadd.f32 %v4267, %v4283
      %v4301 = vadd.f32 %v4268, %v4283
      %v4302 = vadd.f32 %v4269, %v4288
      %v4303 = vadd.f32 %v4270, %v4288
      %v4304 = vadd.f32 %v4271, %v4293
      %v4305 = vadd.f32 %v4272, %v4293
      %v4306 = vadd.f32 %v4273, %v4298
      %v4307 = vadd.f32 %v4274, %v4298
      %v4308 = vmax.f32 %v4300, 0.0
      %v4309 = vmax.f32 %v4301, 0.0
      %v4310 = vmax.f32 %v4302, 0.0
      %v4311 = vmax.f32 %v4303, 0.0
      %v4312 = vmax.f32 %v4304, 0.0
      %v4313 = vmax.f32 %v4305, 0.0
      %v4314 = vmax.f32 %v4306, 0.0
      %v4315 = vmax.f32 %v4307, 0.0
      %s4316 = scalar_lea.vmem %s10, 16
      %v4317 = vld [vmem:[%s4316] sm:$0xff]
      %v4318 = vld [vmem:[%s4316 + $0x8] sm:$0xff]
      %s4319 = scalar_lea.vmem %s11, 16
      %v4320 = vld [vmem:[%s4319] sm:$0xff]
      %v4321 = vld [vmem:[%s4319 + $0x8] sm:$0xff]
      %4323 = vset.pattern.permute.xlu0 0
      %4324 = vperm.xlu0 %4323, %v4320
      %v4325 = vpop.permute.xlu0 %4324
      %4328 = vset.pattern.permute.xlu0 0
      %4329 = vperm.xlu0 %4328, %v4321
      %v4330 = vpop.permute.xlu0 %4329
      %v4333 = vsel %vm1407, %v4317, 0
      %v4336 = vsel %vm1407, %v4318, 0
      %4338 = vmatprep.subr.mxu0 %v4309
      %4339 = vmatpush1.msra.mxu0 %v4308
      %4340 = vmatprep.subr.mxu0 %v4311
      %4341 = vmatpush1.msra.mxu0 %v4310
      %4342 = vmatprep.subr.mxu0 %v4313
      %4343 = vmatpush1.msra.mxu0 %v4312
      %4344 = vmatprep.subr.mxu0 %v4315
      %4345 = vmatpush1.msra.mxu0 %v4314
      %4346 = vmatprep.subr.mxu0 0.0
      %4347 = vmatpush1.msra.mxu0 0.0
      %4348 = vmatprep.subr.mxu0 0.0
      %4349 = vmatpush1.msra.mxu0 0.0
      %4350 = vmatprep.subr.mxu0 0.0
      %4351 = vmatpush1.msra.mxu0 0.0
      %4352 = vmatprep.subr.mxu0 0.0
      %4353 = vmatpush1.msra.mxu0 0.0
      %4354 = vmatprep.subr.mxu0 0.0
      %4355 = vmatpush1.msra.mxu0 0.0
      %4356 = vmatprep.subr.mxu0 0.0
      %4357 = vmatpush1.msra.mxu0 0.0
      %4358 = vmatprep.subr.mxu0 0.0
      %4359 = vmatpush1.msra.mxu0 0.0
      %4360 = vmatprep.subr.mxu0 0.0
      %4361 = vmatpush1.msra.mxu0 0.0
      %4362 = vmatprep.subr.mxu0 0.0
      %4363 = vmatpush1.msra.mxu0 0.0
      %4364 = vmatprep.subr.mxu0 0.0
      %4365 = vmatpush1.msra.mxu0 0.0
      %4366 = vmatprep.subr.mxu0 0.0
      %4367 = vmatpush1.msra.mxu0 0.0
      %4368 = vmatprep.subr.mxu0 0.0
      %4369 = vmatpush1.msra.mxu0 0.0
      %4370 = vmatprep.subr.mxu0 0.0
      %4371 = vmatpush1.msra.mxu0 0.0
      %4372 = vmatprep.subr.mxu0 0.0
      %4373 = vmatpush1.msra.mxu0 0.0
      %4374 = vmatprep.subr.mxu0 0.0
      %4375 = vmatpush1.msra.mxu0 0.0
      %4376 = vmatprep.subr.mxu0 0.0
      %4377 = vmatpush1.msra.mxu0 0.0
      %4378 = vmatprep.subr.mxu0 0.0
      %4379 = vmatpush1.msra.mxu0 0.0
      %4380 = vmatprep.subr.mxu0 0.0
      %4381 = vmatpush1.msra.mxu0 0.0
      %4382 = vmatprep.subr.mxu0 0.0
      %4383 = vmatpush1.msra.mxu0 0.0
      %4384 = vmatprep.subr.mxu0 0.0
      %4385 = vmatpush1.msra.mxu0 0.0
      %4386 = vmatprep.subr.mxu0 0.0
      %4387 = vmatpush1.msra.mxu0 0.0
      %4388 = vmatprep.subr.mxu0 0.0
      %4389 = vmatpush1.msra.mxu0 0.0
      %4390 = vmatprep.subr.mxu0 0.0
      %4391 = vmatpush1.msra.mxu0 0.0
      %4392 = vmatprep.subr.mxu0 0.0
      %4393 = vmatpush1.msra.mxu0 0.0
      %4394 = vmatprep.subr.mxu0 0.0
      %4395 = vmatpush1.msra.mxu0 0.0
      %4396 = vmatprep.subr.mxu0 0.0
      %4397 = vmatpush1.msra.mxu0 0.0
      %4398 = vmatprep.subr.mxu0 0.0
      %4399 = vmatpush1.msra.mxu0 0.0
      %4400 = vmatprep.subr.mxu0 0.0
      %4401 = vmatpush1.msra.mxu0 0.0
      %4402 = vmatprep.mubr.f32.mxu0 0.0
      %4403 = vmatmul.mubr.f32.gmra.mrb[0].mxu0 %v4333
      %v4404 = vpop.f32.mrb[0].mxu0
      %v4405 = vadd.f32 %v4325, %v4404
      %v4406 = vpop.f32.mrb[0].mxu0
      %v4407 = vadd.f32 %v4325, %v4406
      %4408 = vmatprep.mubr.f32.mxu0 0.0
      %4409 = vmatmul.mubr.f32.gmra.mrb[0].mxu0 %v4336
      %v4410 = vpop.f32.mrb[0].mxu0
      %v4411 = vadd.f32 %v4330, %v4410
      %v4412 = vpop.f32.mrb[0].mxu0
      %v4413 = vadd.f32 %v4330, %v4412
      %4414 = vdwg.mxu0
      %v4415 = vmax.f32 %v4405, 0.0
      %v4416 = vmax.f32 %v4407, 0.0
      %v4417 = vmax.f32 %v4411, 0.0
      %v4418 = vmax.f32 %v4413, 0.0
      %s4419 = scalar_lea.vmem %s12, 192
      %v4420 = vld [vmem:[%s4419] sm:$0xff]
      %v4421 = vld [vmem:[%s4419 + $0x8] sm:$0xff]
      %v4422 = vld [vmem:[%s4419 + $0x10] sm:$0xff]
      %v4423 = vld [vmem:[%s4419 + $0x18] sm:$0xff]
      %v4424 = vld [vmem:[%s4419 + $0x20] sm:$0xff]
      %v4425 = vld [vmem:[%s4419 + $0x28] sm:$0xff]
      %s4426 = scalar_lea.vmem %s15, 192
      %v4427 = vld [vmem:[%s4426] sm:$0xff]
      %v4428 = vld [vmem:[%s4426 + $0x8] sm:$0xff]
      %v4429 = vld [vmem:[%s4426 + $0x10] sm:$0xff]
      %v4430 = vld [vmem:[%s4426 + $0x18] sm:$0xff]
      %v4431 = vld [vmem:[%s4426 + $0x20] sm:$0xff]
      %v4432 = vld [vmem:[%s4426 + $0x28] sm:$0xff]
      %4434 = vset.pattern.permute.xlu0 0
      %4435 = vperm.xlu0 %4434, %v4427
      %v4436 = vpop.permute.xlu0 %4435
      %4439 = vset.pattern.permute.xlu0 0
      %4440 = vperm.xlu0 %4439, %v4428
      %v4441 = vpop.permute.xlu0 %4440
      %4444 = vset.pattern.permute.xlu0 0
      %4445 = vperm.xlu0 %4444, %v4429
      %v4446 = vpop.permute.xlu0 %4445
      %4449 = vset.pattern.permute.xlu0 0
      %4450 = vperm.xlu0 %4449, %v4430
      %v4451 = vpop.permute.xlu0 %4450
      %4454 = vset.pattern.permute.xlu0 0
      %4455 = vperm.xlu0 %4454, %v4431
      %v4456 = vpop.permute.xlu0 %4455
      %4459 = vset.pattern.permute.xlu0 0
      %4460 = vperm.xlu0 %4459, %v4432
      %v4461 = vpop.permute.xlu0 %4460
      %v4464 = vsel %vm1537, %v4420, 0
      %v4467 = vsel %vm1537, %v4421, 0
      %v4470 = vsel %vm1537, %v4422, 0
      %v4473 = vsel %vm1537, %v4423, 0
      %v4476 = vsel %vm1537, %v4424, 0
      %v4479 = vsel %vm1537, %v4425, 0
      %4481 = vmatprep.subr.mxu0 %v4416
      %4482 = vmatpush1.msra.mxu0 %v4415
      %4483 = vmatprep.subr.mxu0 %v4418
      %4484 = vmatpush1.msra.mxu0 %v4417
      %4485 = vmatprep.subr.mxu0 0.0
      %4486 = vmatpush1.msra.mxu0 0.0
      %4487 = vmatprep.subr.mxu0 0.0
      %4488 = vmatpush1.msra.mxu0 0.0
      %4489 = vmatprep.subr.mxu0 0.0
      %4490 = vmatpush1.msra.mxu0 0.0
      %4491 = vmatprep.subr.mxu0 0.0
      %4492 = vmatpush1.msra.mxu0 0.0
      %4493 = vmatprep.subr.mxu0 0.0
      %4494 = vmatpush1.msra.mxu0 0.0
      %4495 = vmatprep.subr.mxu0 0.0
      %4496 = vmatpush1.msra.mxu0 0.0
      %4497 = vmatprep.subr.mxu0 0.0
      %4498 = vmatpush1.msra.mxu0 0.0
      %4499 = vmatprep.subr.mxu0 0.0
      %4500 = vmatpush1.msra.mxu0 0.0
      %4501 = vmatprep.subr.mxu0 0.0
      %4502 = vmatpush1.msra.mxu0 0.0
      %4503 = vmatprep.subr.mxu0 0.0
      %4504 = vmatpush1.msra.mxu0 0.0
      %4505 = vmatprep.subr.mxu0 0.0
      %4506 = vmatpush1.msra.mxu0 0.0
      %4507 = vmatprep.subr.mxu0 0.0
      %4508 = vmatpush1.msra.mxu0 0.0
      %4509 = vmatprep.subr.mxu0 0.0
      %4510 = vmatpush1.msra.mxu0 0.0
      %4511 = vmatprep.subr.mxu0 0.0
      %4512 = vmatpush1.msra.mxu0 0.0
      %4513 = vmatprep.subr.mxu0 0.0
      %4514 = vmatpush1.msra.mxu0 0.0
      %4515 = vmatprep.subr.mxu0 0.0
      %4516 = vmatpush1.msra.mxu0 0.0
      %4517 = vmatprep.subr.mxu0 0.0
      %4518 = vmatpush1.msra.mxu0 0.0
      %4519 = vmatprep.subr.mxu0 0.0
      %4520 = vmatpush1.msra.mxu0 0.0
      %4521 = vmatprep.subr.mxu0 0.0
      %4522 = vmatpush1.msra.mxu0 0.0
      %4523 = vmatprep.subr.mxu0 0.0
      %4524 = vmatpush1.msra.mxu0 0.0
      %4525 = vmatprep.subr.mxu0 0.0
      %4526 = vmatpush1.msra.mxu0 0.0
      %4527 = vmatprep.subr.mxu0 0.0
      %4528 = vmatpush1.msra.mxu0 0.0
      %4529 = vmatprep.subr.mxu0 0.0
      %4530 = vmatpush1.msra.mxu0 0.0
      %4531 = vmatprep.subr.mxu0 0.0
      %4532 = vmatpush1.msra.mxu0 0.0
      %4533 = vmatprep.subr.mxu0 0.0
      %4534 = vmatpush1.msra.mxu0 0.0
      %4535 = vmatprep.subr.mxu0 0.0
      %4536 = vmatpush1.msra.mxu0 0.0
      %4537 = vmatprep.subr.mxu0 0.0
      %4538 = vmatpush1.msra.mxu0 0.0
      %4539 = vmatprep.subr.mxu0 0.0
      %4540 = vmatpush1.msra.mxu0 0.0
      %4541 = vmatprep.subr.mxu0 0.0
      %4542 = vmatpush1.msra.mxu0 0.0
      %4543 = vmatprep.subr.mxu0 0.0
      %4544 = vmatpush1.msra.mxu0 0.0
      %4545 = vmatprep.mubr.f32.mxu0 0.0
      %4546 = vmatmul.mubr.f32.gmra.mrb[0].mxu0 %v4464
      %v4547 = vpop.f32.mrb[0].mxu0
      %v4548 = vadd.f32 %v4436, %v4547
      %v4549 = vpop.f32.mrb[0].mxu0
      %v4550 = vadd.f32 %v4436, %v4549
      %4551 = vmatprep.mubr.f32.mxu0 0.0
      %4552 = vmatmul.mubr.f32.gmra.mrb[0].mxu0 %v4467
      %v4553 = vpop.f32.mrb[0].mxu0
      %v4554 = vadd.f32 %v4441, %v4553
      %v4555 = vpop.f32.mrb[0].mxu0
      %v4556 = vadd.f32 %v4441, %v4555
      %4557 = vmatprep.mubr.f32.mxu0 0.0
      %4558 = vmatmul.mubr.f32.gmra.mrb[0].mxu0 %v4470
      %v4559 = vpop.f32.mrb[0].mxu0
      %v4560 = vadd.f32 %v4446, %v4559
      %v4561 = vpop.f32.mrb[0].mxu0
      %v4562 = vadd.f32 %v4446, %v4561
      %4563 = vmatprep.mubr.f32.mxu0 0.0
      %4564 = vmatmul.mubr.f32.gmra.mrb[0].mxu0 %v4473
      %v4565 = vpop.f32.mrb[0].mxu0
      %v4566 = vadd.f32 %v4451, %v4565
      %v4567 = vpop.f32.mrb[0].mxu0
      %v4568 = vadd.f32 %v4451, %v4567
      %4569 = vmatprep.mubr.f32.mxu0 0.0
      %4570 = vmatmul.mubr.f32.gmra.mrb[0].mxu0 %v4476
      %v4571 = vpop.f32.mrb[0].mxu0
      %v4572 = vadd.f32 %v4456, %v4571
      %v4573 = vpop.f32.mrb[0].mxu0
      %v4574 = vadd.f32 %v4456, %v4573
      %4575 = vmatprep.mubr.f32.mxu0 0.0
      %4576 = vmatmul.mubr.f32.gmra.mrb[0].mxu0 %v4479
      %v4577 = vpop.f32.mrb[0].mxu0
      %v4578 = vadd.f32 %v4461, %v4577
      %v4579 = vpop.f32.mrb[0].mxu0
      %v4580 = vadd.f32 %v4461, %v4579
      %4581 = vdwg.mxu0
      %s4582 = scalar_lea.vmem %s13, 128
      %v4583 = vld [vmem:[%s4582] sm:$0xff]
      %v4584 = vld [vmem:[%s4582 + $0x8] sm:$0xff]
      %v4585 = vld [vmem:[%s4582 + $0x10] sm:$0xff]
      %v4586 = vld [vmem:[%s4582 + $0x18] sm:$0xff]
      %v4588 = vsel %vm749, %v4583, 0
      %v4591 = vsel %vm749, %v4584, 0
      %v4594 = vsel %vm749, %v4585, 0
      %v4597 = vsel %vm749, %v4586, 0
      %4599 = vmatprep.subr.mxu0 %v4136
      %4600 = vmatpush1.msra.mxu0 %v4135
      %4601 = vmatprep.subr.mxu0 %v4160
      %4602 = vmatpush1.msra.mxu0 %v4157
      %4603 = vmatprep.subr.mxu0 0.0
      %4604 = vmatpush1.msra.mxu0 0.0
      %4605 = vmatprep.subr.mxu0 0.0
      %4606 = vmatpush1.msra.mxu0 0.0
      %4607 = vmatprep.subr.mxu0 0.0
      %4608 = vmatpush1.msra.mxu0 0.0
      %4609 = vmatprep.subr.mxu0 0.0
      %4610 = vmatpush1.msra.mxu0 0.0
      %4611 = vmatprep.subr.mxu0 0.0
      %4612 = vmatpush1.msra.mxu0 0.0
      %4613 = vmatprep.subr.mxu0 0.0
      %4614 = vmatpush1.msra.mxu0 0.0
      %4615 = vmatprep.subr.mxu0 0.0
      %4616 = vmatpush1.msra.mxu0 0.0
      %4617 = vmatprep.subr.mxu0 0.0
      %4618 = vmatpush1.msra.mxu0 0.0
      %4619 = vmatprep.subr.mxu0 0.0
      %4620 = vmatpush1.msra.mxu0 0.0
      %4621 = vmatprep.subr.mxu0 0.0
      %4622 = vmatpush1.msra.mxu0 0.0
      %4623 = vmatprep.subr.mxu0 0.0
      %4624 = vmatpush1.msra.mxu0 0.0
      %4625 = vmatprep.subr.mxu0 0.0
      %4626 = vmatpush1.msra.mxu0 0.0
      %4627 = vmatprep.subr.mxu0 0.0
      %4628 = vmatpush1.msra.mxu0 0.0
      %4629 = vmatprep.subr.mxu0 0.0
      %4630 = vmatpush1.msra.mxu0 0.0
      %4631 = vmatprep.subr.mxu0 0.0
      %4632 = vmatpush1.msra.mxu0 0.0
      %4633 = vmatprep.subr.mxu0 0.0
      %4634 = vmatpush1.msra.mxu0 0.0
      %4635 = vmatprep.subr.mxu0 0.0
      %4636 = vmatpush1.msra.mxu0 0.0
      %4637 = vmatprep.subr.mxu0 0.0
      %4638 = vmatpush1.msra.mxu0 0.0
      %4639 = vmatprep.subr.mxu0 0.0
      %4640 = vmatpush1.msra.mxu0 0.0
      %4641 = vmatprep.subr.mxu0 0.0
      %4642 = vmatpush1.msra.mxu0 0.0
      %4643 = vmatprep.subr.mxu0 0.0
      %4644 = vmatpush1.msra.mxu0 0.0
      %4645 = vmatprep.subr.mxu0 0.0
      %4646 = vmatpush1.msra.mxu0 0.0
      %4647 = vmatprep.subr.mxu0 0.0
      %4648 = vmatpush1.msra.mxu0 0.0
      %4649 = vmatprep.subr.mxu0 0.0
      %4650 = vmatpush1.msra.mxu0 0.0
      %4651 = vmatprep.subr.mxu0 0.0
      %4652 = vmatpush1.msra.mxu0 0.0
      %4653 = vmatprep.subr.mxu0 0.0
      %4654 = vmatpush1.msra.mxu0 0.0
      %4655 = vmatprep.subr.mxu0 0.0
      %4656 = vmatpush1.msra.mxu0 0.0
      %4657 = vmatprep.subr.mxu0 0.0
      %4658 = vmatpush1.msra.mxu0 0.0
      %4659 = vmatprep.subr.mxu0 0.0
      %4660 = vmatpush1.msra.mxu0 0.0
      %4661 = vmatprep.subr.mxu0 0.0
      %4662 = vmatpush1.msra.mxu0 0.0
      %4663 = vmatprep.mubr.f32.mxu0 0.0
      %4664 = vmatmul.mubr.f32.gmra.mrb[0].mxu0 %v4588
      %v4665 = vpop.f32.mrb[0].mxu0
      %v4666 = vadd.f32 0.0, %v4665
      %v4667 = vpop.f32.mrb[0].mxu0
      %v4668 = vadd.f32 0.0, %v4667
      %4669 = vmatprep.mubr.f32.mxu0 0.0
      %4670 = vmatmul.mubr.f32.gmra.mrb[0].mxu0 %v4591
      %v4671 = vpop.f32.mrb[0].mxu0
      %v4672 = vadd.f32 0.0, %v4671
      %v4673 = vpop.f32.mrb[0].mxu0
      %v4674 = vadd.f32 0.0, %v4673
      %4675 = vmatprep.mubr.f32.mxu0 0.0
      %4676 = vmatmul.mubr.f32.gmra.mrb[0].mxu0 %v4594
      %v4677 = vpop.f32.mrb[0].mxu0
      %v4678 = vadd.f32 0.0, %v4677
      %v4679 = vpop.f32.mrb[0].mxu0
      %v4680 = vadd.f32 0.0, %v4679
      %4681 = vmatprep.mubr.f32.mxu0 0.0
      %4682 = vmatmul.mubr.f32.gmra.mrb[0].mxu0 %v4597
      %v4683 = vpop.f32.mrb[0].mxu0
      %v4684 = vadd.f32 0.0, %v4683
      %v4685 = vpop.f32.mrb[0].mxu0
      %v4686 = vadd.f32 0.0, %v4685
      %4687 = vdwg.mxu0
      %v4688 = vadd.f32 %v4548, %v4666
      %v4689 = vadd.f32 %v4550, %v4668
      %v4690 = vadd.f32 %v4554, %v4672
      %v4691 = vadd.f32 %v4556, %v4674
      %v4692 = vxor.u32 %v4688, 2147483648
      %v4693 = vxor.u32 %v4689, 2147483648
      %v4694 = vxor.u32 %v4690, 2147483648
      %v4695 = vxor.u32 %v4691, 2147483648
      %v4696 = vmul.f32 %v4692, 1.442695
      %v4697 = vpow.pop %v4696
      %v4698 = vmul.f32 %v4693, 1.442695
      %v4699 = vpow.pop %v4698
      %v4700 = vmul.f32 %v4694, 1.442695
      %v4701 = vpow.pop %v4700
      %v4702 = vmul.f32 %v4695, 1.442695
      %v4703 = vpow.pop %v4702
      %v4704 = vadd.f32 %v4697, 1.0
      %v4705 = vadd.f32 %v4699, 1.0
      %v4706 = vadd.f32 %v4701, 1.0
      %v4707 = vadd.f32 %v4703, 1.0
      %v4708 = vrcp.pop %v4704
      %v4709 = vmul.f32 1.0, %v4708
      %v4710 = vrcp.pop %v4705
      %v4711 = vmul.f32 1.0, %v4710
      %v4712 = vrcp.pop %v4706
      %v4713 = vmul.f32 1.0, %v4712
      %v4714 = vrcp.pop %v4707
      %v4715 = vmul.f32 1.0, %v4714
      %v4716 = vadd.f32 %v4560, %v4678
      %v4717 = vadd.f32 %v4562, %v4680
      %v4718 = vadd.f32 %v4566, %v4684
      %v4719 = vadd.f32 %v4568, %v4686
      %v4720 = vxor.u32 %v4716, 2147483648
      %v4721 = vxor.u32 %v4717, 2147483648
      %v4722 = vxor.u32 %v4718, 2147483648
      %v4723 = vxor.u32 %v4719, 2147483648
      %v4724 = vmul.f32 %v4720, 1.442695
      %v4725 = vpow.pop %v4724
      %v4726 = vmul.f32 %v4721, 1.442695
      %v4727 = vpow.pop %v4726
      %v4728 = vmul.f32 %v4722, 1.442695
      %v4729 = vpow.pop %v4728
      %v4730 = vmul.f32 %v4723, 1.442695
      %v4731 = vpow.pop %v4730
      %v4732 = vadd.f32 %v4725, 1.0
      %v4733 = vadd.f32 %v4727, 1.0
      %v4734 = vadd.f32 %v4729, 1.0
      %v4735 = vadd.f32 %v4731, 1.0
      %v4736 = vrcp.pop %v4732
      %v4737 = vmul.f32 1.0, %v4736
      %v4738 = vrcp.pop %v4733
      %v4739 = vmul.f32 1.0, %v4738
      %v4740 = vrcp.pop %v4734
      %v4741 = vmul.f32 1.0, %v4740
      %v4742 = vrcp.pop %v4735
      %v4743 = vmul.f32 1.0, %v4742
      %s4744 = scalar_lea.vmem %s14, 64
      %v4745 = vld [vmem:[%s4744] sm:$0xff]
      %v4746 = vld [vmem:[%s4744 + $0x8] sm:$0xff]
      %v4747 = vmul.f32 %v4709, %v4135
      %v4748 = vmul.f32 %v4711, %v4136
      %v4749 = vmul.f32 %v4713, %v4137
      %v4750 = vmul.f32 %v4715, %v4138
      %v4752 = vsel %vm749, %v4745, 0
      %v4755 = vsel %vm749, %v4746, 0
      %v4758 = vsel %vm753, %v4749, 0
      %v4761 = vsel %vm753, %v4750, 0
      %4763 = vmatprep.subr.mxu0 %v4748
      %4764 = vmatpush1.msra.mxu0 %v4747
      %4765 = vmatprep.subr.mxu0 %v4761
      %4766 = vmatpush1.msra.mxu0 %v4758
      %4767 = vmatprep.subr.mxu0 0.0
      %4768 = vmatpush1.msra.mxu0 0.0
      %4769 = vmatprep.subr.mxu0 0.0
      %4770 = vmatpush1.msra.mxu0 0.0
      %4771 = vmatprep.subr.mxu0 0.0
      %4772 = vmatpush1.msra.mxu0 0.0
      %4773 = vmatprep.subr.mxu0 0.0
      %4774 = vmatpush1.msra.mxu0 0.0
      %4775 = vmatprep.subr.mxu0 0.0
      %4776 = vmatpush1.msra.mxu0 0.0
      %4777 = vmatprep.subr.mxu0 0.0
      %4778 = vmatpush1.msra.mxu0 0.0
      %4779 = vmatprep.subr.mxu0 0.0
      %4780 = vmatpush1.msra.mxu0 0.0
      %4781 = vmatprep.subr.mxu0 0.0
      %4782 = vmatpush1.msra.mxu0 0.0
      %4783 = vmatprep.subr.mxu0 0.0
      %4784 = vmatpush1.msra.mxu0 0.0
      %4785 = vmatprep.subr.mxu0 0.0
      %4786 = vmatpush1.msra.mxu0 0.0
      %4787 = vmatprep.subr.mxu0 0.0
      %4788 = vmatpush1.msra.mxu0 0.0
      %4789 = vmatprep.subr.mxu0 0.0
      %4790 = vmatpush1.msra.mxu0 0.0
      %4791 = vmatprep.subr.mxu0 0.0
      %4792 = vmatpush1.msra.mxu0 0.0
      %4793 = vmatprep.subr.mxu0 0.0
      %4794 = vmatpush1.msra.mxu0 0.0
      %4795 = vmatprep.subr.mxu0 0.0
      %4796 = vmatpush1.msra.mxu0 0.0
      %4797 = vmatprep.subr.mxu0 0.0
      %4798 = vmatpush1.msra.mxu0 0.0
      %4799 = vmatprep.subr.mxu0 0.0
      %4800 = vmatpush1.msra.mxu0 0.0
      %4801 = vmatprep.subr.mxu0 0.0
      %4802 = vmatpush1.msra.mxu0 0.0
      %4803 = vmatprep.subr.mxu0 0.0
      %4804 = vmatpush1.msra.mxu0 0.0
      %4805 = vmatprep.subr.mxu0 0.0
      %4806 = vmatpush1.msra.mxu0 0.0
      %4807 = vmatprep.subr.mxu0 0.0
      %4808 = vmatpush1.msra.mxu0 0.0
      %4809 = vmatprep.subr.mxu0 0.0
      %4810 = vmatpush1.msra.mxu0 0.0
      %4811 = vmatprep.subr.mxu0 0.0
      %4812 = vmatpush1.msra.mxu0 0.0
      %4813 = vmatprep.subr.mxu0 0.0
      %4814 = vmatpush1.msra.mxu0 0.0
      %4815 = vmatprep.subr.mxu0 0.0
      %4816 = vmatpush1.msra.mxu0 0.0
      %4817 = vmatprep.subr.mxu0 0.0
      %4818 = vmatpush1.msra.mxu0 0.0
      %4819 = vmatprep.subr.mxu0 0.0
      %4820 = vmatpush1.msra.mxu0 0.0
      %4821 = vmatprep.subr.mxu0 0.0
      %4822 = vmatpush1.msra.mxu0 0.0
      %4823 = vmatprep.subr.mxu0 0.0
      %4824 = vmatpush1.msra.mxu0 0.0
      %4825 = vmatprep.subr.mxu0 0.0
      %4826 = vmatpush1.msra.mxu0 0.0
      %4827 = vmatprep.mubr.f32.mxu0 0.0
      %4828 = vmatmul.mubr.f32.gmra.mrb[0].mxu0 %v4752
      %v4829 = vpop.f32.mrb[0].mxu0
      %v4830 = vadd.f32 0.0, %v4829
      %v4831 = vpop.f32.mrb[0].mxu0
      %v4832 = vadd.f32 0.0, %v4831
      %4833 = vmatprep.mubr.f32.mxu0 0.0
      %4834 = vmatmul.mubr.f32.gmra.mrb[0].mxu0 %v4755
      %v4835 = vpop.f32.mrb[0].mxu0
      %v4836 = vadd.f32 0.0, %v4835
      %v4837 = vpop.f32.mrb[0].mxu0
      %v4838 = vadd.f32 0.0, %v4837
      %4839 = vdwg.mxu0
      %v4840 = vadd.f32 %v4572, %v4830
      %v4841 = vadd.f32 %v4574, %v4832
      %v4842 = vadd.f32 %v4578, %v4836
      %v4843 = vadd.f32 %v4580, %v4838
      %v4844 = vtanh.pop %v4840
      %v4845 = vtanh.pop %v4841
      %v4846 = vtanh.pop %v4842
      %v4847 = vtanh.pop %v4843
      %v4848 = vsub.f32 1.0, %v4737
      %v4849 = vsub.f32 1.0, %v4739
      %v4850 = vsub.f32 1.0, %v4741
      %v4851 = vsub.f32 1.0, %v4743
      %v4852 = vmul.f32 %v4848, %v4135
      %v4853 = vmul.f32 %v4849, %v4136
      %v4854 = vmul.f32 %v4850, %v4137
      %v4855 = vmul.f32 %v4851, %v4138
      %v4856 = vmul.f32 %v4737, %v4844
      %v4857 = vmul.f32 %v4739, %v4845
      %v4858 = vmul.f32 %v4741, %v4846
      %v4859 = vmul.f32 %v4743, %v4847
      %v4860 = vadd.f32 %v4852, %v4856
      %v4861 = vadd.f32 %v4853, %v4857
      %v4862 = vadd.f32 %v4854, %v4858
      %v4863 = vadd.f32 %v4855, %v4859
      %s4864 = scalar_lea.vmem %s712, 128
      %4865 = vst [vmem:[%s4864] sm:$0xff] %v4860
      %4866 = vst [vmem:[%s4864 + $0x8] sm:$0xff] %v4861
      %4867 = vst [vmem:[%s4864 + $0x10] sm:$0x3] %v4862
      %4868 = vst [vmem:[%s4864 + $0x18] sm:$0x3] %v4863
      %s4869 = scalar_lea.vmem %s702, 160
      %v4870 = vld [vmem:[%s4869] sm:$0xff]
      %v4871 = vld [vmem:[%s4869 + $0x8] sm:$0xff]
      %v4872 = vld [vmem:[%s4869 + $0x10] sm:$0x3]
      %v4873 = vld [vmem:[%s4869 + $0x18] sm:$0x3]
      %v4874 = vld [vmem:[%s4139] sm:$0xff]
      %v4875 = vld [vmem:[%s4139 + $0x8] sm:$0xff]
      %v4876 = vld [vmem:[%s4139 + $0x10] sm:$0xff]
      %v4877 = vld [vmem:[%s4139 + $0x18] sm:$0xff]
      %v4879 = vsel %vm749, %v4874, 0
      %v4882 = vsel %vm749, %v4875, 0
      %v4885 = vsel %vm749, %v4876, 0
      %v4888 = vsel %vm749, %v4877, 0
      %v4891 = vsel %vm753, %v4872, 0
      %v4894 = vsel %vm753, %v4873, 0
      %4896 = vmatprep.subr.mxu0 %v4871
      %4897 = vmatpush1.msra.mxu0 %v4870
      %4898 = vmatprep.subr.mxu0 %v4894
      %4899 = vmatpush1.msra.mxu0 %v4891
      %4900 = vmatprep.subr.mxu0 0.0
      %4901 = vmatpush1.msra.mxu0 0.0
      %4902 = vmatprep.subr.mxu0 0.0
      %4903 = vmatpush1.msra.mxu0 0.0
      %4904 = vmatprep.subr.mxu0 0.0
      %4905 = vmatpush1.msra.mxu0 0.0
      %4906 = vmatprep.subr.mxu0 0.0
      %4907 = vmatpush1.msra.mxu0 0.0
      %4908 = vmatprep.subr.mxu0 0.0
      %4909 = vmatpush1.msra.mxu0 0.0
      %4910 = vmatprep.subr.mxu0 0.0
      %4911 = vmatpush1.msra.mxu0 0.0
      %4912 = vmatprep.subr.mxu0 0.0
      %4913 = vmatpush1.msra.mxu0 0.0
      %4914 = vmatprep.subr.mxu0 0.0
      %4915 = vmatpush1.msra.mxu0 0.0
      %4916 = vmatprep.subr.mxu0 0.0
      %4917 = vmatpush1.msra.mxu0 0.0
      %4918 = vmatprep.subr.mxu0 0.0
      %4919 = vmatpush1.msra.mxu0 0.0
      %4920 = vmatprep.subr.mxu0 0.0
      %4921 = vmatpush1.msra.mxu0 0.0
      %4922 = vmatprep.subr.mxu0 0.0
      %4923 = vmatpush1.msra.mxu0 0.0
      %4924 = vmatprep.subr.mxu0 0.0
      %4925 = vmatpush1.msra.mxu0 0.0
      %4926 = vmatprep.subr.mxu0 0.0
      %4927 = vmatpush1.msra.mxu0 0.0
      %4928 = vmatprep.subr.mxu0 0.0
      %4929 = vmatpush1.msra.mxu0 0.0
      %4930 = vmatprep.subr.mxu0 0.0
      %4931 = vmatpush1.msra.mxu0 0.0
      %4932 = vmatprep.subr.mxu0 0.0
      %4933 = vmatpush1.msra.mxu0 0.0
      %4934 = vmatprep.subr.mxu0 0.0
      %4935 = vmatpush1.msra.mxu0 0.0
      %4936 = vmatprep.subr.mxu0 0.0
      %4937 = vmatpush1.msra.mxu0 0.0
      %4938 = vmatprep.subr.mxu0 0.0
      %4939 = vmatpush1.msra.mxu0 0.0
      %4940 = vmatprep.subr.mxu0 0.0
      %4941 = vmatpush1.msra.mxu0 0.0
      %4942 = vmatprep.subr.mxu0 0.0
      %4943 = vmatpush1.msra.mxu0 0.0
      %4944 = vmatprep.subr.mxu0 0.0
      %4945 = vmatpush1.msra.mxu0 0.0
      %4946 = vmatprep.subr.mxu0 0.0
      %4947 = vmatpush1.msra.mxu0 0.0
      %4948 = vmatprep.subr.mxu0 0.0
      %4949 = vmatpush1.msra.mxu0 0.0
      %4950 = vmatprep.subr.mxu0 0.0
      %4951 = vmatpush1.msra.mxu0 0.0
      %4952 = vmatprep.subr.mxu0 0.0
      %4953 = vmatpush1.msra.mxu0 0.0
      %4954 = vmatprep.subr.mxu0 0.0
      %4955 = vmatpush1.msra.mxu0 0.0
      %4956 = vmatprep.subr.mxu0 0.0
      %4957 = vmatpush1.msra.mxu0 0.0
      %4958 = vmatprep.subr.mxu0 0.0
      %4959 = vmatpush1.msra.mxu0 0.0
      %4960 = vmatprep.mubr.f32.mxu0 0.0
      %4961 = vmatmul.mubr.f32.gmra.mrb[0].mxu0 %v4879
      %v4962 = vpop.f32.mrb[0].mxu0
      %v4963 = vadd.f32 0.0, %v4962
      %v4964 = vpop.f32.mrb[0].mxu0
      %v4965 = vadd.f32 0.0, %v4964
      %4966 = vmatprep.mubr.f32.mxu0 0.0
      %4967 = vmatmul.mubr.f32.gmra.mrb[0].mxu0 %v4882
      %v4968 = vpop.f32.mrb[0].mxu0
      %v4969 = vadd.f32 0.0, %v4968
      %v4970 = vpop.f32.mrb[0].mxu0
      %v4971 = vadd.f32 0.0, %v4970
      %4972 = vmatprep.mubr.f32.mxu0 0.0
      %4973 = vmatmul.mubr.f32.gmra.mrb[0].mxu0 %v4885
      %v4974 = vpop.f32.mrb[0].mxu0
      %v4975 = vadd.f32 0.0, %v4974
      %v4976 = vpop.f32.mrb[0].mxu0
      %v4977 = vadd.f32 0.0, %v4976
      %4978 = vmatprep.mubr.f32.mxu0 0.0
      %4979 = vmatmul.mubr.f32.gmra.mrb[0].mxu0 %v4888
      %v4980 = vpop.f32.mrb[0].mxu0
      %v4981 = vadd.f32 0.0, %v4980
      %v4982 = vpop.f32.mrb[0].mxu0
      %v4983 = vadd.f32 0.0, %v4982
      %4984 = vdwg.mxu0
      %v4985 = vlaneseq
      %v4986 = vshrl.u32 %v4985, 7
      %v4987 = vsub.s32 2, %v4986
      %v4988 = vrot.slane %v1001, %v4987
      %v4989 = vlaneseq
      %v4990 = vshrl.u32 %v4989, 7
      %v4991 = vsub.s32 2, %v4990
      %v4992 = vrot.slane %v1002, %v4991
      %v4993 = vmul.f32 %v1192, %v4988
      %v4994 = vmul.f32 %v1194, %v4992
      %v4995 = vmul.f32 %v1198, %v4988
      %v4996 = vmul.f32 %v1200, %v4992
      %v4997 = vmul.f32 %v1204, %v4988
      %v4998 = vmul.f32 %v1206, %v4992
      %v4999 = vmul.f32 %v1210, %v4988
      %v5000 = vmul.f32 %v1212, %v4992
      %v5001 = vadd.f32 %v4993, %v4963
      %v5002 = vadd.f32 %v4994, %v4965
      %v5003 = vadd.f32 %v4995, %v4969
      %v5004 = vadd.f32 %v4996, %v4971
      %v5005 = vadd.f32 %v4997, %v4975
      %v5006 = vadd.f32 %v4998, %v4977
      %v5007 = vadd.f32 %v4999, %v4981
      %v5008 = vadd.f32 %v5000, %v4983
      %v5009 = vld [vmem:[%s4275] sm:$0xff]
      %v5010 = vld [vmem:[%s4275 + $0x8] sm:$0xff]
      %v5011 = vld [vmem:[%s4275 + $0x10] sm:$0xff]
      %v5012 = vld [vmem:[%s4275 + $0x18] sm:$0xff]
      %5014 = vset.pattern.permute.xlu0 0
      %5015 = vperm.xlu0 %5014, %v5009
      %v5016 = vpop.permute.xlu0 %5015
      %5019 = vset.pattern.permute.xlu0 0
      %5020 = vperm.xlu0 %5019, %v5010
      %v5021 = vpop.permute.xlu0 %5020
      %5024 = vset.pattern.permute.xlu0 0
      %5025 = vperm.xlu0 %5024, %v5011
      %v5026 = vpop.permute.xlu0 %5025
      %5029 = vset.pattern.permute.xlu0 0
      %5030 = vperm.xlu0 %5029, %v5012
      %v5031 = vpop.permute.xlu0 %5030
      %v5033 = vadd.f32 %v5001, %v5016
      %v5034 = vadd.f32 %v5002, %v5016
      %v5035 = vadd.f32 %v5003, %v5021
      %v5036 = vadd.f32 %v5004, %v5021
      %v5037 = vadd.f32 %v5005, %v5026
      %v5038 = vadd.f32 %v5006, %v5026
      %v5039 = vadd.f32 %v5007, %v5031
      %v5040 = vadd.f32 %v5008, %v5031
      %v5041 = vmax.f32 %v5033, 0.0
      %v5042 = vmax.f32 %v5034, 0.0
      %v5043 = vmax.f32 %v5035, 0.0
      %v5044 = vmax.f32 %v5036, 0.0
      %v5045 = vmax.f32 %v5037, 0.0
      %v5046 = vmax.f32 %v5038, 0.0
      %v5047 = vmax.f32 %v5039, 0.0
      %v5048 = vmax.f32 %v5040, 0.0
      %v5049 = vld [vmem:[%s4316] sm:$0xff]
      %v5050 = vld [vmem:[%s4316 + $0x8] sm:$0xff]
      %v5051 = vld [vmem:[%s4319] sm:$0xff]
      %v5052 = vld [vmem:[%s4319 + $0x8] sm:$0xff]
      %5054 = vset.pattern.permute.xlu0 0
      %5055 = vperm.xlu0 %5054, %v5051
      %v5056 = vpop.permute.xlu0 %5055
      %5059 = vset.pattern.permute.xlu0 0
      %5060 = vperm.xlu0 %5059, %v5052
      %v5061 = vpop.permute.xlu0 %5060
      %v5064 = vsel %vm1407, %v5049, 0
      %v5067 = vsel %vm1407, %v5050, 0
      %5069 = vmatprep.subr.mxu0 %v5042
      %5070 = vmatpush1.msra.mxu0 %v5041
      %5071 = vmatprep.subr.mxu0 %v5044
      %5072 = vmatpush1.msra.mxu0 %v5043
      %5073 = vmatprep.subr.mxu0 %v5046
      %5074 = vmatpush1.msra.mxu0 %v5045
      %5075 = vmatprep.subr.mxu0 %v5048
      %5076 = vmatpush1.msra.mxu0 %v5047
      %5077 = vmatprep.subr.mxu0 0.0
      %5078 = vmatpush1.msra.mxu0 0.0
      %5079 = vmatprep.subr.mxu0 0.0
      %5080 = vmatpush1.msra.mxu0 0.0
      %5081 = vmatprep.subr.mxu0 0.0
      %5082 = vmatpush1.msra.mxu0 0.0
      %5083 = vmatprep.subr.mxu0 0.0
      %5084 = vmatpush1.msra.mxu0 0.0
      %5085 = vmatprep.subr.mxu0 0.0
      %5086 = vmatpush1.msra.mxu0 0.0
      %5087 = vmatprep.subr.mxu0 0.0
      %5088 = vmatpush1.msra.mxu0 0.0
      %5089 = vmatprep.subr.mxu0 0.0
      %5090 = vmatpush1.msra.mxu0 0.0
      %5091 = vmatprep.subr.mxu0 0.0
      %5092 = vmatpush1.msra.mxu0 0.0
      %5093 = vmatprep.subr.mxu0 0.0
      %5094 = vmatpush1.msra.mxu0 0.0
      %5095 = vmatprep.subr.mxu0 0.0
      %5096 = vmatpush1.msra.mxu0 0.0
      %5097 = vmatprep.subr.mxu0 0.0
      %5098 = vmatpush1.msra.mxu0 0.0
      %5099 = vmatprep.subr.mxu0 0.0
      %5100 = vmatpush1.msra.mxu0 0.0
      %5101 = vmatprep.subr.mxu0 0.0
      %5102 = vmatpush1.msra.mxu0 0.0
      %5103 = vmatprep.subr.mxu0 0.0
      %5104 = vmatpush1.msra.mxu0 0.0
      %5105 = vmatprep.subr.mxu0 0.0
      %5106 = vmatpush1.msra.mxu0 0.0
      %5107 = vmatprep.subr.mxu0 0.0
      %5108 = vmatpush1.msra.mxu0 0.0
      %5109 = vmatprep.subr.mxu0 0.0
      %5110 = vmatpush1.msra.mxu0 0.0
      %5111 = vmatprep.subr.mxu0 0.0
      %5112 = vmatpush1.msra.mxu0 0.0
      %5113 = vmatprep.subr.mxu0 0.0
      %5114 = vmatpush1.msra.mxu0 0.0
      %5115 = vmatprep.subr.mxu0 0.0
      %5116 = vmatpush1.msra.mxu0 0.0
      %5117 = vmatprep.subr.mxu0 0.0
      %5118 = vmatpush1.msra.mxu0 0.0
      %5119 = vmatprep.subr.mxu0 0.0
      %5120 = vmatpush1.msra.mxu0 0.0
      %5121 = vmatprep.subr.mxu0 0.0
      %5122 = vmatpush1.msra.mxu0 0.0
      %5123 = vmatprep.subr.mxu0 0.0
      %5124 = vmatpush1.msra.mxu0 0.0
      %5125 = vmatprep.subr.mxu0 0.0
      %5126 = vmatpush1.msra.mxu0 0.0
      %5127 = vmatprep.subr.mxu0 0.0
      %5128 = vmatpush1.msra.mxu0 0.0
      %5129 = vmatprep.subr.mxu0 0.0
      %5130 = vmatpush1.msra.mxu0 0.0
      %5131 = vmatprep.subr.mxu0 0.0
      %5132 = vmatpush1.msra.mxu0 0.0
      %5133 = vmatprep.mubr.f32.mxu0 0.0
      %5134 = vmatmul.mubr.f32.gmra.mrb[0].mxu0 %v5064
      %v5135 = vpop.f32.mrb[0].mxu0
      %v5136 = vadd.f32 %v5056, %v5135
      %v5137 = vpop.f32.mrb[0].mxu0
      %v5138 = vadd.f32 %v5056, %v5137
      %5139 = vmatprep.mubr.f32.mxu0 0.0
      %5140 = vmatmul.mubr.f32.gmra.mrb[0].mxu0 %v5067
      %v5141 = vpop.f32.mrb[0].mxu0
      %v5142 = vadd.f32 %v5061, %v5141
      %v5143 = vpop.f32.mrb[0].mxu0
      %v5144 = vadd.f32 %v5061, %v5143
      %5145 = vdwg.mxu0
      %v5146 = vmax.f32 %v5136, 0.0
      %v5147 = vmax.f32 %v5138, 0.0
      %v5148 = vmax.f32 %v5142, 0.0
      %v5149 = vmax.f32 %v5144, 0.0
      %s5150 = scalar_lea.vmem %s12, 240
      %v5151 = vld [vmem:[%s5150] sm:$0xff]
      %v5152 = vld [vmem:[%s5150 + $0x8] sm:$0xff]
      %v5153 = vld [vmem:[%s5150 + $0x10] sm:$0xff]
      %v5154 = vld [vmem:[%s5150 + $0x18] sm:$0xff]
      %v5155 = vld [vmem:[%s5150 + $0x20] sm:$0xff]
      %v5156 = vld [vmem:[%s5150 + $0x28] sm:$0xff]
      %s5157 = scalar_lea.vmem %s15, 240
      %v5158 = vld [vmem:[%s5157] sm:$0xff]
      %v5159 = vld [vmem:[%s5157 + $0x8] sm:$0xff]
      %v5160 = vld [vmem:[%s5157 + $0x10] sm:$0xff]
      %v5161 = vld [vmem:[%s5157 + $0x18] sm:$0xff]
      %v5162 = vld [vmem:[%s5157 + $0x20] sm:$0xff]
      %v5163 = vld [vmem:[%s5157 + $0x28] sm:$0xff]
      %5165 = vset.pattern.permute.xlu0 0
      %5166 = vperm.xlu0 %5165, %v5158
      %v5167 = vpop.permute.xlu0 %5166
      %5170 = vset.pattern.permute.xlu0 0
      %5171 = vperm.xlu0 %5170, %v5159
      %v5172 = vpop.permute.xlu0 %5171
      %5175 = vset.pattern.permute.xlu0 0
      %5176 = vperm.xlu0 %5175, %v5160
      %v5177 = vpop.permute.xlu0 %5176
      %5180 = vset.pattern.permute.xlu0 0
      %5181 = vperm.xlu0 %5180, %v5161
      %v5182 = vpop.permute.xlu0 %5181
      %5185 = vset.pattern.permute.xlu0 0
      %5186 = vperm.xlu0 %5185, %v5162
      %v5187 = vpop.permute.xlu0 %5186
      %5190 = vset.pattern.permute.xlu0 0
      %5191 = vperm.xlu0 %5190, %v5163
      %v5192 = vpop.permute.xlu0 %5191
      %v5195 = vsel %vm1537, %v5151, 0
      %v5198 = vsel %vm1537, %v5152, 0
      %v5201 = vsel %vm1537, %v5153, 0
      %v5204 = vsel %vm1537, %v5154, 0
      %v5207 = vsel %vm1537, %v5155, 0
      %v5210 = vsel %vm1537, %v5156, 0
      %5212 = vmatprep.subr.mxu0 %v5147
      %5213 = vmatpush1.msra.mxu0 %v5146
      %5214 = vmatprep.subr.mxu0 %v5149
      %5215 = vmatpush1.msra.mxu0 %v5148
      %5216 = vmatprep.subr.mxu0 0.0
      %5217 = vmatpush1.msra.mxu0 0.0
      %5218 = vmatprep.subr.mxu0 0.0
      %5219 = vmatpush1.msra.mxu0 0.0
      %5220 = vmatprep.subr.mxu0 0.0
      %5221 = vmatpush1.msra.mxu0 0.0
      %5222 = vmatprep.subr.mxu0 0.0
      %5223 = vmatpush1.msra.mxu0 0.0
      %5224 = vmatprep.subr.mxu0 0.0
      %5225 = vmatpush1.msra.mxu0 0.0
      %5226 = vmatprep.subr.mxu0 0.0
      %5227 = vmatpush1.msra.mxu0 0.0
      %5228 = vmatprep.subr.mxu0 0.0
      %5229 = vmatpush1.msra.mxu0 0.0
      %5230 = vmatprep.subr.mxu0 0.0
      %5231 = vmatpush1.msra.mxu0 0.0
      %5232 = vmatprep.subr.mxu0 0.0
      %5233 = vmatpush1.msra.mxu0 0.0
      %5234 = vmatprep.subr.mxu0 0.0
      %5235 = vmatpush1.msra.mxu0 0.0
      %5236 = vmatprep.subr.mxu0 0.0
      %5237 = vmatpush1.msra.mxu0 0.0
      %5238 = vmatprep.subr.mxu0 0.0
      %5239 = vmatpush1.msra.mxu0 0.0
      %5240 = vmatprep.subr.mxu0 0.0
      %5241 = vmatpush1.msra.mxu0 0.0
      %5242 = vmatprep.subr.mxu0 0.0
      %5243 = vmatpush1.msra.mxu0 0.0
      %5244 = vmatprep.subr.mxu0 0.0
      %5245 = vmatpush1.msra.mxu0 0.0
      %5246 = vmatprep.subr.mxu0 0.0
      %5247 = vmatpush1.msra.mxu0 0.0
      %5248 = vmatprep.subr.mxu0 0.0
      %5249 = vmatpush1.msra.mxu0 0.0
      %5250 = vmatprep.subr.mxu0 0.0
      %5251 = vmatpush1.msra.mxu0 0.0
      %5252 = vmatprep.subr.mxu0 0.0
      %5253 = vmatpush1.msra.mxu0 0.0
      %5254 = vmatprep.subr.mxu0 0.0
      %5255 = vmatpush1.msra.mxu0 0.0
      %5256 = vmatprep.subr.mxu0 0.0
      %5257 = vmatpush1.msra.mxu0 0.0
      %5258 = vmatprep.subr.mxu0 0.0
      %5259 = vmatpush1.msra.mxu0 0.0
      %5260 = vmatprep.subr.mxu0 0.0
      %5261 = vmatpush1.msra.mxu0 0.0
      %5262 = vmatprep.subr.mxu0 0.0
      %5263 = vmatpush1.msra.mxu0 0.0
      %5264 = vmatprep.subr.mxu0 0.0
      %5265 = vmatpush1.msra.mxu0 0.0
      %5266 = vmatprep.subr.mxu0 0.0
      %5267 = vmatpush1.msra.mxu0 0.0
      %5268 = vmatprep.subr.mxu0 0.0
      %5269 = vmatpush1.msra.mxu0 0.0
      %5270 = vmatprep.subr.mxu0 0.0
      %5271 = vmatpush1.msra.mxu0 0.0
      %5272 = vmatprep.subr.mxu0 0.0
      %5273 = vmatpush1.msra.mxu0 0.0
      %5274 = vmatprep.subr.mxu0 0.0
      %5275 = vmatpush1.msra.mxu0 0.0
      %5276 = vmatprep.mubr.f32.mxu0 0.0
      %5277 = vmatmul.mubr.f32.gmra.mrb[0].mxu0 %v5195
      %v5278 = vpop.f32.mrb[0].mxu0
      %v5279 = vadd.f32 %v5167, %v5278
      %v5280 = vpop.f32.mrb[0].mxu0
      %v5281 = vadd.f32 %v5167, %v5280
      %5282 = vmatprep.mubr.f32.mxu0 0.0
      %5283 = vmatmul.mubr.f32.gmra.mrb[0].mxu0 %v5198
      %v5284 = vpop.f32.mrb[0].mxu0
      %v5285 = vadd.f32 %v5172, %v5284
      %v5286 = vpop.f32.mrb[0].mxu0
      %v5287 = vadd.f32 %v5172, %v5286
      %5288 = vmatprep.mubr.f32.mxu0 0.0
      %5289 = vmatmul.mubr.f32.gmra.mrb[0].mxu0 %v5201
      %v5290 = vpop.f32.mrb[0].mxu0
      %v5291 = vadd.f32 %v5177, %v5290
      %v5292 = vpop.f32.mrb[0].mxu0
      %v5293 = vadd.f32 %v5177, %v5292
      %5294 = vmatprep.mubr.f32.mxu0 0.0
      %5295 = vmatmul.mubr.f32.gmra.mrb[0].mxu0 %v5204
      %v5296 = vpop.f32.mrb[0].mxu0
      %v5297 = vadd.f32 %v5182, %v5296
      %v5298 = vpop.f32.mrb[0].mxu0
      %v5299 = vadd.f32 %v5182, %v5298
      %5300 = vmatprep.mubr.f32.mxu0 0.0
      %5301 = vmatmul.mubr.f32.gmra.mrb[0].mxu0 %v5207
      %v5302 = vpop.f32.mrb[0].mxu0
      %v5303 = vadd.f32 %v5187, %v5302
      %v5304 = vpop.f32.mrb[0].mxu0
      %v5305 = vadd.f32 %v5187, %v5304
      %5306 = vmatprep.mubr.f32.mxu0 0.0
      %5307 = vmatmul.mubr.f32.gmra.mrb[0].mxu0 %v5210
      %v5308 = vpop.f32.mrb[0].mxu0
      %v5309 = vadd.f32 %v5192, %v5308
      %v5310 = vpop.f32.mrb[0].mxu0
      %v5311 = vadd.f32 %v5192, %v5310
      %5312 = vdwg.mxu0
      %s5313 = scalar_lea.vmem %s13, 160
      %v5314 = vld [vmem:[%s5313] sm:$0xff]
      %v5315 = vld [vmem:[%s5313 + $0x8] sm:$0xff]
      %v5316 = vld [vmem:[%s5313 + $0x10] sm:$0xff]
      %v5317 = vld [vmem:[%s5313 + $0x18] sm:$0xff]
      %v5319 = vsel %vm749, %v5314, 0
      %v5322 = vsel %vm749, %v5315, 0
      %v5325 = vsel %vm749, %v5316, 0
      %v5328 = vsel %vm749, %v5317, 0
      %5330 = vmatprep.subr.mxu0 %v4871
      %5331 = vmatpush1.msra.mxu0 %v4870
      %5332 = vmatprep.subr.mxu0 %v4894
      %5333 = vmatpush1.msra.mxu0 %v4891
      %5334 = vmatprep.subr.mxu0 0.0
      %5335 = vmatpush1.msra.mxu0 0.0
      %5336 = vmatprep.subr.mxu0 0.0
      %5337 = vmatpush1.msra.mxu0 0.0
      %5338 = vmatprep.subr.mxu0 0.0
      %5339 = vmatpush1.msra.mxu0 0.0
      %5340 = vmatprep.subr.mxu0 0.0
      %5341 = vmatpush1.msra.mxu0 0.0
      %5342 = vmatprep.subr.mxu0 0.0
      %5343 = vmatpush1.msra.mxu0 0.0
      %5344 = vmatprep.subr.mxu0 0.0
      %5345 = vmatpush1.msra.mxu0 0.0
      %5346 = vmatprep.subr.mxu0 0.0
      %5347 = vmatpush1.msra.mxu0 0.0
      %5348 = vmatprep.subr.mxu0 0.0
      %5349 = vmatpush1.msra.mxu0 0.0
      %5350 = vmatprep.subr.mxu0 0.0
      %5351 = vmatpush1.msra.mxu0 0.0
      %5352 = vmatprep.subr.mxu0 0.0
      %5353 = vmatpush1.msra.mxu0 0.0
      %5354 = vmatprep.subr.mxu0 0.0
      %5355 = vmatpush1.msra.mxu0 0.0
      %5356 = vmatprep.subr.mxu0 0.0
      %5357 = vmatpush1.msra.mxu0 0.0
      %5358 = vmatprep.subr.mxu0 0.0
      %5359 = vmatpush1.msra.mxu0 0.0
      %5360 = vmatprep.subr.mxu0 0.0
      %5361 = vmatpush1.msra.mxu0 0.0
      %5362 = vmatprep.subr.mxu0 0.0
      %5363 = vmatpush1.msra.mxu0 0.0
      %5364 = vmatprep.subr.mxu0 0.0
      %5365 = vmatpush1.msra.mxu0 0.0
      %5366 = vmatprep.subr.mxu0 0.0
      %5367 = vmatpush1.msra.mxu0 0.0
      %5368 = vmatprep.subr.mxu0 0.0
      %5369 = vmatpush1.msra.mxu0 0.0
      %5370 = vmatprep.subr.mxu0 0.0
      %5371 = vmatpush1.msra.mxu0 0.0
      %5372 = vmatprep.subr.mxu0 0.0
      %5373 = vmatpush1.msra.mxu0 0.0
      %5374 = vmatprep.subr.mxu0 0.0
      %5375 = vmatpush1.msra.mxu0 0.0
      %5376 = vmatprep.subr.mxu0 0.0
      %5377 = vmatpush1.msra.mxu0 0.0
      %5378 = vmatprep.subr.mxu0 0.0
      %5379 = vmatpush1.msra.mxu0 0.0
      %5380 = vmatprep.subr.mxu0 0.0
      %5381 = vmatpush1.msra.mxu0 0.0
      %5382 = vmatprep.subr.mxu0 0.0
      %5383 = vmatpush1.msra.mxu0 0.0
      %5384 = vmatprep.subr.mxu0 0.0
      %5385 = vmatpush1.msra.mxu0 0.0
      %5386 = vmatprep.subr.mxu0 0.0
      %5387 = vmatpush1.msra.mxu0 0.0
      %5388 = vmatprep.subr.mxu0 0.0
      %5389 = vmatpush1.msra.mxu0 0.0
      %5390 = vmatprep.subr.mxu0 0.0
      %5391 = vmatpush1.msra.mxu0 0.0
      %5392 = vmatprep.subr.mxu0 0.0
      %5393 = vmatpush1.msra.mxu0 0.0
      %5394 = vmatprep.mubr.f32.mxu0 0.0
      %5395 = vmatmul.mubr.f32.gmra.mrb[0].mxu0 %v5319
      %v5396 = vpop.f32.mrb[0].mxu0
      %v5397 = vadd.f32 0.0, %v5396
      %v5398 = vpop.f32.mrb[0].mxu0
      %v5399 = vadd.f32 0.0, %v5398
      %5400 = vmatprep.mubr.f32.mxu0 0.0
      %5401 = vmatmul.mubr.f32.gmra.mrb[0].mxu0 %v5322
      %v5402 = vpop.f32.mrb[0].mxu0
      %v5403 = vadd.f32 0.0, %v5402
      %v5404 = vpop.f32.mrb[0].mxu0
      %v5405 = vadd.f32 0.0, %v5404
      %5406 = vmatprep.mubr.f32.mxu0 0.0
      %5407 = vmatmul.mubr.f32.gmra.mrb[0].mxu0 %v5325
      %v5408 = vpop.f32.mrb[0].mxu0
      %v5409 = vadd.f32 0.0, %v5408
      %v5410 = vpop.f32.mrb[0].mxu0
      %v5411 = vadd.f32 0.0, %v5410
      %5412 = vmatprep.mubr.f32.mxu0 0.0
      %5413 = vmatmul.mubr.f32.gmra.mrb[0].mxu0 %v5328
      %v5414 = vpop.f32.mrb[0].mxu0
      %v5415 = vadd.f32 0.0, %v5414
      %v5416 = vpop.f32.mrb[0].mxu0
      %v5417 = vadd.f32 0.0, %v5416
      %5418 = vdwg.mxu0
      %v5419 = vadd.f32 %v5279, %v5397
      %v5420 = vadd.f32 %v5281, %v5399
      %v5421 = vadd.f32 %v5285, %v5403
      %v5422 = vadd.f32 %v5287, %v5405
      %v5423 = vxor.u32 %v5419, 2147483648
      %v5424 = vxor.u32 %v5420, 2147483648
      %v5425 = vxor.u32 %v5421, 2147483648
      %v5426 = vxor.u32 %v5422, 2147483648
      %v5427 = vmul.f32 %v5423, 1.442695
      %v5428 = vpow.pop %v5427
      %v5429 = vmul.f32 %v5424, 1.442695
      %v5430 = vpow.pop %v5429
      %v5431 = vmul.f32 %v5425, 1.442695
      %v5432 = vpow.pop %v5431
      %v5433 = vmul.f32 %v5426, 1.442695
      %v5434 = vpow.pop %v5433
      %v5435 = vadd.f32 %v5428, 1.0
      %v5436 = vadd.f32 %v5430, 1.0
      %v5437 = vadd.f32 %v5432, 1.0
      %v5438 = vadd.f32 %v5434, 1.0
      %v5439 = vrcp.pop %v5435
      %v5440 = vmul.f32 1.0, %v5439
      %v5441 = vrcp.pop %v5436
      %v5442 = vmul.f32 1.0, %v5441
      %v5443 = vrcp.pop %v5437
      %v5444 = vmul.f32 1.0, %v5443
      %v5445 = vrcp.pop %v5438
      %v5446 = vmul.f32 1.0, %v5445
      %v5447 = vadd.f32 %v5291, %v5409
      %v5448 = vadd.f32 %v5293, %v5411
      %v5449 = vadd.f32 %v5297, %v5415
      %v5450 = vadd.f32 %v5299, %v5417
      %v5451 = vxor.u32 %v5447, 2147483648
      %v5452 = vxor.u32 %v5448, 2147483648
      %v5453 = vxor.u32 %v5449, 2147483648
      %v5454 = vxor.u32 %v5450, 2147483648
      %v5455 = vmul.f32 %v5451, 1.442695
      %v5456 = vpow.pop %v5455
      %v5457 = vmul.f32 %v5452, 1.442695
      %v5458 = vpow.pop %v5457
      %v5459 = vmul.f32 %v5453, 1.442695
      %v5460 = vpow.pop %v5459
      %v5461 = vmul.f32 %v5454, 1.442695
      %v5462 = vpow.pop %v5461
      %v5463 = vadd.f32 %v5456, 1.0
      %v5464 = vadd.f32 %v5458, 1.0
      %v5465 = vadd.f32 %v5460, 1.0
      %v5466 = vadd.f32 %v5462, 1.0
      %v5467 = vrcp.pop %v5463
      %v5468 = vmul.f32 1.0, %v5467
      %v5469 = vrcp.pop %v5464
      %v5470 = vmul.f32 1.0, %v5469
      %v5471 = vrcp.pop %v5465
      %v5472 = vmul.f32 1.0, %v5471
      %v5473 = vrcp.pop %v5466
      %v5474 = vmul.f32 1.0, %v5473
      %s5475 = scalar_lea.vmem %s14, 80
      %v5476 = vld [vmem:[%s5475] sm:$0xff]
      %v5477 = vld [vmem:[%s5475 + $0x8] sm:$0xff]
      %v5478 = vmul.f32 %v5440, %v4870
      %v5479 = vmul.f32 %v5442, %v4871
      %v5480 = vmul.f32 %v5444, %v4872
      %v5481 = vmul.f32 %v5446, %v4873
      %v5483 = vsel %vm749, %v5476, 0
      %v5486 = vsel %vm749, %v5477, 0
      %v5489 = vsel %vm753, %v5480, 0
      %v5492 = vsel %vm753, %v5481, 0
      %5494 = vmatprep.subr.mxu0 %v5479
      %5495 = vmatpush1.msra.mxu0 %v5478
      %5496 = vmatprep.subr.mxu0 %v5492
      %5497 = vmatpush1.msra.mxu0 %v5489
      %5498 = vmatprep.subr.mxu0 0.0
      %5499 = vmatpush1.msra.mxu0 0.0
      %5500 = vmatprep.subr.mxu0 0.0
      %5501 = vmatpush1.msra.mxu0 0.0
      %5502 = vmatprep.subr.mxu0 0.0
      %5503 = vmatpush1.msra.mxu0 0.0
      %5504 = vmatprep.subr.mxu0 0.0
      %5505 = vmatpush1.msra.mxu0 0.0
      %5506 = vmatprep.subr.mxu0 0.0
      %5507 = vmatpush1.msra.mxu0 0.0
      %5508 = vmatprep.subr.mxu0 0.0
      %5509 = vmatpush1.msra.mxu0 0.0
      %5510 = vmatprep.subr.mxu0 0.0
      %5511 = vmatpush1.msra.mxu0 0.0
      %5512 = vmatprep.subr.mxu0 0.0
      %5513 = vmatpush1.msra.mxu0 0.0
      %5514 = vmatprep.subr.mxu0 0.0
      %5515 = vmatpush1.msra.mxu0 0.0
      %5516 = vmatprep.subr.mxu0 0.0
      %5517 = vmatpush1.msra.mxu0 0.0
      %5518 = vmatprep.subr.mxu0 0.0
      %5519 = vmatpush1.msra.mxu0 0.0
      %5520 = vmatprep.subr.mxu0 0.0
      %5521 = vmatpush1.msra.mxu0 0.0
      %5522 = vmatprep.subr.mxu0 0.0
      %5523 = vmatpush1.msra.mxu0 0.0
      %5524 = vmatprep.subr.mxu0 0.0
      %5525 = vmatpush1.msra.mxu0 0.0
      %5526 = vmatprep.subr.mxu0 0.0
      %5527 = vmatpush1.msra.mxu0 0.0
      %5528 = vmatprep.subr.mxu0 0.0
      %5529 = vmatpush1.msra.mxu0 0.0
      %5530 = vmatprep.subr.mxu0 0.0
      %5531 = vmatpush1.msra.mxu0 0.0
      %5532 = vmatprep.subr.mxu0 0.0
      %5533 = vmatpush1.msra.mxu0 0.0
      %5534 = vmatprep.subr.mxu0 0.0
      %5535 = vmatpush1.msra.mxu0 0.0
      %5536 = vmatprep.subr.mxu0 0.0
      %5537 = vmatpush1.msra.mxu0 0.0
      %5538 = vmatprep.subr.mxu0 0.0
      %5539 = vmatpush1.msra.mxu0 0.0
      %5540 = vmatprep.subr.mxu0 0.0
      %5541 = vmatpush1.msra.mxu0 0.0
      %5542 = vmatprep.subr.mxu0 0.0
      %5543 = vmatpush1.msra.mxu0 0.0
      %5544 = vmatprep.subr.mxu0 0.0
      %5545 = vmatpush1.msra.mxu0 0.0
      %5546 = vmatprep.subr.mxu0 0.0
      %5547 = vmatpush1.msra.mxu0 0.0
      %5548 = vmatprep.subr.mxu0 0.0
      %5549 = vmatpush1.msra.mxu0 0.0
      %5550 = vmatprep.subr.mxu0 0.0
      %5551 = vmatpush1.msra.mxu0 0.0
      %5552 = vmatprep.subr.mxu0 0.0
      %5553 = vmatpush1.msra.mxu0 0.0
      %5554 = vmatprep.subr.mxu0 0.0
      %5555 = vmatpush1.msra.mxu0 0.0
      %5556 = vmatprep.subr.mxu0 0.0
      %5557 = vmatpush1.msra.mxu0 0.0
      %5558 = vmatprep.mubr.f32.mxu0 0.0
      %5559 = vmatmul.mubr.f32.gmra.mrb[0].mxu0 %v5483
      %v5560 = vpop.f32.mrb[0].mxu0
      %v5561 = vadd.f32 0.0, %v5560
      %v5562 = vpop.f32.mrb[0].mxu0
      %v5563 = vadd.f32 0.0, %v5562
      %5564 = vmatprep.mubr.f32.mxu0 0.0
      %5565 = vmatmul.mubr.f32.gmra.mrb[0].mxu0 %v5486
      %v5566 = vpop.f32.mrb[0].mxu0
      %v5567 = vadd.f32 0.0, %v5566
      %v5568 = vpop.f32.mrb[0].mxu0
      %v5569 = vadd.f32 0.0, %v5568
      %5570 = vdwg.mxu0
      %v5571 = vadd.f32 %v5303, %v5561
      %v5572 = vadd.f32 %v5305, %v5563
      %v5573 = vadd.f32 %v5309, %v5567
      %v5574 = vadd.f32 %v5311, %v5569
      %v5575 = vtanh.pop %v5571
      %v5576 = vtanh.pop %v5572
      %v5577 = vtanh.pop %v5573
      %v5578 = vtanh.pop %v5574
      %v5579 = vsub.f32 1.0, %v5468
      %v5580 = vsub.f32 1.0, %v5470
      %v5581 = vsub.f32 1.0, %v5472
      %v5582 = vsub.f32 1.0, %v5474
      %v5583 = vmul.f32 %v5579, %v4870
      %v5584 = vmul.f32 %v5580, %v4871
      %v5585 = vmul.f32 %v5581, %v4872
      %v5586 = vmul.f32 %v5582, %v4873
      %v5587 = vmul.f32 %v5468, %v5575
      %v5588 = vmul.f32 %v5470, %v5576
      %v5589 = vmul.f32 %v5472, %v5577
      %v5590 = vmul.f32 %v5474, %v5578
      %v5591 = vadd.f32 %v5583, %v5587
      %v5592 = vadd.f32 %v5584, %v5588
      %v5593 = vadd.f32 %v5585, %v5589
      %v5594 = vadd.f32 %v5586, %v5590
      %s5595 = scalar_lea.vmem %s712, 160
      %5596 = vst [vmem:[%s5595] sm:$0xff] %v5591
      %5597 = vst [vmem:[%s5595 + $0x8] sm:$0xff] %v5592
      %5598 = vst [vmem:[%s5595 + $0x10] sm:$0x3] %v5593
      %5599 = vst [vmem:[%s5595 + $0x18] sm:$0x3] %v5594
      %s5600 = smul.u32 2, %s35
      %p5601 = scmp.lt.s32.totalorder %s34, 1
      %s5602 = scalar_select %p5601, %s34, 1
      %p5603 = scmp.lt.s32.totalorder %s5600, 1
      %s5604 = scalar_select %p5603, %s5600, 1
      %s5605 = smul.addr %s5602, 24
      %s5606 = sadd.s32 %s5604, %s5605
      %s5607 = smul.addr %s5606, 8
      %s5608 = scalar_lea.vmem %s16, %s5607
      %s5609 = smul.u32 2, %s35
      %p5610 = scmp.lt.s32.totalorder %s34, 1
      %s5611 = scalar_select %p5610, %s34, 1
      %p5612 = scmp.lt.s32.totalorder %s5609, 1
      %s5613 = scalar_select %p5612, %s5609, 1
      %s5614 = smul.addr %s5611, 2
      %s5615 = sadd.s32 %s5613, %s5614
      %s5616 = smul.addr %s5615, 8
      %s5617 = scalar_lea.vmem %s17, %s5616
      %s5618 = smul.u32 2, %s35
      %p5619 = scmp.lt.s32.totalorder %s34, 1
      %s5620 = scalar_select %p5619, %s34, 1
      %p5621 = scmp.lt.s32.totalorder %s5618, 1
      %s5622 = scalar_select %p5621, %s5618, 1
      %s5623 = smul.addr %s5620, 2
      %s5624 = sadd.s32 %s5622, %s5623
      %s5625 = smul.addr %s5624, 4
      %s5626 = scalar_lea.vmem %s18, %s5625
      // Predicated region
      $region85: #{_part_graph_forward_impl.1} parent=83 // pred_check
        %p5627 = pneg %p419
      $region86: #{_part_graph_forward_impl.1} parent=83 // pred_check_branch
        %5629 = sbr.rel (%p5627) target = $region88
      $region87: #{_part_graph_forward_impl.1} parent=83 // pred_region
        %s5630 = smul.u32 2, %s35
      $region88: #{_part_graph_forward_impl.1} parent=83 // pred_fallthru
        _
      // Predicated region
      $region89: #{_part_graph_forward_impl.1} parent=83 // pred_check
        %p5631 = pneg %p447
      $region90: #{_part_graph_forward_impl.1} parent=83 // pred_check_branch
        %5633 = sbr.rel (%p5631) target = $region92
      $region91: #{_part_graph_forward_impl.1} parent=83 // pred_region
        %s5634 = smul.u32 2, %s35
      $region92: #{_part_graph_forward_impl.1} parent=83 // pred_fallthru
        _
      // Predicated region
      $region93: #{_part_graph_forward_impl.1} parent=83 // pred_check
        %p5635 = pneg %p475
      $region94: #{_part_graph_forward_impl.1} parent=83 // pred_check_branch
        %5637 = sbr.rel (%p5635) target = $region96
      $region95: #{_part_graph_forward_impl.1} parent=83 // pred_region
        %s5638 = smul.u32 2, %s35
      $region96: #{_part_graph_forward_impl.1} parent=83 // pred_fallthru
        _
    $region84: #{_part_graph_forward_impl.1} parent=5 // pred_fallthru
      _
    %p5639 = scmp.le.s32.totalorder 2, %s25
    // Predicated region
    $region97: #{_part_graph_forward_impl.1} parent=5 // pred_check
      %p5640 = pneg %p5639
    $region98: #{_part_graph_forward_impl.1} parent=5 // pred_check_branch
      %5642 = sbr.rel (%p5640) target = $region100
    $region99: #{_part_graph_forward_impl.1} parent=5 // pred_region
      %s5643 = ssub.s32 %s25, 2
      // Predicated region
      $region101: #{_part_graph_forward_impl.1} parent=99 // pred_check
        %p5644 = pneg %p425
      $region102: #{_part_graph_forward_impl.1} parent=99 // pred_check_branch
        %5646 = sbr.rel (%p5644) target = $region104
      $region103: #{_part_graph_forward_impl.1} parent=99 // pred_region
        %s5647 = smul.u32 2, %s37
        %p5648 = scmp.lt.s32.totalorder %s36, 1
        %s5649 = scalar_select %p5648, %s36, 1
        %p5650 = scmp.lt.s32.totalorder %s5647, 1
        %s5651 = scalar_select %p5650, %s5647, 1
        %s5652 = smul.addr %s5649, 24
        %s5653 = sadd.s32 %s5651, %s5652
        %s5654 = smul.addr %s5653, 8
        %s5655 = scalar_lea.vmem %s16, %s5654
      $region104: #{_part_graph_forward_impl.1} parent=99 // pred_fallthru
        _
      // Predicated region
      $region105: #{_part_graph_forward_impl.1} parent=99 // pred_check
        %p5656 = pneg %p453
      $region106: #{_part_graph_forward_impl.1} parent=99 // pred_check_branch
        %5658 = sbr.rel (%p5656) target = $region108
      $region107: #{_part_graph_forward_impl.1} parent=99 // pred_region
        %s5659 = smul.u32 2, %s37
        %p5660 = scmp.lt.s32.totalorder %s36, 1
        %s5661 = scalar_select %p5660, %s36, 1
        %p5662 = scmp.lt.s32.totalorder %s5659, 1
        %s5663 = scalar_select %p5662, %s5659, 1
        %s5664 = smul.addr %s5661, 2
        %s5665 = sadd.s32 %s5663, %s5664
        %s5666 = smul.addr %s5665, 8
        %s5667 = scalar_lea.vmem %s17, %s5666
      $region108: #{_part_graph_forward_impl.1} parent=99 // pred_fallthru
        _
      // Predicated region
      $region109: #{_part_graph_forward_impl.1} parent=99 // pred_check
        %p5668 = pneg %p481
      $region110: #{_part_graph_forward_impl.1} parent=99 // pred_check_branch
        %5670 = sbr.rel (%p5668) target = $region112
      $region111: #{_part_graph_forward_impl.1} parent=99 // pred_region
        %s5671 = smul.u32 2, %s37
        %p5672 = scmp.lt.s32.totalorder %s36, 1
        %s5673 = scalar_select %p5672, %s36, 1
        %p5674 = scmp.lt.s32.totalorder %s5671, 1
        %s5675 = scalar_select %p5674, %s5671, 1
        %s5676 = smul.addr %s5673, 2
        %s5677 = sadd.s32 %s5675, %s5676
        %s5678 = smul.addr %s5677, 4
        %s5679 = scalar_lea.vmem %s18, %s5678
      $region112: #{_part_graph_forward_impl.1} parent=99 // pred_fallthru
        _
    $region100: #{_part_graph_forward_impl.1} parent=5 // pred_fallthru
      _
  $region6: #{_part_graph_forward_impl.1} parent=0 // loop_footer
    %s29 = sadd.s32 1, %s25
  $region7: #{_part_graph_forward_impl.1} parent=0 // loop_footer_branch
    %24 = sbr.rel target = $region3
  $region8: #{_part_graph_forward_impl.1} parent=0 // loop_exit
    _

</llo_original>
